<compile_context>
chip_gen: v7x
topology: tpu7x:2x2x1
jax: 0.10.0
libtpu: 0.0.40
codegen_flags: <defaults>
</compile_context>

<pallas_src>
import functools

import jax
import jax.numpy as jnp
import numpy as np
from jax import lax
from jax.experimental import pallas as pl
from jax.experimental.pallas import tpu as pltpu


def _fused_cnn_kernel(xu_ref, mask_ref,
                      w1_ref, w2_ref, w3_ref,
                      b1_ref, b2_ref,
                      b3_ref, a1_ref, a2_ref,
                      o_ref,
                      *scratch,
                      K, W, BHW, Cin, Cmid, conv2_accumulate):
    KK = K * K
    pad = (K - 1) // 2
    # lane shift per kernel tap, ky-major / kx-minor (matches weight packing)
    shifts = [(ky - pad) * W + (kx - pad) for ky in range(K) for kx in range(K)]

    def tap(a, s):
        """Lanes shifted so lane q holds a[..., q + s]; zero-pad via mask."""
        if s % BHW == 0:
            return a
        return pltpu.roll(a, shift=(-s) % BHW, axis=1)

    masks = mask_ref[...]                    # (KK, BHW), loaded once
    a0 = xu_ref[0]                           # (Cin, BHW)  -- [x; u]
    x_img = a0[0:1, :]                       # residual input (1, BHW)
    alpha1 = a1_ref[0]
    alpha2 = a2_ref[0]

    # -------- conv1 (Cin -> Cmid): patch kept in vregs, one deep-K matmul ----
    p1 = jnp.concatenate(
        [tap(a0, s) * masks[off:off + 1, :] for off, s in enumerate(shifts)],
        axis=0)                                               # (KK*Cin, BHW)
    z1 = jnp.dot(w1_ref[...], p1,
                 preferred_element_type=jnp.float32) + b1_ref[...]
    act1 = jnp.where(z1 >= 0, z1, alpha1 * z1)                # (Cmid, BHW)

    # -------- conv2 (Cmid -> Cmid) + PReLU --------
    if conv2_accumulate:
        # v7x: 25 accumulated (Cmid,Cmid)@(Cmid,BHW) matmuls, no im2col scratch.
        z2 = jnp.dot(w2_ref[0], tap(act1, shifts[0]) * masks[0:1, :],
                     preferred_element_type=jnp.float32)
        for off in range(1, KK):
            z2 = z2 + jnp.dot(w2_ref[off],
                              tap(act1, shifts[off]) * masks[off:off + 1, :],
                              preferred_element_type=jnp.float32)
        z2 = z2 + b2_ref[...]
    else:
        # v5e/v6e: single deep-K matmul through a VMEM im2col scratch
        # (stores are 32-row, 8-sublane-aligned -> unmasked vst).
        p_ref = scratch[0]
        for off, s in enumerate(shifts):
            p_ref[off * Cmid:(off + 1) * Cmid, :] = (
                tap(act1, s) * masks[off:off + 1, :])
        z2 = jnp.dot(w2_ref[...], p_ref[...],
                     preferred_element_type=jnp.float32) + b2_ref[...]
    act2 = jnp.where(z2 >= 0, z2, alpha2 * z2)                # (Cmid, BHW)

    # -------- conv3 (Cmid -> 1): accumulated skinny dots, no scratch ---------
    w3 = w3_ref[...]                                          # (KK, Cmid)
    z3 = jnp.dot(w3[0:1, :], tap(act2, shifts[0]) * masks[0:1, :],
                 preferred_element_type=jnp.float32)
    for off in range(1, KK):
        z3 = z3 + jnp.dot(w3[off:off + 1, :],
                          tap(act2, shifts[off]) * masks[off:off + 1, :],
                          preferred_element_type=jnp.float32)

    o_ref[0] = z3 + b3_ref[0] + x_img


def _offset_masks(K, H, W):
    """(K*K, H*W) f32: 1.0 where the shifted pixel is in-bounds (zero-pad conv)."""
    pad = (K - 1) // 2
    q = np.arange(H * W)
    ys, xs = q // W, q % W
    rows = []
    for ky in range(K):
        for kx in range(K):
            dy, dx = ky - pad, kx - pad
            valid = ((ys + dy >= 0) & (ys + dy < H) &
                     (xs + dx >= 0) & (xs + dx < W))
            rows.append(valid.astype(np.float32))
    return jnp.asarray(np.stack(rows, axis=0))


def _pick_batch_fold(N, HW, is_v7x):
    """Images per grid step (folded onto lanes). Keep >=2 grid steps on v7x."""
    if HW % 128 != 0:
        return 1
    num_cores = 2 if is_v7x else 1
    max_lanes = 2048                      # keeps the im2col scratch <= ~6.4 MiB
    best = 1
    for b in range(1, N + 1):
        if N % b == 0 and (N // b) >= num_cores and b * HW <= max_lanes:
            best = b
    return best


def cnn_image_space_forward(params, x, u):
    """x, u: (N, H, W, 1) NHWC float32.  Returns (N, H, W, 1) = x + cnn(cat(x, u))."""
    N, H, W, _ = x.shape
    K, _, Cin, Cmid = params["w1"].shape            # HWIO: (5, 5, 2, 32)
    HW = H * W
    f32 = jnp.float32

    kind = ""
    try:
        kind = jax.devices()[0].device_kind.lower()
    except Exception:
        pass
    is_v7x = ("v7" in kind) or ("tpu7" in kind)
    conv2_accumulate = is_v7x                        # MRB in-place accumulation
    B = _pick_batch_fold(N, HW, is_v7x)
    G = N // B
    BHW = B * HW

    # single input slab: xu[g, c, b*HW + p] = (x, u)[g*B + b, c, p]
    xu = jnp.stack([x.reshape(N, HW), u.reshape(N, HW)], axis=1).astype(f32)
    xu = xu.reshape(G, B, Cin, HW).transpose(0, 2, 1, 3).reshape(G, Cin, BHW)

    # boundary masks, tiled across the folded batch (mask depends only on p)
    mask = jnp.tile(_offset_masks(K, H, W), (1, B))  # (K*K, BHW)

    # pack HWIO weights
    def pack_deep(w):                                # -> (Cout, K*K*Cin)
        kk, _, ci, co = w.shape
        return jnp.transpose(w, (3, 0, 1, 2)).reshape(co, kk * kk * ci).astype(f32)

    w1m = pack_deep(params["w1"])                    # (32, 50)
    if conv2_accumulate:
        w2m = jnp.transpose(params["w2"], (0, 1, 3, 2)).reshape(
            K * K, Cmid, Cmid).astype(f32)           # (25, 32, 32)
        w2_spec = pl.BlockSpec((K * K, Cmid, Cmid), lambda g: (0, 0, 0))
    else:
        w2m = pack_deep(params["w2"])                # (32, 800)
        w2_spec = pl.BlockSpec((Cmid, K * K * Cmid), lambda g: (0, 0))
    w3m = params["w3"].reshape(K * K, Cmid).astype(f32)   # (25, 32)

    b1 = params["b1"].reshape(Cmid, 1).astype(f32)
    b2 = params["b2"].reshape(Cmid, 1).astype(f32)
    b3s = jnp.asarray(params["b3"], f32).reshape(1,)
    a1s = jnp.asarray(params["a1"], f32).reshape(1,)
    a2s = jnp.asarray(params["a2"], f32).reshape(1,)

    kernel = functools.partial(
        _fused_cnn_kernel,
        K=K, W=W, BHW=BHW, Cin=Cin, Cmid=Cmid,
        conv2_accumulate=conv2_accumulate)

    per_blk = lambda g: (g, 0, 0)
    const2 = lambda g: (0, 0)
    smem_spec = pl.BlockSpec(memory_space=pltpu.MemorySpace.SMEM)

    scratch_shapes = ([] if conv2_accumulate
                      else [pltpu.VMEM((K * K * Cmid, BHW), f32)])

    out = pl.pallas_call(
        kernel,
        out_shape=jax.ShapeDtypeStruct((G, 1, BHW), f32),
        grid_spec=pltpu.PrefetchScalarGridSpec(
            num_scalar_prefetch=0,
            grid=(G,),
            in_specs=[
                pl.BlockSpec((1, Cin, BHW), per_blk),        # x & u, lane-dense
                pl.BlockSpec((K * K, BHW), const2),          # boundary masks
                pl.BlockSpec((Cmid, K * K * Cin), const2),   # w1 packed
                w2_spec,                                     # w2 (layout by path)
                pl.BlockSpec((K * K, Cmid), const2),         # w3 rows per tap
                pl.BlockSpec((Cmid, 1), const2),             # b1
                pl.BlockSpec((Cmid, 1), const2),             # b2
                smem_spec,                                   # b3   (scalar, SMEM)
                smem_spec,                                   # alpha1
                smem_spec,                                   # alpha2
            ],
            out_specs=pl.BlockSpec((1, 1, BHW), per_blk),
            scratch_shapes=scratch_shapes,
        ),
        compiler_params=pltpu.CompilerParams(
            dimension_semantics=("parallel",)),
    )(xu, mask, w1m, w2m, w3m, b1, b2, b3s, a1s, a2s)

    return out.reshape(N, H, W, 1)


# ---------------- pure-JAX reference (correctness check) ----------------
def _conv_ref(x, w, b):
    return lax.conv_general_dilated(
        x, w, window_strides=(1, 1), padding="SAME",
        dimension_numbers=("NHWC", "HWIO", "NHWC")) + b


def reference_forward(params, x, u):
    d = jnp.concatenate([x, u], axis=-1)
    d = _conv_ref(d, params["w1"], params["b1"])
    d = jnp.where(d >= 0, d, params["a1"] * d)
    d = _conv_ref(d, params["w2"], params["b2"])
    d = jnp.where(d >= 0, d, params["a2"] * d)
    d = _conv_ref(d, params["w3"], params["b3"])
    return x + d


if __name__ == "__main__":
    N, H, W = 2, 16, 16
    n_filters, n_in_channels, kernel_size = 32, 2, 5

    key = jax.random.PRNGKey(0)
    ks = jax.random.split(key, 8)

    # module takes x, u each with a single channel (cat -> n_in_channels = 2)
    x = jax.random.normal(ks[0], (N, H, W, 1), jnp.float32)
    u = jax.random.normal(ks[1], (N, H, W, 1), jnp.float32)

    # deterministic synthetic parameters (HWIO weights, PReLU init = 0.25)
    params = dict(
        w1=0.05 * jax.random.normal(ks[2], (kernel_size, kernel_size, n_in_channels, n_filters), jnp.float32),
        b1=0.01 * jax.random.normal(ks[3], (n_filters,), jnp.float32),
        w2=0.05 * jax.random.normal(ks[4], (kernel_size, kernel_size, n_filters, n_filters), jnp.float32),
        b2=0.01 * jax.random.normal(ks[5], (n_filters,), jnp.float32),
        w3=0.05 * jax.random.normal(ks[6], (kernel_size, kernel_size, n_filters, 1), jnp.float32),
        b3=0.01 * jax.random.normal(ks[7], (1,), jnp.float32),
        a1=0.25,
        a2=0.25,
    )

    out = cnn_image_space_forward(params, x, u)
    out = jax.block_until_ready(out)
    assert out.shape == (N, H, W, 1) and out.dtype == jnp.float32

    ref = jax.block_until_ready(reference_forward(params, x, u))
    np.testing.assert_allclose(np.asarray(out), np.asarray(ref), rtol=1e-4, atol=1e-4)

    print("KERNEL_OK")
</pallas_src>

<mosaic_0001>
module attributes {stable_mosaic.version = 11 : i64} {
  func.func @_fused_cnn_kernel(%arg0: i32, %arg1: memref<1x2x512xf32, #tpu.memory_space<vmem>>, %arg2: memref<25x512xf32, #tpu.memory_space<vmem>>, %arg3: memref<32x50xf32, #tpu.memory_space<vmem>>, %arg4: memref<32x800xf32, #tpu.memory_space<vmem>>, %arg5: memref<25x32xf32, #tpu.memory_space<vmem>>, %arg6: memref<32x1xf32, #tpu.memory_space<vmem>>, %arg7: memref<32x1xf32, #tpu.memory_space<vmem>>, %arg8: memref<1xf32, #tpu.memory_space<smem>>, %arg9: memref<1xf32, #tpu.memory_space<smem>>, %arg10: memref<1xf32, #tpu.memory_space<smem>>, %arg11: memref<1x1x512xf32, #tpu.memory_space<vmem>>, %arg12: memref<800x512xf32, #tpu.memory_space<vmem>>) attributes {dimension_semantics = [#tpu.dimension_semantics<parallel>], iteration_bounds = array<i64: 1>, scalar_prefetch = 0 : i64, scratch_operands = 1 : i64, tpu.core_type = #tpu.core_type<tc>, window_params = [{transform_indices = @transform_0, window_bounds = array<i64: 1, 2, 512>}, {pipeline_mode = #tpu.pipeline_mode<synchronous>, transform_indices = @transform_1, window_bounds = array<i64: 25, 512>}, {pipeline_mode = #tpu.pipeline_mode<synchronous>, transform_indices = @transform_2, window_bounds = array<i64: 32, 50>}, {pipeline_mode = #tpu.pipeline_mode<synchronous>, transform_indices = @transform_3, window_bounds = array<i64: 32, 800>}, {pipeline_mode = #tpu.pipeline_mode<synchronous>, transform_indices = @transform_4, window_bounds = array<i64: 25, 32>}, {pipeline_mode = #tpu.pipeline_mode<synchronous>, transform_indices = @transform_5, window_bounds = array<i64: 32, 1>}, {pipeline_mode = #tpu.pipeline_mode<synchronous>, transform_indices = @transform_6, window_bounds = array<i64: 32, 1>}, {transform_indices = @transform_7, window_bounds = array<i64: 1>}, {transform_indices = @transform_8, window_bounds = array<i64: 1>}, {transform_indices = @transform_9, window_bounds = array<i64: 1>}, {transform_indices = @transform_10, window_bounds = array<i64: 1, 1, 512>}]} {
    %c0 = arith.constant 0 : index
    %c0_0 = arith.constant 0 : index
    %0 = vector.load %arg2[%c0, %c0_0] : memref<25x512xf32, #tpu.memory_space<vmem>>, vector<25x512xf32>
    %c0_1 = arith.constant 0 : index
    %c0_2 = arith.constant 0 : index
    %c0_3 = arith.constant 0 : index
    %1 = vector.load %arg1[%c0_1, %c0_2, %c0_3] : memref<1x2x512xf32, #tpu.memory_space<vmem>>, vector<1x2x512xf32>
    %2 = vector.shape_cast %1 : vector<1x2x512xf32> to vector<2x512xf32>
    %3 = vector.extract_strided_slice %2 {offsets = [0, 0], sizes = [1, 512], strides = [1, 1]} : vector<2x512xf32> to vector<1x512xf32>
    %c0_4 = arith.constant 0 : index
    %4 = memref.load %arg9[%c0_4] : memref<1xf32, #tpu.memory_space<smem>>
    %c0_5 = arith.constant 0 : index
    %5 = memref.load %arg10[%c0_5] : memref<1xf32, #tpu.memory_space<smem>>
    %c34_i32 = arith.constant 34 : i32
    %6 = tpu.dynamic_rotate %2 by %c34_i32 dim 1 : vector<2x512xf32>, i32 -> vector<2x512xf32>
    %7 = vector.extract_strided_slice %0 {offsets = [0, 0], sizes = [1, 512], strides = [1, 1]} : vector<25x512xf32> to vector<1x512xf32>
    %8 = vector.broadcast %7 : vector<1x512xf32> to vector<2x512xf32>
    %9 = arith.mulf %6, %8 : vector<2x512xf32>
    %c33_i32 = arith.constant 33 : i32
    %10 = tpu.dynamic_rotate %2 by %c33_i32 dim 1 : vector<2x512xf32>, i32 -> vector<2x512xf32>
    %11 = vector.extract_strided_slice %0 {offsets = [1, 0], sizes = [1, 512], strides = [1, 1]} : vector<25x512xf32> to vector<1x512xf32>
    %12 = vector.broadcast %11 : vector<1x512xf32> to vector<2x512xf32>
    %13 = arith.mulf %10, %12 : vector<2x512xf32>
    %c32_i32 = arith.constant 32 : i32
    %14 = tpu.dynamic_rotate %2 by %c32_i32 dim 1 : vector<2x512xf32>, i32 -> vector<2x512xf32>
    %15 = vector.extract_strided_slice %0 {offsets = [2, 0], sizes = [1, 512], strides = [1, 1]} : vector<25x512xf32> to vector<1x512xf32>
    %16 = vector.broadcast %15 : vector<1x512xf32> to vector<2x512xf32>
    %17 = arith.mulf %14, %16 : vector<2x512xf32>
    %c31_i32 = arith.constant 31 : i32
    %18 = tpu.dynamic_rotate %2 by %c31_i32 dim 1 : vector<2x512xf32>, i32 -> vector<2x512xf32>
    %19 = vector.extract_strided_slice %0 {offsets = [3, 0], sizes = [1, 512], strides = [1, 1]} : vector<25x512xf32> to vector<1x512xf32>
    %20 = vector.broadcast %19 : vector<1x512xf32> to vector<2x512xf32>
    %21 = arith.mulf %18, %20 : vector<2x512xf32>
    %c30_i32 = arith.constant 30 : i32
    %22 = tpu.dynamic_rotate %2 by %c30_i32 dim 1 : vector<2x512xf32>, i32 -> vector<2x512xf32>
    %23 = vector.extract_strided_slice %0 {offsets = [4, 0], sizes = [1, 512], strides = [1, 1]} : vector<25x512xf32> to vector<1x512xf32>
    %24 = vector.broadcast %23 : vector<1x512xf32> to vector<2x512xf32>
    %25 = arith.mulf %22, %24 : vector<2x512xf32>
    %c18_i32 = arith.constant 18 : i32
    %26 = tpu.dynamic_rotate %2 by %c18_i32 dim 1 : vector<2x512xf32>, i32 -> vector<2x512xf32>
    %27 = vector.extract_strided_slice %0 {offsets = [5, 0], sizes = [1, 512], strides = [1, 1]} : vector<25x512xf32> to vector<1x512xf32>
    %28 = vector.broadcast %27 : vector<1x512xf32> to vector<2x512xf32>
    %29 = arith.mulf %26, %28 : vector<2x512xf32>
    %c17_i32 = arith.constant 17 : i32
    %30 = tpu.dynamic_rotate %2 by %c17_i32 dim 1 : vector<2x512xf32>, i32 -> vector<2x512xf32>
    %31 = vector.extract_strided_slice %0 {offsets = [6, 0], sizes = [1, 512], strides = [1, 1]} : vector<25x512xf32> to vector<1x512xf32>
    %32 = vector.broadcast %31 : vector<1x512xf32> to vector<2x512xf32>
    %33 = arith.mulf %30, %32 : vector<2x512xf32>
    %c16_i32 = arith.constant 16 : i32
    %34 = tpu.dynamic_rotate %2 by %c16_i32 dim 1 : vector<2x512xf32>, i32 -> vector<2x512xf32>
    %35 = vector.extract_strided_slice %0 {offsets = [7, 0], sizes = [1, 512], strides = [1, 1]} : vector<25x512xf32> to vector<1x512xf32>
    %36 = vector.broadcast %35 : vector<1x512xf32> to vector<2x512xf32>
    %37 = arith.mulf %34, %36 : vector<2x512xf32>
    %c15_i32 = arith.constant 15 : i32
    %38 = tpu.dynamic_rotate %2 by %c15_i32 dim 1 : vector<2x512xf32>, i32 -> vector<2x512xf32>
    %39 = vector.extract_strided_slice %0 {offsets = [8, 0], sizes = [1, 512], strides = [1, 1]} : vector<25x512xf32> to vector<1x512xf32>
    %40 = vector.broadcast %39 : vector<1x512xf32> to vector<2x512xf32>
    %41 = arith.mulf %38, %40 : vector<2x512xf32>
    %c14_i32 = arith.constant 14 : i32
    %42 = tpu.dynamic_rotate %2 by %c14_i32 dim 1 : vector<2x512xf32>, i32 -> vector<2x512xf32>
    %43 = vector.extract_strided_slice %0 {offsets = [9, 0], sizes = [1, 512], strides = [1, 1]} : vector<25x512xf32> to vector<1x512xf32>
    %44 = vector.broadcast %43 : vector<1x512xf32> to vector<2x512xf32>
    %45 = arith.mulf %42, %44 : vector<2x512xf32>
    %c2_i32 = arith.constant 2 : i32
    %46 = tpu.dynamic_rotate %2 by %c2_i32 dim 1 : vector<2x512xf32>, i32 -> vector<2x512xf32>
    %47 = vector.extract_strided_slice %0 {offsets = [10, 0], sizes = [1, 512], strides = [1, 1]} : vector<25x512xf32> to vector<1x512xf32>
    %48 = vector.broadcast %47 : vector<1x512xf32> to vector<2x512xf32>
    %49 = arith.mulf %46, %48 : vector<2x512xf32>
    %c1_i32 = arith.constant 1 : i32
    %50 = tpu.dynamic_rotate %2 by %c1_i32 dim 1 : vector<2x512xf32>, i32 -> vector<2x512xf32>
    %51 = vector.extract_strided_slice %0 {offsets = [11, 0], sizes = [1, 512], strides = [1, 1]} : vector<25x512xf32> to vector<1x512xf32>
    %52 = vector.broadcast %51 : vector<1x512xf32> to vector<2x512xf32>
    %53 = arith.mulf %50, %52 : vector<2x512xf32>
    %54 = vector.extract_strided_slice %0 {offsets = [12, 0], sizes = [1, 512], strides = [1, 1]} : vector<25x512xf32> to vector<1x512xf32>
    %55 = vector.broadcast %54 : vector<1x512xf32> to vector<2x512xf32>
    %56 = arith.mulf %2, %55 : vector<2x512xf32>
    %c511_i32 = arith.constant 511 : i32
    %57 = tpu.dynamic_rotate %2 by %c511_i32 dim 1 : vector<2x512xf32>, i32 -> vector<2x512xf32>
    %58 = vector.extract_strided_slice %0 {offsets = [13, 0], sizes = [1, 512], strides = [1, 1]} : vector<25x512xf32> to vector<1x512xf32>
    %59 = vector.broadcast %58 : vector<1x512xf32> to vector<2x512xf32>
    %60 = arith.mulf %57, %59 : vector<2x512xf32>
    %c510_i32 = arith.constant 510 : i32
    %61 = tpu.dynamic_rotate %2 by %c510_i32 dim 1 : vector<2x512xf32>, i32 -> vector<2x512xf32>
    %62 = vector.extract_strided_slice %0 {offsets = [14, 0], sizes = [1, 512], strides = [1, 1]} : vector<25x512xf32> to vector<1x512xf32>
    %63 = vector.broadcast %62 : vector<1x512xf32> to vector<2x512xf32>
    %64 = arith.mulf %61, %63 : vector<2x512xf32>
    %c498_i32 = arith.constant 498 : i32
    %65 = tpu.dynamic_rotate %2 by %c498_i32 dim 1 : vector<2x512xf32>, i32 -> vector<2x512xf32>
    %66 = vector.extract_strided_slice %0 {offsets = [15, 0], sizes = [1, 512], strides = [1, 1]} : vector<25x512xf32> to vector<1x512xf32>
    %67 = vector.broadcast %66 : vector<1x512xf32> to vector<2x512xf32>
    %68 = arith.mulf %65, %67 : vector<2x512xf32>
    %c497_i32 = arith.constant 497 : i32
    %69 = tpu.dynamic_rotate %2 by %c497_i32 dim 1 : vector<2x512xf32>, i32 -> vector<2x512xf32>
    %70 = vector.extract_strided_slice %0 {offsets = [16, 0], sizes = [1, 512], strides = [1, 1]} : vector<25x512xf32> to vector<1x512xf32>
    %71 = vector.broadcast %70 : vector<1x512xf32> to vector<2x512xf32>
    %72 = arith.mulf %69, %71 : vector<2x512xf32>
    %c496_i32 = arith.constant 496 : i32
    %73 = tpu.dynamic_rotate %2 by %c496_i32 dim 1 : vector<2x512xf32>, i32 -> vector<2x512xf32>
    %74 = vector.extract_strided_slice %0 {offsets = [17, 0], sizes = [1, 512], strides = [1, 1]} : vector<25x512xf32> to vector<1x512xf32>
    %75 = vector.broadcast %74 : vector<1x512xf32> to vector<2x512xf32>
    %76 = arith.mulf %73, %75 : vector<2x512xf32>
    %c495_i32 = arith.constant 495 : i32
    %77 = tpu.dynamic_rotate %2 by %c495_i32 dim 1 : vector<2x512xf32>, i32 -> vector<2x512xf32>
    %78 = vector.extract_strided_slice %0 {offsets = [18, 0], sizes = [1, 512], strides = [1, 1]} : vector<25x512xf32> to vector<1x512xf32>
    %79 = vector.broadcast %78 : vector<1x512xf32> to vector<2x512xf32>
    %80 = arith.mulf %77, %79 : vector<2x512xf32>
    %c494_i32 = arith.constant 494 : i32
    %81 = tpu.dynamic_rotate %2 by %c494_i32 dim 1 : vector<2x512xf32>, i32 -> vector<2x512xf32>
    %82 = vector.extract_strided_slice %0 {offsets = [19, 0], sizes = [1, 512], strides = [1, 1]} : vector<25x512xf32> to vector<1x512xf32>
    %83 = vector.broadcast %82 : vector<1x512xf32> to vector<2x512xf32>
    %84 = arith.mulf %81, %83 : vector<2x512xf32>
    %c482_i32 = arith.constant 482 : i32
    %85 = tpu.dynamic_rotate %2 by %c482_i32 dim 1 : vector<2x512xf32>, i32 -> vector<2x512xf32>
    %86 = vector.extract_strided_slice %0 {offsets = [20, 0], sizes = [1, 512], strides = [1, 1]} : vector<25x512xf32> to vector<1x512xf32>
    %87 = vector.broadcast %86 : vector<1x512xf32> to vector<2x512xf32>
    %88 = arith.mulf %85, %87 : vector<2x512xf32>
    %c481_i32 = arith.constant 481 : i32
    %89 = tpu.dynamic_rotate %2 by %c481_i32 dim 1 : vector<2x512xf32>, i32 -> vector<2x512xf32>
    %90 = vector.extract_strided_slice %0 {offsets = [21, 0], sizes = [1, 512], strides = [1, 1]} : vector<25x512xf32> to vector<1x512xf32>
    %91 = vector.broadcast %90 : vector<1x512xf32> to vector<2x512xf32>
    %92 = arith.mulf %89, %91 : vector<2x512xf32>
    %c480_i32 = arith.constant 480 : i32
    %93 = tpu.dynamic_rotate %2 by %c480_i32 dim 1 : vector<2x512xf32>, i32 -> vector<2x512xf32>
    %94 = vector.extract_strided_slice %0 {offsets = [22, 0], sizes = [1, 512], strides = [1, 1]} : vector<25x512xf32> to vector<1x512xf32>
    %95 = vector.broadcast %94 : vector<1x512xf32> to vector<2x512xf32>
    %96 = arith.mulf %93, %95 : vector<2x512xf32>
    %c479_i32 = arith.constant 479 : i32
    %97 = tpu.dynamic_rotate %2 by %c479_i32 dim 1 : vector<2x512xf32>, i32 -> vector<2x512xf32>
    %98 = vector.extract_strided_slice %0 {offsets = [23, 0], sizes = [1, 512], strides = [1, 1]} : vector<25x512xf32> to vector<1x512xf32>
    %99 = vector.broadcast %98 : vector<1x512xf32> to vector<2x512xf32>
    %100 = arith.mulf %97, %99 : vector<2x512xf32>
    %c478_i32 = arith.constant 478 : i32
    %101 = tpu.dynamic_rotate %2 by %c478_i32 dim 1 : vector<2x512xf32>, i32 -> vector<2x512xf32>
    %102 = vector.extract_strided_slice %0 {offsets = [24, 0], sizes = [1, 512], strides = [1, 1]} : vector<25x512xf32> to vector<1x512xf32>
    %103 = vector.broadcast %102 : vector<1x512xf32> to vector<2x512xf32>
    %104 = arith.mulf %101, %103 : vector<2x512xf32>
    %105 = tpu.concatenate %9, %13, %17, %21, %25, %29, %33, %37, %41, %45, %49, %53, %56, %60, %64, %68 in 0 : vector<2x512xf32>, vector<2x512xf32>, vector<2x512xf32>, vector<2x512xf32>, vector<2x512xf32>, vector<2x512xf32>, vector<2x512xf32>, vector<2x512xf32>, vector<2x512xf32>, vector<2x512xf32>, vector<2x512xf32>, vector<2x512xf32>, vector<2x512xf32>, vector<2x512xf32>, vector<2x512xf32>, vector<2x512xf32> -> vector<32x512xf32>
    %106 = tpu.concatenate %72, %76, %80, %84, %88, %92, %96, %100, %104 in 0 : vector<2x512xf32>, vector<2x512xf32>, vector<2x512xf32>, vector<2x512xf32>, vector<2x512xf32>, vector<2x512xf32>, vector<2x512xf32>, vector<2x512xf32>, vector<2x512xf32> -> vector<18x512xf32>
    %107 = tpu.concatenate %105, %106 in 0 : vector<32x512xf32>, vector<18x512xf32> -> vector<50x512xf32>
    %c0_6 = arith.constant 0 : index
    %c0_7 = arith.constant 0 : index
    %108 = vector.load %arg3[%c0_6, %c0_7] : memref<32x50xf32, #tpu.memory_space<vmem>>, vector<32x50xf32>
    %cst = arith.constant dense<0.000000e+00> : vector<32x512xf32>
    %109 = tpu.matmul %108, %107, %cst {dimension_numbers = #tpu.dot_dimension_numbers<[1], [0], [0], [1], [0, 0, 1, 1], [], []>} : vector<32x50xf32>, vector<50x512xf32>, vector<32x512xf32> -> vector<32x512xf32>
    %c0_8 = arith.constant 0 : index
    %c0_9 = arith.constant 0 : index
    %110 = vector.load %arg6[%c0_8, %c0_9] : memref<32x1xf32, #tpu.memory_space<vmem>>, vector<32x1xf32>
    %111 = vector.broadcast %110 : vector<32x1xf32> to vector<32x512xf32>
    %112 = arith.addf %109, %111 : vector<32x512xf32>
    %cst_10 = arith.constant 0.000000e+00 : f32
    %113 = vector.broadcast %cst_10 : f32 to vector<32x512xf32>
    %114 = arith.cmpf oge, %112, %113 : vector<32x512xf32>
    %115 = vector.broadcast %4 : f32 to vector<32x512xf32>
    %116 = arith.mulf %115, %112 : vector<32x512xf32>
    %117 = arith.select %114, %112, %116 : vector<32x512xi1>, vector<32x512xf32>
    %c34_i32_11 = arith.constant 34 : i32
    %118 = tpu.dynamic_rotate %117 by %c34_i32_11 dim 1 : vector<32x512xf32>, i32 -> vector<32x512xf32>
    %119 = vector.extract_strided_slice %0 {offsets = [0, 0], sizes = [1, 512], strides = [1, 1]} : vector<25x512xf32> to vector<1x512xf32>
    %120 = vector.broadcast %119 : vector<1x512xf32> to vector<32x512xf32>
    %121 = arith.mulf %118, %120 : vector<32x512xf32>
    %c0_12 = arith.constant 0 : index
    %c0_13 = arith.constant 0 : index
    %122 = vector.load %arg12[%c0_12, %c0_13] : memref<800x512xf32, #tpu.memory_space<vmem>>, vector<32x512xf32>
    tpu.vector_store %arg12[%c0_12, %c0_13], %121 {strides = array<i32>} : memref<800x512xf32, #tpu.memory_space<vmem>>, vector<32x512xf32>,
    %c33_i32_14 = arith.constant 33 : i32
    %123 = tpu.dynamic_rotate %117 by %c33_i32_14 dim 1 : vector<32x512xf32>, i32 -> vector<32x512xf32>
    %124 = vector.extract_strided_slice %0 {offsets = [1, 0], sizes = [1, 512], strides = [1, 1]} : vector<25x512xf32> to vector<1x512xf32>
    %125 = vector.broadcast %124 : vector<1x512xf32> to vector<32x512xf32>
    %126 = arith.mulf %123, %125 : vector<32x512xf32>
    %c32 = arith.constant 32 : index
    %c0_15 = arith.constant 0 : index
    %127 = vector.load %arg12[%c32, %c0_15] : memref<800x512xf32, #tpu.memory_space<vmem>>, vector<32x512xf32>
    tpu.vector_store %arg12[%c32, %c0_15], %126 {strides = array<i32>} : memref<800x512xf32, #tpu.memory_space<vmem>>, vector<32x512xf32>,
    %c32_i32_16 = arith.constant 32 : i32
    %128 = tpu.dynamic_rotate %117 by %c32_i32_16 dim 1 : vector<32x512xf32>, i32 -> vector<32x512xf32>
    %129 = vector.extract_strided_slice %0 {offsets = [2, 0], sizes = [1, 512], strides = [1, 1]} : vector<25x512xf32> to vector<1x512xf32>
    %130 = vector.broadcast %129 : vector<1x512xf32> to vector<32x512xf32>
    %131 = arith.mulf %128, %130 : vector<32x512xf32>
    %c64 = arith.constant 64 : index
    %c0_17 = arith.constant 0 : index
    %132 = vector.load %arg12[%c64, %c0_17] : memref<800x512xf32, #tpu.memory_space<vmem>>, vector<32x512xf32>
    tpu.vector_store %arg12[%c64, %c0_17], %131 {strides = array<i32>} : memref<800x512xf32, #tpu.memory_space<vmem>>, vector<32x512xf32>,
    %c31_i32_18 = arith.constant 31 : i32
    %133 = tpu.dynamic_rotate %117 by %c31_i32_18 dim 1 : vector<32x512xf32>, i32 -> vector<32x512xf32>
    %134 = vector.extract_strided_slice %0 {offsets = [3, 0], sizes = [1, 512], strides = [1, 1]} : vector<25x512xf32> to vector<1x512xf32>
    %135 = vector.broadcast %134 : vector<1x512xf32> to vector<32x512xf32>
    %136 = arith.mulf %133, %135 : vector<32x512xf32>
    %c96 = arith.constant 96 : index
    %c0_19 = arith.constant 0 : index
    %137 = vector.load %arg12[%c96, %c0_19] : memref<800x512xf32, #tpu.memory_space<vmem>>, vector<32x512xf32>
    tpu.vector_store %arg12[%c96, %c0_19], %136 {strides = array<i32>} : memref<800x512xf32, #tpu.memory_space<vmem>>, vector<32x512xf32>,
    %c30_i32_20 = arith.constant 30 : i32
    %138 = tpu.dynamic_rotate %117 by %c30_i32_20 dim 1 : vector<32x512xf32>, i32 -> vector<32x512xf32>
    %139 = vector.extract_strided_slice %0 {offsets = [4, 0], sizes = [1, 512], strides = [1, 1]} : vector<25x512xf32> to vector<1x512xf32>
    %140 = vector.broadcast %139 : vector<1x512xf32> to vector<32x512xf32>
    %141 = arith.mulf %138, %140 : vector<32x512xf32>
    %c128 = arith.constant 128 : index
    %c0_21 = arith.constant 0 : index
    %142 = vector.load %arg12[%c128, %c0_21] : memref<800x512xf32, #tpu.memory_space<vmem>>, vector<32x512xf32>
    tpu.vector_store %arg12[%c128, %c0_21], %141 {strides = array<i32>} : memref<800x512xf32, #tpu.memory_space<vmem>>, vector<32x512xf32>,
    %c18_i32_22 = arith.constant 18 : i32
    %143 = tpu.dynamic_rotate %117 by %c18_i32_22 dim 1 : vector<32x512xf32>, i32 -> vector<32x512xf32>
    %144 = vector.extract_strided_slice %0 {offsets = [5, 0], sizes = [1, 512], strides = [1, 1]} : vector<25x512xf32> to vector<1x512xf32>
    %145 = vector.broadcast %144 : vector<1x512xf32> to vector<32x512xf32>
    %146 = arith.mulf %143, %145 : vector<32x512xf32>
    %c160 = arith.constant 160 : index
    %c0_23 = arith.constant 0 : index
    %147 = vector.load %arg12[%c160, %c0_23] : memref<800x512xf32, #tpu.memory_space<vmem>>, vector<32x512xf32>
    tpu.vector_store %arg12[%c160, %c0_23], %146 {strides = array<i32>} : memref<800x512xf32, #tpu.memory_space<vmem>>, vector<32x512xf32>,
    %c17_i32_24 = arith.constant 17 : i32
    %148 = tpu.dynamic_rotate %117 by %c17_i32_24 dim 1 : vector<32x512xf32>, i32 -> vector<32x512xf32>
    %149 = vector.extract_strided_slice %0 {offsets = [6, 0], sizes = [1, 512], strides = [1, 1]} : vector<25x512xf32> to vector<1x512xf32>
    %150 = vector.broadcast %149 : vector<1x512xf32> to vector<32x512xf32>
    %151 = arith.mulf %148, %150 : vector<32x512xf32>
    %c192 = arith.constant 192 : index
    %c0_25 = arith.constant 0 : index
    %152 = vector.load %arg12[%c192, %c0_25] : memref<800x512xf32, #tpu.memory_space<vmem>>, vector<32x512xf32>
    tpu.vector_store %arg12[%c192, %c0_25], %151 {strides = array<i32>} : memref<800x512xf32, #tpu.memory_space<vmem>>, vector<32x512xf32>,
    %c16_i32_26 = arith.constant 16 : i32
    %153 = tpu.dynamic_rotate %117 by %c16_i32_26 dim 1 : vector<32x512xf32>, i32 -> vector<32x512xf32>
    %154 = vector.extract_strided_slice %0 {offsets = [7, 0], sizes = [1, 512], strides = [1, 1]} : vector<25x512xf32> to vector<1x512xf32>
    %155 = vector.broadcast %154 : vector<1x512xf32> to vector<32x512xf32>
    %156 = arith.mulf %153, %155 : vector<32x512xf32>
    %c224 = arith.constant 224 : index
    %c0_27 = arith.constant 0 : index
    %157 = vector.load %arg12[%c224, %c0_27] : memref<800x512xf32, #tpu.memory_space<vmem>>, vector<32x512xf32>
    tpu.vector_store %arg12[%c224, %c0_27], %156 {strides = array<i32>} : memref<800x512xf32, #tpu.memory_space<vmem>>, vector<32x512xf32>,
    %c15_i32_28 = arith.constant 15 : i32
    %158 = tpu.dynamic_rotate %117 by %c15_i32_28 dim 1 : vector<32x512xf32>, i32 -> vector<32x512xf32>
    %159 = vector.extract_strided_slice %0 {offsets = [8, 0], sizes = [1, 512], strides = [1, 1]} : vector<25x512xf32> to vector<1x512xf32>
    %160 = vector.broadcast %159 : vector<1x512xf32> to vector<32x512xf32>
    %161 = arith.mulf %158, %160 : vector<32x512xf32>
    %c256 = arith.constant 256 : index
    %c0_29 = arith.constant 0 : index
    %162 = vector.load %arg12[%c256, %c0_29] : memref<800x512xf32, #tpu.memory_space<vmem>>, vector<32x512xf32>
    tpu.vector_store %arg12[%c256, %c0_29], %161 {strides = array<i32>} : memref<800x512xf32, #tpu.memory_space<vmem>>, vector<32x512xf32>,
    %c14_i32_30 = arith.constant 14 : i32
    %163 = tpu.dynamic_rotate %117 by %c14_i32_30 dim 1 : vector<32x512xf32>, i32 -> vector<32x512xf32>
    %164 = vector.extract_strided_slice %0 {offsets = [9, 0], sizes = [1, 512], strides = [1, 1]} : vector<25x512xf32> to vector<1x512xf32>
    %165 = vector.broadcast %164 : vector<1x512xf32> to vector<32x512xf32>
    %166 = arith.mulf %163, %165 : vector<32x512xf32>
    %c288 = arith.constant 288 : index
    %c0_31 = arith.constant 0 : index
    %167 = vector.load %arg12[%c288, %c0_31] : memref<800x512xf32, #tpu.memory_space<vmem>>, vector<32x512xf32>
    tpu.vector_store %arg12[%c288, %c0_31], %166 {strides = array<i32>} : memref<800x512xf32, #tpu.memory_space<vmem>>, vector<32x512xf32>,
    %c2_i32_32 = arith.constant 2 : i32
    %168 = tpu.dynamic_rotate %117 by %c2_i32_32 dim 1 : vector<32x512xf32>, i32 -> vector<32x512xf32>
    %169 = vector.extract_strided_slice %0 {offsets = [10, 0], sizes = [1, 512], strides = [1, 1]} : vector<25x512xf32> to vector<1x512xf32>
    %170 = vector.broadcast %169 : vector<1x512xf32> to vector<32x512xf32>
    %171 = arith.mulf %168, %170 : vector<32x512xf32>
    %c320 = arith.constant 320 : index
    %c0_33 = arith.constant 0 : index
    %172 = vector.load %arg12[%c320, %c0_33] : memref<800x512xf32, #tpu.memory_space<vmem>>, vector<32x512xf32>
    tpu.vector_store %arg12[%c320, %c0_33], %171 {strides = array<i32>} : memref<800x512xf32, #tpu.memory_space<vmem>>, vector<32x512xf32>,
    %c1_i32_34 = arith.constant 1 : i32
    %173 = tpu.dynamic_rotate %117 by %c1_i32_34 dim 1 : vector<32x512xf32>, i32 -> vector<32x512xf32>
    %174 = vector.extract_strided_slice %0 {offsets = [11, 0], sizes = [1, 512], strides = [1, 1]} : vector<25x512xf32> to vector<1x512xf32>
    %175 = vector.broadcast %174 : vector<1x512xf32> to vector<32x512xf32>
    %176 = arith.mulf %173, %175 : vector<32x512xf32>
    %c352 = arith.constant 352 : index
    %c0_35 = arith.constant 0 : index
    %177 = vector.load %arg12[%c352, %c0_35] : memref<800x512xf32, #tpu.memory_space<vmem>>, vector<32x512xf32>
    tpu.vector_store %arg12[%c352, %c0_35], %176 {strides = array<i32>} : memref<800x512xf32, #tpu.memory_space<vmem>>, vector<32x512xf32>,
    %178 = vector.extract_strided_slice %0 {offsets = [12, 0], sizes = [1, 512], strides = [1, 1]} : vector<25x512xf32> to vector<1x512xf32>
    %179 = vector.broadcast %178 : vector<1x512xf32> to vector<32x512xf32>
    %180 = arith.mulf %117, %179 : vector<32x512xf32>
    %c384 = arith.constant 384 : index
    %c0_36 = arith.constant 0 : index
    %181 = vector.load %arg12[%c384, %c0_36] : memref<800x512xf32, #tpu.memory_space<vmem>>, vector<32x512xf32>
    tpu.vector_store %arg12[%c384, %c0_36], %180 {strides = array<i32>} : memref<800x512xf32, #tpu.memory_space<vmem>>, vector<32x512xf32>,
    %c511_i32_37 = arith.constant 511 : i32
    %182 = tpu.dynamic_rotate %117 by %c511_i32_37 dim 1 : vector<32x512xf32>, i32 -> vector<32x512xf32>
    %183 = vector.extract_strided_slice %0 {offsets = [13, 0], sizes = [1, 512], strides = [1, 1]} : vector<25x512xf32> to vector<1x512xf32>
    %184 = vector.broadcast %183 : vector<1x512xf32> to vector<32x512xf32>
    %185 = arith.mulf %182, %184 : vector<32x512xf32>
    %c416 = arith.constant 416 : index
    %c0_38 = arith.constant 0 : index
    %186 = vector.load %arg12[%c416, %c0_38] : memref<800x512xf32, #tpu.memory_space<vmem>>, vector<32x512xf32>
    tpu.vector_store %arg12[%c416, %c0_38], %185 {strides = array<i32>} : memref<800x512xf32, #tpu.memory_space<vmem>>, vector<32x512xf32>,
    %c510_i32_39 = arith.constant 510 : i32
    %187 = tpu.dynamic_rotate %117 by %c510_i32_39 dim 1 : vector<32x512xf32>, i32 -> vector<32x512xf32>
    %188 = vector.extract_strided_slice %0 {offsets = [14, 0], sizes = [1, 512], strides = [1, 1]} : vector<25x512xf32> to vector<1x512xf32>
    %189 = vector.broadcast %188 : vector<1x512xf32> to vector<32x512xf32>
    %190 = arith.mulf %187, %189 : vector<32x512xf32>
    %c448 = arith.constant 448 : index
    %c0_40 = arith.constant 0 : index
    %191 = vector.load %arg12[%c448, %c0_40] : memref<800x512xf32, #tpu.memory_space<vmem>>, vector<32x512xf32>
    tpu.vector_store %arg12[%c448, %c0_40], %190 {strides = array<i32>} : memref<800x512xf32, #tpu.memory_space<vmem>>, vector<32x512xf32>,
    %c498_i32_41 = arith.constant 498 : i32
    %192 = tpu.dynamic_rotate %117 by %c498_i32_41 dim 1 : vector<32x512xf32>, i32 -> vector<32x512xf32>
    %193 = vector.extract_strided_slice %0 {offsets = [15, 0], sizes = [1, 512], strides = [1, 1]} : vector<25x512xf32> to vector<1x512xf32>
    %194 = vector.broadcast %193 : vector<1x512xf32> to vector<32x512xf32>
    %195 = arith.mulf %192, %194 : vector<32x512xf32>
    %c480 = arith.constant 480 : index
    %c0_42 = arith.constant 0 : index
    %196 = vector.load %arg12[%c480, %c0_42] : memref<800x512xf32, #tpu.memory_space<vmem>>, vector<32x512xf32>
    tpu.vector_store %arg12[%c480, %c0_42], %195 {strides = array<i32>} : memref<800x512xf32, #tpu.memory_space<vmem>>, vector<32x512xf32>,
    %c497_i32_43 = arith.constant 497 : i32
    %197 = tpu.dynamic_rotate %117 by %c497_i32_43 dim 1 : vector<32x512xf32>, i32 -> vector<32x512xf32>
    %198 = vector.extract_strided_slice %0 {offsets = [16, 0], sizes = [1, 512], strides = [1, 1]} : vector<25x512xf32> to vector<1x512xf32>
    %199 = vector.broadcast %198 : vector<1x512xf32> to vector<32x512xf32>
    %200 = arith.mulf %197, %199 : vector<32x512xf32>
    %c512 = arith.constant 512 : index
    %c0_44 = arith.constant 0 : index
    %201 = vector.load %arg12[%c512, %c0_44] : memref<800x512xf32, #tpu.memory_space<vmem>>, vector<32x512xf32>
    tpu.vector_store %arg12[%c512, %c0_44], %200 {strides = array<i32>} : memref<800x512xf32, #tpu.memory_space<vmem>>, vector<32x512xf32>,
    %c496_i32_45 = arith.constant 496 : i32
    %202 = tpu.dynamic_rotate %117 by %c496_i32_45 dim 1 : vector<32x512xf32>, i32 -> vector<32x512xf32>
    %203 = vector.extract_strided_slice %0 {offsets = [17, 0], sizes = [1, 512], strides = [1, 1]} : vector<25x512xf32> to vector<1x512xf32>
    %204 = vector.broadcast %203 : vector<1x512xf32> to vector<32x512xf32>
    %205 = arith.mulf %202, %204 : vector<32x512xf32>
    %c544 = arith.constant 544 : index
    %c0_46 = arith.constant 0 : index
    %206 = vector.load %arg12[%c544, %c0_46] : memref<800x512xf32, #tpu.memory_space<vmem>>, vector<32x512xf32>
    tpu.vector_store %arg12[%c544, %c0_46], %205 {strides = array<i32>} : memref<800x512xf32, #tpu.memory_space<vmem>>, vector<32x512xf32>,
    %c495_i32_47 = arith.constant 495 : i32
    %207 = tpu.dynamic_rotate %117 by %c495_i32_47 dim 1 : vector<32x512xf32>, i32 -> vector<32x512xf32>
    %208 = vector.extract_strided_slice %0 {offsets = [18, 0], sizes = [1, 512], strides = [1, 1]} : vector<25x512xf32> to vector<1x512xf32>
    %209 = vector.broadcast %208 : vector<1x512xf32> to vector<32x512xf32>
    %210 = arith.mulf %207, %209 : vector<32x512xf32>
    %c576 = arith.constant 576 : index
    %c0_48 = arith.constant 0 : index
    %211 = vector.load %arg12[%c576, %c0_48] : memref<800x512xf32, #tpu.memory_space<vmem>>, vector<32x512xf32>
    tpu.vector_store %arg12[%c576, %c0_48], %210 {strides = array<i32>} : memref<800x512xf32, #tpu.memory_space<vmem>>, vector<32x512xf32>,
    %c494_i32_49 = arith.constant 494 : i32
    %212 = tpu.dynamic_rotate %117 by %c494_i32_49 dim 1 : vector<32x512xf32>, i32 -> vector<32x512xf32>
    %213 = vector.extract_strided_slice %0 {offsets = [19, 0], sizes = [1, 512], strides = [1, 1]} : vector<25x512xf32> to vector<1x512xf32>
    %214 = vector.broadcast %213 : vector<1x512xf32> to vector<32x512xf32>
    %215 = arith.mulf %212, %214 : vector<32x512xf32>
    %c608 = arith.constant 608 : index
    %c0_50 = arith.constant 0 : index
    %216 = vector.load %arg12[%c608, %c0_50] : memref<800x512xf32, #tpu.memory_space<vmem>>, vector<32x512xf32>
    tpu.vector_store %arg12[%c608, %c0_50], %215 {strides = array<i32>} : memref<800x512xf32, #tpu.memory_space<vmem>>, vector<32x512xf32>,
    %c482_i32_51 = arith.constant 482 : i32
    %217 = tpu.dynamic_rotate %117 by %c482_i32_51 dim 1 : vector<32x512xf32>, i32 -> vector<32x512xf32>
    %218 = vector.extract_strided_slice %0 {offsets = [20, 0], sizes = [1, 512], strides = [1, 1]} : vector<25x512xf32> to vector<1x512xf32>
    %219 = vector.broadcast %218 : vector<1x512xf32> to vector<32x512xf32>
    %220 = arith.mulf %217, %219 : vector<32x512xf32>
    %c640 = arith.constant 640 : index
    %c0_52 = arith.constant 0 : index
    %221 = vector.load %arg12[%c640, %c0_52] : memref<800x512xf32, #tpu.memory_space<vmem>>, vector<32x512xf32>
    tpu.vector_store %arg12[%c640, %c0_52], %220 {strides = array<i32>} : memref<800x512xf32, #tpu.memory_space<vmem>>, vector<32x512xf32>,
    %c481_i32_53 = arith.constant 481 : i32
    %222 = tpu.dynamic_rotate %117 by %c481_i32_53 dim 1 : vector<32x512xf32>, i32 -> vector<32x512xf32>
    %223 = vector.extract_strided_slice %0 {offsets = [21, 0], sizes = [1, 512], strides = [1, 1]} : vector<25x512xf32> to vector<1x512xf32>
    %224 = vector.broadcast %223 : vector<1x512xf32> to vector<32x512xf32>
    %225 = arith.mulf %222, %224 : vector<32x512xf32>
    %c672 = arith.constant 672 : index
    %c0_54 = arith.constant 0 : index
    %226 = vector.load %arg12[%c672, %c0_54] : memref<800x512xf32, #tpu.memory_space<vmem>>, vector<32x512xf32>
    tpu.vector_store %arg12[%c672, %c0_54], %225 {strides = array<i32>} : memref<800x512xf32, #tpu.memory_space<vmem>>, vector<32x512xf32>,
    %c480_i32_55 = arith.constant 480 : i32
    %227 = tpu.dynamic_rotate %117 by %c480_i32_55 dim 1 : vector<32x512xf32>, i32 -> vector<32x512xf32>
    %228 = vector.extract_strided_slice %0 {offsets = [22, 0], sizes = [1, 512], strides = [1, 1]} : vector<25x512xf32> to vector<1x512xf32>
    %229 = vector.broadcast %228 : vector<1x512xf32> to vector<32x512xf32>
    %230 = arith.mulf %227, %229 : vector<32x512xf32>
    %c704 = arith.constant 704 : index
    %c0_56 = arith.constant 0 : index
    %231 = vector.load %arg12[%c704, %c0_56] : memref<800x512xf32, #tpu.memory_space<vmem>>, vector<32x512xf32>
    tpu.vector_store %arg12[%c704, %c0_56], %230 {strides = array<i32>} : memref<800x512xf32, #tpu.memory_space<vmem>>, vector<32x512xf32>,
    %c479_i32_57 = arith.constant 479 : i32
    %232 = tpu.dynamic_rotate %117 by %c479_i32_57 dim 1 : vector<32x512xf32>, i32 -> vector<32x512xf32>
    %233 = vector.extract_strided_slice %0 {offsets = [23, 0], sizes = [1, 512], strides = [1, 1]} : vector<25x512xf32> to vector<1x512xf32>
    %234 = vector.broadcast %233 : vector<1x512xf32> to vector<32x512xf32>
    %235 = arith.mulf %232, %234 : vector<32x512xf32>
    %c736 = arith.constant 736 : index
    %c0_58 = arith.constant 0 : index
    %236 = vector.load %arg12[%c736, %c0_58] : memref<800x512xf32, #tpu.memory_space<vmem>>, vector<32x512xf32>
    tpu.vector_store %arg12[%c736, %c0_58], %235 {strides = array<i32>} : memref<800x512xf32, #tpu.memory_space<vmem>>, vector<32x512xf32>,
    %c478_i32_59 = arith.constant 478 : i32
    %237 = tpu.dynamic_rotate %117 by %c478_i32_59 dim 1 : vector<32x512xf32>, i32 -> vector<32x512xf32>
    %238 = vector.extract_strided_slice %0 {offsets = [24, 0], sizes = [1, 512], strides = [1, 1]} : vector<25x512xf32> to vector<1x512xf32>
    %239 = vector.broadcast %238 : vector<1x512xf32> to vector<32x512xf32>
    %240 = arith.mulf %237, %239 : vector<32x512xf32>
    %c768 = arith.constant 768 : index
    %c0_60 = arith.constant 0 : index
    %241 = vector.load %arg12[%c768, %c0_60] : memref<800x512xf32, #tpu.memory_space<vmem>>, vector<32x512xf32>
    tpu.vector_store %arg12[%c768, %c0_60], %240 {strides = array<i32>} : memref<800x512xf32, #tpu.memory_space<vmem>>, vector<32x512xf32>,
    %c0_61 = arith.constant 0 : index
    %c0_62 = arith.constant 0 : index
    %242 = vector.load %arg4[%c0_61, %c0_62] : memref<32x800xf32, #tpu.memory_space<vmem>>, vector<32x800xf32>
    %c0_63 = arith.constant 0 : index
    %c0_64 = arith.constant 0 : index
    %243 = vector.load %arg12[%c0_63, %c0_64] : memref<800x512xf32, #tpu.memory_space<vmem>>, vector<800x512xf32>
    %cst_65 = arith.constant dense<0.000000e+00> : vector<32x512xf32>
    %244 = tpu.matmul %242, %243, %cst_65 {dimension_numbers = #tpu.dot_dimension_numbers<[1], [0], [0], [1], [0, 0, 1, 1], [], []>} : vector<32x800xf32>, vector<800x512xf32>, vector<32x512xf32> -> vector<32x512xf32>
    %c0_66 = arith.constant 0 : index
    %c0_67 = arith.constant 0 : index
    %245 = vector.load %arg7[%c0_66, %c0_67] : memref<32x1xf32, #tpu.memory_space<vmem>>, vector<32x1xf32>
    %246 = vector.broadcast %245 : vector<32x1xf32> to vector<32x512xf32>
    %247 = arith.addf %244, %246 : vector<32x512xf32>
    %cst_68 = arith.constant 0.000000e+00 : f32
    %248 = vector.broadcast %cst_68 : f32 to vector<32x512xf32>
    %249 = arith.cmpf oge, %247, %248 : vector<32x512xf32>
    %250 = vector.broadcast %5 : f32 to vector<32x512xf32>
    %251 = arith.mulf %250, %247 : vector<32x512xf32>
    %252 = arith.select %249, %247, %251 : vector<32x512xi1>, vector<32x512xf32>
    %c0_69 = arith.constant 0 : index
    %c0_70 = arith.constant 0 : index
    %253 = vector.load %arg5[%c0_69, %c0_70] : memref<25x32xf32, #tpu.memory_space<vmem>>, vector<25x32xf32>
    %254 = vector.extract_strided_slice %253 {offsets = [0, 0], sizes = [1, 32], strides = [1, 1]} : vector<25x32xf32> to vector<1x32xf32>
    %c34_i32_71 = arith.constant 34 : i32
    %255 = tpu.dynamic_rotate %252 by %c34_i32_71 dim 1 : vector<32x512xf32>, i32 -> vector<32x512xf32>
    %256 = vector.extract_strided_slice %0 {offsets = [0, 0], sizes = [1, 512], strides = [1, 1]} : vector<25x512xf32> to vector<1x512xf32>
    %257 = vector.broadcast %256 : vector<1x512xf32> to vector<32x512xf32>
    %258 = arith.mulf %255, %257 : vector<32x512xf32>
    %cst_72 = arith.constant dense<0.000000e+00> : vector<1x512xf32>
    %259 = tpu.matmul %254, %258, %cst_72 {dimension_numbers = #tpu.dot_dimension_numbers<[1], [0], [0], [1], [0, 0, 1, 1], [], []>} : vector<1x32xf32>, vector<32x512xf32>, vector<1x512xf32> -> vector<1x512xf32>
    %260 = vector.extract_strided_slice %253 {offsets = [1, 0], sizes = [1, 32], strides = [1, 1]} : vector<25x32xf32> to vector<1x32xf32>
    %c33_i32_73 = arith.constant 33 : i32
    %261 = tpu.dynamic_rotate %252 by %c33_i32_73 dim 1 : vector<32x512xf32>, i32 -> vector<32x512xf32>
    %262 = vector.extract_strided_slice %0 {offsets = [1, 0], sizes = [1, 512], strides = [1, 1]} : vector<25x512xf32> to vector<1x512xf32>
    %263 = vector.broadcast %262 : vector<1x512xf32> to vector<32x512xf32>
    %264 = arith.mulf %261, %263 : vector<32x512xf32>
    %cst_74 = arith.constant dense<0.000000e+00> : vector<1x512xf32>
    %265 = tpu.matmul %260, %264, %cst_74 {dimension_numbers = #tpu.dot_dimension_numbers<[1], [0], [0], [1], [0, 0, 1, 1], [], []>} : vector<1x32xf32>, vector<32x512xf32>, vector<1x512xf32> -> vector<1x512xf32>
    %266 = arith.addf %259, %265 : vector<1x512xf32>
    %267 = vector.extract_strided_slice %253 {offsets = [2, 0], sizes = [1, 32], strides = [1, 1]} : vector<25x32xf32> to vector<1x32xf32>
    %c32_i32_75 = arith.constant 32 : i32
    %268 = tpu.dynamic_rotate %252 by %c32_i32_75 dim 1 : vector<32x512xf32>, i32 -> vector<32x512xf32>
    %269 = vector.extract_strided_slice %0 {offsets = [2, 0], sizes = [1, 512], strides = [1, 1]} : vector<25x512xf32> to vector<1x512xf32>
    %270 = vector.broadcast %269 : vector<1x512xf32> to vector<32x512xf32>
    %271 = arith.mulf %268, %270 : vector<32x512xf32>
    %cst_76 = arith.constant dense<0.000000e+00> : vector<1x512xf32>
    %272 = tpu.matmul %267, %271, %cst_76 {dimension_numbers = #tpu.dot_dimension_numbers<[1], [0], [0], [1], [0, 0, 1, 1], [], []>} : vector<1x32xf32>, vector<32x512xf32>, vector<1x512xf32> -> vector<1x512xf32>
    %273 = arith.addf %266, %272 : vector<1x512xf32>
    %274 = vector.extract_strided_slice %253 {offsets = [3, 0], sizes = [1, 32], strides = [1, 1]} : vector<25x32xf32> to vector<1x32xf32>
    %c31_i32_77 = arith.constant 31 : i32
    %275 = tpu.dynamic_rotate %252 by %c31_i32_77 dim 1 : vector<32x512xf32>, i32 -> vector<32x512xf32>
    %276 = vector.extract_strided_slice %0 {offsets = [3, 0], sizes = [1, 512], strides = [1, 1]} : vector<25x512xf32> to vector<1x512xf32>
    %277 = vector.broadcast %276 : vector<1x512xf32> to vector<32x512xf32>
    %278 = arith.mulf %275, %277 : vector<32x512xf32>
    %cst_78 = arith.constant dense<0.000000e+00> : vector<1x512xf32>
    %279 = tpu.matmul %274, %278, %cst_78 {dimension_numbers = #tpu.dot_dimension_numbers<[1], [0], [0], [1], [0, 0, 1, 1], [], []>} : vector<1x32xf32>, vector<32x512xf32>, vector<1x512xf32> -> vector<1x512xf32>
    %280 = arith.addf %273, %279 : vector<1x512xf32>
    %281 = vector.extract_strided_slice %253 {offsets = [4, 0], sizes = [1, 32], strides = [1, 1]} : vector<25x32xf32> to vector<1x32xf32>
    %c30_i32_79 = arith.constant 30 : i32
    %282 = tpu.dynamic_rotate %252 by %c30_i32_79 dim 1 : vector<32x512xf32>, i32 -> vector<32x512xf32>
    %283 = vector.extract_strided_slice %0 {offsets = [4, 0], sizes = [1, 512], strides = [1, 1]} : vector<25x512xf32> to vector<1x512xf32>
    %284 = vector.broadcast %283 : vector<1x512xf32> to vector<32x512xf32>
    %285 = arith.mulf %282, %284 : vector<32x512xf32>
    %cst_80 = arith.constant dense<0.000000e+00> : vector<1x512xf32>
    %286 = tpu.matmul %281, %285, %cst_80 {dimension_numbers = #tpu.dot_dimension_numbers<[1], [0], [0], [1], [0, 0, 1, 1], [], []>} : vector<1x32xf32>, vector<32x512xf32>, vector<1x512xf32> -> vector<1x512xf32>
    %287 = arith.addf %280, %286 : vector<1x512xf32>
    %288 = vector.extract_strided_slice %253 {offsets = [5, 0], sizes = [1, 32], strides = [1, 1]} : vector<25x32xf32> to vector<1x32xf32>
    %c18_i32_81 = arith.constant 18 : i32
    %289 = tpu.dynamic_rotate %252 by %c18_i32_81 dim 1 : vector<32x512xf32>, i32 -> vector<32x512xf32>
    %290 = vector.extract_strided_slice %0 {offsets = [5, 0], sizes = [1, 512], strides = [1, 1]} : vector<25x512xf32> to vector<1x512xf32>
    %291 = vector.broadcast %290 : vector<1x512xf32> to vector<32x512xf32>
    %292 = arith.mulf %289, %291 : vector<32x512xf32>
    %cst_82 = arith.constant dense<0.000000e+00> : vector<1x512xf32>
    %293 = tpu.matmul %288, %292, %cst_82 {dimension_numbers = #tpu.dot_dimension_numbers<[1], [0], [0], [1], [0, 0, 1, 1], [], []>} : vector<1x32xf32>, vector<32x512xf32>, vector<1x512xf32> -> vector<1x512xf32>
    %294 = arith.addf %287, %293 : vector<1x512xf32>
    %295 = vector.extract_strided_slice %253 {offsets = [6, 0], sizes = [1, 32], strides = [1, 1]} : vector<25x32xf32> to vector<1x32xf32>
    %c17_i32_83 = arith.constant 17 : i32
    %296 = tpu.dynamic_rotate %252 by %c17_i32_83 dim 1 : vector<32x512xf32>, i32 -> vector<32x512xf32>
    %297 = vector.extract_strided_slice %0 {offsets = [6, 0], sizes = [1, 512], strides = [1, 1]} : vector<25x512xf32> to vector<1x512xf32>
    %298 = vector.broadcast %297 : vector<1x512xf32> to vector<32x512xf32>
    %299 = arith.mulf %296, %298 : vector<32x512xf32>
    %cst_84 = arith.constant dense<0.000000e+00> : vector<1x512xf32>
    %300 = tpu.matmul %295, %299, %cst_84 {dimension_numbers = #tpu.dot_dimension_numbers<[1], [0], [0], [1], [0, 0, 1, 1], [], []>} : vector<1x32xf32>, vector<32x512xf32>, vector<1x512xf32> -> vector<1x512xf32>
    %301 = arith.addf %294, %300 : vector<1x512xf32>
    %302 = vector.extract_strided_slice %253 {offsets = [7, 0], sizes = [1, 32], strides = [1, 1]} : vector<25x32xf32> to vector<1x32xf32>
    %c16_i32_85 = arith.constant 16 : i32
    %303 = tpu.dynamic_rotate %252 by %c16_i32_85 dim 1 : vector<32x512xf32>, i32 -> vector<32x512xf32>
    %304 = vector.extract_strided_slice %0 {offsets = [7, 0], sizes = [1, 512], strides = [1, 1]} : vector<25x512xf32> to vector<1x512xf32>
    %305 = vector.broadcast %304 : vector<1x512xf32> to vector<32x512xf32>
    %306 = arith.mulf %303, %305 : vector<32x512xf32>
    %cst_86 = arith.constant dense<0.000000e+00> : vector<1x512xf32>
    %307 = tpu.matmul %302, %306, %cst_86 {dimension_numbers = #tpu.dot_dimension_numbers<[1], [0], [0], [1], [0, 0, 1, 1], [], []>} : vector<1x32xf32>, vector<32x512xf32>, vector<1x512xf32> -> vector<1x512xf32>
    %308 = arith.addf %301, %307 : vector<1x512xf32>
    %309 = vector.extract_strided_slice %253 {offsets = [8, 0], sizes = [1, 32], strides = [1, 1]} : vector<25x32xf32> to vector<1x32xf32>
    %c15_i32_87 = arith.constant 15 : i32
    %310 = tpu.dynamic_rotate %252 by %c15_i32_87 dim 1 : vector<32x512xf32>, i32 -> vector<32x512xf32>
    %311 = vector.extract_strided_slice %0 {offsets = [8, 0], sizes = [1, 512], strides = [1, 1]} : vector<25x512xf32> to vector<1x512xf32>
    %312 = vector.broadcast %311 : vector<1x512xf32> to vector<32x512xf32>
    %313 = arith.mulf %310, %312 : vector<32x512xf32>
    %cst_88 = arith.constant dense<0.000000e+00> : vector<1x512xf32>
    %314 = tpu.matmul %309, %313, %cst_88 {dimension_numbers = #tpu.dot_dimension_numbers<[1], [0], [0], [1], [0, 0, 1, 1], [], []>} : vector<1x32xf32>, vector<32x512xf32>, vector<1x512xf32> -> vector<1x512xf32>
    %315 = arith.addf %308, %314 : vector<1x512xf32>
    %316 = vector.extract_strided_slice %253 {offsets = [9, 0], sizes = [1, 32], strides = [1, 1]} : vector<25x32xf32> to vector<1x32xf32>
    %c14_i32_89 = arith.constant 14 : i32
    %317 = tpu.dynamic_rotate %252 by %c14_i32_89 dim 1 : vector<32x512xf32>, i32 -> vector<32x512xf32>
    %318 = vector.extract_strided_slice %0 {offsets = [9, 0], sizes = [1, 512], strides = [1, 1]} : vector<25x512xf32> to vector<1x512xf32>
    %319 = vector.broadcast %318 : vector<1x512xf32> to vector<32x512xf32>
    %320 = arith.mulf %317, %319 : vector<32x512xf32>
    %cst_90 = arith.constant dense<0.000000e+00> : vector<1x512xf32>
    %321 = tpu.matmul %316, %320, %cst_90 {dimension_numbers = #tpu.dot_dimension_numbers<[1], [0], [0], [1], [0, 0, 1, 1], [], []>} : vector<1x32xf32>, vector<32x512xf32>, vector<1x512xf32> -> vector<1x512xf32>
    %322 = arith.addf %315, %321 : vector<1x512xf32>
    %323 = vector.extract_strided_slice %253 {offsets = [10, 0], sizes = [1, 32], strides = [1, 1]} : vector<25x32xf32> to vector<1x32xf32>
    %c2_i32_91 = arith.constant 2 : i32
    %324 = tpu.dynamic_rotate %252 by %c2_i32_91 dim 1 : vector<32x512xf32>, i32 -> vector<32x512xf32>
    %325 = vector.extract_strided_slice %0 {offsets = [10, 0], sizes = [1, 512], strides = [1, 1]} : vector<25x512xf32> to vector<1x512xf32>
    %326 = vector.broadcast %325 : vector<1x512xf32> to vector<32x512xf32>
    %327 = arith.mulf %324, %326 : vector<32x512xf32>
    %cst_92 = arith.constant dense<0.000000e+00> : vector<1x512xf32>
    %328 = tpu.matmul %323, %327, %cst_92 {dimension_numbers = #tpu.dot_dimension_numbers<[1], [0], [0], [1], [0, 0, 1, 1], [], []>} : vector<1x32xf32>, vector<32x512xf32>, vector<1x512xf32> -> vector<1x512xf32>
    %329 = arith.addf %322, %328 : vector<1x512xf32>
    %330 = vector.extract_strided_slice %253 {offsets = [11, 0], sizes = [1, 32], strides = [1, 1]} : vector<25x32xf32> to vector<1x32xf32>
    %c1_i32_93 = arith.constant 1 : i32
    %331 = tpu.dynamic_rotate %252 by %c1_i32_93 dim 1 : vector<32x512xf32>, i32 -> vector<32x512xf32>
    %332 = vector.extract_strided_slice %0 {offsets = [11, 0], sizes = [1, 512], strides = [1, 1]} : vector<25x512xf32> to vector<1x512xf32>
    %333 = vector.broadcast %332 : vector<1x512xf32> to vector<32x512xf32>
    %334 = arith.mulf %331, %333 : vector<32x512xf32>
    %cst_94 = arith.constant dense<0.000000e+00> : vector<1x512xf32>
    %335 = tpu.matmul %330, %334, %cst_94 {dimension_numbers = #tpu.dot_dimension_numbers<[1], [0], [0], [1], [0, 0, 1, 1], [], []>} : vector<1x32xf32>, vector<32x512xf32>, vector<1x512xf32> -> vector<1x512xf32>
    %336 = arith.addf %329, %335 : vector<1x512xf32>
    %337 = vector.extract_strided_slice %253 {offsets = [12, 0], sizes = [1, 32], strides = [1, 1]} : vector<25x32xf32> to vector<1x32xf32>
    %338 = vector.extract_strided_slice %0 {offsets = [12, 0], sizes = [1, 512], strides = [1, 1]} : vector<25x512xf32> to vector<1x512xf32>
    %339 = vector.broadcast %338 : vector<1x512xf32> to vector<32x512xf32>
    %340 = arith.mulf %252, %339 : vector<32x512xf32>
    %cst_95 = arith.constant dense<0.000000e+00> : vector<1x512xf32>
    %341 = tpu.matmul %337, %340, %cst_95 {dimension_numbers = #tpu.dot_dimension_numbers<[1], [0], [0], [1], [0, 0, 1, 1], [], []>} : vector<1x32xf32>, vector<32x512xf32>, vector<1x512xf32> -> vector<1x512xf32>
    %342 = arith.addf %336, %341 : vector<1x512xf32>
    %343 = vector.extract_strided_slice %253 {offsets = [13, 0], sizes = [1, 32], strides = [1, 1]} : vector<25x32xf32> to vector<1x32xf32>
    %c511_i32_96 = arith.constant 511 : i32
    %344 = tpu.dynamic_rotate %252 by %c511_i32_96 dim 1 : vector<32x512xf32>, i32 -> vector<32x512xf32>
    %345 = vector.extract_strided_slice %0 {offsets = [13, 0], sizes = [1, 512], strides = [1, 1]} : vector<25x512xf32> to vector<1x512xf32>
    %346 = vector.broadcast %345 : vector<1x512xf32> to vector<32x512xf32>
    %347 = arith.mulf %344, %346 : vector<32x512xf32>
    %cst_97 = arith.constant dense<0.000000e+00> : vector<1x512xf32>
    %348 = tpu.matmul %343, %347, %cst_97 {dimension_numbers = #tpu.dot_dimension_numbers<[1], [0], [0], [1], [0, 0, 1, 1], [], []>} : vector<1x32xf32>, vector<32x512xf32>, vector<1x512xf32> -> vector<1x512xf32>
    %349 = arith.addf %342, %348 : vector<1x512xf32>
    %350 = vector.extract_strided_slice %253 {offsets = [14, 0], sizes = [1, 32], strides = [1, 1]} : vector<25x32xf32> to vector<1x32xf32>
    %c510_i32_98 = arith.constant 510 : i32
    %351 = tpu.dynamic_rotate %252 by %c510_i32_98 dim 1 : vector<32x512xf32>, i32 -> vector<32x512xf32>
    %352 = vector.extract_strided_slice %0 {offsets = [14, 0], sizes = [1, 512], strides = [1, 1]} : vector<25x512xf32> to vector<1x512xf32>
    %353 = vector.broadcast %352 : vector<1x512xf32> to vector<32x512xf32>
    %354 = arith.mulf %351, %353 : vector<32x512xf32>
    %cst_99 = arith.constant dense<0.000000e+00> : vector<1x512xf32>
    %355 = tpu.matmul %350, %354, %cst_99 {dimension_numbers = #tpu.dot_dimension_numbers<[1], [0], [0], [1], [0, 0, 1, 1], [], []>} : vector<1x32xf32>, vector<32x512xf32>, vector<1x512xf32> -> vector<1x512xf32>
    %356 = arith.addf %349, %355 : vector<1x512xf32>
    %357 = vector.extract_strided_slice %253 {offsets = [15, 0], sizes = [1, 32], strides = [1, 1]} : vector<25x32xf32> to vector<1x32xf32>
    %c498_i32_100 = arith.constant 498 : i32
    %358 = tpu.dynamic_rotate %252 by %c498_i32_100 dim 1 : vector<32x512xf32>, i32 -> vector<32x512xf32>
    %359 = vector.extract_strided_slice %0 {offsets = [15, 0], sizes = [1, 512], strides = [1, 1]} : vector<25x512xf32> to vector<1x512xf32>
    %360 = vector.broadcast %359 : vector<1x512xf32> to vector<32x512xf32>
    %361 = arith.mulf %358, %360 : vector<32x512xf32>
    %cst_101 = arith.constant dense<0.000000e+00> : vector<1x512xf32>
    %362 = tpu.matmul %357, %361, %cst_101 {dimension_numbers = #tpu.dot_dimension_numbers<[1], [0], [0], [1], [0, 0, 1, 1], [], []>} : vector<1x32xf32>, vector<32x512xf32>, vector<1x512xf32> -> vector<1x512xf32>
    %363 = arith.addf %356, %362 : vector<1x512xf32>
    %364 = vector.extract_strided_slice %253 {offsets = [16, 0], sizes = [1, 32], strides = [1, 1]} : vector<25x32xf32> to vector<1x32xf32>
    %c497_i32_102 = arith.constant 497 : i32
    %365 = tpu.dynamic_rotate %252 by %c497_i32_102 dim 1 : vector<32x512xf32>, i32 -> vector<32x512xf32>
    %366 = vector.extract_strided_slice %0 {offsets = [16, 0], sizes = [1, 512], strides = [1, 1]} : vector<25x512xf32> to vector<1x512xf32>
    %367 = vector.broadcast %366 : vector<1x512xf32> to vector<32x512xf32>
    %368 = arith.mulf %365, %367 : vector<32x512xf32>
    %cst_103 = arith.constant dense<0.000000e+00> : vector<1x512xf32>
    %369 = tpu.matmul %364, %368, %cst_103 {dimension_numbers = #tpu.dot_dimension_numbers<[1], [0], [0], [1], [0, 0, 1, 1], [], []>} : vector<1x32xf32>, vector<32x512xf32>, vector<1x512xf32> -> vector<1x512xf32>
    %370 = arith.addf %363, %369 : vector<1x512xf32>
    %371 = vector.extract_strided_slice %253 {offsets = [17, 0], sizes = [1, 32], strides = [1, 1]} : vector<25x32xf32> to vector<1x32xf32>
    %c496_i32_104 = arith.constant 496 : i32
    %372 = tpu.dynamic_rotate %252 by %c496_i32_104 dim 1 : vector<32x512xf32>, i32 -> vector<32x512xf32>
    %373 = vector.extract_strided_slice %0 {offsets = [17, 0], sizes = [1, 512], strides = [1, 1]} : vector<25x512xf32> to vector<1x512xf32>
    %374 = vector.broadcast %373 : vector<1x512xf32> to vector<32x512xf32>
    %375 = arith.mulf %372, %374 : vector<32x512xf32>
    %cst_105 = arith.constant dense<0.000000e+00> : vector<1x512xf32>
    %376 = tpu.matmul %371, %375, %cst_105 {dimension_numbers = #tpu.dot_dimension_numbers<[1], [0], [0], [1], [0, 0, 1, 1], [], []>} : vector<1x32xf32>, vector<32x512xf32>, vector<1x512xf32> -> vector<1x512xf32>
    %377 = arith.addf %370, %376 : vector<1x512xf32>
    %378 = vector.extract_strided_slice %253 {offsets = [18, 0], sizes = [1, 32], strides = [1, 1]} : vector<25x32xf32> to vector<1x32xf32>
    %c495_i32_106 = arith.constant 495 : i32
    %379 = tpu.dynamic_rotate %252 by %c495_i32_106 dim 1 : vector<32x512xf32>, i32 -> vector<32x512xf32>
    %380 = vector.extract_strided_slice %0 {offsets = [18, 0], sizes = [1, 512], strides = [1, 1]} : vector<25x512xf32> to vector<1x512xf32>
    %381 = vector.broadcast %380 : vector<1x512xf32> to vector<32x512xf32>
    %382 = arith.mulf %379, %381 : vector<32x512xf32>
    %cst_107 = arith.constant dense<0.000000e+00> : vector<1x512xf32>
    %383 = tpu.matmul %378, %382, %cst_107 {dimension_numbers = #tpu.dot_dimension_numbers<[1], [0], [0], [1], [0, 0, 1, 1], [], []>} : vector<1x32xf32>, vector<32x512xf32>, vector<1x512xf32> -> vector<1x512xf32>
    %384 = arith.addf %377, %383 : vector<1x512xf32>
    %385 = vector.extract_strided_slice %253 {offsets = [19, 0], sizes = [1, 32], strides = [1, 1]} : vector<25x32xf32> to vector<1x32xf32>
    %c494_i32_108 = arith.constant 494 : i32
    %386 = tpu.dynamic_rotate %252 by %c494_i32_108 dim 1 : vector<32x512xf32>, i32 -> vector<32x512xf32>
    %387 = vector.extract_strided_slice %0 {offsets = [19, 0], sizes = [1, 512], strides = [1, 1]} : vector<25x512xf32> to vector<1x512xf32>
    %388 = vector.broadcast %387 : vector<1x512xf32> to vector<32x512xf32>
    %389 = arith.mulf %386, %388 : vector<32x512xf32>
    %cst_109 = arith.constant dense<0.000000e+00> : vector<1x512xf32>
    %390 = tpu.matmul %385, %389, %cst_109 {dimension_numbers = #tpu.dot_dimension_numbers<[1], [0], [0], [1], [0, 0, 1, 1], [], []>} : vector<1x32xf32>, vector<32x512xf32>, vector<1x512xf32> -> vector<1x512xf32>
    %391 = arith.addf %384, %390 : vector<1x512xf32>
    %392 = vector.extract_strided_slice %253 {offsets = [20, 0], sizes = [1, 32], strides = [1, 1]} : vector<25x32xf32> to vector<1x32xf32>
    %c482_i32_110 = arith.constant 482 : i32
    %393 = tpu.dynamic_rotate %252 by %c482_i32_110 dim 1 : vector<32x512xf32>, i32 -> vector<32x512xf32>
    %394 = vector.extract_strided_slice %0 {offsets = [20, 0], sizes = [1, 512], strides = [1, 1]} : vector<25x512xf32> to vector<1x512xf32>
    %395 = vector.broadcast %394 : vector<1x512xf32> to vector<32x512xf32>
    %396 = arith.mulf %393, %395 : vector<32x512xf32>
    %cst_111 = arith.constant dense<0.000000e+00> : vector<1x512xf32>
    %397 = tpu.matmul %392, %396, %cst_111 {dimension_numbers = #tpu.dot_dimension_numbers<[1], [0], [0], [1], [0, 0, 1, 1], [], []>} : vector<1x32xf32>, vector<32x512xf32>, vector<1x512xf32> -> vector<1x512xf32>
    %398 = arith.addf %391, %397 : vector<1x512xf32>
    %399 = vector.extract_strided_slice %253 {offsets = [21, 0], sizes = [1, 32], strides = [1, 1]} : vector<25x32xf32> to vector<1x32xf32>
    %c481_i32_112 = arith.constant 481 : i32
    %400 = tpu.dynamic_rotate %252 by %c481_i32_112 dim 1 : vector<32x512xf32>, i32 -> vector<32x512xf32>
    %401 = vector.extract_strided_slice %0 {offsets = [21, 0], sizes = [1, 512], strides = [1, 1]} : vector<25x512xf32> to vector<1x512xf32>
    %402 = vector.broadcast %401 : vector<1x512xf32> to vector<32x512xf32>
    %403 = arith.mulf %400, %402 : vector<32x512xf32>
    %cst_113 = arith.constant dense<0.000000e+00> : vector<1x512xf32>
    %404 = tpu.matmul %399, %403, %cst_113 {dimension_numbers = #tpu.dot_dimension_numbers<[1], [0], [0], [1], [0, 0, 1, 1], [], []>} : vector<1x32xf32>, vector<32x512xf32>, vector<1x512xf32> -> vector<1x512xf32>
    %405 = arith.addf %398, %404 : vector<1x512xf32>
    %406 = vector.extract_strided_slice %253 {offsets = [22, 0], sizes = [1, 32], strides = [1, 1]} : vector<25x32xf32> to vector<1x32xf32>
    %c480_i32_114 = arith.constant 480 : i32
    %407 = tpu.dynamic_rotate %252 by %c480_i32_114 dim 1 : vector<32x512xf32>, i32 -> vector<32x512xf32>
    %408 = vector.extract_strided_slice %0 {offsets = [22, 0], sizes = [1, 512], strides = [1, 1]} : vector<25x512xf32> to vector<1x512xf32>
    %409 = vector.broadcast %408 : vector<1x512xf32> to vector<32x512xf32>
    %410 = arith.mulf %407, %409 : vector<32x512xf32>
    %cst_115 = arith.constant dense<0.000000e+00> : vector<1x512xf32>
    %411 = tpu.matmul %406, %410, %cst_115 {dimension_numbers = #tpu.dot_dimension_numbers<[1], [0], [0], [1], [0, 0, 1, 1], [], []>} : vector<1x32xf32>, vector<32x512xf32>, vector<1x512xf32> -> vector<1x512xf32>
    %412 = arith.addf %405, %411 : vector<1x512xf32>
    %413 = vector.extract_strided_slice %253 {offsets = [23, 0], sizes = [1, 32], strides = [1, 1]} : vector<25x32xf32> to vector<1x32xf32>
    %c479_i32_116 = arith.constant 479 : i32
    %414 = tpu.dynamic_rotate %252 by %c479_i32_116 dim 1 : vector<32x512xf32>, i32 -> vector<32x512xf32>
    %415 = vector.extract_strided_slice %0 {offsets = [23, 0], sizes = [1, 512], strides = [1, 1]} : vector<25x512xf32> to vector<1x512xf32>
    %416 = vector.broadcast %415 : vector<1x512xf32> to vector<32x512xf32>
    %417 = arith.mulf %414, %416 : vector<32x512xf32>
    %cst_117 = arith.constant dense<0.000000e+00> : vector<1x512xf32>
    %418 = tpu.matmul %413, %417, %cst_117 {dimension_numbers = #tpu.dot_dimension_numbers<[1], [0], [0], [1], [0, 0, 1, 1], [], []>} : vector<1x32xf32>, vector<32x512xf32>, vector<1x512xf32> -> vector<1x512xf32>
    %419 = arith.addf %412, %418 : vector<1x512xf32>
    %420 = vector.extract_strided_slice %253 {offsets = [24, 0], sizes = [1, 32], strides = [1, 1]} : vector<25x32xf32> to vector<1x32xf32>
    %c478_i32_118 = arith.constant 478 : i32
    %421 = tpu.dynamic_rotate %252 by %c478_i32_118 dim 1 : vector<32x512xf32>, i32 -> vector<32x512xf32>
    %422 = vector.extract_strided_slice %0 {offsets = [24, 0], sizes = [1, 512], strides = [1, 1]} : vector<25x512xf32> to vector<1x512xf32>
    %423 = vector.broadcast %422 : vector<1x512xf32> to vector<32x512xf32>
    %424 = arith.mulf %421, %423 : vector<32x512xf32>
    %cst_119 = arith.constant dense<0.000000e+00> : vector<1x512xf32>
    %425 = tpu.matmul %420, %424, %cst_119 {dimension_numbers = #tpu.dot_dimension_numbers<[1], [0], [0], [1], [0, 0, 1, 1], [], []>} : vector<1x32xf32>, vector<32x512xf32>, vector<1x512xf32> -> vector<1x512xf32>
    %426 = arith.addf %419, %425 : vector<1x512xf32>
    %c0_120 = arith.constant 0 : index
    %427 = memref.load %arg8[%c0_120] : memref<1xf32, #tpu.memory_space<smem>>
    %428 = vector.broadcast %427 : f32 to vector<1x512xf32>
    %429 = arith.addf %426, %428 : vector<1x512xf32>
    %430 = arith.addf %429, %3 : vector<1x512xf32>
    %c0_121 = arith.constant 0 : index
    %c0_122 = arith.constant 0 : index
    %c0_123 = arith.constant 0 : index
    %431 = vector.load %arg11[%c0_121, %c0_122, %c0_123] : memref<1x1x512xf32, #tpu.memory_space<vmem>>, vector<1x1x512xf32>
    %432 = vector.shape_cast %431 : vector<1x1x512xf32> to vector<1x512xf32>
    %433 = vector.shape_cast %430 : vector<1x512xf32> to vector<1x1x512xf32>
    tpu.vector_store %arg11[%c0_121, %c0_122, %c0_123], %433 {strides = array<i32>} : memref<1x1x512xf32, #tpu.memory_space<vmem>>, vector<1x1x512xf32>,
    return
  }
  func.func @transform_0(%arg0: i32) -> (i32, i32, i32) {
    %c0_i32 = arith.constant 0 : i32
    %c0_i32_0 = arith.constant 0 : i32
    %c0_i32_1 = arith.constant 0 : i32
    return %arg0, %c0_i32, %c0_i32_0 : i32, i32, i32
  }
  func.func @transform_1(%arg0: i32) -> (i32, i32) {
    %c0_i32 = arith.constant 0 : i32
    %c0_i32_0 = arith.constant 0 : i32
    %c0_i32_1 = arith.constant 0 : i32
    return %c0_i32, %c0_i32_0 : i32, i32
  }
  func.func @transform_2(%arg0: i32) -> (i32, i32) {
    %c0_i32 = arith.constant 0 : i32
    %c0_i32_0 = arith.constant 0 : i32
    %c0_i32_1 = arith.constant 0 : i32
    return %c0_i32, %c0_i32_0 : i32, i32
  }
  func.func @transform_3(%arg0: i32) -> (i32, i32) {
    %c0_i32 = arith.constant 0 : i32
    %c0_i32_0 = arith.constant 0 : i32
    %c0_i32_1 = arith.constant 0 : i32
    return %c0_i32, %c0_i32_0 : i32, i32
  }
  func.func @transform_4(%arg0: i32) -> (i32, i32) {
    %c0_i32 = arith.constant 0 : i32
    %c0_i32_0 = arith.constant 0 : i32
    %c0_i32_1 = arith.constant 0 : i32
    return %c0_i32, %c0_i32_0 : i32, i32
  }
  func.func @transform_5(%arg0: i32) -> (i32, i32) {
    %c0_i32 = arith.constant 0 : i32
    %c0_i32_0 = arith.constant 0 : i32
    %c0_i32_1 = arith.constant 0 : i32
    return %c0_i32, %c0_i32_0 : i32, i32
  }
  func.func @transform_6(%arg0: i32) -> (i32, i32) {
    %c0_i32 = arith.constant 0 : i32
    %c0_i32_0 = arith.constant 0 : i32
    %c0_i32_1 = arith.constant 0 : i32
    return %c0_i32, %c0_i32_0 : i32, i32
  }
  func.func @transform_7(%arg0: i32) -> i32 {
    %c0_i32 = arith.constant 0 : i32
    %c0_i32_0 = arith.constant 0 : i32
    return %c0_i32 : i32
  }
  func.func @transform_8(%arg0: i32) -> i32 {
    %c0_i32 = arith.constant 0 : i32
    %c0_i32_0 = arith.constant 0 : i32
    return %c0_i32 : i32
  }
  func.func @transform_9(%arg0: i32) -> i32 {
    %c0_i32 = arith.constant 0 : i32
    %c0_i32_0 = arith.constant 0 : i32
    return %c0_i32 : i32
  }
  func.func @transform_10(%arg0: i32) -> (i32, i32, i32) {
    %c0_i32 = arith.constant 0 : i32
    %c0_i32_0 = arith.constant 0 : i32
    %c0_i32_1 = arith.constant 0 : i32
    return %arg0, %c0_i32, %c0_i32_0 : i32, i32, i32
  }
}

</mosaic_0001>

<llo_original>
// kernel: tpu_custom_call.1
$region0: #{tpu_custom_call.1}
  #allocation0 [shape = 'u32[]', space=smem, size = 0x4, offset = 0x4, fixed_abs, tag = 'smem constant byte address 0x4 - core index']
  #allocation1 [shape = 'u32[144,128]{1,0:T(1,128)}', space=vmem, size = 0x12000, scoped, tag = 'internal scratch']
  #allocation2 [shape = 'f32[800,512]{1,0:T(8,128)}', space=vmem, size = 0x190000, scoped, tag = 'scratch operand']
  #allocation3 [shape = 'f32[1]{0:T(128)S(6)}', space=smem, size = 0x200, scoped, tag = 'scoped memory for tpu_custom_call.1']
  #allocation4 [shape = 'f32[1]{0:T(128)S(6)}', space=smem, size = 0x200, scoped, tag = 'scoped memory for tpu_custom_call.1']
  #allocation5 [shape = 'f32[1]{0:T(128)S(6)}', space=smem, size = 0x200, scoped, tag = 'scoped memory for tpu_custom_call.1']
  %s0 = inlined_call_operand.vmem [shape: f32[1,2,512], index: 0, kind: input, shape index: {}]
  %s1 = inlined_call_operand.hbm [shape: f32[25,512], index: 1, kind: input, shape index: {}]
  %s2 = inlined_call_operand.vmem [shape: f32[32,50], index: 2, kind: input, shape index: {}]
  %s3 = inlined_call_operand.hbm [shape: f32[32,800], index: 3, kind: input, shape index: {}]
  %s4 = inlined_call_operand.vmem [shape: f32[25,32], index: 4, kind: input, shape index: {}]
  %s5 = inlined_call_operand.vmem [shape: f32[32,1], index: 5, kind: input, shape index: {}]
  %s6 = inlined_call_operand.vmem [shape: f32[32,1], index: 6, kind: input, shape index: {}]
  %s7 = inlined_call_operand.<no memory space> [shape: f32[1], index: 7, kind: input, shape index: {}]
  %s8 = inlined_call_operand.<no memory space> [shape: f32[1], index: 8, kind: input, shape index: {}]
  %s9 = inlined_call_operand.<no memory space> [shape: f32[1], index: 9, kind: input, shape index: {}]
  %s10 = inlined_call_operand.hbm [shape: f32[1,1,512], index: 10, kind: output, shape index: {}]
  %s11 = sld [smem:[#allocation0]]
  $region58: #{tpu_custom_call.1} parent=0
    _
  %s13 = ssub.s32 1, %s11
  %s14 = scalar_select 0, %s13, %s11
  %15 = sst [smem:[#allocation3]] %s7
  %16 = sst [smem:[#allocation4]] %s8
  %17 = sst [smem:[#allocation5]] %s9
  $region1: #{tpu_custom_call.1} parent=0
    #allocation6 [shape = 'u8[65536]{0}', space=vmem, size = 0x10000, scoped, tag = 'input window, operand 1, single buffered']
    #allocation7 [shape = 's32[1]{0}', space=sflag, size = 0x4, scoped, tag = 'scoped memory for tpu_custom_call.1']
    #allocation8 [shape = 's32[1]{0}', space=sflag, size = 0x4, scoped, tag = 'scoped memory for tpu_custom_call.1']
    #allocation9 [shape = 'u8[114688]{0}', space=vmem, size = 0x1c000, scoped, tag = 'input window, operand 3, single buffered']
    #allocation10 [shape = 's32[1]{0}', space=sflag, size = 0x4, scoped, tag = 'scoped memory for tpu_custom_call.1']
    #allocation11 [shape = 'u8[2048]{0}', space=vmem, size = 0x800, scoped, tag = 'output window, operand 0, single buffered']
    %18 = vsyncpa [#allocation7], 0
    %19 = vsyncpa [#allocation10], 0
    %20 = vsyncpa [#allocation8], 0
    // Predicated region
    $region2: #{tpu_custom_call.1} parent=1 // pred_check
      _
    $region3: #{tpu_custom_call.1} parent=1 // pred_check_branch
      %22 = sbr.rel (0) target = $region5
    $region4: #{tpu_custom_call.1} parent=1 // pred_region
      _
    $region5: #{tpu_custom_call.1} parent=1 // pred_fallthru
      _
    // Predicated region
    $region6: #{tpu_custom_call.1} parent=1 // pred_check
      _
    $region7: #{tpu_custom_call.1} parent=1 // pred_check_branch
      %24 = sbr.rel (0) target = $region9
    $region8: #{tpu_custom_call.1} parent=1 // pred_region
      %s26 = ssub.s32 2048, 2048
      %27 = vsyncadd [#allocation7], %s26
      %s28 = sshll.u32 [#allocation6], 4
      %s29 = int_to_ptr.vmem [resolvable:$true] %s28
      %34 = dma.hbm_to_vmem [thread:$0]  %s1, 2048, %s29, [#allocation7], 512, 512, 32
    $region9: #{tpu_custom_call.1} parent=1 // pred_fallthru
      _
    // Predicated region
    $region10: #{tpu_custom_call.1} parent=1 // pred_check
      _
    $region11: #{tpu_custom_call.1} parent=1 // pred_check_branch
      %36 = sbr.rel (0) target = $region13
    $region12: #{tpu_custom_call.1} parent=1 // pred_region
      _
    $region13: #{tpu_custom_call.1} parent=1 // pred_fallthru
      _
    // Predicated region
    $region14: #{tpu_custom_call.1} parent=1 // pred_check
      _
    $region15: #{tpu_custom_call.1} parent=1 // pred_check_branch
      %38 = sbr.rel (0) target = $region17
    $region16: #{tpu_custom_call.1} parent=1 // pred_region
      %s40 = ssub.s32 3584, 3584
      %41 = vsyncadd [#allocation10], %s40
      %s42 = sshll.u32 [#allocation9], 4
      %s43 = int_to_ptr.vmem [resolvable:$true] %s42
      %48 = dma.hbm_to_vmem [thread:$0]  %s3, 3584, %s43, [#allocation10], 896, 896, 56
    $region17: #{tpu_custom_call.1} parent=1 // pred_fallthru
      _
    // Predicated region
    $region18: #{tpu_custom_call.1} parent=1 // pred_check
      _
    $region19: #{tpu_custom_call.1} parent=1 // pred_check_branch
      %50 = sbr.rel (0) target = $region21
    $region20: #{tpu_custom_call.1} parent=1 // pred_region
      _
    $region21: #{tpu_custom_call.1} parent=1 // pred_fallthru
      _
    // Predicated region
    $region22: #{tpu_custom_call.1} parent=1 // pred_check
      _
    $region23: #{tpu_custom_call.1} parent=1 // pred_check_branch
      %52 = sbr.rel (0) target = $region25
    $region24: #{tpu_custom_call.1} parent=1 // pred_region
      _
    $region25: #{tpu_custom_call.1} parent=1 // pred_fallthru
      _
    // Predicated region
    $region26: #{tpu_custom_call.1} parent=1 // pred_check
      _
    $region27: #{tpu_custom_call.1} parent=1 // pred_check_branch
      %54 = sbr.rel (0) target = $region29
    $region28: #{tpu_custom_call.1} parent=1 // pred_region
      _
    $region29: #{tpu_custom_call.1} parent=1 // pred_fallthru
      _
    // Predicated region
    $region30: #{tpu_custom_call.1} parent=1 // pred_check
      _
    $region31: #{tpu_custom_call.1} parent=1 // pred_check_branch
      %56 = sbr.rel (0) target = $region33
    $region32: #{tpu_custom_call.1} parent=1 // pred_region
      _
    $region33: #{tpu_custom_call.1} parent=1 // pred_fallthru
      _
    // Predicated region
    $region34: #{tpu_custom_call.1} parent=1 // pred_check
      _
    $region35: #{tpu_custom_call.1} parent=1 // pred_check_branch
      %58 = sbr.rel (0) target = $region37
    $region36: #{tpu_custom_call.1} parent=1 // pred_region
      _
    $region37: #{tpu_custom_call.1} parent=1 // pred_fallthru
      _
    // Predicated region
    $region38: #{tpu_custom_call.1} parent=1 // pred_check
      _
    $region39: #{tpu_custom_call.1} parent=1 // pred_check_branch
      %60 = sbr.rel (0) target = $region41
    $region40: #{tpu_custom_call.1} parent=1 // pred_region
      _
    $region41: #{tpu_custom_call.1} parent=1 // pred_fallthru
      _
    // Predicated region
    $region42: #{tpu_custom_call.1} parent=1 // pred_check
      _
    $region43: #{tpu_custom_call.1} parent=1 // pred_check_branch
      %62 = sbr.rel (0) target = $region45
    $region44: #{tpu_custom_call.1} parent=1 // pred_region
      %63 = dma.done [#allocation7], 2048
    $region45: #{tpu_custom_call.1} parent=1 // pred_fallthru
      _
    // Predicated region
    $region46: #{tpu_custom_call.1} parent=1 // pred_check
      _
    $region47: #{tpu_custom_call.1} parent=1 // pred_check_branch
      %65 = sbr.rel (0) target = $region49
    $region48: #{tpu_custom_call.1} parent=1 // pred_region
      %66 = dma.done [#allocation10], 3584
    $region49: #{tpu_custom_call.1} parent=1 // pred_fallthru
      _
    %v67 = vld [vmem:[#allocation6] sm:$0xff]
    %v68 = vld [vmem:[#allocation6 + $0x8] sm:$0xff]
    %v69 = vld [vmem:[#allocation6 + $0x10] sm:$0xff]
    %v70 = vld [vmem:[#allocation6 + $0x18] sm:$0xff]
    %v71 = vld [vmem:[#allocation6 + $0x20] sm:$0xff]
    %v72 = vld [vmem:[#allocation6 + $0x28] sm:$0xff]
    %v73 = vld [vmem:[#allocation6 + $0x30] sm:$0xff]
    %v74 = vld [vmem:[#allocation6 + $0x38] sm:$0xff]
    %v75 = vld [vmem:[#allocation6 + $0x40] sm:$0xff]
    %v76 = vld [vmem:[#allocation6 + $0x48] sm:$0xff]
    %v77 = vld [vmem:[#allocation6 + $0x50] sm:$0xff]
    %v78 = vld [vmem:[#allocation6 + $0x58] sm:$0xff]
    %v79 = vld [vmem:[#allocation6 + $0x60] sm:$0x1]
    %v80 = vld [vmem:[#allocation6 + $0x68] sm:$0x1]
    %v81 = vld [vmem:[#allocation6 + $0x70] sm:$0x1]
    %v82 = vld [vmem:[#allocation6 + $0x78] sm:$0x1]
    %v83 = vld [vmem:[%s0] sm:$0xff]
    %s84 = sld [smem:[#allocation4]]
    %s85 = sld [smem:[#allocation5]]
    %v87 = vcombine.high %v83, %v83
    %v89 = vunpack.c.l.s4 1983009808
    %v90 = vunpack.c.0.s8 %v89
    %v91 = vlaneseq
    %v92 = vshrl.u32 %v91, 7
    %v93 = vsub.s32 %v90, %v92
    %v94 = vrot.slane %v83, %v93
    %v96 = vunpack.c.l.s4 1983009808
    %v97 = vunpack.c.0.s8 %v96
    %v98 = vlaneseq
    %v99 = vshrl.u32 %v98, 7
    %v100 = vsub.s32 %v97, %v99
    %v101 = vrot.slane %v87, %v100
    %v102 = vcombine.high %v94, %v94
    %v103 = vcombine.high %v101, %v101
    %108 = vrot.lane.b32.xlu0 %v94, 34
    %v109 = vpop.permute.xlu0 %108
    %110 = vrot.lane.b32.xlu0 %v102, 34
    %v111 = vpop.permute.xlu0 %110
    %112 = vrot.lane.b32.xlu0 %v101, 34
    %v113 = vpop.permute.xlu0 %112
    %114 = vrot.lane.b32.xlu0 %v103, 34
    %v115 = vpop.permute.xlu0 %114
    %v116 = vlaneseq
    %v117 = vand.u32 %v116, 127
    %vm118 = vcmp.lt.s32.totalorder %v117, 34
    %v119 = vsel %vm118, %v113, %v115
    %v120 = vsel %vm118, %v111, %v113
    %v121 = vsel %vm118, %v109, %v111
    %v122 = vsel %vm118, %v115, %v109
    %v123 = vlaneseq
    %v124 = vshrl.u32 %v123, 7
    %v125 = vsub.s32 0, %v124
    %v126 = vrot.slane %v67, %v125
    %v127 = vlaneseq
    %v128 = vshrl.u32 %v127, 7
    %v129 = vsub.s32 0, %v128
    %v130 = vrot.slane %v68, %v129
    %v131 = vlaneseq
    %v132 = vshrl.u32 %v131, 7
    %v133 = vsub.s32 0, %v132
    %v134 = vrot.slane %v69, %v133
    %v135 = vlaneseq
    %v136 = vshrl.u32 %v135, 7
    %v137 = vsub.s32 0, %v136
    %v138 = vrot.slane %v70, %v137
    %v139 = vmul.f32 %v122, %v126
    %v140 = vmul.f32 %v121, %v130
    %v141 = vmul.f32 %v120, %v134
    %v142 = vmul.f32 %v119, %v138
    %143 = vrot.lane.b32.xlu0 %v94, 33
    %v144 = vpop.permute.xlu0 %143
    %145 = vrot.lane.b32.xlu0 %v102, 33
    %v146 = vpop.permute.xlu0 %145
    %147 = vrot.lane.b32.xlu0 %v101, 33
    %v148 = vpop.permute.xlu0 %147
    %149 = vrot.lane.b32.xlu0 %v103, 33
    %v150 = vpop.permute.xlu0 %149
    %vm151 = vcmp.lt.s32.totalorder %v117, 33
    %v152 = vsel %vm151, %v148, %v150
    %v153 = vsel %vm151, %v146, %v148
    %v154 = vsel %vm151, %v144, %v146
    %v155 = vsel %vm151, %v150, %v144
    %v156 = vlaneseq
    %v157 = vshrl.u32 %v156, 7
    %v158 = vsub.s32 1, %v157
    %v159 = vrot.slane %v67, %v158
    %v160 = vlaneseq
    %v161 = vshrl.u32 %v160, 7
    %v162 = vsub.s32 1, %v161
    %v163 = vrot.slane %v68, %v162
    %v164 = vlaneseq
    %v165 = vshrl.u32 %v164, 7
    %v166 = vsub.s32 1, %v165
    %v167 = vrot.slane %v69, %v166
    %v168 = vlaneseq
    %v169 = vshrl.u32 %v168, 7
    %v170 = vsub.s32 1, %v169
    %v171 = vrot.slane %v70, %v170
    %v172 = vmul.f32 %v155, %v159
    %v173 = vmul.f32 %v154, %v163
    %v174 = vmul.f32 %v153, %v167
    %v175 = vmul.f32 %v152, %v171
    %176 = vrot.lane.b32.xlu0 %v94, 32
    %v177 = vpop.permute.xlu0 %176
    %178 = vrot.lane.b32.xlu0 %v102, 32
    %v179 = vpop.permute.xlu0 %178
    %180 = vrot.lane.b32.xlu0 %v101, 32
    %v181 = vpop.permute.xlu0 %180
    %182 = vrot.lane.b32.xlu0 %v103, 32
    %v183 = vpop.permute.xlu0 %182
    %vm184 = vcmp.lt.s32.totalorder %v117, 32
    %v185 = vsel %vm184, %v181, %v183
    %v186 = vsel %vm184, %v179, %v181
    %v187 = vsel %vm184, %v177, %v179
    %v188 = vsel %vm184, %v183, %v177
    %v189 = vlaneseq
    %v190 = vshrl.u32 %v189, 7
    %v191 = vsub.s32 2, %v190
    %v192 = vrot.slane %v67, %v191
    %v193 = vlaneseq
    %v194 = vshrl.u32 %v193, 7
    %v195 = vsub.s32 2, %v194
    %v196 = vrot.slane %v68, %v195
    %v197 = vlaneseq
    %v198 = vshrl.u32 %v197, 7
    %v199 = vsub.s32 2, %v198
    %v200 = vrot.slane %v69, %v199
    %v201 = vlaneseq
    %v202 = vshrl.u32 %v201, 7
    %v203 = vsub.s32 2, %v202
    %v204 = vrot.slane %v70, %v203
    %v205 = vmul.f32 %v188, %v192
    %v206 = vmul.f32 %v187, %v196
    %v207 = vmul.f32 %v186, %v200
    %v208 = vmul.f32 %v185, %v204
    %209 = vrot.lane.b32.xlu0 %v94, 31
    %v210 = vpop.permute.xlu0 %209
    %211 = vrot.lane.b32.xlu0 %v102, 31
    %v212 = vpop.permute.xlu0 %211
    %213 = vrot.lane.b32.xlu0 %v101, 31
    %v214 = vpop.permute.xlu0 %213
    %215 = vrot.lane.b32.xlu0 %v103, 31
    %v216 = vpop.permute.xlu0 %215
    %vm217 = vcmp.lt.s32.totalorder %v117, 31
    %v218 = vsel %vm217, %v214, %v216
    %v219 = vsel %vm217, %v212, %v214
    %v220 = vsel %vm217, %v210, %v212
    %v221 = vsel %vm217, %v216, %v210
    %v222 = vlaneseq
    %v223 = vshrl.u32 %v222, 7
    %v224 = vsub.s32 3, %v223
    %v225 = vrot.slane %v67, %v224
    %v226 = vlaneseq
    %v227 = vshrl.u32 %v226, 7
    %v228 = vsub.s32 3, %v227
    %v229 = vrot.slane %v68, %v228
    %v230 = vlaneseq
    %v231 = vshrl.u32 %v230, 7
    %v232 = vsub.s32 3, %v231
    %v233 = vrot.slane %v69, %v232
    %v234 = vlaneseq
    %v235 = vshrl.u32 %v234, 7
    %v236 = vsub.s32 3, %v235
    %v237 = vrot.slane %v70, %v236
    %v238 = vmul.f32 %v221, %v225
    %v239 = vmul.f32 %v220, %v229
    %v240 = vmul.f32 %v219, %v233
    %v241 = vmul.f32 %v218, %v237
    %242 = vrot.lane.b32.xlu0 %v94, 30
    %v243 = vpop.permute.xlu0 %242
    %244 = vrot.lane.b32.xlu0 %v102, 30
    %v245 = vpop.permute.xlu0 %244
    %246 = vrot.lane.b32.xlu0 %v101, 30
    %v247 = vpop.permute.xlu0 %246
    %248 = vrot.lane.b32.xlu0 %v103, 30
    %v249 = vpop.permute.xlu0 %248
    %vm250 = vcmp.lt.s32.totalorder %v117, 30
    %v251 = vsel %vm250, %v247, %v249
    %v252 = vsel %vm250, %v245, %v247
    %v253 = vsel %vm250, %v243, %v245
    %v254 = vsel %vm250, %v249, %v243
    %v255 = vlaneseq
    %v256 = vshrl.u32 %v255, 7
    %v257 = vsub.s32 4, %v256
    %v258 = vrot.slane %v67, %v257
    %v259 = vlaneseq
    %v260 = vshrl.u32 %v259, 7
    %v261 = vsub.s32 4, %v260
    %v262 = vrot.slane %v68, %v261
    %v263 = vlaneseq
    %v264 = vshrl.u32 %v263, 7
    %v265 = vsub.s32 4, %v264
    %v266 = vrot.slane %v69, %v265
    %v267 = vlaneseq
    %v268 = vshrl.u32 %v267, 7
    %v269 = vsub.s32 4, %v268
    %v270 = vrot.slane %v70, %v269
    %v271 = vmul.f32 %v254, %v258
    %v272 = vmul.f32 %v253, %v262
    %v273 = vmul.f32 %v252, %v266
    %v274 = vmul.f32 %v251, %v270
    %275 = vrot.lane.b32.xlu0 %v94, 18
    %v276 = vpop.permute.xlu0 %275
    %277 = vrot.lane.b32.xlu0 %v102, 18
    %v278 = vpop.permute.xlu0 %277
    %279 = vrot.lane.b32.xlu0 %v101, 18
    %v280 = vpop.permute.xlu0 %279
    %281 = vrot.lane.b32.xlu0 %v103, 18
    %v282 = vpop.permute.xlu0 %281
    %vm283 = vcmp.lt.s32.totalorder %v117, 18
    %v284 = vsel %vm283, %v280, %v282
    %v285 = vsel %vm283, %v278, %v280
    %v286 = vsel %vm283, %v276, %v278
    %v287 = vsel %vm283, %v282, %v276
    %v288 = vlaneseq
    %v289 = vshrl.u32 %v288, 7
    %v290 = vsub.s32 5, %v289
    %v291 = vrot.slane %v67, %v290
    %v292 = vlaneseq
    %v293 = vshrl.u32 %v292, 7
    %v294 = vsub.s32 5, %v293
    %v295 = vrot.slane %v68, %v294
    %v296 = vlaneseq
    %v297 = vshrl.u32 %v296, 7
    %v298 = vsub.s32 5, %v297
    %v299 = vrot.slane %v69, %v298
    %v300 = vlaneseq
    %v301 = vshrl.u32 %v300, 7
    %v302 = vsub.s32 5, %v301
    %v303 = vrot.slane %v70, %v302
    %v304 = vmul.f32 %v287, %v291
    %v305 = vmul.f32 %v286, %v295
    %v306 = vmul.f32 %v285, %v299
    %v307 = vmul.f32 %v284, %v303
    %308 = vrot.lane.b32.xlu0 %v94, 17
    %v309 = vpop.permute.xlu0 %308
    %310 = vrot.lane.b32.xlu0 %v102, 17
    %v311 = vpop.permute.xlu0 %310
    %312 = vrot.lane.b32.xlu0 %v101, 17
    %v313 = vpop.permute.xlu0 %312
    %314 = vrot.lane.b32.xlu0 %v103, 17
    %v315 = vpop.permute.xlu0 %314
    %vm316 = vcmp.lt.s32.totalorder %v117, 17
    %v317 = vsel %vm316, %v313, %v315
    %v318 = vsel %vm316, %v311, %v313
    %v319 = vsel %vm316, %v309, %v311
    %v320 = vsel %vm316, %v315, %v309
    %v321 = vlaneseq
    %v322 = vshrl.u32 %v321, 7
    %v323 = vsub.s32 6, %v322
    %v324 = vrot.slane %v67, %v323
    %v325 = vlaneseq
    %v326 = vshrl.u32 %v325, 7
    %v327 = vsub.s32 6, %v326
    %v328 = vrot.slane %v68, %v327
    %v329 = vlaneseq
    %v330 = vshrl.u32 %v329, 7
    %v331 = vsub.s32 6, %v330
    %v332 = vrot.slane %v69, %v331
    %v333 = vlaneseq
    %v334 = vshrl.u32 %v333, 7
    %v335 = vsub.s32 6, %v334
    %v336 = vrot.slane %v70, %v335
    %v337 = vmul.f32 %v320, %v324
    %v338 = vmul.f32 %v319, %v328
    %v339 = vmul.f32 %v318, %v332
    %v340 = vmul.f32 %v317, %v336
    %341 = vrot.lane.b32.xlu0 %v94, 16
    %v342 = vpop.permute.xlu0 %341
    %343 = vrot.lane.b32.xlu0 %v102, 16
    %v344 = vpop.permute.xlu0 %343
    %345 = vrot.lane.b32.xlu0 %v101, 16
    %v346 = vpop.permute.xlu0 %345
    %347 = vrot.lane.b32.xlu0 %v103, 16
    %v348 = vpop.permute.xlu0 %347
    %vm349 = vcmp.lt.s32.totalorder %v117, 16
    %v350 = vsel %vm349, %v346, %v348
    %v351 = vsel %vm349, %v344, %v346
    %v352 = vsel %vm349, %v342, %v344
    %v353 = vsel %vm349, %v348, %v342
    %v354 = vlaneseq
    %v355 = vshrl.u32 %v354, 7
    %v356 = vsub.s32 7, %v355
    %v357 = vrot.slane %v67, %v356
    %v358 = vlaneseq
    %v359 = vshrl.u32 %v358, 7
    %v360 = vsub.s32 7, %v359
    %v361 = vrot.slane %v68, %v360
    %v362 = vlaneseq
    %v363 = vshrl.u32 %v362, 7
    %v364 = vsub.s32 7, %v363
    %v365 = vrot.slane %v69, %v364
    %v366 = vlaneseq
    %v367 = vshrl.u32 %v366, 7
    %v368 = vsub.s32 7, %v367
    %v369 = vrot.slane %v70, %v368
    %v370 = vmul.f32 %v353, %v357
    %v371 = vmul.f32 %v352, %v361
    %v372 = vmul.f32 %v351, %v365
    %v373 = vmul.f32 %v350, %v369
    %374 = vrot.lane.b32.xlu0 %v94, 15
    %v375 = vpop.permute.xlu0 %374
    %376 = vrot.lane.b32.xlu0 %v102, 15
    %v377 = vpop.permute.xlu0 %376
    %378 = vrot.lane.b32.xlu0 %v101, 15
    %v379 = vpop.permute.xlu0 %378
    %380 = vrot.lane.b32.xlu0 %v103, 15
    %v381 = vpop.permute.xlu0 %380
    %vm382 = vcmp.lt.s32.totalorder %v117, 15
    %v383 = vsel %vm382, %v379, %v381
    %v384 = vsel %vm382, %v377, %v379
    %v385 = vsel %vm382, %v375, %v377
    %v386 = vsel %vm382, %v381, %v375
    %v387 = vlaneseq
    %v388 = vshrl.u32 %v387, 7
    %v389 = vsub.s32 0, %v388
    %v390 = vrot.slane %v71, %v389
    %v391 = vlaneseq
    %v392 = vshrl.u32 %v391, 7
    %v393 = vsub.s32 0, %v392
    %v394 = vrot.slane %v72, %v393
    %v395 = vlaneseq
    %v396 = vshrl.u32 %v395, 7
    %v397 = vsub.s32 0, %v396
    %v398 = vrot.slane %v73, %v397
    %v399 = vlaneseq
    %v400 = vshrl.u32 %v399, 7
    %v401 = vsub.s32 0, %v400
    %v402 = vrot.slane %v74, %v401
    %v403 = vmul.f32 %v386, %v390
    %v404 = vmul.f32 %v385, %v394
    %v405 = vmul.f32 %v384, %v398
    %v406 = vmul.f32 %v383, %v402
    %407 = vrot.lane.b32.xlu0 %v94, 14
    %v408 = vpop.permute.xlu0 %407
    %409 = vrot.lane.b32.xlu0 %v102, 14
    %v410 = vpop.permute.xlu0 %409
    %411 = vrot.lane.b32.xlu0 %v101, 14
    %v412 = vpop.permute.xlu0 %411
    %413 = vrot.lane.b32.xlu0 %v103, 14
    %v414 = vpop.permute.xlu0 %413
    %vm415 = vcmp.lt.s32.totalorder %v117, 14
    %v416 = vsel %vm415, %v412, %v414
    %v417 = vsel %vm415, %v410, %v412
    %v418 = vsel %vm415, %v408, %v410
    %v419 = vsel %vm415, %v414, %v408
    %v420 = vlaneseq
    %v421 = vshrl.u32 %v420, 7
    %v422 = vsub.s32 1, %v421
    %v423 = vrot.slane %v71, %v422
    %v424 = vlaneseq
    %v425 = vshrl.u32 %v424, 7
    %v426 = vsub.s32 1, %v425
    %v427 = vrot.slane %v72, %v426
    %v428 = vlaneseq
    %v429 = vshrl.u32 %v428, 7
    %v430 = vsub.s32 1, %v429
    %v431 = vrot.slane %v73, %v430
    %v432 = vlaneseq
    %v433 = vshrl.u32 %v432, 7
    %v434 = vsub.s32 1, %v433
    %v435 = vrot.slane %v74, %v434
    %v436 = vmul.f32 %v419, %v423
    %v437 = vmul.f32 %v418, %v427
    %v438 = vmul.f32 %v417, %v431
    %v439 = vmul.f32 %v416, %v435
    %440 = vrot.lane.b32.xlu0 %v94, 2
    %v441 = vpop.permute.xlu0 %440
    %442 = vrot.lane.b32.xlu0 %v102, 2
    %v443 = vpop.permute.xlu0 %442
    %444 = vrot.lane.b32.xlu0 %v101, 2
    %v445 = vpop.permute.xlu0 %444
    %446 = vrot.lane.b32.xlu0 %v103, 2
    %v447 = vpop.permute.xlu0 %446
    %vm448 = vcmp.lt.s32.totalorder %v117, 2
    %v449 = vsel %vm448, %v445, %v447
    %v450 = vsel %vm448, %v443, %v445
    %v451 = vsel %vm448, %v441, %v443
    %v452 = vsel %vm448, %v447, %v441
    %v453 = vlaneseq
    %v454 = vshrl.u32 %v453, 7
    %v455 = vsub.s32 2, %v454
    %v456 = vrot.slane %v71, %v455
    %v457 = vlaneseq
    %v458 = vshrl.u32 %v457, 7
    %v459 = vsub.s32 2, %v458
    %v460 = vrot.slane %v72, %v459
    %v461 = vlaneseq
    %v462 = vshrl.u32 %v461, 7
    %v463 = vsub.s32 2, %v462
    %v464 = vrot.slane %v73, %v463
    %v465 = vlaneseq
    %v466 = vshrl.u32 %v465, 7
    %v467 = vsub.s32 2, %v466
    %v468 = vrot.slane %v74, %v467
    %v469 = vmul.f32 %v452, %v456
    %v470 = vmul.f32 %v451, %v460
    %v471 = vmul.f32 %v450, %v464
    %v472 = vmul.f32 %v449, %v468
    %473 = vrot.lane.b32.xlu0 %v94, 1
    %v474 = vpop.permute.xlu0 %473
    %475 = vrot.lane.b32.xlu0 %v102, 1
    %v476 = vpop.permute.xlu0 %475
    %477 = vrot.lane.b32.xlu0 %v101, 1
    %v478 = vpop.permute.xlu0 %477
    %479 = vrot.lane.b32.xlu0 %v103, 1
    %v480 = vpop.permute.xlu0 %479
    %vm481 = vcmp.lt.s32.totalorder %v117, 1
    %v482 = vsel %vm481, %v478, %v480
    %v483 = vsel %vm481, %v476, %v478
    %v484 = vsel %vm481, %v474, %v476
    %v485 = vsel %vm481, %v480, %v474
    %v486 = vlaneseq
    %v487 = vshrl.u32 %v486, 7
    %v488 = vsub.s32 3, %v487
    %v489 = vrot.slane %v71, %v488
    %v490 = vlaneseq
    %v491 = vshrl.u32 %v490, 7
    %v492 = vsub.s32 3, %v491
    %v493 = vrot.slane %v72, %v492
    %v494 = vlaneseq
    %v495 = vshrl.u32 %v494, 7
    %v496 = vsub.s32 3, %v495
    %v497 = vrot.slane %v73, %v496
    %v498 = vlaneseq
    %v499 = vshrl.u32 %v498, 7
    %v500 = vsub.s32 3, %v499
    %v501 = vrot.slane %v74, %v500
    %v502 = vmul.f32 %v485, %v489
    %v503 = vmul.f32 %v484, %v493
    %v504 = vmul.f32 %v483, %v497
    %v505 = vmul.f32 %v482, %v501
    %v506 = vlaneseq
    %v507 = vshrl.u32 %v506, 7
    %v508 = vsub.s32 4, %v507
    %v509 = vrot.slane %v71, %v508
    %v510 = vlaneseq
    %v511 = vshrl.u32 %v510, 7
    %v512 = vsub.s32 4, %v511
    %v513 = vrot.slane %v72, %v512
    %v514 = vlaneseq
    %v515 = vshrl.u32 %v514, 7
    %v516 = vsub.s32 4, %v515
    %v517 = vrot.slane %v73, %v516
    %v518 = vlaneseq
    %v519 = vshrl.u32 %v518, 7
    %v520 = vsub.s32 4, %v519
    %v521 = vrot.slane %v74, %v520
    %v526 = vcombine.low %v509, %v513
    %v527 = vcombine.low %v517, %v521
    %v529 = vunpack.c.l.s4 1983009808
    %v530 = vunpack.c.0.s8 %v529
    %v531 = vlaneseq
    %v532 = vshrl.u32 %v531, 7
    %v533 = vsub.s32 %v530, %v532
    %v534 = vrot.slane %v526, %v533
    %v536 = vunpack.c.l.s4 1983009808
    %v537 = vunpack.c.0.s8 %v536
    %v538 = vlaneseq
    %v539 = vshrl.u32 %v538, 7
    %v540 = vsub.s32 %v537, %v539
    %v541 = vrot.slane %v527, %v540
    %v542 = vcombine.low %v534, %v541
    %v544 = vmul.f32 %v83, %v542
    %545 = vrot.lane.b32.xlu0 %v94, 127
    %v546 = vpop.permute.xlu0 %545
    %547 = vrot.lane.b32.xlu0 %v102, 127
    %v548 = vpop.permute.xlu0 %547
    %549 = vrot.lane.b32.xlu0 %v101, 127
    %v550 = vpop.permute.xlu0 %549
    %551 = vrot.lane.b32.xlu0 %v103, 127
    %v552 = vpop.permute.xlu0 %551
    %vm553 = vcmp.lt.s32.totalorder %v117, 127
    %v554 = vsel %vm553, %v550, %v552
    %v555 = vsel %vm553, %v548, %v550
    %v556 = vsel %vm553, %v546, %v548
    %v557 = vsel %vm553, %v552, %v546
    %v558 = vlaneseq
    %v559 = vshrl.u32 %v558, 7
    %v560 = vsub.s32 5, %v559
    %v561 = vrot.slane %v71, %v560
    %v562 = vlaneseq
    %v563 = vshrl.u32 %v562, 7
    %v564 = vsub.s32 5, %v563
    %v565 = vrot.slane %v72, %v564
    %v566 = vlaneseq
    %v567 = vshrl.u32 %v566, 7
    %v568 = vsub.s32 5, %v567
    %v569 = vrot.slane %v73, %v568
    %v570 = vlaneseq
    %v571 = vshrl.u32 %v570, 7
    %v572 = vsub.s32 5, %v571
    %v573 = vrot.slane %v74, %v572
    %v574 = vmul.f32 %v556, %v561
    %v575 = vmul.f32 %v555, %v565
    %v576 = vmul.f32 %v554, %v569
    %v577 = vmul.f32 %v557, %v573
    %578 = vrot.lane.b32.xlu0 %v94, 126
    %v579 = vpop.permute.xlu0 %578
    %580 = vrot.lane.b32.xlu0 %v102, 126
    %v581 = vpop.permute.xlu0 %580
    %582 = vrot.lane.b32.xlu0 %v101, 126
    %v583 = vpop.permute.xlu0 %582
    %584 = vrot.lane.b32.xlu0 %v103, 126
    %v585 = vpop.permute.xlu0 %584
    %vm586 = vcmp.lt.s32.totalorder %v117, 126
    %v587 = vsel %vm586, %v583, %v585
    %v588 = vsel %vm586, %v581, %v583
    %v589 = vsel %vm586, %v579, %v581
    %v590 = vsel %vm586, %v585, %v579
    %v591 = vlaneseq
    %v592 = vshrl.u32 %v591, 7
    %v593 = vsub.s32 6, %v592
    %v594 = vrot.slane %v71, %v593
    %v595 = vlaneseq
    %v596 = vshrl.u32 %v595, 7
    %v597 = vsub.s32 6, %v596
    %v598 = vrot.slane %v72, %v597
    %v599 = vlaneseq
    %v600 = vshrl.u32 %v599, 7
    %v601 = vsub.s32 6, %v600
    %v602 = vrot.slane %v73, %v601
    %v603 = vlaneseq
    %v604 = vshrl.u32 %v603, 7
    %v605 = vsub.s32 6, %v604
    %v606 = vrot.slane %v74, %v605
    %v607 = vmul.f32 %v589, %v594
    %v608 = vmul.f32 %v588, %v598
    %v609 = vmul.f32 %v587, %v602
    %v610 = vmul.f32 %v590, %v606
    %611 = vrot.lane.b32.xlu0 %v94, 114
    %v612 = vpop.permute.xlu0 %611
    %613 = vrot.lane.b32.xlu0 %v102, 114
    %v614 = vpop.permute.xlu0 %613
    %615 = vrot.lane.b32.xlu0 %v101, 114
    %v616 = vpop.permute.xlu0 %615
    %617 = vrot.lane.b32.xlu0 %v103, 114
    %v618 = vpop.permute.xlu0 %617
    %vm619 = vcmp.lt.s32.totalorder %v117, 114
    %v620 = vsel %vm619, %v616, %v618
    %v621 = vsel %vm619, %v614, %v616
    %v622 = vsel %vm619, %v612, %v614
    %v623 = vsel %vm619, %v618, %v612
    %v624 = vlaneseq
    %v625 = vshrl.u32 %v624, 7
    %v626 = vsub.s32 7, %v625
    %v627 = vrot.slane %v71, %v626
    %v628 = vlaneseq
    %v629 = vshrl.u32 %v628, 7
    %v630 = vsub.s32 7, %v629
    %v631 = vrot.slane %v72, %v630
    %v632 = vlaneseq
    %v633 = vshrl.u32 %v632, 7
    %v634 = vsub.s32 7, %v633
    %v635 = vrot.slane %v73, %v634
    %v636 = vlaneseq
    %v637 = vshrl.u32 %v636, 7
    %v638 = vsub.s32 7, %v637
    %v639 = vrot.slane %v74, %v638
    %v640 = vmul.f32 %v622, %v627
    %v641 = vmul.f32 %v621, %v631
    %v642 = vmul.f32 %v620, %v635
    %v643 = vmul.f32 %v623, %v639
    %644 = vrot.lane.b32.xlu0 %v94, 113
    %v645 = vpop.permute.xlu0 %644
    %646 = vrot.lane.b32.xlu0 %v102, 113
    %v647 = vpop.permute.xlu0 %646
    %648 = vrot.lane.b32.xlu0 %v101, 113
    %v649 = vpop.permute.xlu0 %648
    %650 = vrot.lane.b32.xlu0 %v103, 113
    %v651 = vpop.permute.xlu0 %650
    %vm652 = vcmp.lt.s32.totalorder %v117, 113
    %v653 = vsel %vm652, %v649, %v651
    %v654 = vsel %vm652, %v647, %v649
    %v655 = vsel %vm652, %v645, %v647
    %v656 = vsel %vm652, %v651, %v645
    %v657 = vlaneseq
    %v658 = vshrl.u32 %v657, 7
    %v659 = vsub.s32 0, %v658
    %v660 = vrot.slane %v75, %v659
    %v661 = vlaneseq
    %v662 = vshrl.u32 %v661, 7
    %v663 = vsub.s32 0, %v662
    %v664 = vrot.slane %v76, %v663
    %v665 = vlaneseq
    %v666 = vshrl.u32 %v665, 7
    %v667 = vsub.s32 0, %v666
    %v668 = vrot.slane %v77, %v667
    %v669 = vlaneseq
    %v670 = vshrl.u32 %v669, 7
    %v671 = vsub.s32 0, %v670
    %v672 = vrot.slane %v78, %v671
    %v673 = vmul.f32 %v655, %v660
    %v674 = vmul.f32 %v654, %v664
    %v675 = vmul.f32 %v653, %v668
    %v676 = vmul.f32 %v656, %v672
    %677 = vrot.lane.b32.xlu0 %v94, 112
    %v678 = vpop.permute.xlu0 %677
    %679 = vrot.lane.b32.xlu0 %v102, 112
    %v680 = vpop.permute.xlu0 %679
    %681 = vrot.lane.b32.xlu0 %v101, 112
    %v682 = vpop.permute.xlu0 %681
    %683 = vrot.lane.b32.xlu0 %v103, 112
    %v684 = vpop.permute.xlu0 %683
    %vm685 = vcmp.lt.s32.totalorder %v117, 112
    %v686 = vsel %vm685, %v682, %v684
    %v687 = vsel %vm685, %v680, %v682
    %v688 = vsel %vm685, %v678, %v680
    %v689 = vsel %vm685, %v684, %v678
    %v690 = vlaneseq
    %v691 = vshrl.u32 %v690, 7
    %v692 = vsub.s32 1, %v691
    %v693 = vrot.slane %v75, %v692
    %v694 = vlaneseq
    %v695 = vshrl.u32 %v694, 7
    %v696 = vsub.s32 1, %v695
    %v697 = vrot.slane %v76, %v696
    %v698 = vlaneseq
    %v699 = vshrl.u32 %v698, 7
    %v700 = vsub.s32 1, %v699
    %v701 = vrot.slane %v77, %v700
    %v702 = vlaneseq
    %v703 = vshrl.u32 %v702, 7
    %v704 = vsub.s32 1, %v703
    %v705 = vrot.slane %v78, %v704
    %v706 = vmul.f32 %v688, %v693
    %v707 = vmul.f32 %v687, %v697
    %v708 = vmul.f32 %v686, %v701
    %v709 = vmul.f32 %v689, %v705
    %710 = vrot.lane.b32.xlu0 %v94, 111
    %v711 = vpop.permute.xlu0 %710
    %712 = vrot.lane.b32.xlu0 %v102, 111
    %v713 = vpop.permute.xlu0 %712
    %714 = vrot.lane.b32.xlu0 %v101, 111
    %v715 = vpop.permute.xlu0 %714
    %716 = vrot.lane.b32.xlu0 %v103, 111
    %v717 = vpop.permute.xlu0 %716
    %vm718 = vcmp.lt.s32.totalorder %v117, 111
    %v719 = vsel %vm718, %v715, %v717
    %v720 = vsel %vm718, %v713, %v715
    %v721 = vsel %vm718, %v711, %v713
    %v722 = vsel %vm718, %v717, %v711
    %v723 = vlaneseq
    %v724 = vshrl.u32 %v723, 7
    %v725 = vsub.s32 2, %v724
    %v726 = vrot.slane %v75, %v725
    %v727 = vlaneseq
    %v728 = vshrl.u32 %v727, 7
    %v729 = vsub.s32 2, %v728
    %v730 = vrot.slane %v76, %v729
    %v731 = vlaneseq
    %v732 = vshrl.u32 %v731, 7
    %v733 = vsub.s32 2, %v732
    %v734 = vrot.slane %v77, %v733
    %v735 = vlaneseq
    %v736 = vshrl.u32 %v735, 7
    %v737 = vsub.s32 2, %v736
    %v738 = vrot.slane %v78, %v737
    %v739 = vmul.f32 %v721, %v726
    %v740 = vmul.f32 %v720, %v730
    %v741 = vmul.f32 %v719, %v734
    %v742 = vmul.f32 %v722, %v738
    %743 = vrot.lane.b32.xlu0 %v94, 110
    %v744 = vpop.permute.xlu0 %743
    %745 = vrot.lane.b32.xlu0 %v102, 110
    %v746 = vpop.permute.xlu0 %745
    %747 = vrot.lane.b32.xlu0 %v101, 110
    %v748 = vpop.permute.xlu0 %747
    %749 = vrot.lane.b32.xlu0 %v103, 110
    %v750 = vpop.permute.xlu0 %749
    %vm751 = vcmp.lt.s32.totalorder %v117, 110
    %v752 = vsel %vm751, %v748, %v750
    %v753 = vsel %vm751, %v746, %v748
    %v754 = vsel %vm751, %v744, %v746
    %v755 = vsel %vm751, %v750, %v744
    %v756 = vlaneseq
    %v757 = vshrl.u32 %v756, 7
    %v758 = vsub.s32 3, %v757
    %v759 = vrot.slane %v75, %v758
    %v760 = vlaneseq
    %v761 = vshrl.u32 %v760, 7
    %v762 = vsub.s32 3, %v761
    %v763 = vrot.slane %v76, %v762
    %v764 = vlaneseq
    %v765 = vshrl.u32 %v764, 7
    %v766 = vsub.s32 3, %v765
    %v767 = vrot.slane %v77, %v766
    %v768 = vlaneseq
    %v769 = vshrl.u32 %v768, 7
    %v770 = vsub.s32 3, %v769
    %v771 = vrot.slane %v78, %v770
    %v772 = vmul.f32 %v754, %v759
    %v773 = vmul.f32 %v753, %v763
    %v774 = vmul.f32 %v752, %v767
    %v775 = vmul.f32 %v755, %v771
    %776 = vrot.lane.b32.xlu0 %v94, 98
    %v777 = vpop.permute.xlu0 %776
    %778 = vrot.lane.b32.xlu0 %v102, 98
    %v779 = vpop.permute.xlu0 %778
    %780 = vrot.lane.b32.xlu0 %v101, 98
    %v781 = vpop.permute.xlu0 %780
    %782 = vrot.lane.b32.xlu0 %v103, 98
    %v783 = vpop.permute.xlu0 %782
    %vm784 = vcmp.lt.s32.totalorder %v117, 98
    %v785 = vsel %vm784, %v781, %v783
    %v786 = vsel %vm784, %v779, %v781
    %v787 = vsel %vm784, %v777, %v779
    %v788 = vsel %vm784, %v783, %v777
    %v789 = vlaneseq
    %v790 = vshrl.u32 %v789, 7
    %v791 = vsub.s32 4, %v790
    %v792 = vrot.slane %v75, %v791
    %v793 = vlaneseq
    %v794 = vshrl.u32 %v793, 7
    %v795 = vsub.s32 4, %v794
    %v796 = vrot.slane %v76, %v795
    %v797 = vlaneseq
    %v798 = vshrl.u32 %v797, 7
    %v799 = vsub.s32 4, %v798
    %v800 = vrot.slane %v77, %v799
    %v801 = vlaneseq
    %v802 = vshrl.u32 %v801, 7
    %v803 = vsub.s32 4, %v802
    %v804 = vrot.slane %v78, %v803
    %v805 = vmul.f32 %v787, %v792
    %v806 = vmul.f32 %v786, %v796
    %v807 = vmul.f32 %v785, %v800
    %v808 = vmul.f32 %v788, %v804
    %809 = vrot.lane.b32.xlu0 %v94, 97
    %v810 = vpop.permute.xlu0 %809
    %811 = vrot.lane.b32.xlu0 %v102, 97
    %v812 = vpop.permute.xlu0 %811
    %813 = vrot.lane.b32.xlu0 %v101, 97
    %v814 = vpop.permute.xlu0 %813
    %815 = vrot.lane.b32.xlu0 %v103, 97
    %v816 = vpop.permute.xlu0 %815
    %vm817 = vcmp.lt.s32.totalorder %v117, 97
    %v818 = vsel %vm817, %v814, %v816
    %v819 = vsel %vm817, %v812, %v814
    %v820 = vsel %vm817, %v810, %v812
    %v821 = vsel %vm817, %v816, %v810
    %v822 = vlaneseq
    %v823 = vshrl.u32 %v822, 7
    %v824 = vsub.s32 5, %v823
    %v825 = vrot.slane %v75, %v824
    %v826 = vlaneseq
    %v827 = vshrl.u32 %v826, 7
    %v828 = vsub.s32 5, %v827
    %v829 = vrot.slane %v76, %v828
    %v830 = vlaneseq
    %v831 = vshrl.u32 %v830, 7
    %v832 = vsub.s32 5, %v831
    %v833 = vrot.slane %v77, %v832
    %v834 = vlaneseq
    %v835 = vshrl.u32 %v834, 7
    %v836 = vsub.s32 5, %v835
    %v837 = vrot.slane %v78, %v836
    %v838 = vmul.f32 %v820, %v825
    %v839 = vmul.f32 %v819, %v829
    %v840 = vmul.f32 %v818, %v833
    %v841 = vmul.f32 %v821, %v837
    %842 = vrot.lane.b32.xlu0 %v94, 96
    %v843 = vpop.permute.xlu0 %842
    %844 = vrot.lane.b32.xlu0 %v102, 96
    %v845 = vpop.permute.xlu0 %844
    %846 = vrot.lane.b32.xlu0 %v101, 96
    %v847 = vpop.permute.xlu0 %846
    %848 = vrot.lane.b32.xlu0 %v103, 96
    %v849 = vpop.permute.xlu0 %848
    %vm850 = vcmp.lt.s32.totalorder %v117, 96
    %v851 = vsel %vm850, %v847, %v849
    %v852 = vsel %vm850, %v845, %v847
    %v853 = vsel %vm850, %v843, %v845
    %v854 = vsel %vm850, %v849, %v843
    %v855 = vlaneseq
    %v856 = vshrl.u32 %v855, 7
    %v857 = vsub.s32 6, %v856
    %v858 = vrot.slane %v75, %v857
    %v859 = vlaneseq
    %v860 = vshrl.u32 %v859, 7
    %v861 = vsub.s32 6, %v860
    %v862 = vrot.slane %v76, %v861
    %v863 = vlaneseq
    %v864 = vshrl.u32 %v863, 7
    %v865 = vsub.s32 6, %v864
    %v866 = vrot.slane %v77, %v865
    %v867 = vlaneseq
    %v868 = vshrl.u32 %v867, 7
    %v869 = vsub.s32 6, %v868
    %v870 = vrot.slane %v78, %v869
    %v871 = vmul.f32 %v853, %v858
    %v872 = vmul.f32 %v852, %v862
    %v873 = vmul.f32 %v851, %v866
    %v874 = vmul.f32 %v854, %v870
    %875 = vrot.lane.b32.xlu0 %v94, 95
    %v876 = vpop.permute.xlu0 %875
    %877 = vrot.lane.b32.xlu0 %v102, 95
    %v878 = vpop.permute.xlu0 %877
    %879 = vrot.lane.b32.xlu0 %v101, 95
    %v880 = vpop.permute.xlu0 %879
    %881 = vrot.lane.b32.xlu0 %v103, 95
    %v882 = vpop.permute.xlu0 %881
    %vm883 = vcmp.lt.s32.totalorder %v117, 95
    %v884 = vsel %vm883, %v880, %v882
    %v885 = vsel %vm883, %v878, %v880
    %v886 = vsel %vm883, %v876, %v878
    %v887 = vsel %vm883, %v882, %v876
    %v888 = vlaneseq
    %v889 = vshrl.u32 %v888, 7
    %v890 = vsub.s32 7, %v889
    %v891 = vrot.slane %v75, %v890
    %v892 = vlaneseq
    %v893 = vshrl.u32 %v892, 7
    %v894 = vsub.s32 7, %v893
    %v895 = vrot.slane %v76, %v894
    %v896 = vlaneseq
    %v897 = vshrl.u32 %v896, 7
    %v898 = vsub.s32 7, %v897
    %v899 = vrot.slane %v77, %v898
    %v900 = vlaneseq
    %v901 = vshrl.u32 %v900, 7
    %v902 = vsub.s32 7, %v901
    %v903 = vrot.slane %v78, %v902
    %v904 = vmul.f32 %v886, %v891
    %v905 = vmul.f32 %v885, %v895
    %v906 = vmul.f32 %v884, %v899
    %v907 = vmul.f32 %v887, %v903
    %908 = vrot.lane.b32.xlu0 %v94, 94
    %v909 = vpop.permute.xlu0 %908
    %910 = vrot.lane.b32.xlu0 %v102, 94
    %v911 = vpop.permute.xlu0 %910
    %912 = vrot.lane.b32.xlu0 %v101, 94
    %v913 = vpop.permute.xlu0 %912
    %914 = vrot.lane.b32.xlu0 %v103, 94
    %v915 = vpop.permute.xlu0 %914
    %vm916 = vcmp.lt.s32.totalorder %v117, 94
    %v917 = vsel %vm916, %v913, %v915
    %v918 = vsel %vm916, %v911, %v913
    %v919 = vsel %vm916, %v909, %v911
    %v920 = vsel %vm916, %v915, %v909
    %v921 = vlaneseq
    %v922 = vshrl.u32 %v921, 7
    %v923 = vsub.s32 0, %v922
    %v924 = vrot.slane %v79, %v923
    %v925 = vlaneseq
    %v926 = vshrl.u32 %v925, 7
    %v927 = vsub.s32 0, %v926
    %v928 = vrot.slane %v80, %v927
    %v929 = vlaneseq
    %v930 = vshrl.u32 %v929, 7
    %v931 = vsub.s32 0, %v930
    %v932 = vrot.slane %v81, %v931
    %v933 = vlaneseq
    %v934 = vshrl.u32 %v933, 7
    %v935 = vsub.s32 0, %v934
    %v936 = vrot.slane %v82, %v935
    %v937 = vmul.f32 %v919, %v924
    %v938 = vmul.f32 %v918, %v928
    %v939 = vmul.f32 %v917, %v932
    %v940 = vmul.f32 %v920, %v936
    %v945 = vrot.slane %v172, 6
    %v946 = vrot.slane %v173, 6
    %v947 = vrot.slane %v174, 6
    %v948 = vrot.slane %v175, 6
    %v957 = vrot.slane %v205, 4
    %v958 = vrot.slane %v206, 4
    %v959 = vrot.slane %v207, 4
    %v960 = vrot.slane %v208, 4
    %v969 = vrot.slane %v238, 2
    %v970 = vrot.slane %v239, 2
    %v971 = vrot.slane %v240, 2
    %v972 = vrot.slane %v241, 2
    %v981 = vrot.slane %v304, 6
    %v982 = vrot.slane %v305, 6
    %v983 = vrot.slane %v306, 6
    %v984 = vrot.slane %v307, 6
    %v993 = vrot.slane %v337, 4
    %v994 = vrot.slane %v338, 4
    %v995 = vrot.slane %v339, 4
    %v996 = vrot.slane %v340, 4
    %v1005 = vrot.slane %v370, 2
    %v1006 = vrot.slane %v371, 2
    %v1007 = vrot.slane %v372, 2
    %v1008 = vrot.slane %v373, 2
    %v1017 = vrot.slane %v436, 6
    %v1018 = vrot.slane %v437, 6
    %v1019 = vrot.slane %v438, 6
    %v1020 = vrot.slane %v439, 6
    %v1029 = vrot.slane %v469, 4
    %v1030 = vrot.slane %v470, 4
    %v1031 = vrot.slane %v471, 4
    %v1032 = vrot.slane %v472, 4
    %v1041 = vrot.slane %v502, 2
    %v1042 = vrot.slane %v503, 2
    %v1043 = vrot.slane %v504, 2
    %v1044 = vrot.slane %v505, 2
    %v1050 = vcombine.high %v544, %v544
    %v1052 = vunpack.c.l.s4 1983009808
    %v1053 = vunpack.c.0.s8 %v1052
    %v1054 = vlaneseq
    %v1055 = vshrl.u32 %v1054, 7
    %v1056 = vsub.s32 %v1053, %v1055
    %v1057 = vrot.slane %v544, %v1056
    %v1059 = vunpack.c.l.s4 1983009808
    %v1060 = vunpack.c.0.s8 %v1059
    %v1061 = vlaneseq
    %v1062 = vshrl.u32 %v1061, 7
    %v1063 = vsub.s32 %v1060, %v1062
    %v1064 = vrot.slane %v1050, %v1063
    %v1065 = vcombine.high %v1057, %v1057
    %v1066 = vcombine.high %v1064, %v1064
    %v1075 = vrot.slane %v574, 6
    %v1076 = vrot.slane %v575, 6
    %v1077 = vrot.slane %v576, 6
    %v1078 = vrot.slane %v577, 6
    %v1087 = vrot.slane %v607, 4
    %v1088 = vrot.slane %v608, 4
    %v1089 = vrot.slane %v609, 4
    %v1090 = vrot.slane %v610, 4
    %v1099 = vrot.slane %v640, 2
    %v1100 = vrot.slane %v641, 2
    %v1101 = vrot.slane %v642, 2
    %v1102 = vrot.slane %v643, 2
    %vm1107 = vcmask 1041408
    %v1108 = vsel %vm1107, %v139, %v945
    %v1109 = vsel %vm1107, %v140, %v946
    %v1110 = vsel %vm1107, %v141, %v947
    %v1111 = vsel %vm1107, %v142, %v948
    %vm1112 = vcmask 1043456
    %v1113 = vsel %vm1112, %v1108, %v957
    %v1114 = vsel %vm1112, %v1109, %v958
    %v1115 = vsel %vm1112, %v1110, %v959
    %v1116 = vsel %vm1112, %v1111, %v960
    %vm1117 = vcmask 1045504
    %v1118 = vsel %vm1117, %v1113, %v969
    %v1119 = vsel %vm1117, %v1114, %v970
    %v1120 = vsel %vm1117, %v1115, %v971
    %v1121 = vsel %vm1117, %v1116, %v972
    %v1122 = vsel %vm1107, %v271, %v981
    %v1123 = vsel %vm1107, %v272, %v982
    %v1124 = vsel %vm1107, %v273, %v983
    %v1125 = vsel %vm1107, %v274, %v984
    %v1126 = vsel %vm1112, %v1122, %v993
    %v1127 = vsel %vm1112, %v1123, %v994
    %v1128 = vsel %vm1112, %v1124, %v995
    %v1129 = vsel %vm1112, %v1125, %v996
    %v1130 = vsel %vm1117, %v1126, %v1005
    %v1131 = vsel %vm1117, %v1127, %v1006
    %v1132 = vsel %vm1117, %v1128, %v1007
    %v1133 = vsel %vm1117, %v1129, %v1008
    %v1134 = vsel %vm1107, %v403, %v1017
    %v1135 = vsel %vm1107, %v404, %v1018
    %v1136 = vsel %vm1107, %v405, %v1019
    %v1137 = vsel %vm1107, %v406, %v1020
    %v1138 = vsel %vm1112, %v1134, %v1029
    %v1139 = vsel %vm1112, %v1135, %v1030
    %v1140 = vsel %vm1112, %v1136, %v1031
    %v1141 = vsel %vm1112, %v1137, %v1032
    %v1142 = vsel %vm1117, %v1138, %v1041
    %v1143 = vsel %vm1117, %v1139, %v1042
    %v1144 = vsel %vm1117, %v1140, %v1043
    %v1145 = vsel %vm1117, %v1141, %v1044
    %v1146 = vsel %vm1107, %v1057, %v1075
    %v1147 = vsel %vm1107, %v1065, %v1076
    %v1148 = vsel %vm1107, %v1064, %v1077
    %v1149 = vsel %vm1107, %v1066, %v1078
    %v1150 = vsel %vm1112, %v1146, %v1087
    %v1151 = vsel %vm1112, %v1147, %v1088
    %v1152 = vsel %vm1112, %v1148, %v1089
    %v1153 = vsel %vm1112, %v1149, %v1090
    %v1154 = vsel %vm1117, %v1150, %v1099
    %v1155 = vsel %vm1117, %v1151, %v1100
    %v1156 = vsel %vm1117, %v1152, %v1101
    %v1157 = vsel %vm1117, %v1153, %v1102
    %v1162 = vrot.slane %v706, 6
    %v1163 = vrot.slane %v707, 6
    %v1164 = vrot.slane %v708, 6
    %v1165 = vrot.slane %v709, 6
    %v1174 = vrot.slane %v739, 4
    %v1175 = vrot.slane %v740, 4
    %v1176 = vrot.slane %v741, 4
    %v1177 = vrot.slane %v742, 4
    %v1186 = vrot.slane %v772, 2
    %v1187 = vrot.slane %v773, 2
    %v1188 = vrot.slane %v774, 2
    %v1189 = vrot.slane %v775, 2
    %v1198 = vrot.slane %v838, 6
    %v1199 = vrot.slane %v839, 6
    %v1200 = vrot.slane %v840, 6
    %v1201 = vrot.slane %v841, 6
    %v1210 = vrot.slane %v871, 4
    %v1211 = vrot.slane %v872, 4
    %v1212 = vrot.slane %v873, 4
    %v1213 = vrot.slane %v874, 4
    %v1222 = vrot.slane %v904, 2
    %v1223 = vrot.slane %v905, 2
    %v1224 = vrot.slane %v906, 2
    %v1225 = vrot.slane %v907, 2
    %v1230 = vsel %vm1107, %v673, %v1162
    %v1231 = vsel %vm1107, %v674, %v1163
    %v1232 = vsel %vm1107, %v675, %v1164
    %v1233 = vsel %vm1107, %v676, %v1165
    %v1234 = vsel %vm1112, %v1230, %v1174
    %v1235 = vsel %vm1112, %v1231, %v1175
    %v1236 = vsel %vm1112, %v1232, %v1176
    %v1237 = vsel %vm1112, %v1233, %v1177
    %v1238 = vsel %vm1117, %v1234, %v1186
    %v1239 = vsel %vm1117, %v1235, %v1187
    %v1240 = vsel %vm1117, %v1236, %v1188
    %v1241 = vsel %vm1117, %v1237, %v1189
    %v1242 = vsel %vm1107, %v805, %v1198
    %v1243 = vsel %vm1107, %v806, %v1199
    %v1244 = vsel %vm1107, %v807, %v1200
    %v1245 = vsel %vm1107, %v808, %v1201
    %v1246 = vsel %vm1112, %v1242, %v1210
    %v1247 = vsel %vm1112, %v1243, %v1211
    %v1248 = vsel %vm1112, %v1244, %v1212
    %v1249 = vsel %vm1112, %v1245, %v1213
    %v1250 = vsel %vm1117, %v1246, %v1222
    %v1251 = vsel %vm1117, %v1247, %v1223
    %v1252 = vsel %vm1117, %v1248, %v1224
    %v1253 = vsel %vm1117, %v1249, %v1225
    %v1254 = vld [vmem:[%s2] sm:$0xff]
    %v1255 = vld [vmem:[%s2 + $0x8] sm:$0xff]
    %v1256 = vld [vmem:[%s2 + $0x10] sm:$0xff]
    %v1257 = vld [vmem:[%s2 + $0x18] sm:$0xff]
    %v1258 = vld [vmem:[%s5] sm:$0xff]
    %v1259 = vld [vmem:[%s5 + $0x8] sm:$0xff]
    %v1260 = vld [vmem:[%s5 + $0x10] sm:$0xff]
    %v1261 = vld [vmem:[%s5 + $0x18] sm:$0xff]
    %1263 = vset.pattern.permute.xlu0 0
    %1264 = vperm.xlu0 %1263, %v1258
    %v1265 = vpop.permute.xlu0 %1264
    %1268 = vset.pattern.permute.xlu0 0
    %1269 = vperm.xlu0 %1268, %v1259
    %v1270 = vpop.permute.xlu0 %1269
    %1273 = vset.pattern.permute.xlu0 0
    %1274 = vperm.xlu0 %1273, %v1260
    %v1275 = vpop.permute.xlu0 %1274
    %1278 = vset.pattern.permute.xlu0 0
    %1279 = vperm.xlu0 %1278, %v1261
    %v1280 = vpop.permute.xlu0 %1279
    %vm1282 = vcmask 408576
    %v1284 = vsel %vm1282, %v1254, 0
    %v1287 = vsel %vm1282, %v1255, 0
    %v1290 = vsel %vm1282, %v1256, 0
    %v1293 = vsel %vm1282, %v1257, 0
    %v1296 = vsel %vm1107, %v937, 0
    %v1299 = vsel %vm1107, %v938, 0
    %v1302 = vsel %vm1107, %v939, 0
    %v1305 = vsel %vm1107, %v940, 0
    %1307 = vmatprep.subr.mxu0 %v1119
    %1308 = vmatpush1.msra.mxu0 %v1118
    %1309 = vmatprep.subr.mxu0 %v1131
    %1310 = vmatpush1.msra.mxu0 %v1130
    %1311 = vmatprep.subr.mxu0 %v1143
    %1312 = vmatpush1.msra.mxu0 %v1142
    %1313 = vmatprep.subr.mxu0 %v1155
    %1314 = vmatpush1.msra.mxu0 %v1154
    %1315 = vmatprep.subr.mxu0 %v1239
    %1316 = vmatpush1.msra.mxu0 %v1238
    %1317 = vmatprep.subr.mxu0 %v1251
    %1318 = vmatpush1.msra.mxu0 %v1250
    %1319 = vmatprep.subr.mxu0 %v1299
    %1320 = vmatpush1.msra.mxu0 %v1296
    %1321 = vmatprep.subr.mxu0 0.0
    %1322 = vmatpush1.msra.mxu0 0.0
    %1323 = vmatprep.subr.mxu0 0.0
    %1324 = vmatpush1.msra.mxu0 0.0
    %1325 = vmatprep.subr.mxu0 0.0
    %1326 = vmatpush1.msra.mxu0 0.0
    %1327 = vmatprep.subr.mxu0 0.0
    %1328 = vmatpush1.msra.mxu0 0.0
    %1329 = vmatprep.subr.mxu0 0.0
    %1330 = vmatpush1.msra.mxu0 0.0
    %1331 = vmatprep.subr.mxu0 0.0
    %1332 = vmatpush1.msra.mxu0 0.0
    %1333 = vmatprep.subr.mxu0 0.0
    %1334 = vmatpush1.msra.mxu0 0.0
    %1335 = vmatprep.subr.mxu0 0.0
    %1336 = vmatpush1.msra.mxu0 0.0
    %1337 = vmatprep.subr.mxu0 0.0
    %1338 = vmatpush1.msra.mxu0 0.0
    %1339 = vmatprep.subr.mxu0 0.0
    %1340 = vmatpush1.msra.mxu0 0.0
    %1341 = vmatprep.subr.mxu0 0.0
    %1342 = vmatpush1.msra.mxu0 0.0
    %1343 = vmatprep.subr.mxu0 0.0
    %1344 = vmatpush1.msra.mxu0 0.0
    %1345 = vmatprep.subr.mxu0 0.0
    %1346 = vmatpush1.msra.mxu0 0.0
    %1347 = vmatprep.subr.mxu0 0.0
    %1348 = vmatpush1.msra.mxu0 0.0
    %1349 = vmatprep.subr.mxu0 0.0
    %1350 = vmatpush1.msra.mxu0 0.0
    %1351 = vmatprep.subr.mxu0 0.0
    %1352 = vmatpush1.msra.mxu0 0.0
    %1353 = vmatprep.subr.mxu0 0.0
    %1354 = vmatpush1.msra.mxu0 0.0
    %1355 = vmatprep.subr.mxu0 0.0
    %1356 = vmatpush1.msra.mxu0 0.0
    %1357 = vmatprep.subr.mxu0 0.0
    %1358 = vmatpush1.msra.mxu0 0.0
    %1359 = vmatprep.subr.mxu0 0.0
    %1360 = vmatpush1.msra.mxu0 0.0
    %1361 = vmatprep.subr.mxu0 0.0
    %1362 = vmatpush1.msra.mxu0 0.0
    %1363 = vmatprep.subr.mxu0 0.0
    %1364 = vmatpush1.msra.mxu0 0.0
    %1365 = vmatprep.subr.mxu0 0.0
    %1366 = vmatpush1.msra.mxu0 0.0
    %1367 = vmatprep.subr.mxu0 0.0
    %1368 = vmatpush1.msra.mxu0 0.0
    %1369 = vmatprep.subr.mxu0 0.0
    %1370 = vmatpush1.msra.mxu0 0.0
    %1371 = vmatprep.mubr.f32.mxu0 0.0
    %1372 = vmatmul.mubr.f32.gmra.mrb[0].mxu0 %v1284
    %v1373 = vpop.f32.mrb[0].mxu0
    %v1374 = vadd.f32 %v1265, %v1373
    %v1375 = vpop.f32.mrb[0].mxu0
    %v1376 = vadd.f32 %v1265, %v1375
    %1377 = vmatprep.mubr.f32.mxu0 0.0
    %1378 = vmatmul.mubr.f32.gmra.mrb[0].mxu0 %v1287
    %v1379 = vpop.f32.mrb[0].mxu0
    %v1380 = vadd.f32 %v1270, %v1379
    %v1381 = vpop.f32.mrb[0].mxu0
    %v1382 = vadd.f32 %v1270, %v1381
    %1383 = vmatprep.mubr.f32.mxu0 0.0
    %1384 = vmatmul.mubr.f32.gmra.mrb[0].mxu0 %v1290
    %v1385 = vpop.f32.mrb[0].mxu0
    %v1386 = vadd.f32 %v1275, %v1385
    %v1387 = vpop.f32.mrb[0].mxu0
    %v1388 = vadd.f32 %v1275, %v1387
    %1389 = vmatprep.mubr.f32.mxu0 0.0
    %1390 = vmatmul.mubr.f32.gmra.mrb[0].mxu0 %v1293
    %v1391 = vpop.f32.mrb[0].mxu0
    %v1392 = vadd.f32 %v1280, %v1391
    %v1393 = vpop.f32.mrb[0].mxu0
    %v1394 = vadd.f32 %v1280, %v1393
    %1395 = vdwg.mxu0
    %1396 = vmatprep.subr.mxu0 %v1121
    %1397 = vmatpush1.msra.mxu0 %v1120
    %1398 = vmatprep.subr.mxu0 %v1133
    %1399 = vmatpush1.msra.mxu0 %v1132
    %1400 = vmatprep.subr.mxu0 %v1145
    %1401 = vmatpush1.msra.mxu0 %v1144
    %1402 = vmatprep.subr.mxu0 %v1157
    %1403 = vmatpush1.msra.mxu0 %v1156
    %1404 = vmatprep.subr.mxu0 %v1241
    %1405 = vmatpush1.msra.mxu0 %v1240
    %1406 = vmatprep.subr.mxu0 %v1253
    %1407 = vmatpush1.msra.mxu0 %v1252
    %1408 = vmatprep.subr.mxu0 %v1305
    %1409 = vmatpush1.msra.mxu0 %v1302
    %1410 = vmatprep.subr.mxu0 0.0
    %1411 = vmatpush1.msra.mxu0 0.0
    %1412 = vmatprep.subr.mxu0 0.0
    %1413 = vmatpush1.msra.mxu0 0.0
    %1414 = vmatprep.subr.mxu0 0.0
    %1415 = vmatpush1.msra.mxu0 0.0
    %1416 = vmatprep.subr.mxu0 0.0
    %1417 = vmatpush1.msra.mxu0 0.0
    %1418 = vmatprep.subr.mxu0 0.0
    %1419 = vmatpush1.msra.mxu0 0.0
    %1420 = vmatprep.subr.mxu0 0.0
    %1421 = vmatpush1.msra.mxu0 0.0
    %1422 = vmatprep.subr.mxu0 0.0
    %1423 = vmatpush1.msra.mxu0 0.0
    %1424 = vmatprep.subr.mxu0 0.0
    %1425 = vmatpush1.msra.mxu0 0.0
    %1426 = vmatprep.subr.mxu0 0.0
    %1427 = vmatpush1.msra.mxu0 0.0
    %1428 = vmatprep.subr.mxu0 0.0
    %1429 = vmatpush1.msra.mxu0 0.0
    %1430 = vmatprep.subr.mxu0 0.0
    %1431 = vmatpush1.msra.mxu0 0.0
    %1432 = vmatprep.subr.mxu0 0.0
    %1433 = vmatpush1.msra.mxu0 0.0
    %1434 = vmatprep.subr.mxu0 0.0
    %1435 = vmatpush1.msra.mxu0 0.0
    %1436 = vmatprep.subr.mxu0 0.0
    %1437 = vmatpush1.msra.mxu0 0.0
    %1438 = vmatprep.subr.mxu0 0.0
    %1439 = vmatpush1.msra.mxu0 0.0
    %1440 = vmatprep.subr.mxu0 0.0
    %1441 = vmatpush1.msra.mxu0 0.0
    %1442 = vmatprep.subr.mxu0 0.0
    %1443 = vmatpush1.msra.mxu0 0.0
    %1444 = vmatprep.subr.mxu0 0.0
    %1445 = vmatpush1.msra.mxu0 0.0
    %1446 = vmatprep.subr.mxu0 0.0
    %1447 = vmatpush1.msra.mxu0 0.0
    %1448 = vmatprep.subr.mxu0 0.0
    %1449 = vmatpush1.msra.mxu0 0.0
    %1450 = vmatprep.subr.mxu0 0.0
    %1451 = vmatpush1.msra.mxu0 0.0
    %1452 = vmatprep.subr.mxu0 0.0
    %1453 = vmatpush1.msra.mxu0 0.0
    %1454 = vmatprep.subr.mxu0 0.0
    %1455 = vmatpush1.msra.mxu0 0.0
    %1456 = vmatprep.subr.mxu0 0.0
    %1457 = vmatpush1.msra.mxu0 0.0
    %1458 = vmatprep.subr.mxu0 0.0
    %1459 = vmatpush1.msra.mxu0 0.0
    %1460 = vmatprep.mubr.f32.mxu0 0.0
    %1461 = vmatmul.mubr.f32.gmra.mrb[0].mxu0 %v1284
    %v1462 = vpop.f32.mrb[0].mxu0
    %v1463 = vadd.f32 %v1265, %v1462
    %v1464 = vpop.f32.mrb[0].mxu0
    %v1465 = vadd.f32 %v1265, %v1464
    %1466 = vmatprep.mubr.f32.mxu0 0.0
    %1467 = vmatmul.mubr.f32.gmra.mrb[0].mxu0 %v1287
    %v1468 = vpop.f32.mrb[0].mxu0
    %v1469 = vadd.f32 %v1270, %v1468
    %v1470 = vpop.f32.mrb[0].mxu0
    %v1471 = vadd.f32 %v1270, %v1470
    %1472 = vmatprep.mubr.f32.mxu0 0.0
    %1473 = vmatmul.mubr.f32.gmra.mrb[0].mxu0 %v1290
    %v1474 = vpop.f32.mrb[0].mxu0
    %v1475 = vadd.f32 %v1275, %v1474
    %v1476 = vpop.f32.mrb[0].mxu0
    %v1477 = vadd.f32 %v1275, %v1476
    %1478 = vmatprep.mubr.f32.mxu0 0.0
    %1479 = vmatmul.mubr.f32.gmra.mrb[0].mxu0 %v1293
    %v1480 = vpop.f32.mrb[0].mxu0
    %v1481 = vadd.f32 %v1280, %v1480
    %v1482 = vpop.f32.mrb[0].mxu0
    %v1483 = vadd.f32 %v1280, %v1482
    %1484 = vdwg.mxu0
    %vm1485 = vcmp.ge.f32.partialorder %v1374, 0.0
    %vm1486 = vcmp.ge.f32.partialorder %v1376, 0.0
    %vm1487 = vcmp.ge.f32.partialorder %v1463, 0.0
    %vm1488 = vcmp.ge.f32.partialorder %v1465, 0.0
    %vm1489 = vcmp.ge.f32.partialorder %v1380, 0.0
    %vm1490 = vcmp.ge.f32.partialorder %v1382, 0.0
    %vm1491 = vcmp.ge.f32.partialorder %v1469, 0.0
    %vm1492 = vcmp.ge.f32.partialorder %v1471, 0.0
    %vm1493 = vcmp.ge.f32.partialorder %v1386, 0.0
    %vm1494 = vcmp.ge.f32.partialorder %v1388, 0.0
    %vm1495 = vcmp.ge.f32.partialorder %v1475, 0.0
    %vm1496 = vcmp.ge.f32.partialorder %v1477, 0.0
    %vm1497 = vcmp.ge.f32.partialorder %v1392, 0.0
    %vm1498 = vcmp.ge.f32.partialorder %v1394, 0.0
    %vm1499 = vcmp.ge.f32.partialorder %v1481, 0.0
    %vm1500 = vcmp.ge.f32.partialorder %v1483, 0.0
    %v1501 = vstv %s84
    %v1502 = vmul.f32 %v1501, %v1374
    %v1503 = vmul.f32 %v1501, %v1376
    %v1504 = vmul.f32 %v1501, %v1463
    %v1505 = vmul.f32 %v1501, %v1465
    %v1506 = vmul.f32 %v1501, %v1380
    %v1507 = vmul.f32 %v1501, %v1382
    %v1508 = vmul.f32 %v1501, %v1469
    %v1509 = vmul.f32 %v1501, %v1471
    %v1510 = vmul.f32 %v1501, %v1386
    %v1511 = vmul.f32 %v1501, %v1388
    %v1512 = vmul.f32 %v1501, %v1475
    %v1513 = vmul.f32 %v1501, %v1477
    %v1514 = vmul.f32 %v1501, %v1392
    %v1515 = vmul.f32 %v1501, %v1394
    %v1516 = vmul.f32 %v1501, %v1481
    %v1517 = vmul.f32 %v1501, %v1483
    %v1518 = vsel %vm1485, %v1374, %v1502
    %v1519 = vsel %vm1486, %v1376, %v1503
    %v1520 = vsel %vm1487, %v1463, %v1504
    %v1521 = vsel %vm1488, %v1465, %v1505
    %v1522 = vsel %vm1489, %v1380, %v1506
    %v1523 = vsel %vm1490, %v1382, %v1507
    %v1524 = vsel %vm1491, %v1469, %v1508
    %v1525 = vsel %vm1492, %v1471, %v1509
    %v1526 = vsel %vm1493, %v1386, %v1510
    %v1527 = vsel %vm1494, %v1388, %v1511
    %v1528 = vsel %vm1495, %v1475, %v1512
    %v1529 = vsel %vm1496, %v1477, %v1513
    %v1530 = vsel %vm1497, %v1392, %v1514
    %v1531 = vsel %vm1498, %v1394, %v1515
    %v1532 = vsel %vm1499, %v1481, %v1516
    %v1533 = vsel %vm1500, %v1483, %v1517
    %1534 = vrot.lane.b32.xlu0 %v1518, 34
    %v1535 = vpop.permute.xlu0 %1534
    %1536 = vrot.lane.b32.xlu0 %v1522, 34
    %v1537 = vpop.permute.xlu0 %1536
    %1538 = vrot.lane.b32.xlu0 %v1526, 34
    %v1539 = vpop.permute.xlu0 %1538
    %1540 = vrot.lane.b32.xlu0 %v1530, 34
    %v1541 = vpop.permute.xlu0 %1540
    %1542 = vrot.lane.b32.xlu0 %v1519, 34
    %v1543 = vpop.permute.xlu0 %1542
    %1544 = vrot.lane.b32.xlu0 %v1523, 34
    %v1545 = vpop.permute.xlu0 %1544
    %1546 = vrot.lane.b32.xlu0 %v1527, 34
    %v1547 = vpop.permute.xlu0 %1546
    %1548 = vrot.lane.b32.xlu0 %v1531, 34
    %v1549 = vpop.permute.xlu0 %1548
    %1550 = vrot.lane.b32.xlu0 %v1520, 34
    %v1551 = vpop.permute.xlu0 %1550
    %1552 = vrot.lane.b32.xlu0 %v1524, 34
    %v1553 = vpop.permute.xlu0 %1552
    %1554 = vrot.lane.b32.xlu0 %v1528, 34
    %v1555 = vpop.permute.xlu0 %1554
    %1556 = vrot.lane.b32.xlu0 %v1532, 34
    %v1557 = vpop.permute.xlu0 %1556
    %1558 = vrot.lane.b32.xlu0 %v1521, 34
    %v1559 = vpop.permute.xlu0 %1558
    %1560 = vrot.lane.b32.xlu0 %v1525, 34
    %v1561 = vpop.permute.xlu0 %1560
    %1562 = vrot.lane.b32.xlu0 %v1529, 34
    %v1563 = vpop.permute.xlu0 %1562
    %1564 = vrot.lane.b32.xlu0 %v1533, 34
    %v1565 = vpop.permute.xlu0 %1564
    %v1566 = vsel %vm118, %v1551, %v1559
    %v1567 = vsel %vm118, %v1553, %v1561
    %v1568 = vsel %vm118, %v1555, %v1563
    %v1569 = vsel %vm118, %v1557, %v1565
    %v1570 = vsel %vm118, %v1543, %v1551
    %v1571 = vsel %vm118, %v1545, %v1553
    %v1572 = vsel %vm118, %v1547, %v1555
    %v1573 = vsel %vm118, %v1549, %v1557
    %v1574 = vsel %vm118, %v1535, %v1543
    %v1575 = vsel %vm118, %v1537, %v1545
    %v1576 = vsel %vm118, %v1539, %v1547
    %v1577 = vsel %vm118, %v1541, %v1549
    %v1578 = vsel %vm118, %v1559, %v1535
    %v1579 = vsel %vm118, %v1561, %v1537
    %v1580 = vsel %vm118, %v1563, %v1539
    %v1581 = vsel %vm118, %v1565, %v1541
    %v1582 = vmul.f32 %v1578, %v126
    %v1583 = vmul.f32 %v1574, %v130
    %v1584 = vmul.f32 %v1570, %v134
    %v1585 = vmul.f32 %v1566, %v138
    %v1586 = vmul.f32 %v1579, %v126
    %v1587 = vmul.f32 %v1575, %v130
    %v1588 = vmul.f32 %v1571, %v134
    %v1589 = vmul.f32 %v1567, %v138
    %v1590 = vmul.f32 %v1580, %v126
    %v1591 = vmul.f32 %v1576, %v130
    %v1592 = vmul.f32 %v1572, %v134
    %v1593 = vmul.f32 %v1568, %v138
    %v1594 = vmul.f32 %v1581, %v126
    %v1595 = vmul.f32 %v1577, %v130
    %v1596 = vmul.f32 %v1573, %v134
    %v1597 = vmul.f32 %v1569, %v138
    %1598 = vst [vmem:[#allocation2] sm:$0xff] %v1582
    %1599 = vst [vmem:[#allocation2 + $0x8] sm:$0xff] %v1583
    %1600 = vst [vmem:[#allocation2 + $0x10] sm:$0xff] %v1584
    %1601 = vst [vmem:[#allocation2 + $0x18] sm:$0xff] %v1585
    %1602 = vst [vmem:[#allocation2 + $0x20] sm:$0xff] %v1586
    %1603 = vst [vmem:[#allocation2 + $0x28] sm:$0xff] %v1587
    %1604 = vst [vmem:[#allocation2 + $0x30] sm:$0xff] %v1588
    %1605 = vst [vmem:[#allocation2 + $0x38] sm:$0xff] %v1589
    %1606 = vst [vmem:[#allocation2 + $0x40] sm:$0xff] %v1590
    %1607 = vst [vmem:[#allocation2 + $0x48] sm:$0xff] %v1591
    %1608 = vst [vmem:[#allocation2 + $0x50] sm:$0xff] %v1592
    %1609 = vst [vmem:[#allocation2 + $0x58] sm:$0xff] %v1593
    %1610 = vst [vmem:[#allocation2 + $0x60] sm:$0xff] %v1594
    %1611 = vst [vmem:[#allocation2 + $0x68] sm:$0xff] %v1595
    %1612 = vst [vmem:[#allocation2 + $0x70] sm:$0xff] %v1596
    %1613 = vst [vmem:[#allocation2 + $0x78] sm:$0xff] %v1597
    %1614 = vrot.lane.b32.xlu0 %v1518, 33
    %v1615 = vpop.permute.xlu0 %1614
    %1616 = vrot.lane.b32.xlu0 %v1522, 33
    %v1617 = vpop.permute.xlu0 %1616
    %1618 = vrot.lane.b32.xlu0 %v1526, 33
    %v1619 = vpop.permute.xlu0 %1618
    %1620 = vrot.lane.b32.xlu0 %v1530, 33
    %v1621 = vpop.permute.xlu0 %1620
    %1622 = vrot.lane.b32.xlu0 %v1519, 33
    %v1623 = vpop.permute.xlu0 %1622
    %1624 = vrot.lane.b32.xlu0 %v1523, 33
    %v1625 = vpop.permute.xlu0 %1624
    %1626 = vrot.lane.b32.xlu0 %v1527, 33
    %v1627 = vpop.permute.xlu0 %1626
    %1628 = vrot.lane.b32.xlu0 %v1531, 33
    %v1629 = vpop.permute.xlu0 %1628
    %1630 = vrot.lane.b32.xlu0 %v1520, 33
    %v1631 = vpop.permute.xlu0 %1630
    %1632 = vrot.lane.b32.xlu0 %v1524, 33
    %v1633 = vpop.permute.xlu0 %1632
    %1634 = vrot.lane.b32.xlu0 %v1528, 33
    %v1635 = vpop.permute.xlu0 %1634
    %1636 = vrot.lane.b32.xlu0 %v1532, 33
    %v1637 = vpop.permute.xlu0 %1636
    %1638 = vrot.lane.b32.xlu0 %v1521, 33
    %v1639 = vpop.permute.xlu0 %1638
    %1640 = vrot.lane.b32.xlu0 %v1525, 33
    %v1641 = vpop.permute.xlu0 %1640
    %1642 = vrot.lane.b32.xlu0 %v1529, 33
    %v1643 = vpop.permute.xlu0 %1642
    %1644 = vrot.lane.b32.xlu0 %v1533, 33
    %v1645 = vpop.permute.xlu0 %1644
    %v1646 = vsel %vm151, %v1631, %v1639
    %v1647 = vsel %vm151, %v1633, %v1641
    %v1648 = vsel %vm151, %v1635, %v1643
    %v1649 = vsel %vm151, %v1637, %v1645
    %v1650 = vsel %vm151, %v1623, %v1631
    %v1651 = vsel %vm151, %v1625, %v1633
    %v1652 = vsel %vm151, %v1627, %v1635
    %v1653 = vsel %vm151, %v1629, %v1637
    %v1654 = vsel %vm151, %v1615, %v1623
    %v1655 = vsel %vm151, %v1617, %v1625
    %v1656 = vsel %vm151, %v1619, %v1627
    %v1657 = vsel %vm151, %v1621, %v1629
    %v1658 = vsel %vm151, %v1639, %v1615
    %v1659 = vsel %vm151, %v1641, %v1617
    %v1660 = vsel %vm151, %v1643, %v1619
    %v1661 = vsel %vm151, %v1645, %v1621
    %v1662 = vmul.f32 %v1658, %v159
    %v1663 = vmul.f32 %v1654, %v163
    %v1664 = vmul.f32 %v1650, %v167
    %v1665 = vmul.f32 %v1646, %v171
    %v1666 = vmul.f32 %v1659, %v159
    %v1667 = vmul.f32 %v1655, %v163
    %v1668 = vmul.f32 %v1651, %v167
    %v1669 = vmul.f32 %v1647, %v171
    %v1670 = vmul.f32 %v1660, %v159
    %v1671 = vmul.f32 %v1656, %v163
    %v1672 = vmul.f32 %v1652, %v167
    %v1673 = vmul.f32 %v1648, %v171
    %v1674 = vmul.f32 %v1661, %v159
    %v1675 = vmul.f32 %v1657, %v163
    %v1676 = vmul.f32 %v1653, %v167
    %v1677 = vmul.f32 %v1649, %v171
    %1678 = vst [vmem:[#allocation2 + $0x80] sm:$0xff] %v1662
    %1679 = vst [vmem:[#allocation2 + $0x88] sm:$0xff] %v1663
    %1680 = vst [vmem:[#allocation2 + $0x90] sm:$0xff] %v1664
    %1681 = vst [vmem:[#allocation2 + $0x98] sm:$0xff] %v1665
    %1682 = vst [vmem:[#allocation2 + $0xa0] sm:$0xff] %v1666
    %1683 = vst [vmem:[#allocation2 + $0xa8] sm:$0xff] %v1667
    %1684 = vst [vmem:[#allocation2 + $0xb0] sm:$0xff] %v1668
    %1685 = vst [vmem:[#allocation2 + $0xb8] sm:$0xff] %v1669
    %1686 = vst [vmem:[#allocation2 + $0xc0] sm:$0xff] %v1670
    %1687 = vst [vmem:[#allocation2 + $0xc8] sm:$0xff] %v1671
    %1688 = vst [vmem:[#allocation2 + $0xd0] sm:$0xff] %v1672
    %1689 = vst [vmem:[#allocation2 + $0xd8] sm:$0xff] %v1673
    %1690 = vst [vmem:[#allocation2 + $0xe0] sm:$0xff] %v1674
    %1691 = vst [vmem:[#allocation2 + $0xe8] sm:$0xff] %v1675
    %1692 = vst [vmem:[#allocation2 + $0xf0] sm:$0xff] %v1676
    %1693 = vst [vmem:[#allocation2 + $0xf8] sm:$0xff] %v1677
    %1694 = vrot.lane.b32.xlu0 %v1518, 32
    %v1695 = vpop.permute.xlu0 %1694
    %1696 = vrot.lane.b32.xlu0 %v1522, 32
    %v1697 = vpop.permute.xlu0 %1696
    %1698 = vrot.lane.b32.xlu0 %v1526, 32
    %v1699 = vpop.permute.xlu0 %1698
    %1700 = vrot.lane.b32.xlu0 %v1530, 32
    %v1701 = vpop.permute.xlu0 %1700
    %1702 = vrot.lane.b32.xlu0 %v1519, 32
    %v1703 = vpop.permute.xlu0 %1702
    %1704 = vrot.lane.b32.xlu0 %v1523, 32
    %v1705 = vpop.permute.xlu0 %1704
    %1706 = vrot.lane.b32.xlu0 %v1527, 32
    %v1707 = vpop.permute.xlu0 %1706
    %1708 = vrot.lane.b32.xlu0 %v1531, 32
    %v1709 = vpop.permute.xlu0 %1708
    %1710 = vrot.lane.b32.xlu0 %v1520, 32
    %v1711 = vpop.permute.xlu0 %1710
    %1712 = vrot.lane.b32.xlu0 %v1524, 32
    %v1713 = vpop.permute.xlu0 %1712
    %1714 = vrot.lane.b32.xlu0 %v1528, 32
    %v1715 = vpop.permute.xlu0 %1714
    %1716 = vrot.lane.b32.xlu0 %v1532, 32
    %v1717 = vpop.permute.xlu0 %1716
    %1718 = vrot.lane.b32.xlu0 %v1521, 32
    %v1719 = vpop.permute.xlu0 %1718
    %1720 = vrot.lane.b32.xlu0 %v1525, 32
    %v1721 = vpop.permute.xlu0 %1720
    %1722 = vrot.lane.b32.xlu0 %v1529, 32
    %v1723 = vpop.permute.xlu0 %1722
    %1724 = vrot.lane.b32.xlu0 %v1533, 32
    %v1725 = vpop.permute.xlu0 %1724
    %v1726 = vsel %vm184, %v1711, %v1719
    %v1727 = vsel %vm184, %v1713, %v1721
    %v1728 = vsel %vm184, %v1715, %v1723
    %v1729 = vsel %vm184, %v1717, %v1725
    %v1730 = vsel %vm184, %v1703, %v1711
    %v1731 = vsel %vm184, %v1705, %v1713
    %v1732 = vsel %vm184, %v1707, %v1715
    %v1733 = vsel %vm184, %v1709, %v1717
    %v1734 = vsel %vm184, %v1695, %v1703
    %v1735 = vsel %vm184, %v1697, %v1705
    %v1736 = vsel %vm184, %v1699, %v1707
    %v1737 = vsel %vm184, %v1701, %v1709
    %v1738 = vsel %vm184, %v1719, %v1695
    %v1739 = vsel %vm184, %v1721, %v1697
    %v1740 = vsel %vm184, %v1723, %v1699
    %v1741 = vsel %vm184, %v1725, %v1701
    %v1742 = vmul.f32 %v1738, %v192
    %v1743 = vmul.f32 %v1734, %v196
    %v1744 = vmul.f32 %v1730, %v200
    %v1745 = vmul.f32 %v1726, %v204
    %v1746 = vmul.f32 %v1739, %v192
    %v1747 = vmul.f32 %v1735, %v196
    %v1748 = vmul.f32 %v1731, %v200
    %v1749 = vmul.f32 %v1727, %v204
    %v1750 = vmul.f32 %v1740, %v192
    %v1751 = vmul.f32 %v1736, %v196
    %v1752 = vmul.f32 %v1732, %v200
    %v1753 = vmul.f32 %v1728, %v204
    %v1754 = vmul.f32 %v1741, %v192
    %v1755 = vmul.f32 %v1737, %v196
    %v1756 = vmul.f32 %v1733, %v200
    %v1757 = vmul.f32 %v1729, %v204
    %1758 = vst [vmem:[#allocation2 + $0x100] sm:$0xff] %v1742
    %1759 = vst [vmem:[#allocation2 + $0x108] sm:$0xff] %v1743
    %1760 = vst [vmem:[#allocation2 + $0x110] sm:$0xff] %v1744
    %1761 = vst [vmem:[#allocation2 + $0x118] sm:$0xff] %v1745
    %1762 = vst [vmem:[#allocation2 + $0x120] sm:$0xff] %v1746
    %1763 = vst [vmem:[#allocation2 + $0x128] sm:$0xff] %v1747
    %1764 = vst [vmem:[#allocation2 + $0x130] sm:$0xff] %v1748
    %1765 = vst [vmem:[#allocation2 + $0x138] sm:$0xff] %v1749
    %1766 = vst [vmem:[#allocation2 + $0x140] sm:$0xff] %v1750
    %1767 = vst [vmem:[#allocation2 + $0x148] sm:$0xff] %v1751
    %1768 = vst [vmem:[#allocation2 + $0x150] sm:$0xff] %v1752
    %1769 = vst [vmem:[#allocation2 + $0x158] sm:$0xff] %v1753
    %1770 = vst [vmem:[#allocation2 + $0x160] sm:$0xff] %v1754
    %1771 = vst [vmem:[#allocation2 + $0x168] sm:$0xff] %v1755
    %1772 = vst [vmem:[#allocation2 + $0x170] sm:$0xff] %v1756
    %1773 = vst [vmem:[#allocation2 + $0x178] sm:$0xff] %v1757
    %1774 = vrot.lane.b32.xlu0 %v1518, 31
    %v1775 = vpop.permute.xlu0 %1774
    %1776 = vrot.lane.b32.xlu0 %v1522, 31
    %v1777 = vpop.permute.xlu0 %1776
    %1778 = vrot.lane.b32.xlu0 %v1526, 31
    %v1779 = vpop.permute.xlu0 %1778
    %1780 = vrot.lane.b32.xlu0 %v1530, 31
    %v1781 = vpop.permute.xlu0 %1780
    %1782 = vrot.lane.b32.xlu0 %v1519, 31
    %v1783 = vpop.permute.xlu0 %1782
    %1784 = vrot.lane.b32.xlu0 %v1523, 31
    %v1785 = vpop.permute.xlu0 %1784
    %1786 = vrot.lane.b32.xlu0 %v1527, 31
    %v1787 = vpop.permute.xlu0 %1786
    %1788 = vrot.lane.b32.xlu0 %v1531, 31
    %v1789 = vpop.permute.xlu0 %1788
    %1790 = vrot.lane.b32.xlu0 %v1520, 31
    %v1791 = vpop.permute.xlu0 %1790
    %1792 = vrot.lane.b32.xlu0 %v1524, 31
    %v1793 = vpop.permute.xlu0 %1792
    %1794 = vrot.lane.b32.xlu0 %v1528, 31
    %v1795 = vpop.permute.xlu0 %1794
    %1796 = vrot.lane.b32.xlu0 %v1532, 31
    %v1797 = vpop.permute.xlu0 %1796
    %1798 = vrot.lane.b32.xlu0 %v1521, 31
    %v1799 = vpop.permute.xlu0 %1798
    %1800 = vrot.lane.b32.xlu0 %v1525, 31
    %v1801 = vpop.permute.xlu0 %1800
    %1802 = vrot.lane.b32.xlu0 %v1529, 31
    %v1803 = vpop.permute.xlu0 %1802
    %1804 = vrot.lane.b32.xlu0 %v1533, 31
    %v1805 = vpop.permute.xlu0 %1804
    %v1806 = vsel %vm217, %v1791, %v1799
    %v1807 = vsel %vm217, %v1793, %v1801
    %v1808 = vsel %vm217, %v1795, %v1803
    %v1809 = vsel %vm217, %v1797, %v1805
    %v1810 = vsel %vm217, %v1783, %v1791
    %v1811 = vsel %vm217, %v1785, %v1793
    %v1812 = vsel %vm217, %v1787, %v1795
    %v1813 = vsel %vm217, %v1789, %v1797
    %v1814 = vsel %vm217, %v1775, %v1783
    %v1815 = vsel %vm217, %v1777, %v1785
    %v1816 = vsel %vm217, %v1779, %v1787
    %v1817 = vsel %vm217, %v1781, %v1789
    %v1818 = vsel %vm217, %v1799, %v1775
    %v1819 = vsel %vm217, %v1801, %v1777
    %v1820 = vsel %vm217, %v1803, %v1779
    %v1821 = vsel %vm217, %v1805, %v1781
    %v1822 = vmul.f32 %v1818, %v225
    %v1823 = vmul.f32 %v1814, %v229
    %v1824 = vmul.f32 %v1810, %v233
    %v1825 = vmul.f32 %v1806, %v237
    %v1826 = vmul.f32 %v1819, %v225
    %v1827 = vmul.f32 %v1815, %v229
    %v1828 = vmul.f32 %v1811, %v233
    %v1829 = vmul.f32 %v1807, %v237
    %v1830 = vmul.f32 %v1820, %v225
    %v1831 = vmul.f32 %v1816, %v229
    %v1832 = vmul.f32 %v1812, %v233
    %v1833 = vmul.f32 %v1808, %v237
    %v1834 = vmul.f32 %v1821, %v225
    %v1835 = vmul.f32 %v1817, %v229
    %v1836 = vmul.f32 %v1813, %v233
    %v1837 = vmul.f32 %v1809, %v237
    %1838 = vst [vmem:[#allocation2 + $0x180] sm:$0xff] %v1822
    %1839 = vst [vmem:[#allocation2 + $0x188] sm:$0xff] %v1823
    %1840 = vst [vmem:[#allocation2 + $0x190] sm:$0xff] %v1824
    %1841 = vst [vmem:[#allocation2 + $0x198] sm:$0xff] %v1825
    %1842 = vst [vmem:[#allocation2 + $0x1a0] sm:$0xff] %v1826
    %1843 = vst [vmem:[#allocation2 + $0x1a8] sm:$0xff] %v1827
    %1844 = vst [vmem:[#allocation2 + $0x1b0] sm:$0xff] %v1828
    %1845 = vst [vmem:[#allocation2 + $0x1b8] sm:$0xff] %v1829
    %1846 = vst [vmem:[#allocation2 + $0x1c0] sm:$0xff] %v1830
    %1847 = vst [vmem:[#allocation2 + $0x1c8] sm:$0xff] %v1831
    %1848 = vst [vmem:[#allocation2 + $0x1d0] sm:$0xff] %v1832
    %1849 = vst [vmem:[#allocation2 + $0x1d8] sm:$0xff] %v1833
    %1850 = vst [vmem:[#allocation2 + $0x1e0] sm:$0xff] %v1834
    %1851 = vst [vmem:[#allocation2 + $0x1e8] sm:$0xff] %v1835
    %1852 = vst [vmem:[#allocation2 + $0x1f0] sm:$0xff] %v1836
    %1853 = vst [vmem:[#allocation2 + $0x1f8] sm:$0xff] %v1837
    %1854 = vrot.lane.b32.xlu0 %v1518, 30
    %v1855 = vpop.permute.xlu0 %1854
    %1856 = vrot.lane.b32.xlu0 %v1522, 30
    %v1857 = vpop.permute.xlu0 %1856
    %1858 = vrot.lane.b32.xlu0 %v1526, 30
    %v1859 = vpop.permute.xlu0 %1858
    %1860 = vrot.lane.b32.xlu0 %v1530, 30
    %v1861 = vpop.permute.xlu0 %1860
    %1862 = vrot.lane.b32.xlu0 %v1519, 30
    %v1863 = vpop.permute.xlu0 %1862
    %1864 = vrot.lane.b32.xlu0 %v1523, 30
    %v1865 = vpop.permute.xlu0 %1864
    %1866 = vrot.lane.b32.xlu0 %v1527, 30
    %v1867 = vpop.permute.xlu0 %1866
    %1868 = vrot.lane.b32.xlu0 %v1531, 30
    %v1869 = vpop.permute.xlu0 %1868
    %1870 = vrot.lane.b32.xlu0 %v1520, 30
    %v1871 = vpop.permute.xlu0 %1870
    %1872 = vrot.lane.b32.xlu0 %v1524, 30
    %v1873 = vpop.permute.xlu0 %1872
    %1874 = vrot.lane.b32.xlu0 %v1528, 30
    %v1875 = vpop.permute.xlu0 %1874
    %1876 = vrot.lane.b32.xlu0 %v1532, 30
    %v1877 = vpop.permute.xlu0 %1876
    %1878 = vrot.lane.b32.xlu0 %v1521, 30
    %v1879 = vpop.permute.xlu0 %1878
    %1880 = vrot.lane.b32.xlu0 %v1525, 30
    %v1881 = vpop.permute.xlu0 %1880
    %1882 = vrot.lane.b32.xlu0 %v1529, 30
    %v1883 = vpop.permute.xlu0 %1882
    %1884 = vrot.lane.b32.xlu0 %v1533, 30
    %v1885 = vpop.permute.xlu0 %1884
    %v1886 = vsel %vm250, %v1871, %v1879
    %v1887 = vsel %vm250, %v1873, %v1881
    %v1888 = vsel %vm250, %v1875, %v1883
    %v1889 = vsel %vm250, %v1877, %v1885
    %v1890 = vsel %vm250, %v1863, %v1871
    %v1891 = vsel %vm250, %v1865, %v1873
    %v1892 = vsel %vm250, %v1867, %v1875
    %v1893 = vsel %vm250, %v1869, %v1877
    %v1894 = vsel %vm250, %v1855, %v1863
    %v1895 = vsel %vm250, %v1857, %v1865
    %v1896 = vsel %vm250, %v1859, %v1867
    %v1897 = vsel %vm250, %v1861, %v1869
    %v1898 = vsel %vm250, %v1879, %v1855
    %v1899 = vsel %vm250, %v1881, %v1857
    %v1900 = vsel %vm250, %v1883, %v1859
    %v1901 = vsel %vm250, %v1885, %v1861
    %v1902 = vmul.f32 %v1898, %v258
    %v1903 = vmul.f32 %v1894, %v262
    %v1904 = vmul.f32 %v1890, %v266
    %v1905 = vmul.f32 %v1886, %v270
    %v1906 = vmul.f32 %v1899, %v258
    %v1907 = vmul.f32 %v1895, %v262
    %v1908 = vmul.f32 %v1891, %v266
    %v1909 = vmul.f32 %v1887, %v270
    %v1910 = vmul.f32 %v1900, %v258
    %v1911 = vmul.f32 %v1896, %v262
    %v1912 = vmul.f32 %v1892, %v266
    %v1913 = vmul.f32 %v1888, %v270
    %v1914 = vmul.f32 %v1901, %v258
    %v1915 = vmul.f32 %v1897, %v262
    %v1916 = vmul.f32 %v1893, %v266
    %v1917 = vmul.f32 %v1889, %v270
    %1918 = vst [vmem:[#allocation2 + $0x200] sm:$0xff] %v1902
    %1919 = vst [vmem:[#allocation2 + $0x208] sm:$0xff] %v1903
    %1920 = vst [vmem:[#allocation2 + $0x210] sm:$0xff] %v1904
    %1921 = vst [vmem:[#allocation2 + $0x218] sm:$0xff] %v1905
    %1922 = vst [vmem:[#allocation2 + $0x220] sm:$0xff] %v1906
    %1923 = vst [vmem:[#allocation2 + $0x228] sm:$0xff] %v1907
    %1924 = vst [vmem:[#allocation2 + $0x230] sm:$0xff] %v1908
    %1925 = vst [vmem:[#allocation2 + $0x238] sm:$0xff] %v1909
    %1926 = vst [vmem:[#allocation2 + $0x240] sm:$0xff] %v1910
    %1927 = vst [vmem:[#allocation2 + $0x248] sm:$0xff] %v1911
    %1928 = vst [vmem:[#allocation2 + $0x250] sm:$0xff] %v1912
    %1929 = vst [vmem:[#allocation2 + $0x258] sm:$0xff] %v1913
    %1930 = vst [vmem:[#allocation2 + $0x260] sm:$0xff] %v1914
    %1931 = vst [vmem:[#allocation2 + $0x268] sm:$0xff] %v1915
    %1932 = vst [vmem:[#allocation2 + $0x270] sm:$0xff] %v1916
    %1933 = vst [vmem:[#allocation2 + $0x278] sm:$0xff] %v1917
    %1934 = vrot.lane.b32.xlu0 %v1518, 18
    %v1935 = vpop.permute.xlu0 %1934
    %1936 = vrot.lane.b32.xlu0 %v1522, 18
    %v1937 = vpop.permute.xlu0 %1936
    %1938 = vrot.lane.b32.xlu0 %v1526, 18
    %v1939 = vpop.permute.xlu0 %1938
    %1940 = vrot.lane.b32.xlu0 %v1530, 18
    %v1941 = vpop.permute.xlu0 %1940
    %1942 = vrot.lane.b32.xlu0 %v1519, 18
    %v1943 = vpop.permute.xlu0 %1942
    %1944 = vrot.lane.b32.xlu0 %v1523, 18
    %v1945 = vpop.permute.xlu0 %1944
    %1946 = vrot.lane.b32.xlu0 %v1527, 18
    %v1947 = vpop.permute.xlu0 %1946
    %1948 = vrot.lane.b32.xlu0 %v1531, 18
    %v1949 = vpop.permute.xlu0 %1948
    %1950 = vrot.lane.b32.xlu0 %v1520, 18
    %v1951 = vpop.permute.xlu0 %1950
    %1952 = vrot.lane.b32.xlu0 %v1524, 18
    %v1953 = vpop.permute.xlu0 %1952
    %1954 = vrot.lane.b32.xlu0 %v1528, 18
    %v1955 = vpop.permute.xlu0 %1954
    %1956 = vrot.lane.b32.xlu0 %v1532, 18
    %v1957 = vpop.permute.xlu0 %1956
    %1958 = vrot.lane.b32.xlu0 %v1521, 18
    %v1959 = vpop.permute.xlu0 %1958
    %1960 = vrot.lane.b32.xlu0 %v1525, 18
    %v1961 = vpop.permute.xlu0 %1960
    %1962 = vrot.lane.b32.xlu0 %v1529, 18
    %v1963 = vpop.permute.xlu0 %1962
    %1964 = vrot.lane.b32.xlu0 %v1533, 18
    %v1965 = vpop.permute.xlu0 %1964
    %v1966 = vsel %vm283, %v1951, %v1959
    %v1967 = vsel %vm283, %v1953, %v1961
    %v1968 = vsel %vm283, %v1955, %v1963
    %v1969 = vsel %vm283, %v1957, %v1965
    %v1970 = vsel %vm283, %v1943, %v1951
    %v1971 = vsel %vm283, %v1945, %v1953
    %v1972 = vsel %vm283, %v1947, %v1955
    %v1973 = vsel %vm283, %v1949, %v1957
    %v1974 = vsel %vm283, %v1935, %v1943
    %v1975 = vsel %vm283, %v1937, %v1945
    %v1976 = vsel %vm283, %v1939, %v1947
    %v1977 = vsel %vm283, %v1941, %v1949
    %v1978 = vsel %vm283, %v1959, %v1935
    %v1979 = vsel %vm283, %v1961, %v1937
    %v1980 = vsel %vm283, %v1963, %v1939
    %v1981 = vsel %vm283, %v1965, %v1941
    %v1982 = vmul.f32 %v1978, %v291
    %v1983 = vmul.f32 %v1974, %v295
    %v1984 = vmul.f32 %v1970, %v299
    %v1985 = vmul.f32 %v1966, %v303
    %v1986 = vmul.f32 %v1979, %v291
    %v1987 = vmul.f32 %v1975, %v295
    %v1988 = vmul.f32 %v1971, %v299
    %v1989 = vmul.f32 %v1967, %v303
    %v1990 = vmul.f32 %v1980, %v291
    %v1991 = vmul.f32 %v1976, %v295
    %v1992 = vmul.f32 %v1972, %v299
    %v1993 = vmul.f32 %v1968, %v303
    %v1994 = vmul.f32 %v1981, %v291
    %v1995 = vmul.f32 %v1977, %v295
    %v1996 = vmul.f32 %v1973, %v299
    %v1997 = vmul.f32 %v1969, %v303
    %1998 = vst [vmem:[#allocation2 + $0x280] sm:$0xff] %v1982
    %1999 = vst [vmem:[#allocation2 + $0x288] sm:$0xff] %v1983
    %2000 = vst [vmem:[#allocation2 + $0x290] sm:$0xff] %v1984
    %2001 = vst [vmem:[#allocation2 + $0x298] sm:$0xff] %v1985
    %2002 = vst [vmem:[#allocation2 + $0x2a0] sm:$0xff] %v1986
    %2003 = vst [vmem:[#allocation2 + $0x2a8] sm:$0xff] %v1987
    %2004 = vst [vmem:[#allocation2 + $0x2b0] sm:$0xff] %v1988
    %2005 = vst [vmem:[#allocation2 + $0x2b8] sm:$0xff] %v1989
    %2006 = vst [vmem:[#allocation2 + $0x2c0] sm:$0xff] %v1990
    %2007 = vst [vmem:[#allocation2 + $0x2c8] sm:$0xff] %v1991
    %2008 = vst [vmem:[#allocation2 + $0x2d0] sm:$0xff] %v1992
    %2009 = vst [vmem:[#allocation2 + $0x2d8] sm:$0xff] %v1993
    %2010 = vst [vmem:[#allocation2 + $0x2e0] sm:$0xff] %v1994
    %2011 = vst [vmem:[#allocation2 + $0x2e8] sm:$0xff] %v1995
    %2012 = vst [vmem:[#allocation2 + $0x2f0] sm:$0xff] %v1996
    %2013 = vst [vmem:[#allocation2 + $0x2f8] sm:$0xff] %v1997
    %2014 = vrot.lane.b32.xlu0 %v1518, 17
    %v2015 = vpop.permute.xlu0 %2014
    %2016 = vrot.lane.b32.xlu0 %v1522, 17
    %v2017 = vpop.permute.xlu0 %2016
    %2018 = vrot.lane.b32.xlu0 %v1526, 17
    %v2019 = vpop.permute.xlu0 %2018
    %2020 = vrot.lane.b32.xlu0 %v1530, 17
    %v2021 = vpop.permute.xlu0 %2020
    %2022 = vrot.lane.b32.xlu0 %v1519, 17
    %v2023 = vpop.permute.xlu0 %2022
    %2024 = vrot.lane.b32.xlu0 %v1523, 17
    %v2025 = vpop.permute.xlu0 %2024
    %2026 = vrot.lane.b32.xlu0 %v1527, 17
    %v2027 = vpop.permute.xlu0 %2026
    %2028 = vrot.lane.b32.xlu0 %v1531, 17
    %v2029 = vpop.permute.xlu0 %2028
    %2030 = vrot.lane.b32.xlu0 %v1520, 17
    %v2031 = vpop.permute.xlu0 %2030
    %2032 = vrot.lane.b32.xlu0 %v1524, 17
    %v2033 = vpop.permute.xlu0 %2032
    %2034 = vrot.lane.b32.xlu0 %v1528, 17
    %v2035 = vpop.permute.xlu0 %2034
    %2036 = vrot.lane.b32.xlu0 %v1532, 17
    %v2037 = vpop.permute.xlu0 %2036
    %2038 = vrot.lane.b32.xlu0 %v1521, 17
    %v2039 = vpop.permute.xlu0 %2038
    %2040 = vrot.lane.b32.xlu0 %v1525, 17
    %v2041 = vpop.permute.xlu0 %2040
    %2042 = vrot.lane.b32.xlu0 %v1529, 17
    %v2043 = vpop.permute.xlu0 %2042
    %2044 = vrot.lane.b32.xlu0 %v1533, 17
    %v2045 = vpop.permute.xlu0 %2044
    %v2046 = vsel %vm316, %v2031, %v2039
    %v2047 = vsel %vm316, %v2033, %v2041
    %v2048 = vsel %vm316, %v2035, %v2043
    %v2049 = vsel %vm316, %v2037, %v2045
    %v2050 = vsel %vm316, %v2023, %v2031
    %v2051 = vsel %vm316, %v2025, %v2033
    %v2052 = vsel %vm316, %v2027, %v2035
    %v2053 = vsel %vm316, %v2029, %v2037
    %v2054 = vsel %vm316, %v2015, %v2023
    %v2055 = vsel %vm316, %v2017, %v2025
    %v2056 = vsel %vm316, %v2019, %v2027
    %v2057 = vsel %vm316, %v2021, %v2029
    %v2058 = vsel %vm316, %v2039, %v2015
    %v2059 = vsel %vm316, %v2041, %v2017
    %v2060 = vsel %vm316, %v2043, %v2019
    %v2061 = vsel %vm316, %v2045, %v2021
    %v2062 = vmul.f32 %v2058, %v324
    %v2063 = vmul.f32 %v2054, %v328
    %v2064 = vmul.f32 %v2050, %v332
    %v2065 = vmul.f32 %v2046, %v336
    %v2066 = vmul.f32 %v2059, %v324
    %v2067 = vmul.f32 %v2055, %v328
    %v2068 = vmul.f32 %v2051, %v332
    %v2069 = vmul.f32 %v2047, %v336
    %v2070 = vmul.f32 %v2060, %v324
    %v2071 = vmul.f32 %v2056, %v328
    %v2072 = vmul.f32 %v2052, %v332
    %v2073 = vmul.f32 %v2048, %v336
    %v2074 = vmul.f32 %v2061, %v324
    %v2075 = vmul.f32 %v2057, %v328
    %v2076 = vmul.f32 %v2053, %v332
    %v2077 = vmul.f32 %v2049, %v336
    %2078 = vst [vmem:[#allocation2 + $0x300] sm:$0xff] %v2062
    %2079 = vst [vmem:[#allocation2 + $0x308] sm:$0xff] %v2063
    %2080 = vst [vmem:[#allocation2 + $0x310] sm:$0xff] %v2064
    %2081 = vst [vmem:[#allocation2 + $0x318] sm:$0xff] %v2065
    %2082 = vst [vmem:[#allocation2 + $0x320] sm:$0xff] %v2066
    %2083 = vst [vmem:[#allocation2 + $0x328] sm:$0xff] %v2067
    %2084 = vst [vmem:[#allocation2 + $0x330] sm:$0xff] %v2068
    %2085 = vst [vmem:[#allocation2 + $0x338] sm:$0xff] %v2069
    %2086 = vst [vmem:[#allocation2 + $0x340] sm:$0xff] %v2070
    %2087 = vst [vmem:[#allocation2 + $0x348] sm:$0xff] %v2071
    %2088 = vst [vmem:[#allocation2 + $0x350] sm:$0xff] %v2072
    %2089 = vst [vmem:[#allocation2 + $0x358] sm:$0xff] %v2073
    %2090 = vst [vmem:[#allocation2 + $0x360] sm:$0xff] %v2074
    %2091 = vst [vmem:[#allocation2 + $0x368] sm:$0xff] %v2075
    %2092 = vst [vmem:[#allocation2 + $0x370] sm:$0xff] %v2076
    %2093 = vst [vmem:[#allocation2 + $0x378] sm:$0xff] %v2077
    %2094 = vrot.lane.b32.xlu0 %v1518, 16
    %v2095 = vpop.permute.xlu0 %2094
    %2096 = vrot.lane.b32.xlu0 %v1522, 16
    %v2097 = vpop.permute.xlu0 %2096
    %2098 = vrot.lane.b32.xlu0 %v1526, 16
    %v2099 = vpop.permute.xlu0 %2098
    %2100 = vrot.lane.b32.xlu0 %v1530, 16
    %v2101 = vpop.permute.xlu0 %2100
    %2102 = vrot.lane.b32.xlu0 %v1519, 16
    %v2103 = vpop.permute.xlu0 %2102
    %2104 = vrot.lane.b32.xlu0 %v1523, 16
    %v2105 = vpop.permute.xlu0 %2104
    %2106 = vrot.lane.b32.xlu0 %v1527, 16
    %v2107 = vpop.permute.xlu0 %2106
    %2108 = vrot.lane.b32.xlu0 %v1531, 16
    %v2109 = vpop.permute.xlu0 %2108
    %2110 = vrot.lane.b32.xlu0 %v1520, 16
    %v2111 = vpop.permute.xlu0 %2110
    %2112 = vrot.lane.b32.xlu0 %v1524, 16
    %v2113 = vpop.permute.xlu0 %2112
    %2114 = vrot.lane.b32.xlu0 %v1528, 16
    %v2115 = vpop.permute.xlu0 %2114
    %2116 = vrot.lane.b32.xlu0 %v1532, 16
    %v2117 = vpop.permute.xlu0 %2116
    %2118 = vrot.lane.b32.xlu0 %v1521, 16
    %v2119 = vpop.permute.xlu0 %2118
    %2120 = vrot.lane.b32.xlu0 %v1525, 16
    %v2121 = vpop.permute.xlu0 %2120
    %2122 = vrot.lane.b32.xlu0 %v1529, 16
    %v2123 = vpop.permute.xlu0 %2122
    %2124 = vrot.lane.b32.xlu0 %v1533, 16
    %v2125 = vpop.permute.xlu0 %2124
    %v2126 = vsel %vm349, %v2111, %v2119
    %v2127 = vsel %vm349, %v2113, %v2121
    %v2128 = vsel %vm349, %v2115, %v2123
    %v2129 = vsel %vm349, %v2117, %v2125
    %v2130 = vsel %vm349, %v2103, %v2111
    %v2131 = vsel %vm349, %v2105, %v2113
    %v2132 = vsel %vm349, %v2107, %v2115
    %v2133 = vsel %vm349, %v2109, %v2117
    %v2134 = vsel %vm349, %v2095, %v2103
    %v2135 = vsel %vm349, %v2097, %v2105
    %v2136 = vsel %vm349, %v2099, %v2107
    %v2137 = vsel %vm349, %v2101, %v2109
    %v2138 = vsel %vm349, %v2119, %v2095
    %v2139 = vsel %vm349, %v2121, %v2097
    %v2140 = vsel %vm349, %v2123, %v2099
    %v2141 = vsel %vm349, %v2125, %v2101
    %v2142 = vmul.f32 %v2138, %v357
    %v2143 = vmul.f32 %v2134, %v361
    %v2144 = vmul.f32 %v2130, %v365
    %v2145 = vmul.f32 %v2126, %v369
    %v2146 = vmul.f32 %v2139, %v357
    %v2147 = vmul.f32 %v2135, %v361
    %v2148 = vmul.f32 %v2131, %v365
    %v2149 = vmul.f32 %v2127, %v369
    %v2150 = vmul.f32 %v2140, %v357
    %v2151 = vmul.f32 %v2136, %v361
    %v2152 = vmul.f32 %v2132, %v365
    %v2153 = vmul.f32 %v2128, %v369
    %v2154 = vmul.f32 %v2141, %v357
    %v2155 = vmul.f32 %v2137, %v361
    %v2156 = vmul.f32 %v2133, %v365
    %v2157 = vmul.f32 %v2129, %v369
    %2158 = vst [vmem:[#allocation2 + $0x380] sm:$0xff] %v2142
    %2159 = vst [vmem:[#allocation2 + $0x388] sm:$0xff] %v2143
    %2160 = vst [vmem:[#allocation2 + $0x390] sm:$0xff] %v2144
    %2161 = vst [vmem:[#allocation2 + $0x398] sm:$0xff] %v2145
    %2162 = vst [vmem:[#allocation2 + $0x3a0] sm:$0xff] %v2146
    %2163 = vst [vmem:[#allocation2 + $0x3a8] sm:$0xff] %v2147
    %2164 = vst [vmem:[#allocation2 + $0x3b0] sm:$0xff] %v2148
    %2165 = vst [vmem:[#allocation2 + $0x3b8] sm:$0xff] %v2149
    %2166 = vst [vmem:[#allocation2 + $0x3c0] sm:$0xff] %v2150
    %2167 = vst [vmem:[#allocation2 + $0x3c8] sm:$0xff] %v2151
    %2168 = vst [vmem:[#allocation2 + $0x3d0] sm:$0xff] %v2152
    %2169 = vst [vmem:[#allocation2 + $0x3d8] sm:$0xff] %v2153
    %2170 = vst [vmem:[#allocation2 + $0x3e0] sm:$0xff] %v2154
    %2171 = vst [vmem:[#allocation2 + $0x3e8] sm:$0xff] %v2155
    %2172 = vst [vmem:[#allocation2 + $0x3f0] sm:$0xff] %v2156
    %2173 = vst [vmem:[#allocation2 + $0x3f8] sm:$0xff] %v2157
    %2174 = vrot.lane.b32.xlu0 %v1518, 15
    %v2175 = vpop.permute.xlu0 %2174
    %2176 = vrot.lane.b32.xlu0 %v1522, 15
    %v2177 = vpop.permute.xlu0 %2176
    %2178 = vrot.lane.b32.xlu0 %v1526, 15
    %v2179 = vpop.permute.xlu0 %2178
    %2180 = vrot.lane.b32.xlu0 %v1530, 15
    %v2181 = vpop.permute.xlu0 %2180
    %2182 = vrot.lane.b32.xlu0 %v1519, 15
    %v2183 = vpop.permute.xlu0 %2182
    %2184 = vrot.lane.b32.xlu0 %v1523, 15
    %v2185 = vpop.permute.xlu0 %2184
    %2186 = vrot.lane.b32.xlu0 %v1527, 15
    %v2187 = vpop.permute.xlu0 %2186
    %2188 = vrot.lane.b32.xlu0 %v1531, 15
    %v2189 = vpop.permute.xlu0 %2188
    %2190 = vrot.lane.b32.xlu0 %v1520, 15
    %v2191 = vpop.permute.xlu0 %2190
    %2192 = vrot.lane.b32.xlu0 %v1524, 15
    %v2193 = vpop.permute.xlu0 %2192
    %2194 = vrot.lane.b32.xlu0 %v1528, 15
    %v2195 = vpop.permute.xlu0 %2194
    %2196 = vrot.lane.b32.xlu0 %v1532, 15
    %v2197 = vpop.permute.xlu0 %2196
    %2198 = vrot.lane.b32.xlu0 %v1521, 15
    %v2199 = vpop.permute.xlu0 %2198
    %2200 = vrot.lane.b32.xlu0 %v1525, 15
    %v2201 = vpop.permute.xlu0 %2200
    %2202 = vrot.lane.b32.xlu0 %v1529, 15
    %v2203 = vpop.permute.xlu0 %2202
    %2204 = vrot.lane.b32.xlu0 %v1533, 15
    %v2205 = vpop.permute.xlu0 %2204
    %v2206 = vsel %vm382, %v2191, %v2199
    %v2207 = vsel %vm382, %v2193, %v2201
    %v2208 = vsel %vm382, %v2195, %v2203
    %v2209 = vsel %vm382, %v2197, %v2205
    %v2210 = vsel %vm382, %v2183, %v2191
    %v2211 = vsel %vm382, %v2185, %v2193
    %v2212 = vsel %vm382, %v2187, %v2195
    %v2213 = vsel %vm382, %v2189, %v2197
    %v2214 = vsel %vm382, %v2175, %v2183
    %v2215 = vsel %vm382, %v2177, %v2185
    %v2216 = vsel %vm382, %v2179, %v2187
    %v2217 = vsel %vm382, %v2181, %v2189
    %v2218 = vsel %vm382, %v2199, %v2175
    %v2219 = vsel %vm382, %v2201, %v2177
    %v2220 = vsel %vm382, %v2203, %v2179
    %v2221 = vsel %vm382, %v2205, %v2181
    %v2222 = vmul.f32 %v2218, %v390
    %v2223 = vmul.f32 %v2214, %v394
    %v2224 = vmul.f32 %v2210, %v398
    %v2225 = vmul.f32 %v2206, %v402
    %v2226 = vmul.f32 %v2219, %v390
    %v2227 = vmul.f32 %v2215, %v394
    %v2228 = vmul.f32 %v2211, %v398
    %v2229 = vmul.f32 %v2207, %v402
    %v2230 = vmul.f32 %v2220, %v390
    %v2231 = vmul.f32 %v2216, %v394
    %v2232 = vmul.f32 %v2212, %v398
    %v2233 = vmul.f32 %v2208, %v402
    %v2234 = vmul.f32 %v2221, %v390
    %v2235 = vmul.f32 %v2217, %v394
    %v2236 = vmul.f32 %v2213, %v398
    %v2237 = vmul.f32 %v2209, %v402
    %2238 = vst [vmem:[#allocation2 + $0x400] sm:$0xff] %v2222
    %2239 = vst [vmem:[#allocation2 + $0x408] sm:$0xff] %v2223
    %2240 = vst [vmem:[#allocation2 + $0x410] sm:$0xff] %v2224
    %2241 = vst [vmem:[#allocation2 + $0x418] sm:$0xff] %v2225
    %2242 = vst [vmem:[#allocation2 + $0x420] sm:$0xff] %v2226
    %2243 = vst [vmem:[#allocation2 + $0x428] sm:$0xff] %v2227
    %2244 = vst [vmem:[#allocation2 + $0x430] sm:$0xff] %v2228
    %2245 = vst [vmem:[#allocation2 + $0x438] sm:$0xff] %v2229
    %2246 = vst [vmem:[#allocation2 + $0x440] sm:$0xff] %v2230
    %2247 = vst [vmem:[#allocation2 + $0x448] sm:$0xff] %v2231
    %2248 = vst [vmem:[#allocation2 + $0x450] sm:$0xff] %v2232
    %2249 = vst [vmem:[#allocation2 + $0x458] sm:$0xff] %v2233
    %2250 = vst [vmem:[#allocation2 + $0x460] sm:$0xff] %v2234
    %2251 = vst [vmem:[#allocation2 + $0x468] sm:$0xff] %v2235
    %2252 = vst [vmem:[#allocation2 + $0x470] sm:$0xff] %v2236
    %2253 = vst [vmem:[#allocation2 + $0x478] sm:$0xff] %v2237
    %2254 = vrot.lane.b32.xlu0 %v1518, 14
    %v2255 = vpop.permute.xlu0 %2254
    %2256 = vrot.lane.b32.xlu0 %v1522, 14
    %v2257 = vpop.permute.xlu0 %2256
    %2258 = vrot.lane.b32.xlu0 %v1526, 14
    %v2259 = vpop.permute.xlu0 %2258
    %2260 = vrot.lane.b32.xlu0 %v1530, 14
    %v2261 = vpop.permute.xlu0 %2260
    %2262 = vrot.lane.b32.xlu0 %v1519, 14
    %v2263 = vpop.permute.xlu0 %2262
    %2264 = vrot.lane.b32.xlu0 %v1523, 14
    %v2265 = vpop.permute.xlu0 %2264
    %2266 = vrot.lane.b32.xlu0 %v1527, 14
    %v2267 = vpop.permute.xlu0 %2266
    %2268 = vrot.lane.b32.xlu0 %v1531, 14
    %v2269 = vpop.permute.xlu0 %2268
    %2270 = vrot.lane.b32.xlu0 %v1520, 14
    %v2271 = vpop.permute.xlu0 %2270
    %2272 = vrot.lane.b32.xlu0 %v1524, 14
    %v2273 = vpop.permute.xlu0 %2272
    %2274 = vrot.lane.b32.xlu0 %v1528, 14
    %v2275 = vpop.permute.xlu0 %2274
    %2276 = vrot.lane.b32.xlu0 %v1532, 14
    %v2277 = vpop.permute.xlu0 %2276
    %2278 = vrot.lane.b32.xlu0 %v1521, 14
    %v2279 = vpop.permute.xlu0 %2278
    %2280 = vrot.lane.b32.xlu0 %v1525, 14
    %v2281 = vpop.permute.xlu0 %2280
    %2282 = vrot.lane.b32.xlu0 %v1529, 14
    %v2283 = vpop.permute.xlu0 %2282
    %2284 = vrot.lane.b32.xlu0 %v1533, 14
    %v2285 = vpop.permute.xlu0 %2284
    %v2286 = vsel %vm415, %v2271, %v2279
    %v2287 = vsel %vm415, %v2273, %v2281
    %v2288 = vsel %vm415, %v2275, %v2283
    %v2289 = vsel %vm415, %v2277, %v2285
    %v2290 = vsel %vm415, %v2263, %v2271
    %v2291 = vsel %vm415, %v2265, %v2273
    %v2292 = vsel %vm415, %v2267, %v2275
    %v2293 = vsel %vm415, %v2269, %v2277
    %v2294 = vsel %vm415, %v2255, %v2263
    %v2295 = vsel %vm415, %v2257, %v2265
    %v2296 = vsel %vm415, %v2259, %v2267
    %v2297 = vsel %vm415, %v2261, %v2269
    %v2298 = vsel %vm415, %v2279, %v2255
    %v2299 = vsel %vm415, %v2281, %v2257
    %v2300 = vsel %vm415, %v2283, %v2259
    %v2301 = vsel %vm415, %v2285, %v2261
    %v2302 = vmul.f32 %v2298, %v423
    %v2303 = vmul.f32 %v2294, %v427
    %v2304 = vmul.f32 %v2290, %v431
    %v2305 = vmul.f32 %v2286, %v435
    %v2306 = vmul.f32 %v2299, %v423
    %v2307 = vmul.f32 %v2295, %v427
    %v2308 = vmul.f32 %v2291, %v431
    %v2309 = vmul.f32 %v2287, %v435
    %v2310 = vmul.f32 %v2300, %v423
    %v2311 = vmul.f32 %v2296, %v427
    %v2312 = vmul.f32 %v2292, %v431
    %v2313 = vmul.f32 %v2288, %v435
    %v2314 = vmul.f32 %v2301, %v423
    %v2315 = vmul.f32 %v2297, %v427
    %v2316 = vmul.f32 %v2293, %v431
    %v2317 = vmul.f32 %v2289, %v435
    %2318 = vst [vmem:[#allocation2 + $0x480] sm:$0xff] %v2302
    %2319 = vst [vmem:[#allocation2 + $0x488] sm:$0xff] %v2303
    %2320 = vst [vmem:[#allocation2 + $0x490] sm:$0xff] %v2304
    %2321 = vst [vmem:[#allocation2 + $0x498] sm:$0xff] %v2305
    %2322 = vst [vmem:[#allocation2 + $0x4a0] sm:$0xff] %v2306
    %2323 = vst [vmem:[#allocation2 + $0x4a8] sm:$0xff] %v2307
    %2324 = vst [vmem:[#allocation2 + $0x4b0] sm:$0xff] %v2308
    %2325 = vst [vmem:[#allocation2 + $0x4b8] sm:$0xff] %v2309
    %2326 = vst [vmem:[#allocation2 + $0x4c0] sm:$0xff] %v2310
    %2327 = vst [vmem:[#allocation2 + $0x4c8] sm:$0xff] %v2311
    %2328 = vst [vmem:[#allocation2 + $0x4d0] sm:$0xff] %v2312
    %2329 = vst [vmem:[#allocation2 + $0x4d8] sm:$0xff] %v2313
    %2330 = vst [vmem:[#allocation2 + $0x4e0] sm:$0xff] %v2314
    %2331 = vst [vmem:[#allocation2 + $0x4e8] sm:$0xff] %v2315
    %2332 = vst [vmem:[#allocation2 + $0x4f0] sm:$0xff] %v2316
    %2333 = vst [vmem:[#allocation2 + $0x4f8] sm:$0xff] %v2317
    %2334 = vrot.lane.b32.xlu0 %v1518, 2
    %v2335 = vpop.permute.xlu0 %2334
    %2336 = vrot.lane.b32.xlu0 %v1522, 2
    %v2337 = vpop.permute.xlu0 %2336
    %2338 = vrot.lane.b32.xlu0 %v1526, 2
    %v2339 = vpop.permute.xlu0 %2338
    %2340 = vrot.lane.b32.xlu0 %v1530, 2
    %v2341 = vpop.permute.xlu0 %2340
    %2342 = vrot.lane.b32.xlu0 %v1519, 2
    %v2343 = vpop.permute.xlu0 %2342
    %2344 = vrot.lane.b32.xlu0 %v1523, 2
    %v2345 = vpop.permute.xlu0 %2344
    %2346 = vrot.lane.b32.xlu0 %v1527, 2
    %v2347 = vpop.permute.xlu0 %2346
    %2348 = vrot.lane.b32.xlu0 %v1531, 2
    %v2349 = vpop.permute.xlu0 %2348
    %2350 = vrot.lane.b32.xlu0 %v1520, 2
    %v2351 = vpop.permute.xlu0 %2350
    %2352 = vrot.lane.b32.xlu0 %v1524, 2
    %v2353 = vpop.permute.xlu0 %2352
    %2354 = vrot.lane.b32.xlu0 %v1528, 2
    %v2355 = vpop.permute.xlu0 %2354
    %2356 = vrot.lane.b32.xlu0 %v1532, 2
    %v2357 = vpop.permute.xlu0 %2356
    %2358 = vrot.lane.b32.xlu0 %v1521, 2
    %v2359 = vpop.permute.xlu0 %2358
    %2360 = vrot.lane.b32.xlu0 %v1525, 2
    %v2361 = vpop.permute.xlu0 %2360
    %2362 = vrot.lane.b32.xlu0 %v1529, 2
    %v2363 = vpop.permute.xlu0 %2362
    %2364 = vrot.lane.b32.xlu0 %v1533, 2
    %v2365 = vpop.permute.xlu0 %2364
    %v2366 = vsel %vm448, %v2351, %v2359
    %v2367 = vsel %vm448, %v2353, %v2361
    %v2368 = vsel %vm448, %v2355, %v2363
    %v2369 = vsel %vm448, %v2357, %v2365
    %v2370 = vsel %vm448, %v2343, %v2351
    %v2371 = vsel %vm448, %v2345, %v2353
    %v2372 = vsel %vm448, %v2347, %v2355
    %v2373 = vsel %vm448, %v2349, %v2357
    %v2374 = vsel %vm448, %v2335, %v2343
    %v2375 = vsel %vm448, %v2337, %v2345
    %v2376 = vsel %vm448, %v2339, %v2347
    %v2377 = vsel %vm448, %v2341, %v2349
    %v2378 = vsel %vm448, %v2359, %v2335
    %v2379 = vsel %vm448, %v2361, %v2337
    %v2380 = vsel %vm448, %v2363, %v2339
    %v2381 = vsel %vm448, %v2365, %v2341
    %v2382 = vmul.f32 %v2378, %v456
    %v2383 = vmul.f32 %v2374, %v460
    %v2384 = vmul.f32 %v2370, %v464
    %v2385 = vmul.f32 %v2366, %v468
    %v2386 = vmul.f32 %v2379, %v456
    %v2387 = vmul.f32 %v2375, %v460
    %v2388 = vmul.f32 %v2371, %v464
    %v2389 = vmul.f32 %v2367, %v468
    %v2390 = vmul.f32 %v2380, %v456
    %v2391 = vmul.f32 %v2376, %v460
    %v2392 = vmul.f32 %v2372, %v464
    %v2393 = vmul.f32 %v2368, %v468
    %v2394 = vmul.f32 %v2381, %v456
    %v2395 = vmul.f32 %v2377, %v460
    %v2396 = vmul.f32 %v2373, %v464
    %v2397 = vmul.f32 %v2369, %v468
    %2398 = vst [vmem:[#allocation2 + $0x500] sm:$0xff] %v2382
    %2399 = vst [vmem:[#allocation2 + $0x508] sm:$0xff] %v2383
    %2400 = vst [vmem:[#allocation2 + $0x510] sm:$0xff] %v2384
    %2401 = vst [vmem:[#allocation2 + $0x518] sm:$0xff] %v2385
    %2402 = vst [vmem:[#allocation2 + $0x520] sm:$0xff] %v2386
    %2403 = vst [vmem:[#allocation2 + $0x528] sm:$0xff] %v2387
    %2404 = vst [vmem:[#allocation2 + $0x530] sm:$0xff] %v2388
    %2405 = vst [vmem:[#allocation2 + $0x538] sm:$0xff] %v2389
    %2406 = vst [vmem:[#allocation2 + $0x540] sm:$0xff] %v2390
    %2407 = vst [vmem:[#allocation2 + $0x548] sm:$0xff] %v2391
    %2408 = vst [vmem:[#allocation2 + $0x550] sm:$0xff] %v2392
    %2409 = vst [vmem:[#allocation2 + $0x558] sm:$0xff] %v2393
    %2410 = vst [vmem:[#allocation2 + $0x560] sm:$0xff] %v2394
    %2411 = vst [vmem:[#allocation2 + $0x568] sm:$0xff] %v2395
    %2412 = vst [vmem:[#allocation2 + $0x570] sm:$0xff] %v2396
    %2413 = vst [vmem:[#allocation2 + $0x578] sm:$0xff] %v2397
    %2414 = vrot.lane.b32.xlu0 %v1518, 1
    %v2415 = vpop.permute.xlu0 %2414
    %2416 = vrot.lane.b32.xlu0 %v1522, 1
    %v2417 = vpop.permute.xlu0 %2416
    %2418 = vrot.lane.b32.xlu0 %v1526, 1
    %v2419 = vpop.permute.xlu0 %2418
    %2420 = vrot.lane.b32.xlu0 %v1530, 1
    %v2421 = vpop.permute.xlu0 %2420
    %2422 = vrot.lane.b32.xlu0 %v1519, 1
    %v2423 = vpop.permute.xlu0 %2422
    %2424 = vrot.lane.b32.xlu0 %v1523, 1
    %v2425 = vpop.permute.xlu0 %2424
    %2426 = vrot.lane.b32.xlu0 %v1527, 1
    %v2427 = vpop.permute.xlu0 %2426
    %2428 = vrot.lane.b32.xlu0 %v1531, 1
    %v2429 = vpop.permute.xlu0 %2428
    %2430 = vrot.lane.b32.xlu0 %v1520, 1
    %v2431 = vpop.permute.xlu0 %2430
    %2432 = vrot.lane.b32.xlu0 %v1524, 1
    %v2433 = vpop.permute.xlu0 %2432
    %2434 = vrot.lane.b32.xlu0 %v1528, 1
    %v2435 = vpop.permute.xlu0 %2434
    %2436 = vrot.lane.b32.xlu0 %v1532, 1
    %v2437 = vpop.permute.xlu0 %2436
    %2438 = vrot.lane.b32.xlu0 %v1521, 1
    %v2439 = vpop.permute.xlu0 %2438
    %2440 = vrot.lane.b32.xlu0 %v1525, 1
    %v2441 = vpop.permute.xlu0 %2440
    %2442 = vrot.lane.b32.xlu0 %v1529, 1
    %v2443 = vpop.permute.xlu0 %2442
    %2444 = vrot.lane.b32.xlu0 %v1533, 1
    %v2445 = vpop.permute.xlu0 %2444
    %v2446 = vsel %vm481, %v2431, %v2439
    %v2447 = vsel %vm481, %v2433, %v2441
    %v2448 = vsel %vm481, %v2435, %v2443
    %v2449 = vsel %vm481, %v2437, %v2445
    %v2450 = vsel %vm481, %v2423, %v2431
    %v2451 = vsel %vm481, %v2425, %v2433
    %v2452 = vsel %vm481, %v2427, %v2435
    %v2453 = vsel %vm481, %v2429, %v2437
    %v2454 = vsel %vm481, %v2415, %v2423
    %v2455 = vsel %vm481, %v2417, %v2425
    %v2456 = vsel %vm481, %v2419, %v2427
    %v2457 = vsel %vm481, %v2421, %v2429
    %v2458 = vsel %vm481, %v2439, %v2415
    %v2459 = vsel %vm481, %v2441, %v2417
    %v2460 = vsel %vm481, %v2443, %v2419
    %v2461 = vsel %vm481, %v2445, %v2421
    %v2462 = vmul.f32 %v2458, %v489
    %v2463 = vmul.f32 %v2454, %v493
    %v2464 = vmul.f32 %v2450, %v497
    %v2465 = vmul.f32 %v2446, %v501
    %v2466 = vmul.f32 %v2459, %v489
    %v2467 = vmul.f32 %v2455, %v493
    %v2468 = vmul.f32 %v2451, %v497
    %v2469 = vmul.f32 %v2447, %v501
    %v2470 = vmul.f32 %v2460, %v489
    %v2471 = vmul.f32 %v2456, %v493
    %v2472 = vmul.f32 %v2452, %v497
    %v2473 = vmul.f32 %v2448, %v501
    %v2474 = vmul.f32 %v2461, %v489
    %v2475 = vmul.f32 %v2457, %v493
    %v2476 = vmul.f32 %v2453, %v497
    %v2477 = vmul.f32 %v2449, %v501
    %2478 = vst [vmem:[#allocation2 + $0x580] sm:$0xff] %v2462
    %2479 = vst [vmem:[#allocation2 + $0x588] sm:$0xff] %v2463
    %2480 = vst [vmem:[#allocation2 + $0x590] sm:$0xff] %v2464
    %2481 = vst [vmem:[#allocation2 + $0x598] sm:$0xff] %v2465
    %2482 = vst [vmem:[#allocation2 + $0x5a0] sm:$0xff] %v2466
    %2483 = vst [vmem:[#allocation2 + $0x5a8] sm:$0xff] %v2467
    %2484 = vst [vmem:[#allocation2 + $0x5b0] sm:$0xff] %v2468
    %2485 = vst [vmem:[#allocation2 + $0x5b8] sm:$0xff] %v2469
    %2486 = vst [vmem:[#allocation2 + $0x5c0] sm:$0xff] %v2470
    %2487 = vst [vmem:[#allocation2 + $0x5c8] sm:$0xff] %v2471
    %2488 = vst [vmem:[#allocation2 + $0x5d0] sm:$0xff] %v2472
    %2489 = vst [vmem:[#allocation2 + $0x5d8] sm:$0xff] %v2473
    %2490 = vst [vmem:[#allocation2 + $0x5e0] sm:$0xff] %v2474
    %2491 = vst [vmem:[#allocation2 + $0x5e8] sm:$0xff] %v2475
    %2492 = vst [vmem:[#allocation2 + $0x5f0] sm:$0xff] %v2476
    %2493 = vst [vmem:[#allocation2 + $0x5f8] sm:$0xff] %v2477
    %v2494 = vmul.f32 %v1518, %v509
    %v2495 = vmul.f32 %v1519, %v513
    %v2496 = vmul.f32 %v1520, %v517
    %v2497 = vmul.f32 %v1521, %v521
    %v2498 = vmul.f32 %v1522, %v509
    %v2499 = vmul.f32 %v1523, %v513
    %v2500 = vmul.f32 %v1524, %v517
    %v2501 = vmul.f32 %v1525, %v521
    %v2502 = vmul.f32 %v1526, %v509
    %v2503 = vmul.f32 %v1527, %v513
    %v2504 = vmul.f32 %v1528, %v517
    %v2505 = vmul.f32 %v1529, %v521
    %v2506 = vmul.f32 %v1530, %v509
    %v2507 = vmul.f32 %v1531, %v513
    %v2508 = vmul.f32 %v1532, %v517
    %v2509 = vmul.f32 %v1533, %v521
    %2510 = vst [vmem:[#allocation2 + $0x600] sm:$0xff] %v2494
    %2511 = vst [vmem:[#allocation2 + $0x608] sm:$0xff] %v2495
    %2512 = vst [vmem:[#allocation2 + $0x610] sm:$0xff] %v2496
    %2513 = vst [vmem:[#allocation2 + $0x618] sm:$0xff] %v2497
    %2514 = vst [vmem:[#allocation2 + $0x620] sm:$0xff] %v2498
    %2515 = vst [vmem:[#allocation2 + $0x628] sm:$0xff] %v2499
    %2516 = vst [vmem:[#allocation2 + $0x630] sm:$0xff] %v2500
    %2517 = vst [vmem:[#allocation2 + $0x638] sm:$0xff] %v2501
    %2518 = vst [vmem:[#allocation2 + $0x640] sm:$0xff] %v2502
    %2519 = vst [vmem:[#allocation2 + $0x648] sm:$0xff] %v2503
    %2520 = vst [vmem:[#allocation2 + $0x650] sm:$0xff] %v2504
    %2521 = vst [vmem:[#allocation2 + $0x658] sm:$0xff] %v2505
    %2522 = vst [vmem:[#allocation2 + $0x660] sm:$0xff] %v2506
    %2523 = vst [vmem:[#allocation2 + $0x668] sm:$0xff] %v2507
    %2524 = vst [vmem:[#allocation2 + $0x670] sm:$0xff] %v2508
    %2525 = vst [vmem:[#allocation2 + $0x678] sm:$0xff] %v2509
    %2526 = vrot.lane.b32.xlu0 %v1518, 127
    %v2527 = vpop.permute.xlu0 %2526
    %2528 = vrot.lane.b32.xlu0 %v1522, 127
    %v2529 = vpop.permute.xlu0 %2528
    %2530 = vrot.lane.b32.xlu0 %v1526, 127
    %v2531 = vpop.permute.xlu0 %2530
    %2532 = vrot.lane.b32.xlu0 %v1530, 127
    %v2533 = vpop.permute.xlu0 %2532
    %2534 = vrot.lane.b32.xlu0 %v1519, 127
    %v2535 = vpop.permute.xlu0 %2534
    %2536 = vrot.lane.b32.xlu0 %v1523, 127
    %v2537 = vpop.permute.xlu0 %2536
    %2538 = vrot.lane.b32.xlu0 %v1527, 127
    %v2539 = vpop.permute.xlu0 %2538
    %2540 = vrot.lane.b32.xlu0 %v1531, 127
    %v2541 = vpop.permute.xlu0 %2540
    %2542 = vrot.lane.b32.xlu0 %v1520, 127
    %v2543 = vpop.permute.xlu0 %2542
    %2544 = vrot.lane.b32.xlu0 %v1524, 127
    %v2545 = vpop.permute.xlu0 %2544
    %2546 = vrot.lane.b32.xlu0 %v1528, 127
    %v2547 = vpop.permute.xlu0 %2546
    %2548 = vrot.lane.b32.xlu0 %v1532, 127
    %v2549 = vpop.permute.xlu0 %2548
    %2550 = vrot.lane.b32.xlu0 %v1521, 127
    %v2551 = vpop.permute.xlu0 %2550
    %2552 = vrot.lane.b32.xlu0 %v1525, 127
    %v2553 = vpop.permute.xlu0 %2552
    %2554 = vrot.lane.b32.xlu0 %v1529, 127
    %v2555 = vpop.permute.xlu0 %2554
    %2556 = vrot.lane.b32.xlu0 %v1533, 127
    %v2557 = vpop.permute.xlu0 %2556
    %v2558 = vsel %vm553, %v2543, %v2551
    %v2559 = vsel %vm553, %v2545, %v2553
    %v2560 = vsel %vm553, %v2547, %v2555
    %v2561 = vsel %vm553, %v2549, %v2557
    %v2562 = vsel %vm553, %v2535, %v2543
    %v2563 = vsel %vm553, %v2537, %v2545
    %v2564 = vsel %vm553, %v2539, %v2547
    %v2565 = vsel %vm553, %v2541, %v2549
    %v2566 = vsel %vm553, %v2527, %v2535
    %v2567 = vsel %vm553, %v2529, %v2537
    %v2568 = vsel %vm553, %v2531, %v2539
    %v2569 = vsel %vm553, %v2533, %v2541
    %v2570 = vsel %vm553, %v2551, %v2527
    %v2571 = vsel %vm553, %v2553, %v2529
    %v2572 = vsel %vm553, %v2555, %v2531
    %v2573 = vsel %vm553, %v2557, %v2533
    %v2574 = vmul.f32 %v2566, %v561
    %v2575 = vmul.f32 %v2562, %v565
    %v2576 = vmul.f32 %v2558, %v569
    %v2577 = vmul.f32 %v2570, %v573
    %v2578 = vmul.f32 %v2567, %v561
    %v2579 = vmul.f32 %v2563, %v565
    %v2580 = vmul.f32 %v2559, %v569
    %v2581 = vmul.f32 %v2571, %v573
    %v2582 = vmul.f32 %v2568, %v561
    %v2583 = vmul.f32 %v2564, %v565
    %v2584 = vmul.f32 %v2560, %v569
    %v2585 = vmul.f32 %v2572, %v573
    %v2586 = vmul.f32 %v2569, %v561
    %v2587 = vmul.f32 %v2565, %v565
    %v2588 = vmul.f32 %v2561, %v569
    %v2589 = vmul.f32 %v2573, %v573
    %2590 = vst [vmem:[#allocation2 + $0x680] sm:$0xff] %v2574
    %2591 = vst [vmem:[#allocation2 + $0x688] sm:$0xff] %v2575
    %2592 = vst [vmem:[#allocation2 + $0x690] sm:$0xff] %v2576
    %2593 = vst [vmem:[#allocation2 + $0x698] sm:$0xff] %v2577
    %2594 = vst [vmem:[#allocation2 + $0x6a0] sm:$0xff] %v2578
    %2595 = vst [vmem:[#allocation2 + $0x6a8] sm:$0xff] %v2579
    %2596 = vst [vmem:[#allocation2 + $0x6b0] sm:$0xff] %v2580
    %2597 = vst [vmem:[#allocation2 + $0x6b8] sm:$0xff] %v2581
    %2598 = vst [vmem:[#allocation2 + $0x6c0] sm:$0xff] %v2582
    %2599 = vst [vmem:[#allocation2 + $0x6c8] sm:$0xff] %v2583
    %2600 = vst [vmem:[#allocation2 + $0x6d0] sm:$0xff] %v2584
    %2601 = vst [vmem:[#allocation2 + $0x6d8] sm:$0xff] %v2585
    %2602 = vst [vmem:[#allocation2 + $0x6e0] sm:$0xff] %v2586
    %2603 = vst [vmem:[#allocation2 + $0x6e8] sm:$0xff] %v2587
    %2604 = vst [vmem:[#allocation2 + $0x6f0] sm:$0xff] %v2588
    %2605 = vst [vmem:[#allocation2 + $0x6f8] sm:$0xff] %v2589
    %2606 = vrot.lane.b32.xlu0 %v1518, 126
    %v2607 = vpop.permute.xlu0 %2606
    %2608 = vrot.lane.b32.xlu0 %v1522, 126
    %v2609 = vpop.permute.xlu0 %2608
    %2610 = vrot.lane.b32.xlu0 %v1526, 126
    %v2611 = vpop.permute.xlu0 %2610
    %2612 = vrot.lane.b32.xlu0 %v1530, 126
    %v2613 = vpop.permute.xlu0 %2612
    %2614 = vrot.lane.b32.xlu0 %v1519, 126
    %v2615 = vpop.permute.xlu0 %2614
    %2616 = vrot.lane.b32.xlu0 %v1523, 126
    %v2617 = vpop.permute.xlu0 %2616
    %2618 = vrot.lane.b32.xlu0 %v1527, 126
    %v2619 = vpop.permute.xlu0 %2618
    %2620 = vrot.lane.b32.xlu0 %v1531, 126
    %v2621 = vpop.permute.xlu0 %2620
    %2622 = vrot.lane.b32.xlu0 %v1520, 126
    %v2623 = vpop.permute.xlu0 %2622
    %2624 = vrot.lane.b32.xlu0 %v1524, 126
    %v2625 = vpop.permute.xlu0 %2624
    %2626 = vrot.lane.b32.xlu0 %v1528, 126
    %v2627 = vpop.permute.xlu0 %2626
    %2628 = vrot.lane.b32.xlu0 %v1532, 126
    %v2629 = vpop.permute.xlu0 %2628
    %2630 = vrot.lane.b32.xlu0 %v1521, 126
    %v2631 = vpop.permute.xlu0 %2630
    %2632 = vrot.lane.b32.xlu0 %v1525, 126
    %v2633 = vpop.permute.xlu0 %2632
    %2634 = vrot.lane.b32.xlu0 %v1529, 126
    %v2635 = vpop.permute.xlu0 %2634
    %2636 = vrot.lane.b32.xlu0 %v1533, 126
    %v2637 = vpop.permute.xlu0 %2636
    %v2638 = vsel %vm586, %v2623, %v2631
    %v2639 = vsel %vm586, %v2625, %v2633
    %v2640 = vsel %vm586, %v2627, %v2635
    %v2641 = vsel %vm586, %v2629, %v2637
    %v2642 = vsel %vm586, %v2615, %v2623
    %v2643 = vsel %vm586, %v2617, %v2625
    %v2644 = vsel %vm586, %v2619, %v2627
    %v2645 = vsel %vm586, %v2621, %v2629
    %v2646 = vsel %vm586, %v2607, %v2615
    %v2647 = vsel %vm586, %v2609, %v2617
    %v2648 = vsel %vm586, %v2611, %v2619
    %v2649 = vsel %vm586, %v2613, %v2621
    %v2650 = vsel %vm586, %v2631, %v2607
    %v2651 = vsel %vm586, %v2633, %v2609
    %v2652 = vsel %vm586, %v2635, %v2611
    %v2653 = vsel %vm586, %v2637, %v2613
    %v2654 = vmul.f32 %v2646, %v594
    %v2655 = vmul.f32 %v2642, %v598
    %v2656 = vmul.f32 %v2638, %v602
    %v2657 = vmul.f32 %v2650, %v606
    %v2658 = vmul.f32 %v2647, %v594
    %v2659 = vmul.f32 %v2643, %v598
    %v2660 = vmul.f32 %v2639, %v602
    %v2661 = vmul.f32 %v2651, %v606
    %v2662 = vmul.f32 %v2648, %v594
    %v2663 = vmul.f32 %v2644, %v598
    %v2664 = vmul.f32 %v2640, %v602
    %v2665 = vmul.f32 %v2652, %v606
    %v2666 = vmul.f32 %v2649, %v594
    %v2667 = vmul.f32 %v2645, %v598
    %v2668 = vmul.f32 %v2641, %v602
    %v2669 = vmul.f32 %v2653, %v606
    %2670 = vst [vmem:[#allocation2 + $0x700] sm:$0xff] %v2654
    %2671 = vst [vmem:[#allocation2 + $0x708] sm:$0xff] %v2655
    %2672 = vst [vmem:[#allocation2 + $0x710] sm:$0xff] %v2656
    %2673 = vst [vmem:[#allocation2 + $0x718] sm:$0xff] %v2657
    %2674 = vst [vmem:[#allocation2 + $0x720] sm:$0xff] %v2658
    %2675 = vst [vmem:[#allocation2 + $0x728] sm:$0xff] %v2659
    %2676 = vst [vmem:[#allocation2 + $0x730] sm:$0xff] %v2660
    %2677 = vst [vmem:[#allocation2 + $0x738] sm:$0xff] %v2661
    %2678 = vst [vmem:[#allocation2 + $0x740] sm:$0xff] %v2662
    %2679 = vst [vmem:[#allocation2 + $0x748] sm:$0xff] %v2663
    %2680 = vst [vmem:[#allocation2 + $0x750] sm:$0xff] %v2664
    %2681 = vst [vmem:[#allocation2 + $0x758] sm:$0xff] %v2665
    %2682 = vst [vmem:[#allocation2 + $0x760] sm:$0xff] %v2666
    %2683 = vst [vmem:[#allocation2 + $0x768] sm:$0xff] %v2667
    %2684 = vst [vmem:[#allocation2 + $0x770] sm:$0xff] %v2668
    %2685 = vst [vmem:[#allocation2 + $0x778] sm:$0xff] %v2669
    %2686 = vrot.lane.b32.xlu0 %v1518, 114
    %v2687 = vpop.permute.xlu0 %2686
    %2688 = vrot.lane.b32.xlu0 %v1522, 114
    %v2689 = vpop.permute.xlu0 %2688
    %2690 = vrot.lane.b32.xlu0 %v1526, 114
    %v2691 = vpop.permute.xlu0 %2690
    %2692 = vrot.lane.b32.xlu0 %v1530, 114
    %v2693 = vpop.permute.xlu0 %2692
    %2694 = vrot.lane.b32.xlu0 %v1519, 114
    %v2695 = vpop.permute.xlu0 %2694
    %2696 = vrot.lane.b32.xlu0 %v1523, 114
    %v2697 = vpop.permute.xlu0 %2696
    %2698 = vrot.lane.b32.xlu0 %v1527, 114
    %v2699 = vpop.permute.xlu0 %2698
    %2700 = vrot.lane.b32.xlu0 %v1531, 114
    %v2701 = vpop.permute.xlu0 %2700
    %2702 = vrot.lane.b32.xlu0 %v1520, 114
    %v2703 = vpop.permute.xlu0 %2702
    %2704 = vrot.lane.b32.xlu0 %v1524, 114
    %v2705 = vpop.permute.xlu0 %2704
    %2706 = vrot.lane.b32.xlu0 %v1528, 114
    %v2707 = vpop.permute.xlu0 %2706
    %2708 = vrot.lane.b32.xlu0 %v1532, 114
    %v2709 = vpop.permute.xlu0 %2708
    %2710 = vrot.lane.b32.xlu0 %v1521, 114
    %v2711 = vpop.permute.xlu0 %2710
    %2712 = vrot.lane.b32.xlu0 %v1525, 114
    %v2713 = vpop.permute.xlu0 %2712
    %2714 = vrot.lane.b32.xlu0 %v1529, 114
    %v2715 = vpop.permute.xlu0 %2714
    %2716 = vrot.lane.b32.xlu0 %v1533, 114
    %v2717 = vpop.permute.xlu0 %2716
    %v2718 = vsel %vm619, %v2703, %v2711
    %v2719 = vsel %vm619, %v2705, %v2713
    %v2720 = vsel %vm619, %v2707, %v2715
    %v2721 = vsel %vm619, %v2709, %v2717
    %v2722 = vsel %vm619, %v2695, %v2703
    %v2723 = vsel %vm619, %v2697, %v2705
    %v2724 = vsel %vm619, %v2699, %v2707
    %v2725 = vsel %vm619, %v2701, %v2709
    %v2726 = vsel %vm619, %v2687, %v2695
    %v2727 = vsel %vm619, %v2689, %v2697
    %v2728 = vsel %vm619, %v2691, %v2699
    %v2729 = vsel %vm619, %v2693, %v2701
    %v2730 = vsel %vm619, %v2711, %v2687
    %v2731 = vsel %vm619, %v2713, %v2689
    %v2732 = vsel %vm619, %v2715, %v2691
    %v2733 = vsel %vm619, %v2717, %v2693
    %v2734 = vmul.f32 %v2726, %v627
    %v2735 = vmul.f32 %v2722, %v631
    %v2736 = vmul.f32 %v2718, %v635
    %v2737 = vmul.f32 %v2730, %v639
    %v2738 = vmul.f32 %v2727, %v627
    %v2739 = vmul.f32 %v2723, %v631
    %v2740 = vmul.f32 %v2719, %v635
    %v2741 = vmul.f32 %v2731, %v639
    %v2742 = vmul.f32 %v2728, %v627
    %v2743 = vmul.f32 %v2724, %v631
    %v2744 = vmul.f32 %v2720, %v635
    %v2745 = vmul.f32 %v2732, %v639
    %v2746 = vmul.f32 %v2729, %v627
    %v2747 = vmul.f32 %v2725, %v631
    %v2748 = vmul.f32 %v2721, %v635
    %v2749 = vmul.f32 %v2733, %v639
    %2750 = vst [vmem:[#allocation2 + $0x780] sm:$0xff] %v2734
    %2751 = vst [vmem:[#allocation2 + $0x788] sm:$0xff] %v2735
    %2752 = vst [vmem:[#allocation2 + $0x790] sm:$0xff] %v2736
    %2753 = vst [vmem:[#allocation2 + $0x798] sm:$0xff] %v2737
    %2754 = vst [vmem:[#allocation2 + $0x7a0] sm:$0xff] %v2738
    %2755 = vst [vmem:[#allocation2 + $0x7a8] sm:$0xff] %v2739
    %2756 = vst [vmem:[#allocation2 + $0x7b0] sm:$0xff] %v2740
    %2757 = vst [vmem:[#allocation2 + $0x7b8] sm:$0xff] %v2741
    %2758 = vst [vmem:[#allocation2 + $0x7c0] sm:$0xff] %v2742
    %2759 = vst [vmem:[#allocation2 + $0x7c8] sm:$0xff] %v2743
    %2760 = vst [vmem:[#allocation2 + $0x7d0] sm:$0xff] %v2744
    %2761 = vst [vmem:[#allocation2 + $0x7d8] sm:$0xff] %v2745
    %2762 = vst [vmem:[#allocation2 + $0x7e0] sm:$0xff] %v2746
    %2763 = vst [vmem:[#allocation2 + $0x7e8] sm:$0xff] %v2747
    %2764 = vst [vmem:[#allocation2 + $0x7f0] sm:$0xff] %v2748
    %2765 = vst [vmem:[#allocation2 + $0x7f8] sm:$0xff] %v2749
    %2766 = vrot.lane.b32.xlu0 %v1518, 113
    %v2767 = vpop.permute.xlu0 %2766
    %2768 = vrot.lane.b32.xlu0 %v1522, 113
    %v2769 = vpop.permute.xlu0 %2768
    %2770 = vrot.lane.b32.xlu0 %v1526, 113
    %v2771 = vpop.permute.xlu0 %2770
    %2772 = vrot.lane.b32.xlu0 %v1530, 113
    %v2773 = vpop.permute.xlu0 %2772
    %2774 = vrot.lane.b32.xlu0 %v1519, 113
    %v2775 = vpop.permute.xlu0 %2774
    %2776 = vrot.lane.b32.xlu0 %v1523, 113
    %v2777 = vpop.permute.xlu0 %2776
    %2778 = vrot.lane.b32.xlu0 %v1527, 113
    %v2779 = vpop.permute.xlu0 %2778
    %2780 = vrot.lane.b32.xlu0 %v1531, 113
    %v2781 = vpop.permute.xlu0 %2780
    %2782 = vrot.lane.b32.xlu0 %v1520, 113
    %v2783 = vpop.permute.xlu0 %2782
    %2784 = vrot.lane.b32.xlu0 %v1524, 113
    %v2785 = vpop.permute.xlu0 %2784
    %2786 = vrot.lane.b32.xlu0 %v1528, 113
    %v2787 = vpop.permute.xlu0 %2786
    %2788 = vrot.lane.b32.xlu0 %v1532, 113
    %v2789 = vpop.permute.xlu0 %2788
    %2790 = vrot.lane.b32.xlu0 %v1521, 113
    %v2791 = vpop.permute.xlu0 %2790
    %2792 = vrot.lane.b32.xlu0 %v1525, 113
    %v2793 = vpop.permute.xlu0 %2792
    %2794 = vrot.lane.b32.xlu0 %v1529, 113
    %v2795 = vpop.permute.xlu0 %2794
    %2796 = vrot.lane.b32.xlu0 %v1533, 113
    %v2797 = vpop.permute.xlu0 %2796
    %v2798 = vsel %vm652, %v2783, %v2791
    %v2799 = vsel %vm652, %v2785, %v2793
    %v2800 = vsel %vm652, %v2787, %v2795
    %v2801 = vsel %vm652, %v2789, %v2797
    %v2802 = vsel %vm652, %v2775, %v2783
    %v2803 = vsel %vm652, %v2777, %v2785
    %v2804 = vsel %vm652, %v2779, %v2787
    %v2805 = vsel %vm652, %v2781, %v2789
    %v2806 = vsel %vm652, %v2767, %v2775
    %v2807 = vsel %vm652, %v2769, %v2777
    %v2808 = vsel %vm652, %v2771, %v2779
    %v2809 = vsel %vm652, %v2773, %v2781
    %v2810 = vsel %vm652, %v2791, %v2767
    %v2811 = vsel %vm652, %v2793, %v2769
    %v2812 = vsel %vm652, %v2795, %v2771
    %v2813 = vsel %vm652, %v2797, %v2773
    %v2814 = vmul.f32 %v2806, %v660
    %v2815 = vmul.f32 %v2802, %v664
    %v2816 = vmul.f32 %v2798, %v668
    %v2817 = vmul.f32 %v2810, %v672
    %v2818 = vmul.f32 %v2807, %v660
    %v2819 = vmul.f32 %v2803, %v664
    %v2820 = vmul.f32 %v2799, %v668
    %v2821 = vmul.f32 %v2811, %v672
    %v2822 = vmul.f32 %v2808, %v660
    %v2823 = vmul.f32 %v2804, %v664
    %v2824 = vmul.f32 %v2800, %v668
    %v2825 = vmul.f32 %v2812, %v672
    %v2826 = vmul.f32 %v2809, %v660
    %v2827 = vmul.f32 %v2805, %v664
    %v2828 = vmul.f32 %v2801, %v668
    %v2829 = vmul.f32 %v2813, %v672
    %2830 = vst [vmem:[#allocation2 + $0x800] sm:$0xff] %v2814
    %2831 = vst [vmem:[#allocation2 + $0x808] sm:$0xff] %v2815
    %2832 = vst [vmem:[#allocation2 + $0x810] sm:$0xff] %v2816
    %2833 = vst [vmem:[#allocation2 + $0x818] sm:$0xff] %v2817
    %2834 = vst [vmem:[#allocation2 + $0x820] sm:$0xff] %v2818
    %2835 = vst [vmem:[#allocation2 + $0x828] sm:$0xff] %v2819
    %2836 = vst [vmem:[#allocation2 + $0x830] sm:$0xff] %v2820
    %2837 = vst [vmem:[#allocation2 + $0x838] sm:$0xff] %v2821
    %2838 = vst [vmem:[#allocation2 + $0x840] sm:$0xff] %v2822
    %2839 = vst [vmem:[#allocation2 + $0x848] sm:$0xff] %v2823
    %2840 = vst [vmem:[#allocation2 + $0x850] sm:$0xff] %v2824
    %2841 = vst [vmem:[#allocation2 + $0x858] sm:$0xff] %v2825
    %2842 = vst [vmem:[#allocation2 + $0x860] sm:$0xff] %v2826
    %2843 = vst [vmem:[#allocation2 + $0x868] sm:$0xff] %v2827
    %2844 = vst [vmem:[#allocation2 + $0x870] sm:$0xff] %v2828
    %2845 = vst [vmem:[#allocation2 + $0x878] sm:$0xff] %v2829
    %2846 = vrot.lane.b32.xlu0 %v1518, 112
    %v2847 = vpop.permute.xlu0 %2846
    %2848 = vrot.lane.b32.xlu0 %v1522, 112
    %v2849 = vpop.permute.xlu0 %2848
    %2850 = vrot.lane.b32.xlu0 %v1526, 112
    %v2851 = vpop.permute.xlu0 %2850
    %2852 = vrot.lane.b32.xlu0 %v1530, 112
    %v2853 = vpop.permute.xlu0 %2852
    %2854 = vrot.lane.b32.xlu0 %v1519, 112
    %v2855 = vpop.permute.xlu0 %2854
    %2856 = vrot.lane.b32.xlu0 %v1523, 112
    %v2857 = vpop.permute.xlu0 %2856
    %2858 = vrot.lane.b32.xlu0 %v1527, 112
    %v2859 = vpop.permute.xlu0 %2858
    %2860 = vrot.lane.b32.xlu0 %v1531, 112
    %v2861 = vpop.permute.xlu0 %2860
    %2862 = vrot.lane.b32.xlu0 %v1520, 112
    %v2863 = vpop.permute.xlu0 %2862
    %2864 = vrot.lane.b32.xlu0 %v1524, 112
    %v2865 = vpop.permute.xlu0 %2864
    %2866 = vrot.lane.b32.xlu0 %v1528, 112
    %v2867 = vpop.permute.xlu0 %2866
    %2868 = vrot.lane.b32.xlu0 %v1532, 112
    %v2869 = vpop.permute.xlu0 %2868
    %2870 = vrot.lane.b32.xlu0 %v1521, 112
    %v2871 = vpop.permute.xlu0 %2870
    %2872 = vrot.lane.b32.xlu0 %v1525, 112
    %v2873 = vpop.permute.xlu0 %2872
    %2874 = vrot.lane.b32.xlu0 %v1529, 112
    %v2875 = vpop.permute.xlu0 %2874
    %2876 = vrot.lane.b32.xlu0 %v1533, 112
    %v2877 = vpop.permute.xlu0 %2876
    %v2878 = vsel %vm685, %v2863, %v2871
    %v2879 = vsel %vm685, %v2865, %v2873
    %v2880 = vsel %vm685, %v2867, %v2875
    %v2881 = vsel %vm685, %v2869, %v2877
    %v2882 = vsel %vm685, %v2855, %v2863
    %v2883 = vsel %vm685, %v2857, %v2865
    %v2884 = vsel %vm685, %v2859, %v2867
    %v2885 = vsel %vm685, %v2861, %v2869
    %v2886 = vsel %vm685, %v2847, %v2855
    %v2887 = vsel %vm685, %v2849, %v2857
    %v2888 = vsel %vm685, %v2851, %v2859
    %v2889 = vsel %vm685, %v2853, %v2861
    %v2890 = vsel %vm685, %v2871, %v2847
    %v2891 = vsel %vm685, %v2873, %v2849
    %v2892 = vsel %vm685, %v2875, %v2851
    %v2893 = vsel %vm685, %v2877, %v2853
    %v2894 = vmul.f32 %v2886, %v693
    %v2895 = vmul.f32 %v2882, %v697
    %v2896 = vmul.f32 %v2878, %v701
    %v2897 = vmul.f32 %v2890, %v705
    %v2898 = vmul.f32 %v2887, %v693
    %v2899 = vmul.f32 %v2883, %v697
    %v2900 = vmul.f32 %v2879, %v701
    %v2901 = vmul.f32 %v2891, %v705
    %v2902 = vmul.f32 %v2888, %v693
    %v2903 = vmul.f32 %v2884, %v697
    %v2904 = vmul.f32 %v2880, %v701
    %v2905 = vmul.f32 %v2892, %v705
    %v2906 = vmul.f32 %v2889, %v693
    %v2907 = vmul.f32 %v2885, %v697
    %v2908 = vmul.f32 %v2881, %v701
    %v2909 = vmul.f32 %v2893, %v705
    %2910 = vst [vmem:[#allocation2 + $0x880] sm:$0xff] %v2894
    %2911 = vst [vmem:[#allocation2 + $0x888] sm:$0xff] %v2895
    %2912 = vst [vmem:[#allocation2 + $0x890] sm:$0xff] %v2896
    %2913 = vst [vmem:[#allocation2 + $0x898] sm:$0xff] %v2897
    %2914 = vst [vmem:[#allocation2 + $0x8a0] sm:$0xff] %v2898
    %2915 = vst [vmem:[#allocation2 + $0x8a8] sm:$0xff] %v2899
    %2916 = vst [vmem:[#allocation2 + $0x8b0] sm:$0xff] %v2900
    %2917 = vst [vmem:[#allocation2 + $0x8b8] sm:$0xff] %v2901
    %2918 = vst [vmem:[#allocation2 + $0x8c0] sm:$0xff] %v2902
    %2919 = vst [vmem:[#allocation2 + $0x8c8] sm:$0xff] %v2903
    %2920 = vst [vmem:[#allocation2 + $0x8d0] sm:$0xff] %v2904
    %2921 = vst [vmem:[#allocation2 + $0x8d8] sm:$0xff] %v2905
    %2922 = vst [vmem:[#allocation2 + $0x8e0] sm:$0xff] %v2906
    %2923 = vst [vmem:[#allocation2 + $0x8e8] sm:$0xff] %v2907
    %2924 = vst [vmem:[#allocation2 + $0x8f0] sm:$0xff] %v2908
    %2925 = vst [vmem:[#allocation2 + $0x8f8] sm:$0xff] %v2909
    %2926 = vrot.lane.b32.xlu0 %v1518, 111
    %v2927 = vpop.permute.xlu0 %2926
    %2928 = vrot.lane.b32.xlu0 %v1522, 111
    %v2929 = vpop.permute.xlu0 %2928
    %2930 = vrot.lane.b32.xlu0 %v1526, 111
    %v2931 = vpop.permute.xlu0 %2930
    %2932 = vrot.lane.b32.xlu0 %v1530, 111
    %v2933 = vpop.permute.xlu0 %2932
    %2934 = vrot.lane.b32.xlu0 %v1519, 111
    %v2935 = vpop.permute.xlu0 %2934
    %2936 = vrot.lane.b32.xlu0 %v1523, 111
    %v2937 = vpop.permute.xlu0 %2936
    %2938 = vrot.lane.b32.xlu0 %v1527, 111
    %v2939 = vpop.permute.xlu0 %2938
    %2940 = vrot.lane.b32.xlu0 %v1531, 111
    %v2941 = vpop.permute.xlu0 %2940
    %2942 = vrot.lane.b32.xlu0 %v1520, 111
    %v2943 = vpop.permute.xlu0 %2942
    %2944 = vrot.lane.b32.xlu0 %v1524, 111
    %v2945 = vpop.permute.xlu0 %2944
    %2946 = vrot.lane.b32.xlu0 %v1528, 111
    %v2947 = vpop.permute.xlu0 %2946
    %2948 = vrot.lane.b32.xlu0 %v1532, 111
    %v2949 = vpop.permute.xlu0 %2948
    %2950 = vrot.lane.b32.xlu0 %v1521, 111
    %v2951 = vpop.permute.xlu0 %2950
    %2952 = vrot.lane.b32.xlu0 %v1525, 111
    %v2953 = vpop.permute.xlu0 %2952
    %2954 = vrot.lane.b32.xlu0 %v1529, 111
    %v2955 = vpop.permute.xlu0 %2954
    %2956 = vrot.lane.b32.xlu0 %v1533, 111
    %v2957 = vpop.permute.xlu0 %2956
    %v2958 = vsel %vm718, %v2943, %v2951
    %v2959 = vsel %vm718, %v2945, %v2953
    %v2960 = vsel %vm718, %v2947, %v2955
    %v2961 = vsel %vm718, %v2949, %v2957
    %v2962 = vsel %vm718, %v2935, %v2943
    %v2963 = vsel %vm718, %v2937, %v2945
    %v2964 = vsel %vm718, %v2939, %v2947
    %v2965 = vsel %vm718, %v2941, %v2949
    %v2966 = vsel %vm718, %v2927, %v2935
    %v2967 = vsel %vm718, %v2929, %v2937
    %v2968 = vsel %vm718, %v2931, %v2939
    %v2969 = vsel %vm718, %v2933, %v2941
    %v2970 = vsel %vm718, %v2951, %v2927
    %v2971 = vsel %vm718, %v2953, %v2929
    %v2972 = vsel %vm718, %v2955, %v2931
    %v2973 = vsel %vm718, %v2957, %v2933
    %v2974 = vmul.f32 %v2966, %v726
    %v2975 = vmul.f32 %v2962, %v730
    %v2976 = vmul.f32 %v2958, %v734
    %v2977 = vmul.f32 %v2970, %v738
    %v2978 = vmul.f32 %v2967, %v726
    %v2979 = vmul.f32 %v2963, %v730
    %v2980 = vmul.f32 %v2959, %v734
    %v2981 = vmul.f32 %v2971, %v738
    %v2982 = vmul.f32 %v2968, %v726
    %v2983 = vmul.f32 %v2964, %v730
    %v2984 = vmul.f32 %v2960, %v734
    %v2985 = vmul.f32 %v2972, %v738
    %v2986 = vmul.f32 %v2969, %v726
    %v2987 = vmul.f32 %v2965, %v730
    %v2988 = vmul.f32 %v2961, %v734
    %v2989 = vmul.f32 %v2973, %v738
    %2990 = vst [vmem:[#allocation2 + $0x900] sm:$0xff] %v2974
    %2991 = vst [vmem:[#allocation2 + $0x908] sm:$0xff] %v2975
    %2992 = vst [vmem:[#allocation2 + $0x910] sm:$0xff] %v2976
    %2993 = vst [vmem:[#allocation2 + $0x918] sm:$0xff] %v2977
    %2994 = vst [vmem:[#allocation2 + $0x920] sm:$0xff] %v2978
    %2995 = vst [vmem:[#allocation2 + $0x928] sm:$0xff] %v2979
    %2996 = vst [vmem:[#allocation2 + $0x930] sm:$0xff] %v2980
    %2997 = vst [vmem:[#allocation2 + $0x938] sm:$0xff] %v2981
    %2998 = vst [vmem:[#allocation2 + $0x940] sm:$0xff] %v2982
    %2999 = vst [vmem:[#allocation2 + $0x948] sm:$0xff] %v2983
    %3000 = vst [vmem:[#allocation2 + $0x950] sm:$0xff] %v2984
    %3001 = vst [vmem:[#allocation2 + $0x958] sm:$0xff] %v2985
    %3002 = vst [vmem:[#allocation2 + $0x960] sm:$0xff] %v2986
    %3003 = vst [vmem:[#allocation2 + $0x968] sm:$0xff] %v2987
    %3004 = vst [vmem:[#allocation2 + $0x970] sm:$0xff] %v2988
    %3005 = vst [vmem:[#allocation2 + $0x978] sm:$0xff] %v2989
    %3006 = vrot.lane.b32.xlu0 %v1518, 110
    %v3007 = vpop.permute.xlu0 %3006
    %3008 = vrot.lane.b32.xlu0 %v1522, 110
    %v3009 = vpop.permute.xlu0 %3008
    %3010 = vrot.lane.b32.xlu0 %v1526, 110
    %v3011 = vpop.permute.xlu0 %3010
    %3012 = vrot.lane.b32.xlu0 %v1530, 110
    %v3013 = vpop.permute.xlu0 %3012
    %3014 = vrot.lane.b32.xlu0 %v1519, 110
    %v3015 = vpop.permute.xlu0 %3014
    %3016 = vrot.lane.b32.xlu0 %v1523, 110
    %v3017 = vpop.permute.xlu0 %3016
    %3018 = vrot.lane.b32.xlu0 %v1527, 110
    %v3019 = vpop.permute.xlu0 %3018
    %3020 = vrot.lane.b32.xlu0 %v1531, 110
    %v3021 = vpop.permute.xlu0 %3020
    %3022 = vrot.lane.b32.xlu0 %v1520, 110
    %v3023 = vpop.permute.xlu0 %3022
    %3024 = vrot.lane.b32.xlu0 %v1524, 110
    %v3025 = vpop.permute.xlu0 %3024
    %3026 = vrot.lane.b32.xlu0 %v1528, 110
    %v3027 = vpop.permute.xlu0 %3026
    %3028 = vrot.lane.b32.xlu0 %v1532, 110
    %v3029 = vpop.permute.xlu0 %3028
    %3030 = vrot.lane.b32.xlu0 %v1521, 110
    %v3031 = vpop.permute.xlu0 %3030
    %3032 = vrot.lane.b32.xlu0 %v1525, 110
    %v3033 = vpop.permute.xlu0 %3032
    %3034 = vrot.lane.b32.xlu0 %v1529, 110
    %v3035 = vpop.permute.xlu0 %3034
    %3036 = vrot.lane.b32.xlu0 %v1533, 110
    %v3037 = vpop.permute.xlu0 %3036
    %v3038 = vsel %vm751, %v3023, %v3031
    %v3039 = vsel %vm751, %v3025, %v3033
    %v3040 = vsel %vm751, %v3027, %v3035
    %v3041 = vsel %vm751, %v3029, %v3037
    %v3042 = vsel %vm751, %v3015, %v3023
    %v3043 = vsel %vm751, %v3017, %v3025
    %v3044 = vsel %vm751, %v3019, %v3027
    %v3045 = vsel %vm751, %v3021, %v3029
    %v3046 = vsel %vm751, %v3007, %v3015
    %v3047 = vsel %vm751, %v3009, %v3017
    %v3048 = vsel %vm751, %v3011, %v3019
    %v3049 = vsel %vm751, %v3013, %v3021
    %v3050 = vsel %vm751, %v3031, %v3007
    %v3051 = vsel %vm751, %v3033, %v3009
    %v3052 = vsel %vm751, %v3035, %v3011
    %v3053 = vsel %vm751, %v3037, %v3013
    %v3054 = vmul.f32 %v3046, %v759
    %v3055 = vmul.f32 %v3042, %v763
    %v3056 = vmul.f32 %v3038, %v767
    %v3057 = vmul.f32 %v3050, %v771
    %v3058 = vmul.f32 %v3047, %v759
    %v3059 = vmul.f32 %v3043, %v763
    %v3060 = vmul.f32 %v3039, %v767
    %v3061 = vmul.f32 %v3051, %v771
    %v3062 = vmul.f32 %v3048, %v759
    %v3063 = vmul.f32 %v3044, %v763
    %v3064 = vmul.f32 %v3040, %v767
    %v3065 = vmul.f32 %v3052, %v771
    %v3066 = vmul.f32 %v3049, %v759
    %v3067 = vmul.f32 %v3045, %v763
    %v3068 = vmul.f32 %v3041, %v767
    %v3069 = vmul.f32 %v3053, %v771
    %3070 = vst [vmem:[#allocation2 + $0x980] sm:$0xff] %v3054
    %3071 = vst [vmem:[#allocation2 + $0x988] sm:$0xff] %v3055
    %3072 = vst [vmem:[#allocation2 + $0x990] sm:$0xff] %v3056
    %3073 = vst [vmem:[#allocation2 + $0x998] sm:$0xff] %v3057
    %3074 = vst [vmem:[#allocation2 + $0x9a0] sm:$0xff] %v3058
    %3075 = vst [vmem:[#allocation2 + $0x9a8] sm:$0xff] %v3059
    %3076 = vst [vmem:[#allocation2 + $0x9b0] sm:$0xff] %v3060
    %3077 = vst [vmem:[#allocation2 + $0x9b8] sm:$0xff] %v3061
    %3078 = vst [vmem:[#allocation2 + $0x9c0] sm:$0xff] %v3062
    %3079 = vst [vmem:[#allocation2 + $0x9c8] sm:$0xff] %v3063
    %3080 = vst [vmem:[#allocation2 + $0x9d0] sm:$0xff] %v3064
    %3081 = vst [vmem:[#allocation2 + $0x9d8] sm:$0xff] %v3065
    %3082 = vst [vmem:[#allocation2 + $0x9e0] sm:$0xff] %v3066
    %3083 = vst [vmem:[#allocation2 + $0x9e8] sm:$0xff] %v3067
    %3084 = vst [vmem:[#allocation2 + $0x9f0] sm:$0xff] %v3068
    %3085 = vst [vmem:[#allocation2 + $0x9f8] sm:$0xff] %v3069
    %3086 = vrot.lane.b32.xlu0 %v1518, 98
    %v3087 = vpop.permute.xlu0 %3086
    %3088 = vrot.lane.b32.xlu0 %v1522, 98
    %v3089 = vpop.permute.xlu0 %3088
    %3090 = vrot.lane.b32.xlu0 %v1526, 98
    %v3091 = vpop.permute.xlu0 %3090
    %3092 = vrot.lane.b32.xlu0 %v1530, 98
    %v3093 = vpop.permute.xlu0 %3092
    %3094 = vrot.lane.b32.xlu0 %v1519, 98
    %v3095 = vpop.permute.xlu0 %3094
    %3096 = vrot.lane.b32.xlu0 %v1523, 98
    %v3097 = vpop.permute.xlu0 %3096
    %3098 = vrot.lane.b32.xlu0 %v1527, 98
    %v3099 = vpop.permute.xlu0 %3098
    %3100 = vrot.lane.b32.xlu0 %v1531, 98
    %v3101 = vpop.permute.xlu0 %3100
    %3102 = vrot.lane.b32.xlu0 %v1520, 98
    %v3103 = vpop.permute.xlu0 %3102
    %3104 = vrot.lane.b32.xlu0 %v1524, 98
    %v3105 = vpop.permute.xlu0 %3104
    %3106 = vrot.lane.b32.xlu0 %v1528, 98
    %v3107 = vpop.permute.xlu0 %3106
    %3108 = vrot.lane.b32.xlu0 %v1532, 98
    %v3109 = vpop.permute.xlu0 %3108
    %3110 = vrot.lane.b32.xlu0 %v1521, 98
    %v3111 = vpop.permute.xlu0 %3110
    %3112 = vrot.lane.b32.xlu0 %v1525, 98
    %v3113 = vpop.permute.xlu0 %3112
    %3114 = vrot.lane.b32.xlu0 %v1529, 98
    %v3115 = vpop.permute.xlu0 %3114
    %3116 = vrot.lane.b32.xlu0 %v1533, 98
    %v3117 = vpop.permute.xlu0 %3116
    %v3118 = vsel %vm784, %v3103, %v3111
    %v3119 = vsel %vm784, %v3105, %v3113
    %v3120 = vsel %vm784, %v3107, %v3115
    %v3121 = vsel %vm784, %v3109, %v3117
    %v3122 = vsel %vm784, %v3095, %v3103
    %v3123 = vsel %vm784, %v3097, %v3105
    %v3124 = vsel %vm784, %v3099, %v3107
    %v3125 = vsel %vm784, %v3101, %v3109
    %v3126 = vsel %vm784, %v3087, %v3095
    %v3127 = vsel %vm784, %v3089, %v3097
    %v3128 = vsel %vm784, %v3091, %v3099
    %v3129 = vsel %vm784, %v3093, %v3101
    %v3130 = vsel %vm784, %v3111, %v3087
    %v3131 = vsel %vm784, %v3113, %v3089
    %v3132 = vsel %vm784, %v3115, %v3091
    %v3133 = vsel %vm784, %v3117, %v3093
    %v3134 = vmul.f32 %v3126, %v792
    %v3135 = vmul.f32 %v3122, %v796
    %v3136 = vmul.f32 %v3118, %v800
    %v3137 = vmul.f32 %v3130, %v804
    %v3138 = vmul.f32 %v3127, %v792
    %v3139 = vmul.f32 %v3123, %v796
    %v3140 = vmul.f32 %v3119, %v800
    %v3141 = vmul.f32 %v3131, %v804
    %v3142 = vmul.f32 %v3128, %v792
    %v3143 = vmul.f32 %v3124, %v796
    %v3144 = vmul.f32 %v3120, %v800
    %v3145 = vmul.f32 %v3132, %v804
    %v3146 = vmul.f32 %v3129, %v792
    %v3147 = vmul.f32 %v3125, %v796
    %v3148 = vmul.f32 %v3121, %v800
    %v3149 = vmul.f32 %v3133, %v804
    %3150 = vst [vmem:[#allocation2 + $0xa00] sm:$0xff] %v3134
    %3151 = vst [vmem:[#allocation2 + $0xa08] sm:$0xff] %v3135
    %3152 = vst [vmem:[#allocation2 + $0xa10] sm:$0xff] %v3136
    %3153 = vst [vmem:[#allocation2 + $0xa18] sm:$0xff] %v3137
    %3154 = vst [vmem:[#allocation2 + $0xa20] sm:$0xff] %v3138
    %3155 = vst [vmem:[#allocation2 + $0xa28] sm:$0xff] %v3139
    %3156 = vst [vmem:[#allocation2 + $0xa30] sm:$0xff] %v3140
    %3157 = vst [vmem:[#allocation2 + $0xa38] sm:$0xff] %v3141
    %3158 = vst [vmem:[#allocation2 + $0xa40] sm:$0xff] %v3142
    %3159 = vst [vmem:[#allocation2 + $0xa48] sm:$0xff] %v3143
    %3160 = vst [vmem:[#allocation2 + $0xa50] sm:$0xff] %v3144
    %3161 = vst [vmem:[#allocation2 + $0xa58] sm:$0xff] %v3145
    %3162 = vst [vmem:[#allocation2 + $0xa60] sm:$0xff] %v3146
    %3163 = vst [vmem:[#allocation2 + $0xa68] sm:$0xff] %v3147
    %3164 = vst [vmem:[#allocation2 + $0xa70] sm:$0xff] %v3148
    %3165 = vst [vmem:[#allocation2 + $0xa78] sm:$0xff] %v3149
    %3166 = vrot.lane.b32.xlu0 %v1518, 97
    %v3167 = vpop.permute.xlu0 %3166
    %3168 = vrot.lane.b32.xlu0 %v1522, 97
    %v3169 = vpop.permute.xlu0 %3168
    %3170 = vrot.lane.b32.xlu0 %v1526, 97
    %v3171 = vpop.permute.xlu0 %3170
    %3172 = vrot.lane.b32.xlu0 %v1530, 97
    %v3173 = vpop.permute.xlu0 %3172
    %3174 = vrot.lane.b32.xlu0 %v1519, 97
    %v3175 = vpop.permute.xlu0 %3174
    %3176 = vrot.lane.b32.xlu0 %v1523, 97
    %v3177 = vpop.permute.xlu0 %3176
    %3178 = vrot.lane.b32.xlu0 %v1527, 97
    %v3179 = vpop.permute.xlu0 %3178
    %3180 = vrot.lane.b32.xlu0 %v1531, 97
    %v3181 = vpop.permute.xlu0 %3180
    %3182 = vrot.lane.b32.xlu0 %v1520, 97
    %v3183 = vpop.permute.xlu0 %3182
    %3184 = vrot.lane.b32.xlu0 %v1524, 97
    %v3185 = vpop.permute.xlu0 %3184
    %3186 = vrot.lane.b32.xlu0 %v1528, 97
    %v3187 = vpop.permute.xlu0 %3186
    %3188 = vrot.lane.b32.xlu0 %v1532, 97
    %v3189 = vpop.permute.xlu0 %3188
    %3190 = vrot.lane.b32.xlu0 %v1521, 97
    %v3191 = vpop.permute.xlu0 %3190
    %3192 = vrot.lane.b32.xlu0 %v1525, 97
    %v3193 = vpop.permute.xlu0 %3192
    %3194 = vrot.lane.b32.xlu0 %v1529, 97
    %v3195 = vpop.permute.xlu0 %3194
    %3196 = vrot.lane.b32.xlu0 %v1533, 97
    %v3197 = vpop.permute.xlu0 %3196
    %v3198 = vsel %vm817, %v3183, %v3191
    %v3199 = vsel %vm817, %v3185, %v3193
    %v3200 = vsel %vm817, %v3187, %v3195
    %v3201 = vsel %vm817, %v3189, %v3197
    %v3202 = vsel %vm817, %v3175, %v3183
    %v3203 = vsel %vm817, %v3177, %v3185
    %v3204 = vsel %vm817, %v3179, %v3187
    %v3205 = vsel %vm817, %v3181, %v3189
    %v3206 = vsel %vm817, %v3167, %v3175
    %v3207 = vsel %vm817, %v3169, %v3177
    %v3208 = vsel %vm817, %v3171, %v3179
    %v3209 = vsel %vm817, %v3173, %v3181
    %v3210 = vsel %vm817, %v3191, %v3167
    %v3211 = vsel %vm817, %v3193, %v3169
    %v3212 = vsel %vm817, %v3195, %v3171
    %v3213 = vsel %vm817, %v3197, %v3173
    %v3214 = vmul.f32 %v3206, %v825
    %v3215 = vmul.f32 %v3202, %v829
    %v3216 = vmul.f32 %v3198, %v833
    %v3217 = vmul.f32 %v3210, %v837
    %v3218 = vmul.f32 %v3207, %v825
    %v3219 = vmul.f32 %v3203, %v829
    %v3220 = vmul.f32 %v3199, %v833
    %v3221 = vmul.f32 %v3211, %v837
    %v3222 = vmul.f32 %v3208, %v825
    %v3223 = vmul.f32 %v3204, %v829
    %v3224 = vmul.f32 %v3200, %v833
    %v3225 = vmul.f32 %v3212, %v837
    %v3226 = vmul.f32 %v3209, %v825
    %v3227 = vmul.f32 %v3205, %v829
    %v3228 = vmul.f32 %v3201, %v833
    %v3229 = vmul.f32 %v3213, %v837
    %3230 = vst [vmem:[#allocation2 + $0xa80] sm:$0xff] %v3214
    %3231 = vst [vmem:[#allocation2 + $0xa88] sm:$0xff] %v3215
    %3232 = vst [vmem:[#allocation2 + $0xa90] sm:$0xff] %v3216
    %3233 = vst [vmem:[#allocation2 + $0xa98] sm:$0xff] %v3217
    %3234 = vst [vmem:[#allocation2 + $0xaa0] sm:$0xff] %v3218
    %3235 = vst [vmem:[#allocation2 + $0xaa8] sm:$0xff] %v3219
    %3236 = vst [vmem:[#allocation2 + $0xab0] sm:$0xff] %v3220
    %3237 = vst [vmem:[#allocation2 + $0xab8] sm:$0xff] %v3221
    %3238 = vst [vmem:[#allocation2 + $0xac0] sm:$0xff] %v3222
    %3239 = vst [vmem:[#allocation2 + $0xac8] sm:$0xff] %v3223
    %3240 = vst [vmem:[#allocation2 + $0xad0] sm:$0xff] %v3224
    %3241 = vst [vmem:[#allocation2 + $0xad8] sm:$0xff] %v3225
    %3242 = vst [vmem:[#allocation2 + $0xae0] sm:$0xff] %v3226
    %3243 = vst [vmem:[#allocation2 + $0xae8] sm:$0xff] %v3227
    %3244 = vst [vmem:[#allocation2 + $0xaf0] sm:$0xff] %v3228
    %3245 = vst [vmem:[#allocation2 + $0xaf8] sm:$0xff] %v3229
    %3246 = vrot.lane.b32.xlu0 %v1518, 96
    %v3247 = vpop.permute.xlu0 %3246
    %3248 = vrot.lane.b32.xlu0 %v1522, 96
    %v3249 = vpop.permute.xlu0 %3248
    %3250 = vrot.lane.b32.xlu0 %v1526, 96
    %v3251 = vpop.permute.xlu0 %3250
    %3252 = vrot.lane.b32.xlu0 %v1530, 96
    %v3253 = vpop.permute.xlu0 %3252
    %3254 = vrot.lane.b32.xlu0 %v1519, 96
    %v3255 = vpop.permute.xlu0 %3254
    %3256 = vrot.lane.b32.xlu0 %v1523, 96
    %v3257 = vpop.permute.xlu0 %3256
    %3258 = vrot.lane.b32.xlu0 %v1527, 96
    %v3259 = vpop.permute.xlu0 %3258
    %3260 = vrot.lane.b32.xlu0 %v1531, 96
    %v3261 = vpop.permute.xlu0 %3260
    %3262 = vrot.lane.b32.xlu0 %v1520, 96
    %v3263 = vpop.permute.xlu0 %3262
    %3264 = vrot.lane.b32.xlu0 %v1524, 96
    %v3265 = vpop.permute.xlu0 %3264
    %3266 = vrot.lane.b32.xlu0 %v1528, 96
    %v3267 = vpop.permute.xlu0 %3266
    %3268 = vrot.lane.b32.xlu0 %v1532, 96
    %v3269 = vpop.permute.xlu0 %3268
    %3270 = vrot.lane.b32.xlu0 %v1521, 96
    %v3271 = vpop.permute.xlu0 %3270
    %3272 = vrot.lane.b32.xlu0 %v1525, 96
    %v3273 = vpop.permute.xlu0 %3272
    %3274 = vrot.lane.b32.xlu0 %v1529, 96
    %v3275 = vpop.permute.xlu0 %3274
    %3276 = vrot.lane.b32.xlu0 %v1533, 96
    %v3277 = vpop.permute.xlu0 %3276
    %v3278 = vsel %vm850, %v3263, %v3271
    %v3279 = vsel %vm850, %v3265, %v3273
    %v3280 = vsel %vm850, %v3267, %v3275
    %v3281 = vsel %vm850, %v3269, %v3277
    %v3282 = vsel %vm850, %v3255, %v3263
    %v3283 = vsel %vm850, %v3257, %v3265
    %v3284 = vsel %vm850, %v3259, %v3267
    %v3285 = vsel %vm850, %v3261, %v3269
    %v3286 = vsel %vm850, %v3247, %v3255
    %v3287 = vsel %vm850, %v3249, %v3257
    %v3288 = vsel %vm850, %v3251, %v3259
    %v3289 = vsel %vm850, %v3253, %v3261
    %v3290 = vsel %vm850, %v3271, %v3247
    %v3291 = vsel %vm850, %v3273, %v3249
    %v3292 = vsel %vm850, %v3275, %v3251
    %v3293 = vsel %vm850, %v3277, %v3253
    %v3294 = vmul.f32 %v3286, %v858
    %v3295 = vmul.f32 %v3282, %v862
    %v3296 = vmul.f32 %v3278, %v866
    %v3297 = vmul.f32 %v3290, %v870
    %v3298 = vmul.f32 %v3287, %v858
    %v3299 = vmul.f32 %v3283, %v862
    %v3300 = vmul.f32 %v3279, %v866
    %v3301 = vmul.f32 %v3291, %v870
    %v3302 = vmul.f32 %v3288, %v858
    %v3303 = vmul.f32 %v3284, %v862
    %v3304 = vmul.f32 %v3280, %v866
    %v3305 = vmul.f32 %v3292, %v870
    %v3306 = vmul.f32 %v3289, %v858
    %v3307 = vmul.f32 %v3285, %v862
    %v3308 = vmul.f32 %v3281, %v866
    %v3309 = vmul.f32 %v3293, %v870
    %3310 = vst [vmem:[#allocation2 + $0xb00] sm:$0xff] %v3294
    %3311 = vst [vmem:[#allocation2 + $0xb08] sm:$0xff] %v3295
    %3312 = vst [vmem:[#allocation2 + $0xb10] sm:$0xff] %v3296
    %3313 = vst [vmem:[#allocation2 + $0xb18] sm:$0xff] %v3297
    %3314 = vst [vmem:[#allocation2 + $0xb20] sm:$0xff] %v3298
    %3315 = vst [vmem:[#allocation2 + $0xb28] sm:$0xff] %v3299
    %3316 = vst [vmem:[#allocation2 + $0xb30] sm:$0xff] %v3300
    %3317 = vst [vmem:[#allocation2 + $0xb38] sm:$0xff] %v3301
    %3318 = vst [vmem:[#allocation2 + $0xb40] sm:$0xff] %v3302
    %3319 = vst [vmem:[#allocation2 + $0xb48] sm:$0xff] %v3303
    %3320 = vst [vmem:[#allocation2 + $0xb50] sm:$0xff] %v3304
    %3321 = vst [vmem:[#allocation2 + $0xb58] sm:$0xff] %v3305
    %3322 = vst [vmem:[#allocation2 + $0xb60] sm:$0xff] %v3306
    %3323 = vst [vmem:[#allocation2 + $0xb68] sm:$0xff] %v3307
    %3324 = vst [vmem:[#allocation2 + $0xb70] sm:$0xff] %v3308
    %3325 = vst [vmem:[#allocation2 + $0xb78] sm:$0xff] %v3309
    %3326 = vrot.lane.b32.xlu0 %v1518, 95
    %v3327 = vpop.permute.xlu0 %3326
    %3328 = vrot.lane.b32.xlu0 %v1522, 95
    %v3329 = vpop.permute.xlu0 %3328
    %3330 = vrot.lane.b32.xlu0 %v1526, 95
    %v3331 = vpop.permute.xlu0 %3330
    %3332 = vrot.lane.b32.xlu0 %v1530, 95
    %v3333 = vpop.permute.xlu0 %3332
    %3334 = vrot.lane.b32.xlu0 %v1519, 95
    %v3335 = vpop.permute.xlu0 %3334
    %3336 = vrot.lane.b32.xlu0 %v1523, 95
    %v3337 = vpop.permute.xlu0 %3336
    %3338 = vrot.lane.b32.xlu0 %v1527, 95
    %v3339 = vpop.permute.xlu0 %3338
    %3340 = vrot.lane.b32.xlu0 %v1531, 95
    %v3341 = vpop.permute.xlu0 %3340
    %3342 = vrot.lane.b32.xlu0 %v1520, 95
    %v3343 = vpop.permute.xlu0 %3342
    %3344 = vrot.lane.b32.xlu0 %v1524, 95
    %v3345 = vpop.permute.xlu0 %3344
    %3346 = vrot.lane.b32.xlu0 %v1528, 95
    %v3347 = vpop.permute.xlu0 %3346
    %3348 = vrot.lane.b32.xlu0 %v1532, 95
    %v3349 = vpop.permute.xlu0 %3348
    %3350 = vrot.lane.b32.xlu0 %v1521, 95
    %v3351 = vpop.permute.xlu0 %3350
    %3352 = vrot.lane.b32.xlu0 %v1525, 95
    %v3353 = vpop.permute.xlu0 %3352
    %3354 = vrot.lane.b32.xlu0 %v1529, 95
    %v3355 = vpop.permute.xlu0 %3354
    %3356 = vrot.lane.b32.xlu0 %v1533, 95
    %v3357 = vpop.permute.xlu0 %3356
    %v3358 = vsel %vm883, %v3343, %v3351
    %v3359 = vsel %vm883, %v3345, %v3353
    %v3360 = vsel %vm883, %v3347, %v3355
    %v3361 = vsel %vm883, %v3349, %v3357
    %v3362 = vsel %vm883, %v3335, %v3343
    %v3363 = vsel %vm883, %v3337, %v3345
    %v3364 = vsel %vm883, %v3339, %v3347
    %v3365 = vsel %vm883, %v3341, %v3349
    %v3366 = vsel %vm883, %v3327, %v3335
    %v3367 = vsel %vm883, %v3329, %v3337
    %v3368 = vsel %vm883, %v3331, %v3339
    %v3369 = vsel %vm883, %v3333, %v3341
    %v3370 = vsel %vm883, %v3351, %v3327
    %v3371 = vsel %vm883, %v3353, %v3329
    %v3372 = vsel %vm883, %v3355, %v3331
    %v3373 = vsel %vm883, %v3357, %v3333
    %v3374 = vmul.f32 %v3366, %v891
    %v3375 = vmul.f32 %v3362, %v895
    %v3376 = vmul.f32 %v3358, %v899
    %v3377 = vmul.f32 %v3370, %v903
    %v3378 = vmul.f32 %v3367, %v891
    %v3379 = vmul.f32 %v3363, %v895
    %v3380 = vmul.f32 %v3359, %v899
    %v3381 = vmul.f32 %v3371, %v903
    %v3382 = vmul.f32 %v3368, %v891
    %v3383 = vmul.f32 %v3364, %v895
    %v3384 = vmul.f32 %v3360, %v899
    %v3385 = vmul.f32 %v3372, %v903
    %v3386 = vmul.f32 %v3369, %v891
    %v3387 = vmul.f32 %v3365, %v895
    %v3388 = vmul.f32 %v3361, %v899
    %v3389 = vmul.f32 %v3373, %v903
    %3390 = vst [vmem:[#allocation2 + $0xb80] sm:$0xff] %v3374
    %3391 = vst [vmem:[#allocation2 + $0xb88] sm:$0xff] %v3375
    %3392 = vst [vmem:[#allocation2 + $0xb90] sm:$0xff] %v3376
    %3393 = vst [vmem:[#allocation2 + $0xb98] sm:$0xff] %v3377
    %3394 = vst [vmem:[#allocation2 + $0xba0] sm:$0xff] %v3378
    %3395 = vst [vmem:[#allocation2 + $0xba8] sm:$0xff] %v3379
    %3396 = vst [vmem:[#allocation2 + $0xbb0] sm:$0xff] %v3380
    %3397 = vst [vmem:[#allocation2 + $0xbb8] sm:$0xff] %v3381
    %3398 = vst [vmem:[#allocation2 + $0xbc0] sm:$0xff] %v3382
    %3399 = vst [vmem:[#allocation2 + $0xbc8] sm:$0xff] %v3383
    %3400 = vst [vmem:[#allocation2 + $0xbd0] sm:$0xff] %v3384
    %3401 = vst [vmem:[#allocation2 + $0xbd8] sm:$0xff] %v3385
    %3402 = vst [vmem:[#allocation2 + $0xbe0] sm:$0xff] %v3386
    %3403 = vst [vmem:[#allocation2 + $0xbe8] sm:$0xff] %v3387
    %3404 = vst [vmem:[#allocation2 + $0xbf0] sm:$0xff] %v3388
    %3405 = vst [vmem:[#allocation2 + $0xbf8] sm:$0xff] %v3389
    %3406 = vrot.lane.b32.xlu0 %v1518, 94
    %v3407 = vpop.permute.xlu0 %3406
    %3408 = vrot.lane.b32.xlu0 %v1522, 94
    %v3409 = vpop.permute.xlu0 %3408
    %3410 = vrot.lane.b32.xlu0 %v1526, 94
    %v3411 = vpop.permute.xlu0 %3410
    %3412 = vrot.lane.b32.xlu0 %v1530, 94
    %v3413 = vpop.permute.xlu0 %3412
    %3414 = vrot.lane.b32.xlu0 %v1519, 94
    %v3415 = vpop.permute.xlu0 %3414
    %3416 = vrot.lane.b32.xlu0 %v1523, 94
    %v3417 = vpop.permute.xlu0 %3416
    %3418 = vrot.lane.b32.xlu0 %v1527, 94
    %v3419 = vpop.permute.xlu0 %3418
    %3420 = vrot.lane.b32.xlu0 %v1531, 94
    %v3421 = vpop.permute.xlu0 %3420
    %3422 = vrot.lane.b32.xlu0 %v1520, 94
    %v3423 = vpop.permute.xlu0 %3422
    %3424 = vrot.lane.b32.xlu0 %v1524, 94
    %v3425 = vpop.permute.xlu0 %3424
    %3426 = vrot.lane.b32.xlu0 %v1528, 94
    %v3427 = vpop.permute.xlu0 %3426
    %3428 = vrot.lane.b32.xlu0 %v1532, 94
    %v3429 = vpop.permute.xlu0 %3428
    %3430 = vrot.lane.b32.xlu0 %v1521, 94
    %v3431 = vpop.permute.xlu0 %3430
    %3432 = vrot.lane.b32.xlu0 %v1525, 94
    %v3433 = vpop.permute.xlu0 %3432
    %3434 = vrot.lane.b32.xlu0 %v1529, 94
    %v3435 = vpop.permute.xlu0 %3434
    %3436 = vrot.lane.b32.xlu0 %v1533, 94
    %v3437 = vpop.permute.xlu0 %3436
    %v3438 = vsel %vm916, %v3423, %v3431
    %v3439 = vsel %vm916, %v3425, %v3433
    %v3440 = vsel %vm916, %v3427, %v3435
    %v3441 = vsel %vm916, %v3429, %v3437
    %v3442 = vsel %vm916, %v3415, %v3423
    %v3443 = vsel %vm916, %v3417, %v3425
    %v3444 = vsel %vm916, %v3419, %v3427
    %v3445 = vsel %vm916, %v3421, %v3429
    %v3446 = vsel %vm916, %v3407, %v3415
    %v3447 = vsel %vm916, %v3409, %v3417
    %v3448 = vsel %vm916, %v3411, %v3419
    %v3449 = vsel %vm916, %v3413, %v3421
    %v3450 = vsel %vm916, %v3431, %v3407
    %v3451 = vsel %vm916, %v3433, %v3409
    %v3452 = vsel %vm916, %v3435, %v3411
    %v3453 = vsel %vm916, %v3437, %v3413
    %v3454 = vmul.f32 %v3446, %v924
    %v3455 = vmul.f32 %v3442, %v928
    %v3456 = vmul.f32 %v3438, %v932
    %v3457 = vmul.f32 %v3450, %v936
    %v3458 = vmul.f32 %v3447, %v924
    %v3459 = vmul.f32 %v3443, %v928
    %v3460 = vmul.f32 %v3439, %v932
    %v3461 = vmul.f32 %v3451, %v936
    %v3462 = vmul.f32 %v3448, %v924
    %v3463 = vmul.f32 %v3444, %v928
    %v3464 = vmul.f32 %v3440, %v932
    %v3465 = vmul.f32 %v3452, %v936
    %v3466 = vmul.f32 %v3449, %v924
    %v3467 = vmul.f32 %v3445, %v928
    %v3468 = vmul.f32 %v3441, %v932
    %v3469 = vmul.f32 %v3453, %v936
    %3470 = vst [vmem:[#allocation2 + $0xc00] sm:$0xff] %v3454
    %3471 = vst [vmem:[#allocation2 + $0xc08] sm:$0xff] %v3455
    %3472 = vst [vmem:[#allocation2 + $0xc10] sm:$0xff] %v3456
    %3473 = vst [vmem:[#allocation2 + $0xc18] sm:$0xff] %v3457
    %3474 = vst [vmem:[#allocation2 + $0xc20] sm:$0xff] %v3458
    %3475 = vst [vmem:[#allocation2 + $0xc28] sm:$0xff] %v3459
    %3476 = vst [vmem:[#allocation2 + $0xc30] sm:$0xff] %v3460
    %3477 = vst [vmem:[#allocation2 + $0xc38] sm:$0xff] %v3461
    %3478 = vst [vmem:[#allocation2 + $0xc40] sm:$0xff] %v3462
    %3479 = vst [vmem:[#allocation2 + $0xc48] sm:$0xff] %v3463
    %3480 = vst [vmem:[#allocation2 + $0xc50] sm:$0xff] %v3464
    %3481 = vst [vmem:[#allocation2 + $0xc58] sm:$0xff] %v3465
    %3482 = vst [vmem:[#allocation2 + $0xc60] sm:$0xff] %v3466
    %3483 = vst [vmem:[#allocation2 + $0xc68] sm:$0xff] %v3467
    %3484 = vst [vmem:[#allocation2 + $0xc70] sm:$0xff] %v3468
    %3485 = vst [vmem:[#allocation2 + $0xc78] sm:$0xff] %v3469
    %v3486 = vld [vmem:[#allocation9] sm:$0xff]
    %v3487 = vld [vmem:[#allocation9 + $0x8] sm:$0xff]
    %v3488 = vld [vmem:[#allocation9 + $0x10] sm:$0xff]
    %v3489 = vld [vmem:[#allocation9 + $0x18] sm:$0xff]
    %v3490 = vld [vmem:[#allocation9 + $0x20] sm:$0xff]
    %v3491 = vld [vmem:[#allocation9 + $0x28] sm:$0xff]
    %v3492 = vld [vmem:[#allocation9 + $0x30] sm:$0xff]
    %v3493 = vld [vmem:[#allocation9 + $0x38] sm:$0xff]
    %v3494 = vld [vmem:[#allocation9 + $0x40] sm:$0xff]
    %v3495 = vld [vmem:[#allocation9 + $0x48] sm:$0xff]
    %v3496 = vld [vmem:[#allocation9 + $0x50] sm:$0xff]
    %v3497 = vld [vmem:[#allocation9 + $0x58] sm:$0xff]
    %v3498 = vld [vmem:[#allocation9 + $0x60] sm:$0xff]
    %v3499 = vld [vmem:[#allocation9 + $0x68] sm:$0xff]
    %v3500 = vld [vmem:[#allocation9 + $0x70] sm:$0xff]
    %v3501 = vld [vmem:[#allocation9 + $0x78] sm:$0xff]
    %v3502 = vld [vmem:[#allocation9 + $0x80] sm:$0xff]
    %v3503 = vld [vmem:[#allocation9 + $0x88] sm:$0xff]
    %v3504 = vld [vmem:[#allocation9 + $0x90] sm:$0xff]
    %v3505 = vld [vmem:[#allocation9 + $0x98] sm:$0xff]
    %v3506 = vld [vmem:[#allocation9 + $0xa0] sm:$0xff]
    %v3507 = vld [vmem:[#allocation9 + $0xa8] sm:$0xff]
    %v3508 = vld [vmem:[#allocation9 + $0xb0] sm:$0xff]
    %v3509 = vld [vmem:[#allocation9 + $0xb8] sm:$0xff]
    %v3510 = vld [vmem:[#allocation9 + $0xc0] sm:$0xff]
    %v3511 = vld [vmem:[#allocation9 + $0xc8] sm:$0xff]
    %v3512 = vld [vmem:[#allocation9 + $0xd0] sm:$0xff]
    %v3513 = vld [vmem:[#allocation9 + $0xd8] sm:$0xff]
    %v3514 = vld [vmem:[#allocation2] sm:$0xff]
    %v3515 = vld [vmem:[#allocation2 + $0x8] sm:$0xff]
    %v3516 = vld [vmem:[#allocation2 + $0x10] sm:$0xff]
    %v3517 = vld [vmem:[#allocation2 + $0x18] sm:$0xff]
    %v3518 = vld [vmem:[#allocation2 + $0x20] sm:$0xff]
    %v3519 = vld [vmem:[#allocation2 + $0x28] sm:$0xff]
    %v3520 = vld [vmem:[#allocation2 + $0x30] sm:$0xff]
    %v3521 = vld [vmem:[#allocation2 + $0x38] sm:$0xff]
    %v3522 = vld [vmem:[#allocation2 + $0x40] sm:$0xff]
    %v3523 = vld [vmem:[#allocation2 + $0x48] sm:$0xff]
    %v3524 = vld [vmem:[#allocation2 + $0x50] sm:$0xff]
    %v3525 = vld [vmem:[#allocation2 + $0x58] sm:$0xff]
    %v3526 = vld [vmem:[#allocation2 + $0x60] sm:$0xff]
    %v3527 = vld [vmem:[#allocation2 + $0x68] sm:$0xff]
    %v3528 = vld [vmem:[#allocation2 + $0x70] sm:$0xff]
    %v3529 = vld [vmem:[#allocation2 + $0x78] sm:$0xff]
    %v3530 = vld [vmem:[#allocation2 + $0x80] sm:$0xff]
    %v3531 = vld [vmem:[#allocation2 + $0x88] sm:$0xff]
    %v3532 = vld [vmem:[#allocation2 + $0x90] sm:$0xff]
    %v3533 = vld [vmem:[#allocation2 + $0x98] sm:$0xff]
    %v3534 = vld [vmem:[#allocation2 + $0xa0] sm:$0xff]
    %v3535 = vld [vmem:[#allocation2 + $0xa8] sm:$0xff]
    %v3536 = vld [vmem:[#allocation2 + $0xb0] sm:$0xff]
    %v3537 = vld [vmem:[#allocation2 + $0xb8] sm:$0xff]
    %v3538 = vld [vmem:[#allocation2 + $0xc0] sm:$0xff]
    %v3539 = vld [vmem:[#allocation2 + $0xc8] sm:$0xff]
    %v3540 = vld [vmem:[#allocation2 + $0xd0] sm:$0xff]
    %v3541 = vld [vmem:[#allocation2 + $0xd8] sm:$0xff]
    %v3542 = vld [vmem:[#allocation2 + $0xe0] sm:$0xff]
    %v3543 = vld [vmem:[#allocation2 + $0xe8] sm:$0xff]
    %v3544 = vld [vmem:[#allocation2 + $0xf0] sm:$0xff]
    %v3545 = vld [vmem:[#allocation2 + $0xf8] sm:$0xff]
    %v3546 = vld [vmem:[#allocation2 + $0x100] sm:$0xff]
    %v3547 = vld [vmem:[#allocation2 + $0x108] sm:$0xff]
    %v3548 = vld [vmem:[#allocation2 + $0x110] sm:$0xff]
    %v3549 = vld [vmem:[#allocation2 + $0x118] sm:$0xff]
    %v3550 = vld [vmem:[#allocation2 + $0x120] sm:$0xff]
    %v3551 = vld [vmem:[#allocation2 + $0x128] sm:$0xff]
    %v3552 = vld [vmem:[#allocation2 + $0x130] sm:$0xff]
    %v3553 = vld [vmem:[#allocation2 + $0x138] sm:$0xff]
    %v3554 = vld [vmem:[#allocation2 + $0x140] sm:$0xff]
    %v3555 = vld [vmem:[#allocation2 + $0x148] sm:$0xff]
    %v3556 = vld [vmem:[#allocation2 + $0x150] sm:$0xff]
    %v3557 = vld [vmem:[#allocation2 + $0x158] sm:$0xff]
    %v3558 = vld [vmem:[#allocation2 + $0x160] sm:$0xff]
    %v3559 = vld [vmem:[#allocation2 + $0x168] sm:$0xff]
    %v3560 = vld [vmem:[#allocation2 + $0x170] sm:$0xff]
    %v3561 = vld [vmem:[#allocation2 + $0x178] sm:$0xff]
    %v3562 = vld [vmem:[#allocation2 + $0x180] sm:$0xff]
    %v3563 = vld [vmem:[#allocation2 + $0x188] sm:$0xff]
    %v3564 = vld [vmem:[#allocation2 + $0x190] sm:$0xff]
    %v3565 = vld [vmem:[#allocation2 + $0x198] sm:$0xff]
    %v3566 = vld [vmem:[#allocation2 + $0x1a0] sm:$0xff]
    %v3567 = vld [vmem:[#allocation2 + $0x1a8] sm:$0xff]
    %v3568 = vld [vmem:[#allocation2 + $0x1b0] sm:$0xff]
    %v3569 = vld [vmem:[#allocation2 + $0x1b8] sm:$0xff]
    %v3570 = vld [vmem:[#allocation2 + $0x1c0] sm:$0xff]
    %v3571 = vld [vmem:[#allocation2 + $0x1c8] sm:$0xff]
    %v3572 = vld [vmem:[#allocation2 + $0x1d0] sm:$0xff]
    %v3573 = vld [vmem:[#allocation2 + $0x1d8] sm:$0xff]
    %v3574 = vld [vmem:[#allocation2 + $0x1e0] sm:$0xff]
    %v3575 = vld [vmem:[#allocation2 + $0x1e8] sm:$0xff]
    %v3576 = vld [vmem:[#allocation2 + $0x1f0] sm:$0xff]
    %v3577 = vld [vmem:[#allocation2 + $0x1f8] sm:$0xff]
    %v3578 = vld [vmem:[#allocation2 + $0x200] sm:$0xff]
    %v3579 = vld [vmem:[#allocation2 + $0x208] sm:$0xff]
    %v3580 = vld [vmem:[#allocation2 + $0x210] sm:$0xff]
    %v3581 = vld [vmem:[#allocation2 + $0x218] sm:$0xff]
    %v3582 = vld [vmem:[#allocation2 + $0x220] sm:$0xff]
    %v3583 = vld [vmem:[#allocation2 + $0x228] sm:$0xff]
    %v3584 = vld [vmem:[#allocation2 + $0x230] sm:$0xff]
    %v3585 = vld [vmem:[#allocation2 + $0x238] sm:$0xff]
    %v3586 = vld [vmem:[#allocation2 + $0x240] sm:$0xff]
    %v3587 = vld [vmem:[#allocation2 + $0x248] sm:$0xff]
    %v3588 = vld [vmem:[#allocation2 + $0x250] sm:$0xff]
    %v3589 = vld [vmem:[#allocation2 + $0x258] sm:$0xff]
    %v3590 = vld [vmem:[#allocation2 + $0x260] sm:$0xff]
    %v3591 = vld [vmem:[#allocation2 + $0x268] sm:$0xff]
    %v3592 = vld [vmem:[#allocation2 + $0x270] sm:$0xff]
    %v3593 = vld [vmem:[#allocation2 + $0x278] sm:$0xff]
    %v3594 = vld [vmem:[#allocation2 + $0x280] sm:$0xff]
    %v3595 = vld [vmem:[#allocation2 + $0x288] sm:$0xff]
    %v3596 = vld [vmem:[#allocation2 + $0x290] sm:$0xff]
    %v3597 = vld [vmem:[#allocation2 + $0x298] sm:$0xff]
    %v3598 = vld [vmem:[#allocation2 + $0x2a0] sm:$0xff]
    %v3599 = vld [vmem:[#allocation2 + $0x2a8] sm:$0xff]
    %v3600 = vld [vmem:[#allocation2 + $0x2b0] sm:$0xff]
    %v3601 = vld [vmem:[#allocation2 + $0x2b8] sm:$0xff]
    %v3602 = vld [vmem:[#allocation2 + $0x2c0] sm:$0xff]
    %v3603 = vld [vmem:[#allocation2 + $0x2c8] sm:$0xff]
    %v3604 = vld [vmem:[#allocation2 + $0x2d0] sm:$0xff]
    %v3605 = vld [vmem:[#allocation2 + $0x2d8] sm:$0xff]
    %v3606 = vld [vmem:[#allocation2 + $0x2e0] sm:$0xff]
    %v3607 = vld [vmem:[#allocation2 + $0x2e8] sm:$0xff]
    %v3608 = vld [vmem:[#allocation2 + $0x2f0] sm:$0xff]
    %v3609 = vld [vmem:[#allocation2 + $0x2f8] sm:$0xff]
    %v3610 = vld [vmem:[#allocation2 + $0x300] sm:$0xff]
    %v3611 = vld [vmem:[#allocation2 + $0x308] sm:$0xff]
    %v3612 = vld [vmem:[#allocation2 + $0x310] sm:$0xff]
    %v3613 = vld [vmem:[#allocation2 + $0x318] sm:$0xff]
    %v3614 = vld [vmem:[#allocation2 + $0x320] sm:$0xff]
    %v3615 = vld [vmem:[#allocation2 + $0x328] sm:$0xff]
    %v3616 = vld [vmem:[#allocation2 + $0x330] sm:$0xff]
    %v3617 = vld [vmem:[#allocation2 + $0x338] sm:$0xff]
    %v3618 = vld [vmem:[#allocation2 + $0x340] sm:$0xff]
    %v3619 = vld [vmem:[#allocation2 + $0x348] sm:$0xff]
    %v3620 = vld [vmem:[#allocation2 + $0x350] sm:$0xff]
    %v3621 = vld [vmem:[#allocation2 + $0x358] sm:$0xff]
    %v3622 = vld [vmem:[#allocation2 + $0x360] sm:$0xff]
    %v3623 = vld [vmem:[#allocation2 + $0x368] sm:$0xff]
    %v3624 = vld [vmem:[#allocation2 + $0x370] sm:$0xff]
    %v3625 = vld [vmem:[#allocation2 + $0x378] sm:$0xff]
    %v3626 = vld [vmem:[#allocation2 + $0x380] sm:$0xff]
    %v3627 = vld [vmem:[#allocation2 + $0x388] sm:$0xff]
    %v3628 = vld [vmem:[#allocation2 + $0x390] sm:$0xff]
    %v3629 = vld [vmem:[#allocation2 + $0x398] sm:$0xff]
    %v3630 = vld [vmem:[#allocation2 + $0x3a0] sm:$0xff]
    %v3631 = vld [vmem:[#allocation2 + $0x3a8] sm:$0xff]
    %v3632 = vld [vmem:[#allocation2 + $0x3b0] sm:$0xff]
    %v3633 = vld [vmem:[#allocation2 + $0x3b8] sm:$0xff]
    %v3634 = vld [vmem:[#allocation2 + $0x3c0] sm:$0xff]
    %v3635 = vld [vmem:[#allocation2 + $0x3c8] sm:$0xff]
    %v3636 = vld [vmem:[#allocation2 + $0x3d0] sm:$0xff]
    %v3637 = vld [vmem:[#allocation2 + $0x3d8] sm:$0xff]
    %v3638 = vld [vmem:[#allocation2 + $0x3e0] sm:$0xff]
    %v3639 = vld [vmem:[#allocation2 + $0x3e8] sm:$0xff]
    %v3640 = vld [vmem:[#allocation2 + $0x3f0] sm:$0xff]
    %v3641 = vld [vmem:[#allocation2 + $0x3f8] sm:$0xff]
    %v3642 = vld [vmem:[#allocation2 + $0x400] sm:$0xff]
    %v3643 = vld [vmem:[#allocation2 + $0x408] sm:$0xff]
    %v3644 = vld [vmem:[#allocation2 + $0x410] sm:$0xff]
    %v3645 = vld [vmem:[#allocation2 + $0x418] sm:$0xff]
    %v3646 = vld [vmem:[#allocation2 + $0x420] sm:$0xff]
    %v3647 = vld [vmem:[#allocation2 + $0x428] sm:$0xff]
    %v3648 = vld [vmem:[#allocation2 + $0x430] sm:$0xff]
    %v3649 = vld [vmem:[#allocation2 + $0x438] sm:$0xff]
    %v3650 = vld [vmem:[#allocation2 + $0x440] sm:$0xff]
    %v3651 = vld [vmem:[#allocation2 + $0x448] sm:$0xff]
    %v3652 = vld [vmem:[#allocation2 + $0x450] sm:$0xff]
    %v3653 = vld [vmem:[#allocation2 + $0x458] sm:$0xff]
    %v3654 = vld [vmem:[#allocation2 + $0x460] sm:$0xff]
    %v3655 = vld [vmem:[#allocation2 + $0x468] sm:$0xff]
    %v3656 = vld [vmem:[#allocation2 + $0x470] sm:$0xff]
    %v3657 = vld [vmem:[#allocation2 + $0x478] sm:$0xff]
    %v3658 = vld [vmem:[#allocation2 + $0x480] sm:$0xff]
    %v3659 = vld [vmem:[#allocation2 + $0x488] sm:$0xff]
    %v3660 = vld [vmem:[#allocation2 + $0x490] sm:$0xff]
    %v3661 = vld [vmem:[#allocation2 + $0x498] sm:$0xff]
    %v3662 = vld [vmem:[#allocation2 + $0x4a0] sm:$0xff]
    %v3663 = vld [vmem:[#allocation2 + $0x4a8] sm:$0xff]
    %v3664 = vld [vmem:[#allocation2 + $0x4b0] sm:$0xff]
    %v3665 = vld [vmem:[#allocation2 + $0x4b8] sm:$0xff]
    %v3666 = vld [vmem:[#allocation2 + $0x4c0] sm:$0xff]
    %v3667 = vld [vmem:[#allocation2 + $0x4c8] sm:$0xff]
    %v3668 = vld [vmem:[#allocation2 + $0x4d0] sm:$0xff]
    %v3669 = vld [vmem:[#allocation2 + $0x4d8] sm:$0xff]
    %v3670 = vld [vmem:[#allocation2 + $0x4e0] sm:$0xff]
    %v3671 = vld [vmem:[#allocation2 + $0x4e8] sm:$0xff]
    %v3672 = vld [vmem:[#allocation2 + $0x4f0] sm:$0xff]
    %v3673 = vld [vmem:[#allocation2 + $0x4f8] sm:$0xff]
    %v3674 = vld [vmem:[#allocation2 + $0x500] sm:$0xff]
    %v3675 = vld [vmem:[#allocation2 + $0x508] sm:$0xff]
    %v3676 = vld [vmem:[#allocation2 + $0x510] sm:$0xff]
    %v3677 = vld [vmem:[#allocation2 + $0x518] sm:$0xff]
    %v3678 = vld [vmem:[#allocation2 + $0x520] sm:$0xff]
    %v3679 = vld [vmem:[#allocation2 + $0x528] sm:$0xff]
    %v3680 = vld [vmem:[#allocation2 + $0x530] sm:$0xff]
    %v3681 = vld [vmem:[#allocation2 + $0x538] sm:$0xff]
    %v3682 = vld [vmem:[#allocation2 + $0x540] sm:$0xff]
    %v3683 = vld [vmem:[#allocation2 + $0x548] sm:$0xff]
    %v3684 = vld [vmem:[#allocation2 + $0x550] sm:$0xff]
    %v3685 = vld [vmem:[#allocation2 + $0x558] sm:$0xff]
    %v3686 = vld [vmem:[#allocation2 + $0x560] sm:$0xff]
    %v3687 = vld [vmem:[#allocation2 + $0x568] sm:$0xff]
    %v3688 = vld [vmem:[#allocation2 + $0x570] sm:$0xff]
    %v3689 = vld [vmem:[#allocation2 + $0x578] sm:$0xff]
    %v3690 = vld [vmem:[#allocation2 + $0x580] sm:$0xff]
    %v3691 = vld [vmem:[#allocation2 + $0x588] sm:$0xff]
    %v3692 = vld [vmem:[#allocation2 + $0x590] sm:$0xff]
    %v3693 = vld [vmem:[#allocation2 + $0x598] sm:$0xff]
    %v3694 = vld [vmem:[#allocation2 + $0x5a0] sm:$0xff]
    %v3695 = vld [vmem:[#allocation2 + $0x5a8] sm:$0xff]
    %v3696 = vld [vmem:[#allocation2 + $0x5b0] sm:$0xff]
    %v3697 = vld [vmem:[#allocation2 + $0x5b8] sm:$0xff]
    %v3698 = vld [vmem:[#allocation2 + $0x5c0] sm:$0xff]
    %v3699 = vld [vmem:[#allocation2 + $0x5c8] sm:$0xff]
    %v3700 = vld [vmem:[#allocation2 + $0x5d0] sm:$0xff]
    %v3701 = vld [vmem:[#allocation2 + $0x5d8] sm:$0xff]
    %v3702 = vld [vmem:[#allocation2 + $0x5e0] sm:$0xff]
    %v3703 = vld [vmem:[#allocation2 + $0x5e8] sm:$0xff]
    %v3704 = vld [vmem:[#allocation2 + $0x5f0] sm:$0xff]
    %v3705 = vld [vmem:[#allocation2 + $0x5f8] sm:$0xff]
    %v3706 = vld [vmem:[#allocation2 + $0x600] sm:$0xff]
    %v3707 = vld [vmem:[#allocation2 + $0x608] sm:$0xff]
    %v3708 = vld [vmem:[#allocation2 + $0x610] sm:$0xff]
    %v3709 = vld [vmem:[#allocation2 + $0x618] sm:$0xff]
    %v3710 = vld [vmem:[#allocation2 + $0x620] sm:$0xff]
    %v3711 = vld [vmem:[#allocation2 + $0x628] sm:$0xff]
    %v3712 = vld [vmem:[#allocation2 + $0x630] sm:$0xff]
    %v3713 = vld [vmem:[#allocation2 + $0x638] sm:$0xff]
    %v3714 = vld [vmem:[#allocation2 + $0x640] sm:$0xff]
    %v3715 = vld [vmem:[#allocation2 + $0x648] sm:$0xff]
    %v3716 = vld [vmem:[#allocation2 + $0x650] sm:$0xff]
    %v3717 = vld [vmem:[#allocation2 + $0x658] sm:$0xff]
    %v3718 = vld [vmem:[#allocation2 + $0x660] sm:$0xff]
    %v3719 = vld [vmem:[#allocation2 + $0x668] sm:$0xff]
    %v3720 = vld [vmem:[#allocation2 + $0x670] sm:$0xff]
    %v3721 = vld [vmem:[#allocation2 + $0x678] sm:$0xff]
    %v3722 = vld [vmem:[#allocation2 + $0x680] sm:$0xff]
    %v3723 = vld [vmem:[#allocation2 + $0x688] sm:$0xff]
    %v3724 = vld [vmem:[#allocation2 + $0x690] sm:$0xff]
    %v3725 = vld [vmem:[#allocation2 + $0x698] sm:$0xff]
    %v3726 = vld [vmem:[#allocation2 + $0x6a0] sm:$0xff]
    %v3727 = vld [vmem:[#allocation2 + $0x6a8] sm:$0xff]
    %v3728 = vld [vmem:[#allocation2 + $0x6b0] sm:$0xff]
    %v3729 = vld [vmem:[#allocation2 + $0x6b8] sm:$0xff]
    %v3730 = vld [vmem:[#allocation2 + $0x6c0] sm:$0xff]
    %v3731 = vld [vmem:[#allocation2 + $0x6c8] sm:$0xff]
    %v3732 = vld [vmem:[#allocation2 + $0x6d0] sm:$0xff]
    %v3733 = vld [vmem:[#allocation2 + $0x6d8] sm:$0xff]
    %v3734 = vld [vmem:[#allocation2 + $0x6e0] sm:$0xff]
    %v3735 = vld [vmem:[#allocation2 + $0x6e8] sm:$0xff]
    %v3736 = vld [vmem:[#allocation2 + $0x6f0] sm:$0xff]
    %v3737 = vld [vmem:[#allocation2 + $0x6f8] sm:$0xff]
    %v3738 = vld [vmem:[#allocation2 + $0x700] sm:$0xff]
    %v3739 = vld [vmem:[#allocation2 + $0x708] sm:$0xff]
    %v3740 = vld [vmem:[#allocation2 + $0x710] sm:$0xff]
    %v3741 = vld [vmem:[#allocation2 + $0x718] sm:$0xff]
    %v3742 = vld [vmem:[#allocation2 + $0x720] sm:$0xff]
    %v3743 = vld [vmem:[#allocation2 + $0x728] sm:$0xff]
    %v3744 = vld [vmem:[#allocation2 + $0x730] sm:$0xff]
    %v3745 = vld [vmem:[#allocation2 + $0x738] sm:$0xff]
    %v3746 = vld [vmem:[#allocation2 + $0x740] sm:$0xff]
    %v3747 = vld [vmem:[#allocation2 + $0x748] sm:$0xff]
    %v3748 = vld [vmem:[#allocation2 + $0x750] sm:$0xff]
    %v3749 = vld [vmem:[#allocation2 + $0x758] sm:$0xff]
    %v3750 = vld [vmem:[#allocation2 + $0x760] sm:$0xff]
    %v3751 = vld [vmem:[#allocation2 + $0x768] sm:$0xff]
    %v3752 = vld [vmem:[#allocation2 + $0x770] sm:$0xff]
    %v3753 = vld [vmem:[#allocation2 + $0x778] sm:$0xff]
    %v3754 = vld [vmem:[#allocation2 + $0x780] sm:$0xff]
    %v3755 = vld [vmem:[#allocation2 + $0x788] sm:$0xff]
    %v3756 = vld [vmem:[#allocation2 + $0x790] sm:$0xff]
    %v3757 = vld [vmem:[#allocation2 + $0x798] sm:$0xff]
    %v3758 = vld [vmem:[#allocation2 + $0x7a0] sm:$0xff]
    %v3759 = vld [vmem:[#allocation2 + $0x7a8] sm:$0xff]
    %v3760 = vld [vmem:[#allocation2 + $0x7b0] sm:$0xff]
    %v3761 = vld [vmem:[#allocation2 + $0x7b8] sm:$0xff]
    %v3762 = vld [vmem:[#allocation2 + $0x7c0] sm:$0xff]
    %v3763 = vld [vmem:[#allocation2 + $0x7c8] sm:$0xff]
    %v3764 = vld [vmem:[#allocation2 + $0x7d0] sm:$0xff]
    %v3765 = vld [vmem:[#allocation2 + $0x7d8] sm:$0xff]
    %v3766 = vld [vmem:[#allocation2 + $0x7e0] sm:$0xff]
    %v3767 = vld [vmem:[#allocation2 + $0x7e8] sm:$0xff]
    %v3768 = vld [vmem:[#allocation2 + $0x7f0] sm:$0xff]
    %v3769 = vld [vmem:[#allocation2 + $0x7f8] sm:$0xff]
    %v3770 = vld [vmem:[#allocation2 + $0x800] sm:$0xff]
    %v3771 = vld [vmem:[#allocation2 + $0x808] sm:$0xff]
    %v3772 = vld [vmem:[#allocation2 + $0x810] sm:$0xff]
    %v3773 = vld [vmem:[#allocation2 + $0x818] sm:$0xff]
    %v3774 = vld [vmem:[#allocation2 + $0x820] sm:$0xff]
    %v3775 = vld [vmem:[#allocation2 + $0x828] sm:$0xff]
    %v3776 = vld [vmem:[#allocation2 + $0x830] sm:$0xff]
    %v3777 = vld [vmem:[#allocation2 + $0x838] sm:$0xff]
    %v3778 = vld [vmem:[#allocation2 + $0x840] sm:$0xff]
    %v3779 = vld [vmem:[#allocation2 + $0x848] sm:$0xff]
    %v3780 = vld [vmem:[#allocation2 + $0x850] sm:$0xff]
    %v3781 = vld [vmem:[#allocation2 + $0x858] sm:$0xff]
    %v3782 = vld [vmem:[#allocation2 + $0x860] sm:$0xff]
    %v3783 = vld [vmem:[#allocation2 + $0x868] sm:$0xff]
    %v3784 = vld [vmem:[#allocation2 + $0x870] sm:$0xff]
    %v3785 = vld [vmem:[#allocation2 + $0x878] sm:$0xff]
    %v3786 = vld [vmem:[#allocation2 + $0x880] sm:$0xff]
    %v3787 = vld [vmem:[#allocation2 + $0x888] sm:$0xff]
    %v3788 = vld [vmem:[#allocation2 + $0x890] sm:$0xff]
    %v3789 = vld [vmem:[#allocation2 + $0x898] sm:$0xff]
    %v3790 = vld [vmem:[#allocation2 + $0x8a0] sm:$0xff]
    %v3791 = vld [vmem:[#allocation2 + $0x8a8] sm:$0xff]
    %v3792 = vld [vmem:[#allocation2 + $0x8b0] sm:$0xff]
    %v3793 = vld [vmem:[#allocation2 + $0x8b8] sm:$0xff]
    %v3794 = vld [vmem:[#allocation2 + $0x8c0] sm:$0xff]
    %v3795 = vld [vmem:[#allocation2 + $0x8c8] sm:$0xff]
    %v3796 = vld [vmem:[#allocation2 + $0x8d0] sm:$0xff]
    %v3797 = vld [vmem:[#allocation2 + $0x8d8] sm:$0xff]
    %v3798 = vld [vmem:[#allocation2 + $0x8e0] sm:$0xff]
    %v3799 = vld [vmem:[#allocation2 + $0x8e8] sm:$0xff]
    %v3800 = vld [vmem:[#allocation2 + $0x8f0] sm:$0xff]
    %v3801 = vld [vmem:[#allocation2 + $0x8f8] sm:$0xff]
    %v3802 = vld [vmem:[#allocation2 + $0x900] sm:$0xff]
    %v3803 = vld [vmem:[#allocation2 + $0x908] sm:$0xff]
    %v3804 = vld [vmem:[#allocation2 + $0x910] sm:$0xff]
    %v3805 = vld [vmem:[#allocation2 + $0x918] sm:$0xff]
    %v3806 = vld [vmem:[#allocation2 + $0x920] sm:$0xff]
    %v3807 = vld [vmem:[#allocation2 + $0x928] sm:$0xff]
    %v3808 = vld [vmem:[#allocation2 + $0x930] sm:$0xff]
    %v3809 = vld [vmem:[#allocation2 + $0x938] sm:$0xff]
    %v3810 = vld [vmem:[#allocation2 + $0x940] sm:$0xff]
    %v3811 = vld [vmem:[#allocation2 + $0x948] sm:$0xff]
    %v3812 = vld [vmem:[#allocation2 + $0x950] sm:$0xff]
    %v3813 = vld [vmem:[#allocation2 + $0x958] sm:$0xff]
    %v3814 = vld [vmem:[#allocation2 + $0x960] sm:$0xff]
    %v3815 = vld [vmem:[#allocation2 + $0x968] sm:$0xff]
    %v3816 = vld [vmem:[#allocation2 + $0x970] sm:$0xff]
    %v3817 = vld [vmem:[#allocation2 + $0x978] sm:$0xff]
    %v3818 = vld [vmem:[#allocation2 + $0x980] sm:$0xff]
    %v3819 = vld [vmem:[#allocation2 + $0x988] sm:$0xff]
    %v3820 = vld [vmem:[#allocation2 + $0x990] sm:$0xff]
    %v3821 = vld [vmem:[#allocation2 + $0x998] sm:$0xff]
    %v3822 = vld [vmem:[#allocation2 + $0x9a0] sm:$0xff]
    %v3823 = vld [vmem:[#allocation2 + $0x9a8] sm:$0xff]
    %v3824 = vld [vmem:[#allocation2 + $0x9b0] sm:$0xff]
    %v3825 = vld [vmem:[#allocation2 + $0x9b8] sm:$0xff]
    %v3826 = vld [vmem:[#allocation2 + $0x9c0] sm:$0xff]
    %v3827 = vld [vmem:[#allocation2 + $0x9c8] sm:$0xff]
    %v3828 = vld [vmem:[#allocation2 + $0x9d0] sm:$0xff]
    %v3829 = vld [vmem:[#allocation2 + $0x9d8] sm:$0xff]
    %v3830 = vld [vmem:[#allocation2 + $0x9e0] sm:$0xff]
    %v3831 = vld [vmem:[#allocation2 + $0x9e8] sm:$0xff]
    %v3832 = vld [vmem:[#allocation2 + $0x9f0] sm:$0xff]
    %v3833 = vld [vmem:[#allocation2 + $0x9f8] sm:$0xff]
    %v3834 = vld [vmem:[#allocation2 + $0xa00] sm:$0xff]
    %v3835 = vld [vmem:[#allocation2 + $0xa08] sm:$0xff]
    %v3836 = vld [vmem:[#allocation2 + $0xa10] sm:$0xff]
    %v3837 = vld [vmem:[#allocation2 + $0xa18] sm:$0xff]
    %v3838 = vld [vmem:[#allocation2 + $0xa20] sm:$0xff]
    %v3839 = vld [vmem:[#allocation2 + $0xa28] sm:$0xff]
    %v3840 = vld [vmem:[#allocation2 + $0xa30] sm:$0xff]
    %v3841 = vld [vmem:[#allocation2 + $0xa38] sm:$0xff]
    %v3842 = vld [vmem:[#allocation2 + $0xa40] sm:$0xff]
    %v3843 = vld [vmem:[#allocation2 + $0xa48] sm:$0xff]
    %v3844 = vld [vmem:[#allocation2 + $0xa50] sm:$0xff]
    %v3845 = vld [vmem:[#allocation2 + $0xa58] sm:$0xff]
    %v3846 = vld [vmem:[#allocation2 + $0xa60] sm:$0xff]
    %v3847 = vld [vmem:[#allocation2 + $0xa68] sm:$0xff]
    %v3848 = vld [vmem:[#allocation2 + $0xa70] sm:$0xff]
    %v3849 = vld [vmem:[#allocation2 + $0xa78] sm:$0xff]
    %v3850 = vld [vmem:[#allocation2 + $0xa80] sm:$0xff]
    %v3851 = vld [vmem:[#allocation2 + $0xa88] sm:$0xff]
    %v3852 = vld [vmem:[#allocation2 + $0xa90] sm:$0xff]
    %v3853 = vld [vmem:[#allocation2 + $0xa98] sm:$0xff]
    %v3854 = vld [vmem:[#allocation2 + $0xaa0] sm:$0xff]
    %v3855 = vld [vmem:[#allocation2 + $0xaa8] sm:$0xff]
    %v3856 = vld [vmem:[#allocation2 + $0xab0] sm:$0xff]
    %v3857 = vld [vmem:[#allocation2 + $0xab8] sm:$0xff]
    %v3858 = vld [vmem:[#allocation2 + $0xac0] sm:$0xff]
    %v3859 = vld [vmem:[#allocation2 + $0xac8] sm:$0xff]
    %v3860 = vld [vmem:[#allocation2 + $0xad0] sm:$0xff]
    %v3861 = vld [vmem:[#allocation2 + $0xad8] sm:$0xff]
    %v3862 = vld [vmem:[#allocation2 + $0xae0] sm:$0xff]
    %v3863 = vld [vmem:[#allocation2 + $0xae8] sm:$0xff]
    %v3864 = vld [vmem:[#allocation2 + $0xaf0] sm:$0xff]
    %v3865 = vld [vmem:[#allocation2 + $0xaf8] sm:$0xff]
    %v3866 = vld [vmem:[#allocation2 + $0xb00] sm:$0xff]
    %v3867 = vld [vmem:[#allocation2 + $0xb08] sm:$0xff]
    %v3868 = vld [vmem:[#allocation2 + $0xb10] sm:$0xff]
    %v3869 = vld [vmem:[#allocation2 + $0xb18] sm:$0xff]
    %v3870 = vld [vmem:[#allocation2 + $0xb20] sm:$0xff]
    %v3871 = vld [vmem:[#allocation2 + $0xb28] sm:$0xff]
    %v3872 = vld [vmem:[#allocation2 + $0xb30] sm:$0xff]
    %v3873 = vld [vmem:[#allocation2 + $0xb38] sm:$0xff]
    %v3874 = vld [vmem:[#allocation2 + $0xb40] sm:$0xff]
    %v3875 = vld [vmem:[#allocation2 + $0xb48] sm:$0xff]
    %v3876 = vld [vmem:[#allocation2 + $0xb50] sm:$0xff]
    %v3877 = vld [vmem:[#allocation2 + $0xb58] sm:$0xff]
    %v3878 = vld [vmem:[#allocation2 + $0xb60] sm:$0xff]
    %v3879 = vld [vmem:[#allocation2 + $0xb68] sm:$0xff]
    %v3880 = vld [vmem:[#allocation2 + $0xb70] sm:$0xff]
    %v3881 = vld [vmem:[#allocation2 + $0xb78] sm:$0xff]
    %v3882 = vld [vmem:[#allocation2 + $0xb80] sm:$0xff]
    %v3883 = vld [vmem:[#allocation2 + $0xb88] sm:$0xff]
    %v3884 = vld [vmem:[#allocation2 + $0xb90] sm:$0xff]
    %v3885 = vld [vmem:[#allocation2 + $0xb98] sm:$0xff]
    %v3886 = vld [vmem:[#allocation2 + $0xba0] sm:$0xff]
    %v3887 = vld [vmem:[#allocation2 + $0xba8] sm:$0xff]
    %v3888 = vld [vmem:[#allocation2 + $0xbb0] sm:$0xff]
    %v3889 = vld [vmem:[#allocation2 + $0xbb8] sm:$0xff]
    %v3890 = vld [vmem:[#allocation2 + $0xbc0] sm:$0xff]
    %v3891 = vld [vmem:[#allocation2 + $0xbc8] sm:$0xff]
    %v3892 = vld [vmem:[#allocation2 + $0xbd0] sm:$0xff]
    %v3893 = vld [vmem:[#allocation2 + $0xbd8] sm:$0xff]
    %v3894 = vld [vmem:[#allocation2 + $0xbe0] sm:$0xff]
    %v3895 = vld [vmem:[#allocation2 + $0xbe8] sm:$0xff]
    %v3896 = vld [vmem:[#allocation2 + $0xbf0] sm:$0xff]
    %v3897 = vld [vmem:[#allocation2 + $0xbf8] sm:$0xff]
    %v3898 = vld [vmem:[#allocation2 + $0xc00] sm:$0xff]
    %v3899 = vld [vmem:[#allocation2 + $0xc08] sm:$0xff]
    %v3900 = vld [vmem:[#allocation2 + $0xc10] sm:$0xff]
    %v3901 = vld [vmem:[#allocation2 + $0xc18] sm:$0xff]
    %v3902 = vld [vmem:[#allocation2 + $0xc20] sm:$0xff]
    %v3903 = vld [vmem:[#allocation2 + $0xc28] sm:$0xff]
    %v3904 = vld [vmem:[#allocation2 + $0xc30] sm:$0xff]
    %v3905 = vld [vmem:[#allocation2 + $0xc38] sm:$0xff]
    %v3906 = vld [vmem:[#allocation2 + $0xc40] sm:$0xff]
    %v3907 = vld [vmem:[#allocation2 + $0xc48] sm:$0xff]
    %v3908 = vld [vmem:[#allocation2 + $0xc50] sm:$0xff]
    %v3909 = vld [vmem:[#allocation2 + $0xc58] sm:$0xff]
    %v3910 = vld [vmem:[#allocation2 + $0xc60] sm:$0xff]
    %v3911 = vld [vmem:[#allocation2 + $0xc68] sm:$0xff]
    %v3912 = vld [vmem:[#allocation2 + $0xc70] sm:$0xff]
    %v3913 = vld [vmem:[#allocation2 + $0xc78] sm:$0xff]
    %v3914 = vld [vmem:[%s6] sm:$0xff]
    %v3915 = vld [vmem:[%s6 + $0x8] sm:$0xff]
    %v3916 = vld [vmem:[%s6 + $0x10] sm:$0xff]
    %v3917 = vld [vmem:[%s6 + $0x18] sm:$0xff]
    %3919 = vset.pattern.permute.xlu0 0
    %3920 = vperm.xlu0 %3919, %v3914
    %v3921 = vpop.permute.xlu0 %3920
    %3924 = vset.pattern.permute.xlu0 0
    %3925 = vperm.xlu0 %3924, %v3915
    %v3926 = vpop.permute.xlu0 %3925
    %3929 = vset.pattern.permute.xlu0 0
    %3930 = vperm.xlu0 %3929, %v3916
    %v3931 = vpop.permute.xlu0 %3930
    %3934 = vset.pattern.permute.xlu0 0
    %3935 = vperm.xlu0 %3934, %v3917
    %v3936 = vpop.permute.xlu0 %3935
    %vm3938 = vcmask 261120
    %v3940 = vsel %vm3938, %v3492, 0
    %v3943 = vsel %vm3938, %v3499, 0
    %v3946 = vsel %vm3938, %v3506, 0
    %v3949 = vsel %vm3938, %v3513, 0
    %3951 = vmatprep.subr.mxu0 %v3515
    %3952 = vmatpush1.msra.mxu0 %v3514
    %3953 = vmatprep.subr.mxu0 %v3519
    %3954 = vmatpush1.msra.mxu0 %v3518
    %3955 = vmatprep.subr.mxu0 %v3523
    %3956 = vmatpush1.msra.mxu0 %v3522
    %3957 = vmatprep.subr.mxu0 %v3527
    %3958 = vmatpush1.msra.mxu0 %v3526
    %3959 = vmatprep.subr.mxu0 %v3531
    %3960 = vmatpush1.msra.mxu0 %v3530
    %3961 = vmatprep.subr.mxu0 %v3535
    %3962 = vmatpush1.msra.mxu0 %v3534
    %3963 = vmatprep.subr.mxu0 %v3539
    %3964 = vmatpush1.msra.mxu0 %v3538
    %3965 = vmatprep.subr.mxu0 %v3543
    %3966 = vmatpush1.msra.mxu0 %v3542
    %3967 = vmatprep.subr.mxu0 %v3547
    %3968 = vmatpush1.msra.mxu0 %v3546
    %3969 = vmatprep.subr.mxu0 %v3551
    %3970 = vmatpush1.msra.mxu0 %v3550
    %3971 = vmatprep.subr.mxu0 %v3555
    %3972 = vmatpush1.msra.mxu0 %v3554
    %3973 = vmatprep.subr.mxu0 %v3559
    %3974 = vmatpush1.msra.mxu0 %v3558
    %3975 = vmatprep.subr.mxu0 %v3563
    %3976 = vmatpush1.msra.mxu0 %v3562
    %3977 = vmatprep.subr.mxu0 %v3567
    %3978 = vmatpush1.msra.mxu0 %v3566
    %3979 = vmatprep.subr.mxu0 %v3571
    %3980 = vmatpush1.msra.mxu0 %v3570
    %3981 = vmatprep.subr.mxu0 %v3575
    %3982 = vmatpush1.msra.mxu0 %v3574
    %3983 = vmatprep.subr.mxu0 %v3579
    %3984 = vmatpush1.msra.mxu0 %v3578
    %3985 = vmatprep.subr.mxu0 %v3583
    %3986 = vmatpush1.msra.mxu0 %v3582
    %3987 = vmatprep.subr.mxu0 %v3587
    %3988 = vmatpush1.msra.mxu0 %v3586
    %3989 = vmatprep.subr.mxu0 %v3591
    %3990 = vmatpush1.msra.mxu0 %v3590
    %3991 = vmatprep.subr.mxu0 %v3595
    %3992 = vmatpush1.msra.mxu0 %v3594
    %3993 = vmatprep.subr.mxu0 %v3599
    %3994 = vmatpush1.msra.mxu0 %v3598
    %3995 = vmatprep.subr.mxu0 %v3603
    %3996 = vmatpush1.msra.mxu0 %v3602
    %3997 = vmatprep.subr.mxu0 %v3607
    %3998 = vmatpush1.msra.mxu0 %v3606
    %3999 = vmatprep.subr.mxu0 %v3611
    %4000 = vmatpush1.msra.mxu0 %v3610
    %4001 = vmatprep.subr.mxu0 %v3615
    %4002 = vmatpush1.msra.mxu0 %v3614
    %4003 = vmatprep.subr.mxu0 %v3619
    %4004 = vmatpush1.msra.mxu0 %v3618
    %4005 = vmatprep.subr.mxu0 %v3623
    %4006 = vmatpush1.msra.mxu0 %v3622
    %4007 = vmatprep.subr.mxu0 %v3627
    %4008 = vmatpush1.msra.mxu0 %v3626
    %4009 = vmatprep.subr.mxu0 %v3631
    %4010 = vmatpush1.msra.mxu0 %v3630
    %4011 = vmatprep.subr.mxu0 %v3635
    %4012 = vmatpush1.msra.mxu0 %v3634
    %4013 = vmatprep.subr.mxu0 %v3639
    %4014 = vmatpush1.msra.mxu0 %v3638
    %4015 = vmatprep.mubr.f32.mxu0 %v3487
    %4016 = vmatmul.mubr.f32.gmra.mrb[0].mxu0 %v3486
    %v4017 = vpop.f32.mrb[0].mxu0
    %v4018 = vadd.f32 %v3921, %v4017
    %v4019 = vpop.f32.mrb[0].mxu0
    %v4020 = vadd.f32 %v3921, %v4019
    %4021 = vmatprep.mubr.f32.mxu0 %v3494
    %4022 = vmatmul.mubr.f32.gmra.mrb[0].mxu0 %v3493
    %v4023 = vpop.f32.mrb[0].mxu0
    %v4024 = vadd.f32 %v3926, %v4023
    %v4025 = vpop.f32.mrb[0].mxu0
    %v4026 = vadd.f32 %v3926, %v4025
    %4027 = vmatprep.mubr.f32.mxu0 %v3501
    %4028 = vmatmul.mubr.f32.gmra.mrb[0].mxu0 %v3500
    %v4029 = vpop.f32.mrb[0].mxu0
    %v4030 = vadd.f32 %v3931, %v4029
    %v4031 = vpop.f32.mrb[0].mxu0
    %v4032 = vadd.f32 %v3931, %v4031
    %4033 = vmatprep.mubr.f32.mxu0 %v3508
    %4034 = vmatmul.mubr.f32.gmra.mrb[0].mxu0 %v3507
    %v4035 = vpop.f32.mrb[0].mxu0
    %v4036 = vadd.f32 %v3936, %v4035
    %v4037 = vpop.f32.mrb[0].mxu0
    %v4038 = vadd.f32 %v3936, %v4037
    %4039 = vdwg.mxu0
    %4040 = vmatprep.subr.mxu0 %v3643
    %4041 = vmatpush1.msra.mxu0 %v3642
    %4042 = vmatprep.subr.mxu0 %v3647
    %4043 = vmatpush1.msra.mxu0 %v3646
    %4044 = vmatprep.subr.mxu0 %v3651
    %4045 = vmatpush1.msra.mxu0 %v3650
    %4046 = vmatprep.subr.mxu0 %v3655
    %4047 = vmatpush1.msra.mxu0 %v3654
    %4048 = vmatprep.subr.mxu0 %v3659
    %4049 = vmatpush1.msra.mxu0 %v3658
    %4050 = vmatprep.subr.mxu0 %v3663
    %4051 = vmatpush1.msra.mxu0 %v3662
    %4052 = vmatprep.subr.mxu0 %v3667
    %4053 = vmatpush1.msra.mxu0 %v3666
    %4054 = vmatprep.subr.mxu0 %v3671
    %4055 = vmatpush1.msra.mxu0 %v3670
    %4056 = vmatprep.subr.mxu0 %v3675
    %4057 = vmatpush1.msra.mxu0 %v3674
    %4058 = vmatprep.subr.mxu0 %v3679
    %4059 = vmatpush1.msra.mxu0 %v3678
    %4060 = vmatprep.subr.mxu0 %v3683
    %4061 = vmatpush1.msra.mxu0 %v3682
    %4062 = vmatprep.subr.mxu0 %v3687
    %4063 = vmatpush1.msra.mxu0 %v3686
    %4064 = vmatprep.subr.mxu0 %v3691
    %4065 = vmatpush1.msra.mxu0 %v3690
    %4066 = vmatprep.subr.mxu0 %v3695
    %4067 = vmatpush1.msra.mxu0 %v3694
    %4068 = vmatprep.subr.mxu0 %v3699
    %4069 = vmatpush1.msra.mxu0 %v3698
    %4070 = vmatprep.subr.mxu0 %v3703
    %4071 = vmatpush1.msra.mxu0 %v3702
    %4072 = vmatprep.subr.mxu0 %v3707
    %4073 = vmatpush1.msra.mxu0 %v3706
    %4074 = vmatprep.subr.mxu0 %v3711
    %4075 = vmatpush1.msra.mxu0 %v3710
    %4076 = vmatprep.subr.mxu0 %v3715
    %4077 = vmatpush1.msra.mxu0 %v3714
    %4078 = vmatprep.subr.mxu0 %v3719
    %4079 = vmatpush1.msra.mxu0 %v3718
    %4080 = vmatprep.subr.mxu0 %v3723
    %4081 = vmatpush1.msra.mxu0 %v3722
    %4082 = vmatprep.subr.mxu0 %v3727
    %4083 = vmatpush1.msra.mxu0 %v3726
    %4084 = vmatprep.subr.mxu0 %v3731
    %4085 = vmatpush1.msra.mxu0 %v3730
    %4086 = vmatprep.subr.mxu0 %v3735
    %4087 = vmatpush1.msra.mxu0 %v3734
    %4088 = vmatprep.subr.mxu0 %v3739
    %4089 = vmatpush1.msra.mxu0 %v3738
    %4090 = vmatprep.subr.mxu0 %v3743
    %4091 = vmatpush1.msra.mxu0 %v3742
    %4092 = vmatprep.subr.mxu0 %v3747
    %4093 = vmatpush1.msra.mxu0 %v3746
    %4094 = vmatprep.subr.mxu0 %v3751
    %4095 = vmatpush1.msra.mxu0 %v3750
    %4096 = vmatprep.subr.mxu0 %v3755
    %4097 = vmatpush1.msra.mxu0 %v3754
    %4098 = vmatprep.subr.mxu0 %v3759
    %4099 = vmatpush1.msra.mxu0 %v3758
    %4100 = vmatprep.subr.mxu0 %v3763
    %4101 = vmatpush1.msra.mxu0 %v3762
    %4102 = vmatprep.subr.mxu0 %v3767
    %4103 = vmatpush1.msra.mxu0 %v3766
    %4104 = vmatprep.mubr.f32.mxu0 %v3489
    %4105 = vmatmul.mubr.f32.gmra.mrb[0].mxu0 %v3488
    %v4106 = vpop.f32.mrb[0].mxu0
    %v4107 = vadd.f32 %v4018, %v4106
    %v4108 = vpop.f32.mrb[0].mxu0
    %v4109 = vadd.f32 %v4020, %v4108
    %4110 = vmatprep.mubr.f32.mxu0 %v3496
    %4111 = vmatmul.mubr.f32.gmra.mrb[0].mxu0 %v3495
    %v4112 = vpop.f32.mrb[0].mxu0
    %v4113 = vadd.f32 %v4024, %v4112
    %v4114 = vpop.f32.mrb[0].mxu0
    %v4115 = vadd.f32 %v4026, %v4114
    %4116 = vmatprep.mubr.f32.mxu0 %v3503
    %4117 = vmatmul.mubr.f32.gmra.mrb[0].mxu0 %v3502
    %v4118 = vpop.f32.mrb[0].mxu0
    %v4119 = vadd.f32 %v4030, %v4118
    %v4120 = vpop.f32.mrb[0].mxu0
    %v4121 = vadd.f32 %v4032, %v4120
    %4122 = vmatprep.mubr.f32.mxu0 %v3510
    %4123 = vmatmul.mubr.f32.gmra.mrb[0].mxu0 %v3509
    %v4124 = vpop.f32.mrb[0].mxu0
    %v4125 = vadd.f32 %v4036, %v4124
    %v4126 = vpop.f32.mrb[0].mxu0
    %v4127 = vadd.f32 %v4038, %v4126
    %4128 = vdwg.mxu0
    %4129 = vmatprep.subr.mxu0 %v3771
    %4130 = vmatpush1.msra.mxu0 %v3770
    %4131 = vmatprep.subr.mxu0 %v3775
    %4132 = vmatpush1.msra.mxu0 %v3774
    %4133 = vmatprep.subr.mxu0 %v3779
    %4134 = vmatpush1.msra.mxu0 %v3778
    %4135 = vmatprep.subr.mxu0 %v3783
    %4136 = vmatpush1.msra.mxu0 %v3782
    %4137 = vmatprep.subr.mxu0 %v3787
    %4138 = vmatpush1.msra.mxu0 %v3786
    %4139 = vmatprep.subr.mxu0 %v3791
    %4140 = vmatpush1.msra.mxu0 %v3790
    %4141 = vmatprep.subr.mxu0 %v3795
    %4142 = vmatpush1.msra.mxu0 %v3794
    %4143 = vmatprep.subr.mxu0 %v3799
    %4144 = vmatpush1.msra.mxu0 %v3798
    %4145 = vmatprep.subr.mxu0 %v3803
    %4146 = vmatpush1.msra.mxu0 %v3802
    %4147 = vmatprep.subr.mxu0 %v3807
    %4148 = vmatpush1.msra.mxu0 %v3806
    %4149 = vmatprep.subr.mxu0 %v3811
    %4150 = vmatpush1.msra.mxu0 %v3810
    %4151 = vmatprep.subr.mxu0 %v3815
    %4152 = vmatpush1.msra.mxu0 %v3814
    %4153 = vmatprep.subr.mxu0 %v3819
    %4154 = vmatpush1.msra.mxu0 %v3818
    %4155 = vmatprep.subr.mxu0 %v3823
    %4156 = vmatpush1.msra.mxu0 %v3822
    %4157 = vmatprep.subr.mxu0 %v3827
    %4158 = vmatpush1.msra.mxu0 %v3826
    %4159 = vmatprep.subr.mxu0 %v3831
    %4160 = vmatpush1.msra.mxu0 %v3830
    %4161 = vmatprep.subr.mxu0 %v3835
    %4162 = vmatpush1.msra.mxu0 %v3834
    %4163 = vmatprep.subr.mxu0 %v3839
    %4164 = vmatpush1.msra.mxu0 %v3838
    %4165 = vmatprep.subr.mxu0 %v3843
    %4166 = vmatpush1.msra.mxu0 %v3842
    %4167 = vmatprep.subr.mxu0 %v3847
    %4168 = vmatpush1.msra.mxu0 %v3846
    %4169 = vmatprep.subr.mxu0 %v3851
    %4170 = vmatpush1.msra.mxu0 %v3850
    %4171 = vmatprep.subr.mxu0 %v3855
    %4172 = vmatpush1.msra.mxu0 %v3854
    %4173 = vmatprep.subr.mxu0 %v3859
    %4174 = vmatpush1.msra.mxu0 %v3858
    %4175 = vmatprep.subr.mxu0 %v3863
    %4176 = vmatpush1.msra.mxu0 %v3862
    %4177 = vmatprep.subr.mxu0 %v3867
    %4178 = vmatpush1.msra.mxu0 %v3866
    %4179 = vmatprep.subr.mxu0 %v3871
    %4180 = vmatpush1.msra.mxu0 %v3870
    %4181 = vmatprep.subr.mxu0 %v3875
    %4182 = vmatpush1.msra.mxu0 %v3874
    %4183 = vmatprep.subr.mxu0 %v3879
    %4184 = vmatpush1.msra.mxu0 %v3878
    %4185 = vmatprep.subr.mxu0 %v3883
    %4186 = vmatpush1.msra.mxu0 %v3882
    %4187 = vmatprep.subr.mxu0 %v3887
    %4188 = vmatpush1.msra.mxu0 %v3886
    %4189 = vmatprep.subr.mxu0 %v3891
    %4190 = vmatpush1.msra.mxu0 %v3890
    %4191 = vmatprep.subr.mxu0 %v3895
    %4192 = vmatpush1.msra.mxu0 %v3894
    %4193 = vmatprep.mubr.f32.mxu0 %v3491
    %4194 = vmatmul.mubr.f32.gmra.mrb[0].mxu0 %v3490
    %v4195 = vpop.f32.mrb[0].mxu0
    %v4196 = vadd.f32 %v4107, %v4195
    %v4197 = vpop.f32.mrb[0].mxu0
    %v4198 = vadd.f32 %v4109, %v4197
    %4199 = vmatprep.mubr.f32.mxu0 %v3498
    %4200 = vmatmul.mubr.f32.gmra.mrb[0].mxu0 %v3497
    %v4201 = vpop.f32.mrb[0].mxu0
    %v4202 = vadd.f32 %v4113, %v4201
    %v4203 = vpop.f32.mrb[0].mxu0
    %v4204 = vadd.f32 %v4115, %v4203
    %4205 = vmatprep.mubr.f32.mxu0 %v3505
    %4206 = vmatmul.mubr.f32.gmra.mrb[0].mxu0 %v3504
    %v4207 = vpop.f32.mrb[0].mxu0
    %v4208 = vadd.f32 %v4119, %v4207
    %v4209 = vpop.f32.mrb[0].mxu0
    %v4210 = vadd.f32 %v4121, %v4209
    %4211 = vmatprep.mubr.f32.mxu0 %v3512
    %4212 = vmatmul.mubr.f32.gmra.mrb[0].mxu0 %v3511
    %v4213 = vpop.f32.mrb[0].mxu0
    %v4214 = vadd.f32 %v4125, %v4213
    %v4215 = vpop.f32.mrb[0].mxu0
    %v4216 = vadd.f32 %v4127, %v4215
    %4217 = vdwg.mxu0
    %4218 = vmatprep.subr.mxu0 %v3899
    %4219 = vmatpush1.msra.mxu0 %v3898
    %4220 = vmatprep.subr.mxu0 %v3903
    %4221 = vmatpush1.msra.mxu0 %v3902
    %4222 = vmatprep.subr.mxu0 %v3907
    %4223 = vmatpush1.msra.mxu0 %v3906
    %4224 = vmatprep.subr.mxu0 %v3911
    %4225 = vmatpush1.msra.mxu0 %v3910
    %4226 = vmatprep.subr.mxu0 0.0
    %4227 = vmatpush1.msra.mxu0 0.0
    %4228 = vmatprep.subr.mxu0 0.0
    %4229 = vmatpush1.msra.mxu0 0.0
    %4230 = vmatprep.subr.mxu0 0.0
    %4231 = vmatpush1.msra.mxu0 0.0
    %4232 = vmatprep.subr.mxu0 0.0
    %4233 = vmatpush1.msra.mxu0 0.0
    %4234 = vmatprep.subr.mxu0 0.0
    %4235 = vmatpush1.msra.mxu0 0.0
    %4236 = vmatprep.subr.mxu0 0.0
    %4237 = vmatpush1.msra.mxu0 0.0
    %4238 = vmatprep.subr.mxu0 0.0
    %4239 = vmatpush1.msra.mxu0 0.0
    %4240 = vmatprep.subr.mxu0 0.0
    %4241 = vmatpush1.msra.mxu0 0.0
    %4242 = vmatprep.subr.mxu0 0.0
    %4243 = vmatpush1.msra.mxu0 0.0
    %4244 = vmatprep.subr.mxu0 0.0
    %4245 = vmatpush1.msra.mxu0 0.0
    %4246 = vmatprep.subr.mxu0 0.0
    %4247 = vmatpush1.msra.mxu0 0.0
    %4248 = vmatprep.subr.mxu0 0.0
    %4249 = vmatpush1.msra.mxu0 0.0
    %4250 = vmatprep.subr.mxu0 0.0
    %4251 = vmatpush1.msra.mxu0 0.0
    %4252 = vmatprep.subr.mxu0 0.0
    %4253 = vmatpush1.msra.mxu0 0.0
    %4254 = vmatprep.subr.mxu0 0.0
    %4255 = vmatpush1.msra.mxu0 0.0
    %4256 = vmatprep.subr.mxu0 0.0
    %4257 = vmatpush1.msra.mxu0 0.0
    %4258 = vmatprep.subr.mxu0 0.0
    %4259 = vmatpush1.msra.mxu0 0.0
    %4260 = vmatprep.subr.mxu0 0.0
    %4261 = vmatpush1.msra.mxu0 0.0
    %4262 = vmatprep.subr.mxu0 0.0
    %4263 = vmatpush1.msra.mxu0 0.0
    %4264 = vmatprep.subr.mxu0 0.0
    %4265 = vmatpush1.msra.mxu0 0.0
    %4266 = vmatprep.subr.mxu0 0.0
    %4267 = vmatpush1.msra.mxu0 0.0
    %4268 = vmatprep.subr.mxu0 0.0
    %4269 = vmatpush1.msra.mxu0 0.0
    %4270 = vmatprep.subr.mxu0 0.0
    %4271 = vmatpush1.msra.mxu0 0.0
    %4272 = vmatprep.subr.mxu0 0.0
    %4273 = vmatpush1.msra.mxu0 0.0
    %4274 = vmatprep.subr.mxu0 0.0
    %4275 = vmatpush1.msra.mxu0 0.0
    %4276 = vmatprep.subr.mxu0 0.0
    %4277 = vmatpush1.msra.mxu0 0.0
    %4278 = vmatprep.subr.mxu0 0.0
    %4279 = vmatpush1.msra.mxu0 0.0
    %4280 = vmatprep.subr.mxu0 0.0
    %4281 = vmatpush1.msra.mxu0 0.0
    %4282 = vmatprep.mubr.f32.mxu0 0.0
    %4283 = vmatmul.mubr.f32.gmra.mrb[0].mxu0 %v3940
    %v4284 = vpop.f32.mrb[0].mxu0
    %v4285 = vadd.f32 %v4196, %v4284
    %v4286 = vpop.f32.mrb[0].mxu0
    %v4287 = vadd.f32 %v4198, %v4286
    %4288 = vmatprep.mubr.f32.mxu0 0.0
    %4289 = vmatmul.mubr.f32.gmra.mrb[0].mxu0 %v3943
    %v4290 = vpop.f32.mrb[0].mxu0
    %v4291 = vadd.f32 %v4202, %v4290
    %v4292 = vpop.f32.mrb[0].mxu0
    %v4293 = vadd.f32 %v4204, %v4292
    %4294 = vmatprep.mubr.f32.mxu0 0.0
    %4295 = vmatmul.mubr.f32.gmra.mrb[0].mxu0 %v3946
    %v4296 = vpop.f32.mrb[0].mxu0
    %v4297 = vadd.f32 %v4208, %v4296
    %v4298 = vpop.f32.mrb[0].mxu0
    %v4299 = vadd.f32 %v4210, %v4298
    %4300 = vmatprep.mubr.f32.mxu0 0.0
    %4301 = vmatmul.mubr.f32.gmra.mrb[0].mxu0 %v3949
    %v4302 = vpop.f32.mrb[0].mxu0
    %v4303 = vadd.f32 %v4214, %v4302
    %v4304 = vpop.f32.mrb[0].mxu0
    %v4305 = vadd.f32 %v4216, %v4304
    %4306 = vdwg.mxu0
    %4307 = vmatprep.subr.mxu0 %v3517
    %4308 = vmatpush1.msra.mxu0 %v3516
    %4309 = vmatprep.subr.mxu0 %v3521
    %4310 = vmatpush1.msra.mxu0 %v3520
    %4311 = vmatprep.subr.mxu0 %v3525
    %4312 = vmatpush1.msra.mxu0 %v3524
    %4313 = vmatprep.subr.mxu0 %v3529
    %4314 = vmatpush1.msra.mxu0 %v3528
    %4315 = vmatprep.subr.mxu0 %v3533
    %4316 = vmatpush1.msra.mxu0 %v3532
    %4317 = vmatprep.subr.mxu0 %v3537
    %4318 = vmatpush1.msra.mxu0 %v3536
    %4319 = vmatprep.subr.mxu0 %v3541
    %4320 = vmatpush1.msra.mxu0 %v3540
    %4321 = vmatprep.subr.mxu0 %v3545
    %4322 = vmatpush1.msra.mxu0 %v3544
    %4323 = vmatprep.subr.mxu0 %v3549
    %4324 = vmatpush1.msra.mxu0 %v3548
    %4325 = vmatprep.subr.mxu0 %v3553
    %4326 = vmatpush1.msra.mxu0 %v3552
    %4327 = vmatprep.subr.mxu0 %v3557
    %4328 = vmatpush1.msra.mxu0 %v3556
    %4329 = vmatprep.subr.mxu0 %v3561
    %4330 = vmatpush1.msra.mxu0 %v3560
    %4331 = vmatprep.subr.mxu0 %v3565
    %4332 = vmatpush1.msra.mxu0 %v3564
    %4333 = vmatprep.subr.mxu0 %v3569
    %4334 = vmatpush1.msra.mxu0 %v3568
    %4335 = vmatprep.subr.mxu0 %v3573
    %4336 = vmatpush1.msra.mxu0 %v3572
    %4337 = vmatprep.subr.mxu0 %v3577
    %4338 = vmatpush1.msra.mxu0 %v3576
    %4339 = vmatprep.subr.mxu0 %v3581
    %4340 = vmatpush1.msra.mxu0 %v3580
    %4341 = vmatprep.subr.mxu0 %v3585
    %4342 = vmatpush1.msra.mxu0 %v3584
    %4343 = vmatprep.subr.mxu0 %v3589
    %4344 = vmatpush1.msra.mxu0 %v3588
    %4345 = vmatprep.subr.mxu0 %v3593
    %4346 = vmatpush1.msra.mxu0 %v3592
    %4347 = vmatprep.subr.mxu0 %v3597
    %4348 = vmatpush1.msra.mxu0 %v3596
    %4349 = vmatprep.subr.mxu0 %v3601
    %4350 = vmatpush1.msra.mxu0 %v3600
    %4351 = vmatprep.subr.mxu0 %v3605
    %4352 = vmatpush1.msra.mxu0 %v3604
    %4353 = vmatprep.subr.mxu0 %v3609
    %4354 = vmatpush1.msra.mxu0 %v3608
    %4355 = vmatprep.subr.mxu0 %v3613
    %4356 = vmatpush1.msra.mxu0 %v3612
    %4357 = vmatprep.subr.mxu0 %v3617
    %4358 = vmatpush1.msra.mxu0 %v3616
    %4359 = vmatprep.subr.mxu0 %v3621
    %4360 = vmatpush1.msra.mxu0 %v3620
    %4361 = vmatprep.subr.mxu0 %v3625
    %4362 = vmatpush1.msra.mxu0 %v3624
    %4363 = vmatprep.subr.mxu0 %v3629
    %4364 = vmatpush1.msra.mxu0 %v3628
    %4365 = vmatprep.subr.mxu0 %v3633
    %4366 = vmatpush1.msra.mxu0 %v3632
    %4367 = vmatprep.subr.mxu0 %v3637
    %4368 = vmatpush1.msra.mxu0 %v3636
    %4369 = vmatprep.subr.mxu0 %v3641
    %4370 = vmatpush1.msra.mxu0 %v3640
    %4371 = vmatprep.mubr.f32.mxu0 %v3487
    %4372 = vmatmul.mubr.f32.gmra.mrb[0].mxu0 %v3486
    %v4373 = vpop.f32.mrb[0].mxu0
    %v4374 = vadd.f32 %v3921, %v4373
    %v4375 = vpop.f32.mrb[0].mxu0
    %v4376 = vadd.f32 %v3921, %v4375
    %4377 = vmatprep.mubr.f32.mxu0 %v3494
    %4378 = vmatmul.mubr.f32.gmra.mrb[0].mxu0 %v3493
    %v4379 = vpop.f32.mrb[0].mxu0
    %v4380 = vadd.f32 %v3926, %v4379
    %v4381 = vpop.f32.mrb[0].mxu0
    %v4382 = vadd.f32 %v3926, %v4381
    %4383 = vmatprep.mubr.f32.mxu0 %v3501
    %4384 = vmatmul.mubr.f32.gmra.mrb[0].mxu0 %v3500
    %v4385 = vpop.f32.mrb[0].mxu0
    %v4386 = vadd.f32 %v3931, %v4385
    %v4387 = vpop.f32.mrb[0].mxu0
    %v4388 = vadd.f32 %v3931, %v4387
    %4389 = vmatprep.mubr.f32.mxu0 %v3508
    %4390 = vmatmul.mubr.f32.gmra.mrb[0].mxu0 %v3507
    %v4391 = vpop.f32.mrb[0].mxu0
    %v4392 = vadd.f32 %v3936, %v4391
    %v4393 = vpop.f32.mrb[0].mxu0
    %v4394 = vadd.f32 %v3936, %v4393
    %4395 = vdwg.mxu0
    %4396 = vmatprep.subr.mxu0 %v3645
    %4397 = vmatpush1.msra.mxu0 %v3644
    %4398 = vmatprep.subr.mxu0 %v3649
    %4399 = vmatpush1.msra.mxu0 %v3648
    %4400 = vmatprep.subr.mxu0 %v3653
    %4401 = vmatpush1.msra.mxu0 %v3652
    %4402 = vmatprep.subr.mxu0 %v3657
    %4403 = vmatpush1.msra.mxu0 %v3656
    %4404 = vmatprep.subr.mxu0 %v3661
    %4405 = vmatpush1.msra.mxu0 %v3660
    %4406 = vmatprep.subr.mxu0 %v3665
    %4407 = vmatpush1.msra.mxu0 %v3664
    %4408 = vmatprep.subr.mxu0 %v3669
    %4409 = vmatpush1.msra.mxu0 %v3668
    %4410 = vmatprep.subr.mxu0 %v3673
    %4411 = vmatpush1.msra.mxu0 %v3672
    %4412 = vmatprep.subr.mxu0 %v3677
    %4413 = vmatpush1.msra.mxu0 %v3676
    %4414 = vmatprep.subr.mxu0 %v3681
    %4415 = vmatpush1.msra.mxu0 %v3680
    %4416 = vmatprep.subr.mxu0 %v3685
    %4417 = vmatpush1.msra.mxu0 %v3684
    %4418 = vmatprep.subr.mxu0 %v3689
    %4419 = vmatpush1.msra.mxu0 %v3688
    %4420 = vmatprep.subr.mxu0 %v3693
    %4421 = vmatpush1.msra.mxu0 %v3692
    %4422 = vmatprep.subr.mxu0 %v3697
    %4423 = vmatpush1.msra.mxu0 %v3696
    %4424 = vmatprep.subr.mxu0 %v3701
    %4425 = vmatpush1.msra.mxu0 %v3700
    %4426 = vmatprep.subr.mxu0 %v3705
    %4427 = vmatpush1.msra.mxu0 %v3704
    %4428 = vmatprep.subr.mxu0 %v3709
    %4429 = vmatpush1.msra.mxu0 %v3708
    %4430 = vmatprep.subr.mxu0 %v3713
    %4431 = vmatpush1.msra.mxu0 %v3712
    %4432 = vmatprep.subr.mxu0 %v3717
    %4433 = vmatpush1.msra.mxu0 %v3716
    %4434 = vmatprep.subr.mxu0 %v3721
    %4435 = vmatpush1.msra.mxu0 %v3720
    %4436 = vmatprep.subr.mxu0 %v3725
    %4437 = vmatpush1.msra.mxu0 %v3724
    %4438 = vmatprep.subr.mxu0 %v3729
    %4439 = vmatpush1.msra.mxu0 %v3728
    %4440 = vmatprep.subr.mxu0 %v3733
    %4441 = vmatpush1.msra.mxu0 %v3732
    %4442 = vmatprep.subr.mxu0 %v3737
    %4443 = vmatpush1.msra.mxu0 %v3736
    %4444 = vmatprep.subr.mxu0 %v3741
    %4445 = vmatpush1.msra.mxu0 %v3740
    %4446 = vmatprep.subr.mxu0 %v3745
    %4447 = vmatpush1.msra.mxu0 %v3744
    %4448 = vmatprep.subr.mxu0 %v3749
    %4449 = vmatpush1.msra.mxu0 %v3748
    %4450 = vmatprep.subr.mxu0 %v3753
    %4451 = vmatpush1.msra.mxu0 %v3752
    %4452 = vmatprep.subr.mxu0 %v3757
    %4453 = vmatpush1.msra.mxu0 %v3756
    %4454 = vmatprep.subr.mxu0 %v3761
    %4455 = vmatpush1.msra.mxu0 %v3760
    %4456 = vmatprep.subr.mxu0 %v3765
    %4457 = vmatpush1.msra.mxu0 %v3764
    %4458 = vmatprep.subr.mxu0 %v3769
    %4459 = vmatpush1.msra.mxu0 %v3768
    %4460 = vmatprep.mubr.f32.mxu0 %v3489
    %4461 = vmatmul.mubr.f32.gmra.mrb[0].mxu0 %v3488
    %v4462 = vpop.f32.mrb[0].mxu0
    %v4463 = vadd.f32 %v4374, %v4462
    %v4464 = vpop.f32.mrb[0].mxu0
    %v4465 = vadd.f32 %v4376, %v4464
    %4466 = vmatprep.mubr.f32.mxu0 %v3496
    %4467 = vmatmul.mubr.f32.gmra.mrb[0].mxu0 %v3495
    %v4468 = vpop.f32.mrb[0].mxu0
    %v4469 = vadd.f32 %v4380, %v4468
    %v4470 = vpop.f32.mrb[0].mxu0
    %v4471 = vadd.f32 %v4382, %v4470
    %4472 = vmatprep.mubr.f32.mxu0 %v3503
    %4473 = vmatmul.mubr.f32.gmra.mrb[0].mxu0 %v3502
    %v4474 = vpop.f32.mrb[0].mxu0
    %v4475 = vadd.f32 %v4386, %v4474
    %v4476 = vpop.f32.mrb[0].mxu0
    %v4477 = vadd.f32 %v4388, %v4476
    %4478 = vmatprep.mubr.f32.mxu0 %v3510
    %4479 = vmatmul.mubr.f32.gmra.mrb[0].mxu0 %v3509
    %v4480 = vpop.f32.mrb[0].mxu0
    %v4481 = vadd.f32 %v4392, %v4480
    %v4482 = vpop.f32.mrb[0].mxu0
    %v4483 = vadd.f32 %v4394, %v4482
    %4484 = vdwg.mxu0
    %4485 = vmatprep.subr.mxu0 %v3773
    %4486 = vmatpush1.msra.mxu0 %v3772
    %4487 = vmatprep.subr.mxu0 %v3777
    %4488 = vmatpush1.msra.mxu0 %v3776
    %4489 = vmatprep.subr.mxu0 %v3781
    %4490 = vmatpush1.msra.mxu0 %v3780
    %4491 = vmatprep.subr.mxu0 %v3785
    %4492 = vmatpush1.msra.mxu0 %v3784
    %4493 = vmatprep.subr.mxu0 %v3789
    %4494 = vmatpush1.msra.mxu0 %v3788
    %4495 = vmatprep.subr.mxu0 %v3793
    %4496 = vmatpush1.msra.mxu0 %v3792
    %4497 = vmatprep.subr.mxu0 %v3797
    %4498 = vmatpush1.msra.mxu0 %v3796
    %4499 = vmatprep.subr.mxu0 %v3801
    %4500 = vmatpush1.msra.mxu0 %v3800
    %4501 = vmatprep.subr.mxu0 %v3805
    %4502 = vmatpush1.msra.mxu0 %v3804
    %4503 = vmatprep.subr.mxu0 %v3809
    %4504 = vmatpush1.msra.mxu0 %v3808
    %4505 = vmatprep.subr.mxu0 %v3813
    %4506 = vmatpush1.msra.mxu0 %v3812
    %4507 = vmatprep.subr.mxu0 %v3817
    %4508 = vmatpush1.msra.mxu0 %v3816
    %4509 = vmatprep.subr.mxu0 %v3821
    %4510 = vmatpush1.msra.mxu0 %v3820
    %4511 = vmatprep.subr.mxu0 %v3825
    %4512 = vmatpush1.msra.mxu0 %v3824
    %4513 = vmatprep.subr.mxu0 %v3829
    %4514 = vmatpush1.msra.mxu0 %v3828
    %4515 = vmatprep.subr.mxu0 %v3833
    %4516 = vmatpush1.msra.mxu0 %v3832
    %4517 = vmatprep.subr.mxu0 %v3837
    %4518 = vmatpush1.msra.mxu0 %v3836
    %4519 = vmatprep.subr.mxu0 %v3841
    %4520 = vmatpush1.msra.mxu0 %v3840
    %4521 = vmatprep.subr.mxu0 %v3845
    %4522 = vmatpush1.msra.mxu0 %v3844
    %4523 = vmatprep.subr.mxu0 %v3849
    %4524 = vmatpush1.msra.mxu0 %v3848
    %4525 = vmatprep.subr.mxu0 %v3853
    %4526 = vmatpush1.msra.mxu0 %v3852
    %4527 = vmatprep.subr.mxu0 %v3857
    %4528 = vmatpush1.msra.mxu0 %v3856
    %4529 = vmatprep.subr.mxu0 %v3861
    %4530 = vmatpush1.msra.mxu0 %v3860
    %4531 = vmatprep.subr.mxu0 %v3865
    %4532 = vmatpush1.msra.mxu0 %v3864
    %4533 = vmatprep.subr.mxu0 %v3869
    %4534 = vmatpush1.msra.mxu0 %v3868
    %4535 = vmatprep.subr.mxu0 %v3873
    %4536 = vmatpush1.msra.mxu0 %v3872
    %4537 = vmatprep.subr.mxu0 %v3877
    %4538 = vmatpush1.msra.mxu0 %v3876
    %4539 = vmatprep.subr.mxu0 %v3881
    %4540 = vmatpush1.msra.mxu0 %v3880
    %4541 = vmatprep.subr.mxu0 %v3885
    %4542 = vmatpush1.msra.mxu0 %v3884
    %4543 = vmatprep.subr.mxu0 %v3889
    %4544 = vmatpush1.msra.mxu0 %v3888
    %4545 = vmatprep.subr.mxu0 %v3893
    %4546 = vmatpush1.msra.mxu0 %v3892
    %4547 = vmatprep.subr.mxu0 %v3897
    %4548 = vmatpush1.msra.mxu0 %v3896
    %4549 = vmatprep.mubr.f32.mxu0 %v3491
    %4550 = vmatmul.mubr.f32.gmra.mrb[0].mxu0 %v3490
    %v4551 = vpop.f32.mrb[0].mxu0
    %v4552 = vadd.f32 %v4463, %v4551
    %v4553 = vpop.f32.mrb[0].mxu0
    %v4554 = vadd.f32 %v4465, %v4553
    %4555 = vmatprep.mubr.f32.mxu0 %v3498
    %4556 = vmatmul.mubr.f32.gmra.mrb[0].mxu0 %v3497
    %v4557 = vpop.f32.mrb[0].mxu0
    %v4558 = vadd.f32 %v4469, %v4557
    %v4559 = vpop.f32.mrb[0].mxu0
    %v4560 = vadd.f32 %v4471, %v4559
    %4561 = vmatprep.mubr.f32.mxu0 %v3505
    %4562 = vmatmul.mubr.f32.gmra.mrb[0].mxu0 %v3504
    %v4563 = vpop.f32.mrb[0].mxu0
    %v4564 = vadd.f32 %v4475, %v4563
    %v4565 = vpop.f32.mrb[0].mxu0
    %v4566 = vadd.f32 %v4477, %v4565
    %4567 = vmatprep.mubr.f32.mxu0 %v3512
    %4568 = vmatmul.mubr.f32.gmra.mrb[0].mxu0 %v3511
    %v4569 = vpop.f32.mrb[0].mxu0
    %v4570 = vadd.f32 %v4481, %v4569
    %v4571 = vpop.f32.mrb[0].mxu0
    %v4572 = vadd.f32 %v4483, %v4571
    %4573 = vdwg.mxu0
    %4574 = vmatprep.subr.mxu0 %v3901
    %4575 = vmatpush1.msra.mxu0 %v3900
    %4576 = vmatprep.subr.mxu0 %v3905
    %4577 = vmatpush1.msra.mxu0 %v3904
    %4578 = vmatprep.subr.mxu0 %v3909
    %4579 = vmatpush1.msra.mxu0 %v3908
    %4580 = vmatprep.subr.mxu0 %v3913
    %4581 = vmatpush1.msra.mxu0 %v3912
    %4582 = vmatprep.subr.mxu0 0.0
    %4583 = vmatpush1.msra.mxu0 0.0
    %4584 = vmatprep.subr.mxu0 0.0
    %4585 = vmatpush1.msra.mxu0 0.0
    %4586 = vmatprep.subr.mxu0 0.0
    %4587 = vmatpush1.msra.mxu0 0.0
    %4588 = vmatprep.subr.mxu0 0.0
    %4589 = vmatpush1.msra.mxu0 0.0
    %4590 = vmatprep.subr.mxu0 0.0
    %4591 = vmatpush1.msra.mxu0 0.0
    %4592 = vmatprep.subr.mxu0 0.0
    %4593 = vmatpush1.msra.mxu0 0.0
    %4594 = vmatprep.subr.mxu0 0.0
    %4595 = vmatpush1.msra.mxu0 0.0
    %4596 = vmatprep.subr.mxu0 0.0
    %4597 = vmatpush1.msra.mxu0 0.0
    %4598 = vmatprep.subr.mxu0 0.0
    %4599 = vmatpush1.msra.mxu0 0.0
    %4600 = vmatprep.subr.mxu0 0.0
    %4601 = vmatpush1.msra.mxu0 0.0
    %4602 = vmatprep.subr.mxu0 0.0
    %4603 = vmatpush1.msra.mxu0 0.0
    %4604 = vmatprep.subr.mxu0 0.0
    %4605 = vmatpush1.msra.mxu0 0.0
    %4606 = vmatprep.subr.mxu0 0.0
    %4607 = vmatpush1.msra.mxu0 0.0
    %4608 = vmatprep.subr.mxu0 0.0
    %4609 = vmatpush1.msra.mxu0 0.0
    %4610 = vmatprep.subr.mxu0 0.0
    %4611 = vmatpush1.msra.mxu0 0.0
    %4612 = vmatprep.subr.mxu0 0.0
    %4613 = vmatpush1.msra.mxu0 0.0
    %4614 = vmatprep.subr.mxu0 0.0
    %4615 = vmatpush1.msra.mxu0 0.0
    %4616 = vmatprep.subr.mxu0 0.0
    %4617 = vmatpush1.msra.mxu0 0.0
    %4618 = vmatprep.subr.mxu0 0.0
    %4619 = vmatpush1.msra.mxu0 0.0
    %4620 = vmatprep.subr.mxu0 0.0
    %4621 = vmatpush1.msra.mxu0 0.0
    %4622 = vmatprep.subr.mxu0 0.0
    %4623 = vmatpush1.msra.mxu0 0.0
    %4624 = vmatprep.subr.mxu0 0.0
    %4625 = vmatpush1.msra.mxu0 0.0
    %4626 = vmatprep.subr.mxu0 0.0
    %4627 = vmatpush1.msra.mxu0 0.0
    %4628 = vmatprep.subr.mxu0 0.0
    %4629 = vmatpush1.msra.mxu0 0.0
    %4630 = vmatprep.subr.mxu0 0.0
    %4631 = vmatpush1.msra.mxu0 0.0
    %4632 = vmatprep.subr.mxu0 0.0
    %4633 = vmatpush1.msra.mxu0 0.0
    %4634 = vmatprep.subr.mxu0 0.0
    %4635 = vmatpush1.msra.mxu0 0.0
    %4636 = vmatprep.subr.mxu0 0.0
    %4637 = vmatpush1.msra.mxu0 0.0
    %4638 = vmatprep.mubr.f32.mxu0 0.0
    %4639 = vmatmul.mubr.f32.gmra.mrb[0].mxu0 %v3940
    %v4640 = vpop.f32.mrb[0].mxu0
    %v4641 = vadd.f32 %v4552, %v4640
    %v4642 = vpop.f32.mrb[0].mxu0
    %v4643 = vadd.f32 %v4554, %v4642
    %4644 = vmatprep.mubr.f32.mxu0 0.0
    %4645 = vmatmul.mubr.f32.gmra.mrb[0].mxu0 %v3943
    %v4646 = vpop.f32.mrb[0].mxu0
    %v4647 = vadd.f32 %v4558, %v4646
    %v4648 = vpop.f32.mrb[0].mxu0
    %v4649 = vadd.f32 %v4560, %v4648
    %4650 = vmatprep.mubr.f32.mxu0 0.0
    %4651 = vmatmul.mubr.f32.gmra.mrb[0].mxu0 %v3946
    %v4652 = vpop.f32.mrb[0].mxu0
    %v4653 = vadd.f32 %v4564, %v4652
    %v4654 = vpop.f32.mrb[0].mxu0
    %v4655 = vadd.f32 %v4566, %v4654
    %4656 = vmatprep.mubr.f32.mxu0 0.0
    %4657 = vmatmul.mubr.f32.gmra.mrb[0].mxu0 %v3949
    %v4658 = vpop.f32.mrb[0].mxu0
    %v4659 = vadd.f32 %v4570, %v4658
    %v4660 = vpop.f32.mrb[0].mxu0
    %v4661 = vadd.f32 %v4572, %v4660
    %4662 = vdwg.mxu0
    %vm4663 = vcmp.ge.f32.partialorder %v4285, 0.0
    %vm4664 = vcmp.ge.f32.partialorder %v4287, 0.0
    %vm4665 = vcmp.ge.f32.partialorder %v4641, 0.0
    %vm4666 = vcmp.ge.f32.partialorder %v4643, 0.0
    %vm4667 = vcmp.ge.f32.partialorder %v4291, 0.0
    %vm4668 = vcmp.ge.f32.partialorder %v4293, 0.0
    %vm4669 = vcmp.ge.f32.partialorder %v4647, 0.0
    %vm4670 = vcmp.ge.f32.partialorder %v4649, 0.0
    %vm4671 = vcmp.ge.f32.partialorder %v4297, 0.0
    %vm4672 = vcmp.ge.f32.partialorder %v4299, 0.0
    %vm4673 = vcmp.ge.f32.partialorder %v4653, 0.0
    %vm4674 = vcmp.ge.f32.partialorder %v4655, 0.0
    %vm4675 = vcmp.ge.f32.partialorder %v4303, 0.0
    %vm4676 = vcmp.ge.f32.partialorder %v4305, 0.0
    %vm4677 = vcmp.ge.f32.partialorder %v4659, 0.0
    %vm4678 = vcmp.ge.f32.partialorder %v4661, 0.0
    %v4679 = vstv %s85
    %v4680 = vmul.f32 %v4679, %v4285
    %v4681 = vmul.f32 %v4679, %v4287
    %v4682 = vmul.f32 %v4679, %v4641
    %v4683 = vmul.f32 %v4679, %v4643
    %v4684 = vmul.f32 %v4679, %v4291
    %v4685 = vmul.f32 %v4679, %v4293
    %v4686 = vmul.f32 %v4679, %v4647
    %v4687 = vmul.f32 %v4679, %v4649
    %v4688 = vmul.f32 %v4679, %v4297
    %v4689 = vmul.f32 %v4679, %v4299
    %v4690 = vmul.f32 %v4679, %v4653
    %v4691 = vmul.f32 %v4679, %v4655
    %v4692 = vmul.f32 %v4679, %v4303
    %v4693 = vmul.f32 %v4679, %v4305
    %v4694 = vmul.f32 %v4679, %v4659
    %v4695 = vmul.f32 %v4679, %v4661
    %v4696 = vsel %vm4663, %v4285, %v4680
    %v4697 = vsel %vm4664, %v4287, %v4681
    %v4698 = vsel %vm4665, %v4641, %v4682
    %v4699 = vsel %vm4666, %v4643, %v4683
    %v4700 = vsel %vm4667, %v4291, %v4684
    %v4701 = vsel %vm4668, %v4293, %v4685
    %v4702 = vsel %vm4669, %v4647, %v4686
    %v4703 = vsel %vm4670, %v4649, %v4687
    %v4704 = vsel %vm4671, %v4297, %v4688
    %v4705 = vsel %vm4672, %v4299, %v4689
    %v4706 = vsel %vm4673, %v4653, %v4690
    %v4707 = vsel %vm4674, %v4655, %v4691
    %v4708 = vsel %vm4675, %v4303, %v4692
    %v4709 = vsel %vm4676, %v4305, %v4693
    %v4710 = vsel %vm4677, %v4659, %v4694
    %v4711 = vsel %vm4678, %v4661, %v4695
    %v4712 = vld [vmem:[%s4] sm:$0xff]
    %v4713 = vld [vmem:[%s4 + $0x8] sm:$0xff]
    %v4714 = vld [vmem:[%s4 + $0x10] sm:$0xff]
    %v4715 = vld [vmem:[%s4 + $0x18] sm:$0x1]
    %4716 = vrot.lane.b32.xlu0 %v4696, 34
    %v4717 = vpop.permute.xlu0 %4716
    %4718 = vrot.lane.b32.xlu0 %v4700, 34
    %v4719 = vpop.permute.xlu0 %4718
    %4720 = vrot.lane.b32.xlu0 %v4704, 34
    %v4721 = vpop.permute.xlu0 %4720
    %4722 = vrot.lane.b32.xlu0 %v4708, 34
    %v4723 = vpop.permute.xlu0 %4722
    %4724 = vrot.lane.b32.xlu0 %v4697, 34
    %v4725 = vpop.permute.xlu0 %4724
    %4726 = vrot.lane.b32.xlu0 %v4701, 34
    %v4727 = vpop.permute.xlu0 %4726
    %4728 = vrot.lane.b32.xlu0 %v4705, 34
    %v4729 = vpop.permute.xlu0 %4728
    %4730 = vrot.lane.b32.xlu0 %v4709, 34
    %v4731 = vpop.permute.xlu0 %4730
    %4732 = vrot.lane.b32.xlu0 %v4698, 34
    %v4733 = vpop.permute.xlu0 %4732
    %4734 = vrot.lane.b32.xlu0 %v4702, 34
    %v4735 = vpop.permute.xlu0 %4734
    %4736 = vrot.lane.b32.xlu0 %v4706, 34
    %v4737 = vpop.permute.xlu0 %4736
    %4738 = vrot.lane.b32.xlu0 %v4710, 34
    %v4739 = vpop.permute.xlu0 %4738
    %4740 = vrot.lane.b32.xlu0 %v4699, 34
    %v4741 = vpop.permute.xlu0 %4740
    %4742 = vrot.lane.b32.xlu0 %v4703, 34
    %v4743 = vpop.permute.xlu0 %4742
    %4744 = vrot.lane.b32.xlu0 %v4707, 34
    %v4745 = vpop.permute.xlu0 %4744
    %4746 = vrot.lane.b32.xlu0 %v4711, 34
    %v4747 = vpop.permute.xlu0 %4746
    %v4748 = vsel %vm118, %v4733, %v4741
    %v4749 = vsel %vm118, %v4735, %v4743
    %v4750 = vsel %vm118, %v4737, %v4745
    %v4751 = vsel %vm118, %v4739, %v4747
    %v4752 = vsel %vm118, %v4725, %v4733
    %v4753 = vsel %vm118, %v4727, %v4735
    %v4754 = vsel %vm118, %v4729, %v4737
    %v4755 = vsel %vm118, %v4731, %v4739
    %v4756 = vsel %vm118, %v4717, %v4725
    %v4757 = vsel %vm118, %v4719, %v4727
    %v4758 = vsel %vm118, %v4721, %v4729
    %v4759 = vsel %vm118, %v4723, %v4731
    %v4760 = vsel %vm118, %v4741, %v4717
    %v4761 = vsel %vm118, %v4743, %v4719
    %v4762 = vsel %vm118, %v4745, %v4721
    %v4763 = vsel %vm118, %v4747, %v4723
    %v4764 = vmul.f32 %v4760, %v126
    %v4765 = vmul.f32 %v4756, %v130
    %v4766 = vmul.f32 %v4752, %v134
    %v4767 = vmul.f32 %v4748, %v138
    %v4768 = vmul.f32 %v4761, %v126
    %v4769 = vmul.f32 %v4757, %v130
    %v4770 = vmul.f32 %v4753, %v134
    %v4771 = vmul.f32 %v4749, %v138
    %v4772 = vmul.f32 %v4762, %v126
    %v4773 = vmul.f32 %v4758, %v130
    %v4774 = vmul.f32 %v4754, %v134
    %v4775 = vmul.f32 %v4750, %v138
    %v4776 = vmul.f32 %v4763, %v126
    %v4777 = vmul.f32 %v4759, %v130
    %v4778 = vmul.f32 %v4755, %v134
    %v4779 = vmul.f32 %v4751, %v138
    %4780 = vrot.lane.b32.xlu0 %v4696, 33
    %v4781 = vpop.permute.xlu0 %4780
    %4782 = vrot.lane.b32.xlu0 %v4700, 33
    %v4783 = vpop.permute.xlu0 %4782
    %4784 = vrot.lane.b32.xlu0 %v4704, 33
    %v4785 = vpop.permute.xlu0 %4784
    %4786 = vrot.lane.b32.xlu0 %v4708, 33
    %v4787 = vpop.permute.xlu0 %4786
    %4788 = vrot.lane.b32.xlu0 %v4697, 33
    %v4789 = vpop.permute.xlu0 %4788
    %4790 = vrot.lane.b32.xlu0 %v4701, 33
    %v4791 = vpop.permute.xlu0 %4790
    %4792 = vrot.lane.b32.xlu0 %v4705, 33
    %v4793 = vpop.permute.xlu0 %4792
    %4794 = vrot.lane.b32.xlu0 %v4709, 33
    %v4795 = vpop.permute.xlu0 %4794
    %4796 = vrot.lane.b32.xlu0 %v4698, 33
    %v4797 = vpop.permute.xlu0 %4796
    %4798 = vrot.lane.b32.xlu0 %v4702, 33
    %v4799 = vpop.permute.xlu0 %4798
    %4800 = vrot.lane.b32.xlu0 %v4706, 33
    %v4801 = vpop.permute.xlu0 %4800
    %4802 = vrot.lane.b32.xlu0 %v4710, 33
    %v4803 = vpop.permute.xlu0 %4802
    %4804 = vrot.lane.b32.xlu0 %v4699, 33
    %v4805 = vpop.permute.xlu0 %4804
    %4806 = vrot.lane.b32.xlu0 %v4703, 33
    %v4807 = vpop.permute.xlu0 %4806
    %4808 = vrot.lane.b32.xlu0 %v4707, 33
    %v4809 = vpop.permute.xlu0 %4808
    %4810 = vrot.lane.b32.xlu0 %v4711, 33
    %v4811 = vpop.permute.xlu0 %4810
    %v4812 = vsel %vm151, %v4797, %v4805
    %v4813 = vsel %vm151, %v4799, %v4807
    %v4814 = vsel %vm151, %v4801, %v4809
    %v4815 = vsel %vm151, %v4803, %v4811
    %v4816 = vsel %vm151, %v4789, %v4797
    %v4817 = vsel %vm151, %v4791, %v4799
    %v4818 = vsel %vm151, %v4793, %v4801
    %v4819 = vsel %vm151, %v4795, %v4803
    %v4820 = vsel %vm151, %v4781, %v4789
    %v4821 = vsel %vm151, %v4783, %v4791
    %v4822 = vsel %vm151, %v4785, %v4793
    %v4823 = vsel %vm151, %v4787, %v4795
    %v4824 = vsel %vm151, %v4805, %v4781
    %v4825 = vsel %vm151, %v4807, %v4783
    %v4826 = vsel %vm151, %v4809, %v4785
    %v4827 = vsel %vm151, %v4811, %v4787
    %v4828 = vmul.f32 %v4824, %v159
    %v4829 = vmul.f32 %v4820, %v163
    %v4830 = vmul.f32 %v4816, %v167
    %v4831 = vmul.f32 %v4812, %v171
    %v4832 = vmul.f32 %v4825, %v159
    %v4833 = vmul.f32 %v4821, %v163
    %v4834 = vmul.f32 %v4817, %v167
    %v4835 = vmul.f32 %v4813, %v171
    %v4836 = vmul.f32 %v4826, %v159
    %v4837 = vmul.f32 %v4822, %v163
    %v4838 = vmul.f32 %v4818, %v167
    %v4839 = vmul.f32 %v4814, %v171
    %v4840 = vmul.f32 %v4827, %v159
    %v4841 = vmul.f32 %v4823, %v163
    %v4842 = vmul.f32 %v4819, %v167
    %v4843 = vmul.f32 %v4815, %v171
    %v4845 = vrot.slane %v4712, 1
    %v4846 = vsel %vm3938, %v4845, 0
    %4848 = vmatprep.subr.mxu0 %v4829
    %4849 = vmatpush1.msra.mxu0 %v4828
    %4850 = vmatprep.subr.mxu0 %v4833
    %4851 = vmatpush1.msra.mxu0 %v4832
    %4852 = vmatprep.subr.mxu0 %v4837
    %4853 = vmatpush1.msra.mxu0 %v4836
    %4854 = vmatprep.subr.mxu0 %v4841
    %4855 = vmatpush1.msra.mxu0 %v4840
    %4856 = vmatprep.subr.mxu0 0.0
    %4857 = vmatpush1.msra.mxu0 0.0
    %4858 = vmatprep.subr.mxu0 0.0
    %4859 = vmatpush1.msra.mxu0 0.0
    %4860 = vmatprep.subr.mxu0 0.0
    %4861 = vmatpush1.msra.mxu0 0.0
    %4862 = vmatprep.subr.mxu0 0.0
    %4863 = vmatpush1.msra.mxu0 0.0
    %4864 = vmatprep.subr.mxu0 0.0
    %4865 = vmatpush1.msra.mxu0 0.0
    %4866 = vmatprep.subr.mxu0 0.0
    %4867 = vmatpush1.msra.mxu0 0.0
    %4868 = vmatprep.subr.mxu0 0.0
    %4869 = vmatpush1.msra.mxu0 0.0
    %4870 = vmatprep.subr.mxu0 0.0
    %4871 = vmatpush1.msra.mxu0 0.0
    %4872 = vmatprep.subr.mxu0 0.0
    %4873 = vmatpush1.msra.mxu0 0.0
    %4874 = vmatprep.subr.mxu0 0.0
    %4875 = vmatpush1.msra.mxu0 0.0
    %4876 = vmatprep.subr.mxu0 0.0
    %4877 = vmatpush1.msra.mxu0 0.0
    %4878 = vmatprep.subr.mxu0 0.0
    %4879 = vmatpush1.msra.mxu0 0.0
    %4880 = vmatprep.subr.mxu0 0.0
    %4881 = vmatpush1.msra.mxu0 0.0
    %4882 = vmatprep.subr.mxu0 0.0
    %4883 = vmatpush1.msra.mxu0 0.0
    %4884 = vmatprep.subr.mxu0 0.0
    %4885 = vmatpush1.msra.mxu0 0.0
    %4886 = vmatprep.subr.mxu0 0.0
    %4887 = vmatpush1.msra.mxu0 0.0
    %4888 = vmatprep.subr.mxu0 0.0
    %4889 = vmatpush1.msra.mxu0 0.0
    %4890 = vmatprep.subr.mxu0 0.0
    %4891 = vmatpush1.msra.mxu0 0.0
    %4892 = vmatprep.subr.mxu0 0.0
    %4893 = vmatpush1.msra.mxu0 0.0
    %4894 = vmatprep.subr.mxu0 0.0
    %4895 = vmatpush1.msra.mxu0 0.0
    %4896 = vmatprep.subr.mxu0 0.0
    %4897 = vmatpush1.msra.mxu0 0.0
    %4898 = vmatprep.subr.mxu0 0.0
    %4899 = vmatpush1.msra.mxu0 0.0
    %4900 = vmatprep.subr.mxu0 0.0
    %4901 = vmatpush1.msra.mxu0 0.0
    %4902 = vmatprep.subr.mxu0 0.0
    %4903 = vmatpush1.msra.mxu0 0.0
    %4904 = vmatprep.subr.mxu0 0.0
    %4905 = vmatpush1.msra.mxu0 0.0
    %4906 = vmatprep.subr.mxu0 0.0
    %4907 = vmatpush1.msra.mxu0 0.0
    %4908 = vmatprep.subr.mxu0 0.0
    %4909 = vmatpush1.msra.mxu0 0.0
    %4910 = vmatprep.subr.mxu0 0.0
    %4911 = vmatpush1.msra.mxu0 0.0
    %4912 = vmatprep.mubr.f32.mxu0 0.0
    %4913 = vmatmul.mubr.f32.gmra.mrb[0].mxu0 %v4846
    %v4914 = vpop.f32.mrb[0].mxu0
    %v4915 = vadd.f32 0.0, %v4914
    %v4916 = vpop.f32.mrb[0].mxu0
    %v4917 = vadd.f32 0.0, %v4916
    %4918 = vdwg.mxu0
    %4919 = vmatprep.subr.mxu0 %v4831
    %4920 = vmatpush1.msra.mxu0 %v4830
    %4921 = vmatprep.subr.mxu0 %v4835
    %4922 = vmatpush1.msra.mxu0 %v4834
    %4923 = vmatprep.subr.mxu0 %v4839
    %4924 = vmatpush1.msra.mxu0 %v4838
    %4925 = vmatprep.subr.mxu0 %v4843
    %4926 = vmatpush1.msra.mxu0 %v4842
    %4927 = vmatprep.subr.mxu0 0.0
    %4928 = vmatpush1.msra.mxu0 0.0
    %4929 = vmatprep.subr.mxu0 0.0
    %4930 = vmatpush1.msra.mxu0 0.0
    %4931 = vmatprep.subr.mxu0 0.0
    %4932 = vmatpush1.msra.mxu0 0.0
    %4933 = vmatprep.subr.mxu0 0.0
    %4934 = vmatpush1.msra.mxu0 0.0
    %4935 = vmatprep.subr.mxu0 0.0
    %4936 = vmatpush1.msra.mxu0 0.0
    %4937 = vmatprep.subr.mxu0 0.0
    %4938 = vmatpush1.msra.mxu0 0.0
    %4939 = vmatprep.subr.mxu0 0.0
    %4940 = vmatpush1.msra.mxu0 0.0
    %4941 = vmatprep.subr.mxu0 0.0
    %4942 = vmatpush1.msra.mxu0 0.0
    %4943 = vmatprep.subr.mxu0 0.0
    %4944 = vmatpush1.msra.mxu0 0.0
    %4945 = vmatprep.subr.mxu0 0.0
    %4946 = vmatpush1.msra.mxu0 0.0
    %4947 = vmatprep.subr.mxu0 0.0
    %4948 = vmatpush1.msra.mxu0 0.0
    %4949 = vmatprep.subr.mxu0 0.0
    %4950 = vmatpush1.msra.mxu0 0.0
    %4951 = vmatprep.subr.mxu0 0.0
    %4952 = vmatpush1.msra.mxu0 0.0
    %4953 = vmatprep.subr.mxu0 0.0
    %4954 = vmatpush1.msra.mxu0 0.0
    %4955 = vmatprep.subr.mxu0 0.0
    %4956 = vmatpush1.msra.mxu0 0.0
    %4957 = vmatprep.subr.mxu0 0.0
    %4958 = vmatpush1.msra.mxu0 0.0
    %4959 = vmatprep.subr.mxu0 0.0
    %4960 = vmatpush1.msra.mxu0 0.0
    %4961 = vmatprep.subr.mxu0 0.0
    %4962 = vmatpush1.msra.mxu0 0.0
    %4963 = vmatprep.subr.mxu0 0.0
    %4964 = vmatpush1.msra.mxu0 0.0
    %4965 = vmatprep.subr.mxu0 0.0
    %4966 = vmatpush1.msra.mxu0 0.0
    %4967 = vmatprep.subr.mxu0 0.0
    %4968 = vmatpush1.msra.mxu0 0.0
    %4969 = vmatprep.subr.mxu0 0.0
    %4970 = vmatpush1.msra.mxu0 0.0
    %4971 = vmatprep.subr.mxu0 0.0
    %4972 = vmatpush1.msra.mxu0 0.0
    %4973 = vmatprep.subr.mxu0 0.0
    %4974 = vmatpush1.msra.mxu0 0.0
    %4975 = vmatprep.subr.mxu0 0.0
    %4976 = vmatpush1.msra.mxu0 0.0
    %4977 = vmatprep.subr.mxu0 0.0
    %4978 = vmatpush1.msra.mxu0 0.0
    %4979 = vmatprep.subr.mxu0 0.0
    %4980 = vmatpush1.msra.mxu0 0.0
    %4981 = vmatprep.subr.mxu0 0.0
    %4982 = vmatpush1.msra.mxu0 0.0
    %4983 = vmatprep.mubr.f32.mxu0 0.0
    %4984 = vmatmul.mubr.f32.gmra.mrb[0].mxu0 %v4846
    %v4985 = vpop.f32.mrb[0].mxu0
    %v4986 = vadd.f32 0.0, %v4985
    %v4987 = vpop.f32.mrb[0].mxu0
    %v4988 = vadd.f32 0.0, %v4987
    %4989 = vdwg.mxu0
    %v4990 = vsel %vm3938, %v4712, 0
    %4992 = vmatprep.subr.mxu0 %v4765
    %4993 = vmatpush1.msra.mxu0 %v4764
    %4994 = vmatprep.subr.mxu0 %v4769
    %4995 = vmatpush1.msra.mxu0 %v4768
    %4996 = vmatprep.subr.mxu0 %v4773
    %4997 = vmatpush1.msra.mxu0 %v4772
    %4998 = vmatprep.subr.mxu0 %v4777
    %4999 = vmatpush1.msra.mxu0 %v4776
    %5000 = vmatprep.subr.mxu0 0.0
    %5001 = vmatpush1.msra.mxu0 0.0
    %5002 = vmatprep.subr.mxu0 0.0
    %5003 = vmatpush1.msra.mxu0 0.0
    %5004 = vmatprep.subr.mxu0 0.0
    %5005 = vmatpush1.msra.mxu0 0.0
    %5006 = vmatprep.subr.mxu0 0.0
    %5007 = vmatpush1.msra.mxu0 0.0
    %5008 = vmatprep.subr.mxu0 0.0
    %5009 = vmatpush1.msra.mxu0 0.0
    %5010 = vmatprep.subr.mxu0 0.0
    %5011 = vmatpush1.msra.mxu0 0.0
    %5012 = vmatprep.subr.mxu0 0.0
    %5013 = vmatpush1.msra.mxu0 0.0
    %5014 = vmatprep.subr.mxu0 0.0
    %5015 = vmatpush1.msra.mxu0 0.0
    %5016 = vmatprep.subr.mxu0 0.0
    %5017 = vmatpush1.msra.mxu0 0.0
    %5018 = vmatprep.subr.mxu0 0.0
    %5019 = vmatpush1.msra.mxu0 0.0
    %5020 = vmatprep.subr.mxu0 0.0
    %5021 = vmatpush1.msra.mxu0 0.0
    %5022 = vmatprep.subr.mxu0 0.0
    %5023 = vmatpush1.msra.mxu0 0.0
    %5024 = vmatprep.subr.mxu0 0.0
    %5025 = vmatpush1.msra.mxu0 0.0
    %5026 = vmatprep.subr.mxu0 0.0
    %5027 = vmatpush1.msra.mxu0 0.0
    %5028 = vmatprep.subr.mxu0 0.0
    %5029 = vmatpush1.msra.mxu0 0.0
    %5030 = vmatprep.subr.mxu0 0.0
    %5031 = vmatpush1.msra.mxu0 0.0
    %5032 = vmatprep.subr.mxu0 0.0
    %5033 = vmatpush1.msra.mxu0 0.0
    %5034 = vmatprep.subr.mxu0 0.0
    %5035 = vmatpush1.msra.mxu0 0.0
    %5036 = vmatprep.subr.mxu0 0.0
    %5037 = vmatpush1.msra.mxu0 0.0
    %5038 = vmatprep.subr.mxu0 0.0
    %5039 = vmatpush1.msra.mxu0 0.0
    %5040 = vmatprep.subr.mxu0 0.0
    %5041 = vmatpush1.msra.mxu0 0.0
    %5042 = vmatprep.subr.mxu0 0.0
    %5043 = vmatpush1.msra.mxu0 0.0
    %5044 = vmatprep.subr.mxu0 0.0
    %5045 = vmatpush1.msra.mxu0 0.0
    %5046 = vmatprep.subr.mxu0 0.0
    %5047 = vmatpush1.msra.mxu0 0.0
    %5048 = vmatprep.subr.mxu0 0.0
    %5049 = vmatpush1.msra.mxu0 0.0
    %5050 = vmatprep.subr.mxu0 0.0
    %5051 = vmatpush1.msra.mxu0 0.0
    %5052 = vmatprep.subr.mxu0 0.0
    %5053 = vmatpush1.msra.mxu0 0.0
    %5054 = vmatprep.subr.mxu0 0.0
    %5055 = vmatpush1.msra.mxu0 0.0
    %5056 = vmatprep.mubr.f32.mxu0 0.0
    %5057 = vmatmul.mubr.f32.gmra.mrb[0].mxu0 %v4990
    %v5058 = vpop.f32.mrb[0].mxu0
    %v5059 = vadd.f32 %v4915, %v5058
    %v5060 = vpop.f32.mrb[0].mxu0
    %v5061 = vadd.f32 %v4917, %v5060
    %5062 = vdwg.mxu0
    %5063 = vmatprep.subr.mxu0 %v4767
    %5064 = vmatpush1.msra.mxu0 %v4766
    %5065 = vmatprep.subr.mxu0 %v4771
    %5066 = vmatpush1.msra.mxu0 %v4770
    %5067 = vmatprep.subr.mxu0 %v4775
    %5068 = vmatpush1.msra.mxu0 %v4774
    %5069 = vmatprep.subr.mxu0 %v4779
    %5070 = vmatpush1.msra.mxu0 %v4778
    %5071 = vmatprep.subr.mxu0 0.0
    %5072 = vmatpush1.msra.mxu0 0.0
    %5073 = vmatprep.subr.mxu0 0.0
    %5074 = vmatpush1.msra.mxu0 0.0
    %5075 = vmatprep.subr.mxu0 0.0
    %5076 = vmatpush1.msra.mxu0 0.0
    %5077 = vmatprep.subr.mxu0 0.0
    %5078 = vmatpush1.msra.mxu0 0.0
    %5079 = vmatprep.subr.mxu0 0.0
    %5080 = vmatpush1.msra.mxu0 0.0
    %5081 = vmatprep.subr.mxu0 0.0
    %5082 = vmatpush1.msra.mxu0 0.0
    %5083 = vmatprep.subr.mxu0 0.0
    %5084 = vmatpush1.msra.mxu0 0.0
    %5085 = vmatprep.subr.mxu0 0.0
    %5086 = vmatpush1.msra.mxu0 0.0
    %5087 = vmatprep.subr.mxu0 0.0
    %5088 = vmatpush1.msra.mxu0 0.0
    %5089 = vmatprep.subr.mxu0 0.0
    %5090 = vmatpush1.msra.mxu0 0.0
    %5091 = vmatprep.subr.mxu0 0.0
    %5092 = vmatpush1.msra.mxu0 0.0
    %5093 = vmatprep.subr.mxu0 0.0
    %5094 = vmatpush1.msra.mxu0 0.0
    %5095 = vmatprep.subr.mxu0 0.0
    %5096 = vmatpush1.msra.mxu0 0.0
    %5097 = vmatprep.subr.mxu0 0.0
    %5098 = vmatpush1.msra.mxu0 0.0
    %5099 = vmatprep.subr.mxu0 0.0
    %5100 = vmatpush1.msra.mxu0 0.0
    %5101 = vmatprep.subr.mxu0 0.0
    %5102 = vmatpush1.msra.mxu0 0.0
    %5103 = vmatprep.subr.mxu0 0.0
    %5104 = vmatpush1.msra.mxu0 0.0
    %5105 = vmatprep.subr.mxu0 0.0
    %5106 = vmatpush1.msra.mxu0 0.0
    %5107 = vmatprep.subr.mxu0 0.0
    %5108 = vmatpush1.msra.mxu0 0.0
    %5109 = vmatprep.subr.mxu0 0.0
    %5110 = vmatpush1.msra.mxu0 0.0
    %5111 = vmatprep.subr.mxu0 0.0
    %5112 = vmatpush1.msra.mxu0 0.0
    %5113 = vmatprep.subr.mxu0 0.0
    %5114 = vmatpush1.msra.mxu0 0.0
    %5115 = vmatprep.subr.mxu0 0.0
    %5116 = vmatpush1.msra.mxu0 0.0
    %5117 = vmatprep.subr.mxu0 0.0
    %5118 = vmatpush1.msra.mxu0 0.0
    %5119 = vmatprep.subr.mxu0 0.0
    %5120 = vmatpush1.msra.mxu0 0.0
    %5121 = vmatprep.subr.mxu0 0.0
    %5122 = vmatpush1.msra.mxu0 0.0
    %5123 = vmatprep.subr.mxu0 0.0
    %5124 = vmatpush1.msra.mxu0 0.0
    %5125 = vmatprep.subr.mxu0 0.0
    %5126 = vmatpush1.msra.mxu0 0.0
    %5127 = vmatprep.mubr.f32.mxu0 0.0
    %5128 = vmatmul.mubr.f32.gmra.mrb[0].mxu0 %v4990
    %v5129 = vpop.f32.mrb[0].mxu0
    %v5130 = vadd.f32 %v4986, %v5129
    %v5131 = vpop.f32.mrb[0].mxu0
    %v5132 = vadd.f32 %v4988, %v5131
    %5133 = vdwg.mxu0
    %5134 = vrot.lane.b32.xlu0 %v4696, 32
    %v5135 = vpop.permute.xlu0 %5134
    %5136 = vrot.lane.b32.xlu0 %v4700, 32
    %v5137 = vpop.permute.xlu0 %5136
    %5138 = vrot.lane.b32.xlu0 %v4704, 32
    %v5139 = vpop.permute.xlu0 %5138
    %5140 = vrot.lane.b32.xlu0 %v4708, 32
    %v5141 = vpop.permute.xlu0 %5140
    %5142 = vrot.lane.b32.xlu0 %v4697, 32
    %v5143 = vpop.permute.xlu0 %5142
    %5144 = vrot.lane.b32.xlu0 %v4701, 32
    %v5145 = vpop.permute.xlu0 %5144
    %5146 = vrot.lane.b32.xlu0 %v4705, 32
    %v5147 = vpop.permute.xlu0 %5146
    %5148 = vrot.lane.b32.xlu0 %v4709, 32
    %v5149 = vpop.permute.xlu0 %5148
    %5150 = vrot.lane.b32.xlu0 %v4698, 32
    %v5151 = vpop.permute.xlu0 %5150
    %5152 = vrot.lane.b32.xlu0 %v4702, 32
    %v5153 = vpop.permute.xlu0 %5152
    %5154 = vrot.lane.b32.xlu0 %v4706, 32
    %v5155 = vpop.permute.xlu0 %5154
    %5156 = vrot.lane.b32.xlu0 %v4710, 32
    %v5157 = vpop.permute.xlu0 %5156
    %5158 = vrot.lane.b32.xlu0 %v4699, 32
    %v5159 = vpop.permute.xlu0 %5158
    %5160 = vrot.lane.b32.xlu0 %v4703, 32
    %v5161 = vpop.permute.xlu0 %5160
    %5162 = vrot.lane.b32.xlu0 %v4707, 32
    %v5163 = vpop.permute.xlu0 %5162
    %5164 = vrot.lane.b32.xlu0 %v4711, 32
    %v5165 = vpop.permute.xlu0 %5164
    %v5166 = vsel %vm184, %v5151, %v5159
    %v5167 = vsel %vm184, %v5153, %v5161
    %v5168 = vsel %vm184, %v5155, %v5163
    %v5169 = vsel %vm184, %v5157, %v5165
    %v5170 = vsel %vm184, %v5143, %v5151
    %v5171 = vsel %vm184, %v5145, %v5153
    %v5172 = vsel %vm184, %v5147, %v5155
    %v5173 = vsel %vm184, %v5149, %v5157
    %v5174 = vsel %vm184, %v5135, %v5143
    %v5175 = vsel %vm184, %v5137, %v5145
    %v5176 = vsel %vm184, %v5139, %v5147
    %v5177 = vsel %vm184, %v5141, %v5149
    %v5178 = vsel %vm184, %v5159, %v5135
    %v5179 = vsel %vm184, %v5161, %v5137
    %v5180 = vsel %vm184, %v5163, %v5139
    %v5181 = vsel %vm184, %v5165, %v5141
    %v5182 = vmul.f32 %v5178, %v192
    %v5183 = vmul.f32 %v5174, %v196
    %v5184 = vmul.f32 %v5170, %v200
    %v5185 = vmul.f32 %v5166, %v204
    %v5186 = vmul.f32 %v5179, %v192
    %v5187 = vmul.f32 %v5175, %v196
    %v5188 = vmul.f32 %v5171, %v200
    %v5189 = vmul.f32 %v5167, %v204
    %v5190 = vmul.f32 %v5180, %v192
    %v5191 = vmul.f32 %v5176, %v196
    %v5192 = vmul.f32 %v5172, %v200
    %v5193 = vmul.f32 %v5168, %v204
    %v5194 = vmul.f32 %v5181, %v192
    %v5195 = vmul.f32 %v5177, %v196
    %v5196 = vmul.f32 %v5173, %v200
    %v5197 = vmul.f32 %v5169, %v204
    %v5198 = vrot.slane %v4712, 2
    %v5199 = vsel %vm3938, %v5198, 0
    %5201 = vmatprep.subr.mxu0 %v5183
    %5202 = vmatpush1.msra.mxu0 %v5182
    %5203 = vmatprep.subr.mxu0 %v5187
    %5204 = vmatpush1.msra.mxu0 %v5186
    %5205 = vmatprep.subr.mxu0 %v5191
    %5206 = vmatpush1.msra.mxu0 %v5190
    %5207 = vmatprep.subr.mxu0 %v5195
    %5208 = vmatpush1.msra.mxu0 %v5194
    %5209 = vmatprep.subr.mxu0 0.0
    %5210 = vmatpush1.msra.mxu0 0.0
    %5211 = vmatprep.subr.mxu0 0.0
    %5212 = vmatpush1.msra.mxu0 0.0
    %5213 = vmatprep.subr.mxu0 0.0
    %5214 = vmatpush1.msra.mxu0 0.0
    %5215 = vmatprep.subr.mxu0 0.0
    %5216 = vmatpush1.msra.mxu0 0.0
    %5217 = vmatprep.subr.mxu0 0.0
    %5218 = vmatpush1.msra.mxu0 0.0
    %5219 = vmatprep.subr.mxu0 0.0
    %5220 = vmatpush1.msra.mxu0 0.0
    %5221 = vmatprep.subr.mxu0 0.0
    %5222 = vmatpush1.msra.mxu0 0.0
    %5223 = vmatprep.subr.mxu0 0.0
    %5224 = vmatpush1.msra.mxu0 0.0
    %5225 = vmatprep.subr.mxu0 0.0
    %5226 = vmatpush1.msra.mxu0 0.0
    %5227 = vmatprep.subr.mxu0 0.0
    %5228 = vmatpush1.msra.mxu0 0.0
    %5229 = vmatprep.subr.mxu0 0.0
    %5230 = vmatpush1.msra.mxu0 0.0
    %5231 = vmatprep.subr.mxu0 0.0
    %5232 = vmatpush1.msra.mxu0 0.0
    %5233 = vmatprep.subr.mxu0 0.0
    %5234 = vmatpush1.msra.mxu0 0.0
    %5235 = vmatprep.subr.mxu0 0.0
    %5236 = vmatpush1.msra.mxu0 0.0
    %5237 = vmatprep.subr.mxu0 0.0
    %5238 = vmatpush1.msra.mxu0 0.0
    %5239 = vmatprep.subr.mxu0 0.0
    %5240 = vmatpush1.msra.mxu0 0.0
    %5241 = vmatprep.subr.mxu0 0.0
    %5242 = vmatpush1.msra.mxu0 0.0
    %5243 = vmatprep.subr.mxu0 0.0
    %5244 = vmatpush1.msra.mxu0 0.0
    %5245 = vmatprep.subr.mxu0 0.0
    %5246 = vmatpush1.msra.mxu0 0.0
    %5247 = vmatprep.subr.mxu0 0.0
    %5248 = vmatpush1.msra.mxu0 0.0
    %5249 = vmatprep.subr.mxu0 0.0
    %5250 = vmatpush1.msra.mxu0 0.0
    %5251 = vmatprep.subr.mxu0 0.0
    %5252 = vmatpush1.msra.mxu0 0.0
    %5253 = vmatprep.subr.mxu0 0.0
    %5254 = vmatpush1.msra.mxu0 0.0
    %5255 = vmatprep.subr.mxu0 0.0
    %5256 = vmatpush1.msra.mxu0 0.0
    %5257 = vmatprep.subr.mxu0 0.0
    %5258 = vmatpush1.msra.mxu0 0.0
    %5259 = vmatprep.subr.mxu0 0.0
    %5260 = vmatpush1.msra.mxu0 0.0
    %5261 = vmatprep.subr.mxu0 0.0
    %5262 = vmatpush1.msra.mxu0 0.0
    %5263 = vmatprep.subr.mxu0 0.0
    %5264 = vmatpush1.msra.mxu0 0.0
    %5265 = vmatprep.mubr.f32.mxu0 0.0
    %5266 = vmatmul.mubr.f32.gmra.mrb[0].mxu0 %v5199
    %v5267 = vpop.f32.mrb[0].mxu0
    %v5268 = vadd.f32 0.0, %v5267
    %v5269 = vpop.f32.mrb[0].mxu0
    %v5270 = vadd.f32 0.0, %v5269
    %5271 = vdwg.mxu0
    %5272 = vmatprep.subr.mxu0 %v5185
    %5273 = vmatpush1.msra.mxu0 %v5184
    %5274 = vmatprep.subr.mxu0 %v5189
    %5275 = vmatpush1.msra.mxu0 %v5188
    %5276 = vmatprep.subr.mxu0 %v5193
    %5277 = vmatpush1.msra.mxu0 %v5192
    %5278 = vmatprep.subr.mxu0 %v5197
    %5279 = vmatpush1.msra.mxu0 %v5196
    %5280 = vmatprep.subr.mxu0 0.0
    %5281 = vmatpush1.msra.mxu0 0.0
    %5282 = vmatprep.subr.mxu0 0.0
    %5283 = vmatpush1.msra.mxu0 0.0
    %5284 = vmatprep.subr.mxu0 0.0
    %5285 = vmatpush1.msra.mxu0 0.0
    %5286 = vmatprep.subr.mxu0 0.0
    %5287 = vmatpush1.msra.mxu0 0.0
    %5288 = vmatprep.subr.mxu0 0.0
    %5289 = vmatpush1.msra.mxu0 0.0
    %5290 = vmatprep.subr.mxu0 0.0
    %5291 = vmatpush1.msra.mxu0 0.0
    %5292 = vmatprep.subr.mxu0 0.0
    %5293 = vmatpush1.msra.mxu0 0.0
    %5294 = vmatprep.subr.mxu0 0.0
    %5295 = vmatpush1.msra.mxu0 0.0
    %5296 = vmatprep.subr.mxu0 0.0
    %5297 = vmatpush1.msra.mxu0 0.0
    %5298 = vmatprep.subr.mxu0 0.0
    %5299 = vmatpush1.msra.mxu0 0.0
    %5300 = vmatprep.subr.mxu0 0.0
    %5301 = vmatpush1.msra.mxu0 0.0
    %5302 = vmatprep.subr.mxu0 0.0
    %5303 = vmatpush1.msra.mxu0 0.0
    %5304 = vmatprep.subr.mxu0 0.0
    %5305 = vmatpush1.msra.mxu0 0.0
    %5306 = vmatprep.subr.mxu0 0.0
    %5307 = vmatpush1.msra.mxu0 0.0
    %5308 = vmatprep.subr.mxu0 0.0
    %5309 = vmatpush1.msra.mxu0 0.0
    %5310 = vmatprep.subr.mxu0 0.0
    %5311 = vmatpush1.msra.mxu0 0.0
    %5312 = vmatprep.subr.mxu0 0.0
    %5313 = vmatpush1.msra.mxu0 0.0
    %5314 = vmatprep.subr.mxu0 0.0
    %5315 = vmatpush1.msra.mxu0 0.0
    %5316 = vmatprep.subr.mxu0 0.0
    %5317 = vmatpush1.msra.mxu0 0.0
    %5318 = vmatprep.subr.mxu0 0.0
    %5319 = vmatpush1.msra.mxu0 0.0
    %5320 = vmatprep.subr.mxu0 0.0
    %5321 = vmatpush1.msra.mxu0 0.0
    %5322 = vmatprep.subr.mxu0 0.0
    %5323 = vmatpush1.msra.mxu0 0.0
    %5324 = vmatprep.subr.mxu0 0.0
    %5325 = vmatpush1.msra.mxu0 0.0
    %5326 = vmatprep.subr.mxu0 0.0
    %5327 = vmatpush1.msra.mxu0 0.0
    %5328 = vmatprep.subr.mxu0 0.0
    %5329 = vmatpush1.msra.mxu0 0.0
    %5330 = vmatprep.subr.mxu0 0.0
    %5331 = vmatpush1.msra.mxu0 0.0
    %5332 = vmatprep.subr.mxu0 0.0
    %5333 = vmatpush1.msra.mxu0 0.0
    %5334 = vmatprep.subr.mxu0 0.0
    %5335 = vmatpush1.msra.mxu0 0.0
    %5336 = vmatprep.mubr.f32.mxu0 0.0
    %5337 = vmatmul.mubr.f32.gmra.mrb[0].mxu0 %v5199
    %v5338 = vpop.f32.mrb[0].mxu0
    %v5339 = vadd.f32 0.0, %v5338
    %v5340 = vpop.f32.mrb[0].mxu0
    %v5341 = vadd.f32 0.0, %v5340
    %5342 = vdwg.mxu0
    %v5343 = vadd.f32 %v5059, %v5268
    %v5344 = vadd.f32 %v5061, %v5270
    %v5345 = vadd.f32 %v5130, %v5339
    %v5346 = vadd.f32 %v5132, %v5341
    %5347 = vrot.lane.b32.xlu0 %v4696, 31
    %v5348 = vpop.permute.xlu0 %5347
    %5349 = vrot.lane.b32.xlu0 %v4700, 31
    %v5350 = vpop.permute.xlu0 %5349
    %5351 = vrot.lane.b32.xlu0 %v4704, 31
    %v5352 = vpop.permute.xlu0 %5351
    %5353 = vrot.lane.b32.xlu0 %v4708, 31
    %v5354 = vpop.permute.xlu0 %5353
    %5355 = vrot.lane.b32.xlu0 %v4697, 31
    %v5356 = vpop.permute.xlu0 %5355
    %5357 = vrot.lane.b32.xlu0 %v4701, 31
    %v5358 = vpop.permute.xlu0 %5357
    %5359 = vrot.lane.b32.xlu0 %v4705, 31
    %v5360 = vpop.permute.xlu0 %5359
    %5361 = vrot.lane.b32.xlu0 %v4709, 31
    %v5362 = vpop.permute.xlu0 %5361
    %5363 = vrot.lane.b32.xlu0 %v4698, 31
    %v5364 = vpop.permute.xlu0 %5363
    %5365 = vrot.lane.b32.xlu0 %v4702, 31
    %v5366 = vpop.permute.xlu0 %5365
    %5367 = vrot.lane.b32.xlu0 %v4706, 31
    %v5368 = vpop.permute.xlu0 %5367
    %5369 = vrot.lane.b32.xlu0 %v4710, 31
    %v5370 = vpop.permute.xlu0 %5369
    %5371 = vrot.lane.b32.xlu0 %v4699, 31
    %v5372 = vpop.permute.xlu0 %5371
    %5373 = vrot.lane.b32.xlu0 %v4703, 31
    %v5374 = vpop.permute.xlu0 %5373
    %5375 = vrot.lane.b32.xlu0 %v4707, 31
    %v5376 = vpop.permute.xlu0 %5375
    %5377 = vrot.lane.b32.xlu0 %v4711, 31
    %v5378 = vpop.permute.xlu0 %5377
    %v5379 = vsel %vm217, %v5364, %v5372
    %v5380 = vsel %vm217, %v5366, %v5374
    %v5381 = vsel %vm217, %v5368, %v5376
    %v5382 = vsel %vm217, %v5370, %v5378
    %v5383 = vsel %vm217, %v5356, %v5364
    %v5384 = vsel %vm217, %v5358, %v5366
    %v5385 = vsel %vm217, %v5360, %v5368
    %v5386 = vsel %vm217, %v5362, %v5370
    %v5387 = vsel %vm217, %v5348, %v5356
    %v5388 = vsel %vm217, %v5350, %v5358
    %v5389 = vsel %vm217, %v5352, %v5360
    %v5390 = vsel %vm217, %v5354, %v5362
    %v5391 = vsel %vm217, %v5372, %v5348
    %v5392 = vsel %vm217, %v5374, %v5350
    %v5393 = vsel %vm217, %v5376, %v5352
    %v5394 = vsel %vm217, %v5378, %v5354
    %v5395 = vmul.f32 %v5391, %v225
    %v5396 = vmul.f32 %v5387, %v229
    %v5397 = vmul.f32 %v5383, %v233
    %v5398 = vmul.f32 %v5379, %v237
    %v5399 = vmul.f32 %v5392, %v225
    %v5400 = vmul.f32 %v5388, %v229
    %v5401 = vmul.f32 %v5384, %v233
    %v5402 = vmul.f32 %v5380, %v237
    %v5403 = vmul.f32 %v5393, %v225
    %v5404 = vmul.f32 %v5389, %v229
    %v5405 = vmul.f32 %v5385, %v233
    %v5406 = vmul.f32 %v5381, %v237
    %v5407 = vmul.f32 %v5394, %v225
    %v5408 = vmul.f32 %v5390, %v229
    %v5409 = vmul.f32 %v5386, %v233
    %v5410 = vmul.f32 %v5382, %v237
    %v5411 = vrot.slane %v4712, 3
    %v5412 = vsel %vm3938, %v5411, 0
    %5414 = vmatprep.subr.mxu0 %v5396
    %5415 = vmatpush1.msra.mxu0 %v5395
    %5416 = vmatprep.subr.mxu0 %v5400
    %5417 = vmatpush1.msra.mxu0 %v5399
    %5418 = vmatprep.subr.mxu0 %v5404
    %5419 = vmatpush1.msra.mxu0 %v5403
    %5420 = vmatprep.subr.mxu0 %v5408
    %5421 = vmatpush1.msra.mxu0 %v5407
    %5422 = vmatprep.subr.mxu0 0.0
    %5423 = vmatpush1.msra.mxu0 0.0
    %5424 = vmatprep.subr.mxu0 0.0
    %5425 = vmatpush1.msra.mxu0 0.0
    %5426 = vmatprep.subr.mxu0 0.0
    %5427 = vmatpush1.msra.mxu0 0.0
    %5428 = vmatprep.subr.mxu0 0.0
    %5429 = vmatpush1.msra.mxu0 0.0
    %5430 = vmatprep.subr.mxu0 0.0
    %5431 = vmatpush1.msra.mxu0 0.0
    %5432 = vmatprep.subr.mxu0 0.0
    %5433 = vmatpush1.msra.mxu0 0.0
    %5434 = vmatprep.subr.mxu0 0.0
    %5435 = vmatpush1.msra.mxu0 0.0
    %5436 = vmatprep.subr.mxu0 0.0
    %5437 = vmatpush1.msra.mxu0 0.0
    %5438 = vmatprep.subr.mxu0 0.0
    %5439 = vmatpush1.msra.mxu0 0.0
    %5440 = vmatprep.subr.mxu0 0.0
    %5441 = vmatpush1.msra.mxu0 0.0
    %5442 = vmatprep.subr.mxu0 0.0
    %5443 = vmatpush1.msra.mxu0 0.0
    %5444 = vmatprep.subr.mxu0 0.0
    %5445 = vmatpush1.msra.mxu0 0.0
    %5446 = vmatprep.subr.mxu0 0.0
    %5447 = vmatpush1.msra.mxu0 0.0
    %5448 = vmatprep.subr.mxu0 0.0
    %5449 = vmatpush1.msra.mxu0 0.0
    %5450 = vmatprep.subr.mxu0 0.0
    %5451 = vmatpush1.msra.mxu0 0.0
    %5452 = vmatprep.subr.mxu0 0.0
    %5453 = vmatpush1.msra.mxu0 0.0
    %5454 = vmatprep.subr.mxu0 0.0
    %5455 = vmatpush1.msra.mxu0 0.0
    %5456 = vmatprep.subr.mxu0 0.0
    %5457 = vmatpush1.msra.mxu0 0.0
    %5458 = vmatprep.subr.mxu0 0.0
    %5459 = vmatpush1.msra.mxu0 0.0
    %5460 = vmatprep.subr.mxu0 0.0
    %5461 = vmatpush1.msra.mxu0 0.0
    %5462 = vmatprep.subr.mxu0 0.0
    %5463 = vmatpush1.msra.mxu0 0.0
    %5464 = vmatprep.subr.mxu0 0.0
    %5465 = vmatpush1.msra.mxu0 0.0
    %5466 = vmatprep.subr.mxu0 0.0
    %5467 = vmatpush1.msra.mxu0 0.0
    %5468 = vmatprep.subr.mxu0 0.0
    %5469 = vmatpush1.msra.mxu0 0.0
    %5470 = vmatprep.subr.mxu0 0.0
    %5471 = vmatpush1.msra.mxu0 0.0
    %5472 = vmatprep.subr.mxu0 0.0
    %5473 = vmatpush1.msra.mxu0 0.0
    %5474 = vmatprep.subr.mxu0 0.0
    %5475 = vmatpush1.msra.mxu0 0.0
    %5476 = vmatprep.subr.mxu0 0.0
    %5477 = vmatpush1.msra.mxu0 0.0
    %5478 = vmatprep.mubr.f32.mxu0 0.0
    %5479 = vmatmul.mubr.f32.gmra.mrb[0].mxu0 %v5412
    %v5480 = vpop.f32.mrb[0].mxu0
    %v5481 = vadd.f32 0.0, %v5480
    %v5482 = vpop.f32.mrb[0].mxu0
    %v5483 = vadd.f32 0.0, %v5482
    %5484 = vdwg.mxu0
    %5485 = vmatprep.subr.mxu0 %v5398
    %5486 = vmatpush1.msra.mxu0 %v5397
    %5487 = vmatprep.subr.mxu0 %v5402
    %5488 = vmatpush1.msra.mxu0 %v5401
    %5489 = vmatprep.subr.mxu0 %v5406
    %5490 = vmatpush1.msra.mxu0 %v5405
    %5491 = vmatprep.subr.mxu0 %v5410
    %5492 = vmatpush1.msra.mxu0 %v5409
    %5493 = vmatprep.subr.mxu0 0.0
    %5494 = vmatpush1.msra.mxu0 0.0
    %5495 = vmatprep.subr.mxu0 0.0
    %5496 = vmatpush1.msra.mxu0 0.0
    %5497 = vmatprep.subr.mxu0 0.0
    %5498 = vmatpush1.msra.mxu0 0.0
    %5499 = vmatprep.subr.mxu0 0.0
    %5500 = vmatpush1.msra.mxu0 0.0
    %5501 = vmatprep.subr.mxu0 0.0
    %5502 = vmatpush1.msra.mxu0 0.0
    %5503 = vmatprep.subr.mxu0 0.0
    %5504 = vmatpush1.msra.mxu0 0.0
    %5505 = vmatprep.subr.mxu0 0.0
    %5506 = vmatpush1.msra.mxu0 0.0
    %5507 = vmatprep.subr.mxu0 0.0
    %5508 = vmatpush1.msra.mxu0 0.0
    %5509 = vmatprep.subr.mxu0 0.0
    %5510 = vmatpush1.msra.mxu0 0.0
    %5511 = vmatprep.subr.mxu0 0.0
    %5512 = vmatpush1.msra.mxu0 0.0
    %5513 = vmatprep.subr.mxu0 0.0
    %5514 = vmatpush1.msra.mxu0 0.0
    %5515 = vmatprep.subr.mxu0 0.0
    %5516 = vmatpush1.msra.mxu0 0.0
    %5517 = vmatprep.subr.mxu0 0.0
    %5518 = vmatpush1.msra.mxu0 0.0
    %5519 = vmatprep.subr.mxu0 0.0
    %5520 = vmatpush1.msra.mxu0 0.0
    %5521 = vmatprep.subr.mxu0 0.0
    %5522 = vmatpush1.msra.mxu0 0.0
    %5523 = vmatprep.subr.mxu0 0.0
    %5524 = vmatpush1.msra.mxu0 0.0
    %5525 = vmatprep.subr.mxu0 0.0
    %5526 = vmatpush1.msra.mxu0 0.0
    %5527 = vmatprep.subr.mxu0 0.0
    %5528 = vmatpush1.msra.mxu0 0.0
    %5529 = vmatprep.subr.mxu0 0.0
    %5530 = vmatpush1.msra.mxu0 0.0
    %5531 = vmatprep.subr.mxu0 0.0
    %5532 = vmatpush1.msra.mxu0 0.0
    %5533 = vmatprep.subr.mxu0 0.0
    %5534 = vmatpush1.msra.mxu0 0.0
    %5535 = vmatprep.subr.mxu0 0.0
    %5536 = vmatpush1.msra.mxu0 0.0
    %5537 = vmatprep.subr.mxu0 0.0
    %5538 = vmatpush1.msra.mxu0 0.0
    %5539 = vmatprep.subr.mxu0 0.0
    %5540 = vmatpush1.msra.mxu0 0.0
    %5541 = vmatprep.subr.mxu0 0.0
    %5542 = vmatpush1.msra.mxu0 0.0
    %5543 = vmatprep.subr.mxu0 0.0
    %5544 = vmatpush1.msra.mxu0 0.0
    %5545 = vmatprep.subr.mxu0 0.0
    %5546 = vmatpush1.msra.mxu0 0.0
    %5547 = vmatprep.subr.mxu0 0.0
    %5548 = vmatpush1.msra.mxu0 0.0
    %5549 = vmatprep.mubr.f32.mxu0 0.0
    %5550 = vmatmul.mubr.f32.gmra.mrb[0].mxu0 %v5412
    %v5551 = vpop.f32.mrb[0].mxu0
    %v5552 = vadd.f32 0.0, %v5551
    %v5553 = vpop.f32.mrb[0].mxu0
    %v5554 = vadd.f32 0.0, %v5553
    %5555 = vdwg.mxu0
    %v5556 = vadd.f32 %v5343, %v5481
    %v5557 = vadd.f32 %v5344, %v5483
    %v5558 = vadd.f32 %v5345, %v5552
    %v5559 = vadd.f32 %v5346, %v5554
    %5560 = vrot.lane.b32.xlu0 %v4696, 30
    %v5561 = vpop.permute.xlu0 %5560
    %5562 = vrot.lane.b32.xlu0 %v4700, 30
    %v5563 = vpop.permute.xlu0 %5562
    %5564 = vrot.lane.b32.xlu0 %v4704, 30
    %v5565 = vpop.permute.xlu0 %5564
    %5566 = vrot.lane.b32.xlu0 %v4708, 30
    %v5567 = vpop.permute.xlu0 %5566
    %5568 = vrot.lane.b32.xlu0 %v4697, 30
    %v5569 = vpop.permute.xlu0 %5568
    %5570 = vrot.lane.b32.xlu0 %v4701, 30
    %v5571 = vpop.permute.xlu0 %5570
    %5572 = vrot.lane.b32.xlu0 %v4705, 30
    %v5573 = vpop.permute.xlu0 %5572
    %5574 = vrot.lane.b32.xlu0 %v4709, 30
    %v5575 = vpop.permute.xlu0 %5574
    %5576 = vrot.lane.b32.xlu0 %v4698, 30
    %v5577 = vpop.permute.xlu0 %5576
    %5578 = vrot.lane.b32.xlu0 %v4702, 30
    %v5579 = vpop.permute.xlu0 %5578
    %5580 = vrot.lane.b32.xlu0 %v4706, 30
    %v5581 = vpop.permute.xlu0 %5580
    %5582 = vrot.lane.b32.xlu0 %v4710, 30
    %v5583 = vpop.permute.xlu0 %5582
    %5584 = vrot.lane.b32.xlu0 %v4699, 30
    %v5585 = vpop.permute.xlu0 %5584
    %5586 = vrot.lane.b32.xlu0 %v4703, 30
    %v5587 = vpop.permute.xlu0 %5586
    %5588 = vrot.lane.b32.xlu0 %v4707, 30
    %v5589 = vpop.permute.xlu0 %5588
    %5590 = vrot.lane.b32.xlu0 %v4711, 30
    %v5591 = vpop.permute.xlu0 %5590
    %v5592 = vsel %vm250, %v5577, %v5585
    %v5593 = vsel %vm250, %v5579, %v5587
    %v5594 = vsel %vm250, %v5581, %v5589
    %v5595 = vsel %vm250, %v5583, %v5591
    %v5596 = vsel %vm250, %v5569, %v5577
    %v5597 = vsel %vm250, %v5571, %v5579
    %v5598 = vsel %vm250, %v5573, %v5581
    %v5599 = vsel %vm250, %v5575, %v5583
    %v5600 = vsel %vm250, %v5561, %v5569
    %v5601 = vsel %vm250, %v5563, %v5571
    %v5602 = vsel %vm250, %v5565, %v5573
    %v5603 = vsel %vm250, %v5567, %v5575
    %v5604 = vsel %vm250, %v5585, %v5561
    %v5605 = vsel %vm250, %v5587, %v5563
    %v5606 = vsel %vm250, %v5589, %v5565
    %v5607 = vsel %vm250, %v5591, %v5567
    %v5608 = vmul.f32 %v5604, %v258
    %v5609 = vmul.f32 %v5600, %v262
    %v5610 = vmul.f32 %v5596, %v266
    %v5611 = vmul.f32 %v5592, %v270
    %v5612 = vmul.f32 %v5605, %v258
    %v5613 = vmul.f32 %v5601, %v262
    %v5614 = vmul.f32 %v5597, %v266
    %v5615 = vmul.f32 %v5593, %v270
    %v5616 = vmul.f32 %v5606, %v258
    %v5617 = vmul.f32 %v5602, %v262
    %v5618 = vmul.f32 %v5598, %v266
    %v5619 = vmul.f32 %v5594, %v270
    %v5620 = vmul.f32 %v5607, %v258
    %v5621 = vmul.f32 %v5603, %v262
    %v5622 = vmul.f32 %v5599, %v266
    %v5623 = vmul.f32 %v5595, %v270
    %v5624 = vrot.slane %v4712, 4
    %v5625 = vsel %vm3938, %v5624, 0
    %5627 = vmatprep.subr.mxu0 %v5609
    %5628 = vmatpush1.msra.mxu0 %v5608
    %5629 = vmatprep.subr.mxu0 %v5613
    %5630 = vmatpush1.msra.mxu0 %v5612
    %5631 = vmatprep.subr.mxu0 %v5617
    %5632 = vmatpush1.msra.mxu0 %v5616
    %5633 = vmatprep.subr.mxu0 %v5621
    %5634 = vmatpush1.msra.mxu0 %v5620
    %5635 = vmatprep.subr.mxu0 0.0
    %5636 = vmatpush1.msra.mxu0 0.0
    %5637 = vmatprep.subr.mxu0 0.0
    %5638 = vmatpush1.msra.mxu0 0.0
    %5639 = vmatprep.subr.mxu0 0.0
    %5640 = vmatpush1.msra.mxu0 0.0
    %5641 = vmatprep.subr.mxu0 0.0
    %5642 = vmatpush1.msra.mxu0 0.0
    %5643 = vmatprep.subr.mxu0 0.0
    %5644 = vmatpush1.msra.mxu0 0.0
    %5645 = vmatprep.subr.mxu0 0.0
    %5646 = vmatpush1.msra.mxu0 0.0
    %5647 = vmatprep.subr.mxu0 0.0
    %5648 = vmatpush1.msra.mxu0 0.0
    %5649 = vmatprep.subr.mxu0 0.0
    %5650 = vmatpush1.msra.mxu0 0.0
    %5651 = vmatprep.subr.mxu0 0.0
    %5652 = vmatpush1.msra.mxu0 0.0
    %5653 = vmatprep.subr.mxu0 0.0
    %5654 = vmatpush1.msra.mxu0 0.0
    %5655 = vmatprep.subr.mxu0 0.0
    %5656 = vmatpush1.msra.mxu0 0.0
    %5657 = vmatprep.subr.mxu0 0.0
    %5658 = vmatpush1.msra.mxu0 0.0
    %5659 = vmatprep.subr.mxu0 0.0
    %5660 = vmatpush1.msra.mxu0 0.0
    %5661 = vmatprep.subr.mxu0 0.0
    %5662 = vmatpush1.msra.mxu0 0.0
    %5663 = vmatprep.subr.mxu0 0.0
    %5664 = vmatpush1.msra.mxu0 0.0
    %5665 = vmatprep.subr.mxu0 0.0
    %5666 = vmatpush1.msra.mxu0 0.0
    %5667 = vmatprep.subr.mxu0 0.0
    %5668 = vmatpush1.msra.mxu0 0.0
    %5669 = vmatprep.subr.mxu0 0.0
    %5670 = vmatpush1.msra.mxu0 0.0
    %5671 = vmatprep.subr.mxu0 0.0
    %5672 = vmatpush1.msra.mxu0 0.0
    %5673 = vmatprep.subr.mxu0 0.0
    %5674 = vmatpush1.msra.mxu0 0.0
    %5675 = vmatprep.subr.mxu0 0.0
    %5676 = vmatpush1.msra.mxu0 0.0
    %5677 = vmatprep.subr.mxu0 0.0
    %5678 = vmatpush1.msra.mxu0 0.0
    %5679 = vmatprep.subr.mxu0 0.0
    %5680 = vmatpush1.msra.mxu0 0.0
    %5681 = vmatprep.subr.mxu0 0.0
    %5682 = vmatpush1.msra.mxu0 0.0
    %5683 = vmatprep.subr.mxu0 0.0
    %5684 = vmatpush1.msra.mxu0 0.0
    %5685 = vmatprep.subr.mxu0 0.0
    %5686 = vmatpush1.msra.mxu0 0.0
    %5687 = vmatprep.subr.mxu0 0.0
    %5688 = vmatpush1.msra.mxu0 0.0
    %5689 = vmatprep.subr.mxu0 0.0
    %5690 = vmatpush1.msra.mxu0 0.0
    %5691 = vmatprep.mubr.f32.mxu0 0.0
    %5692 = vmatmul.mubr.f32.gmra.mrb[0].mxu0 %v5625
    %v5693 = vpop.f32.mrb[0].mxu0
    %v5694 = vadd.f32 0.0, %v5693
    %v5695 = vpop.f32.mrb[0].mxu0
    %v5696 = vadd.f32 0.0, %v5695
    %5697 = vdwg.mxu0
    %5698 = vmatprep.subr.mxu0 %v5611
    %5699 = vmatpush1.msra.mxu0 %v5610
    %5700 = vmatprep.subr.mxu0 %v5615
    %5701 = vmatpush1.msra.mxu0 %v5614
    %5702 = vmatprep.subr.mxu0 %v5619
    %5703 = vmatpush1.msra.mxu0 %v5618
    %5704 = vmatprep.subr.mxu0 %v5623
    %5705 = vmatpush1.msra.mxu0 %v5622
    %5706 = vmatprep.subr.mxu0 0.0
    %5707 = vmatpush1.msra.mxu0 0.0
    %5708 = vmatprep.subr.mxu0 0.0
    %5709 = vmatpush1.msra.mxu0 0.0
    %5710 = vmatprep.subr.mxu0 0.0
    %5711 = vmatpush1.msra.mxu0 0.0
    %5712 = vmatprep.subr.mxu0 0.0
    %5713 = vmatpush1.msra.mxu0 0.0
    %5714 = vmatprep.subr.mxu0 0.0
    %5715 = vmatpush1.msra.mxu0 0.0
    %5716 = vmatprep.subr.mxu0 0.0
    %5717 = vmatpush1.msra.mxu0 0.0
    %5718 = vmatprep.subr.mxu0 0.0
    %5719 = vmatpush1.msra.mxu0 0.0
    %5720 = vmatprep.subr.mxu0 0.0
    %5721 = vmatpush1.msra.mxu0 0.0
    %5722 = vmatprep.subr.mxu0 0.0
    %5723 = vmatpush1.msra.mxu0 0.0
    %5724 = vmatprep.subr.mxu0 0.0
    %5725 = vmatpush1.msra.mxu0 0.0
    %5726 = vmatprep.subr.mxu0 0.0
    %5727 = vmatpush1.msra.mxu0 0.0
    %5728 = vmatprep.subr.mxu0 0.0
    %5729 = vmatpush1.msra.mxu0 0.0
    %5730 = vmatprep.subr.mxu0 0.0
    %5731 = vmatpush1.msra.mxu0 0.0
    %5732 = vmatprep.subr.mxu0 0.0
    %5733 = vmatpush1.msra.mxu0 0.0
    %5734 = vmatprep.subr.mxu0 0.0
    %5735 = vmatpush1.msra.mxu0 0.0
    %5736 = vmatprep.subr.mxu0 0.0
    %5737 = vmatpush1.msra.mxu0 0.0
    %5738 = vmatprep.subr.mxu0 0.0
    %5739 = vmatpush1.msra.mxu0 0.0
    %5740 = vmatprep.subr.mxu0 0.0
    %5741 = vmatpush1.msra.mxu0 0.0
    %5742 = vmatprep.subr.mxu0 0.0
    %5743 = vmatpush1.msra.mxu0 0.0
    %5744 = vmatprep.subr.mxu0 0.0
    %5745 = vmatpush1.msra.mxu0 0.0
    %5746 = vmatprep.subr.mxu0 0.0
    %5747 = vmatpush1.msra.mxu0 0.0
    %5748 = vmatprep.subr.mxu0 0.0
    %5749 = vmatpush1.msra.mxu0 0.0
    %5750 = vmatprep.subr.mxu0 0.0
    %5751 = vmatpush1.msra.mxu0 0.0
    %5752 = vmatprep.subr.mxu0 0.0
    %5753 = vmatpush1.msra.mxu0 0.0
    %5754 = vmatprep.subr.mxu0 0.0
    %5755 = vmatpush1.msra.mxu0 0.0
    %5756 = vmatprep.subr.mxu0 0.0
    %5757 = vmatpush1.msra.mxu0 0.0
    %5758 = vmatprep.subr.mxu0 0.0
    %5759 = vmatpush1.msra.mxu0 0.0
    %5760 = vmatprep.subr.mxu0 0.0
    %5761 = vmatpush1.msra.mxu0 0.0
    %5762 = vmatprep.mubr.f32.mxu0 0.0
    %5763 = vmatmul.mubr.f32.gmra.mrb[0].mxu0 %v5625
    %v5764 = vpop.f32.mrb[0].mxu0
    %v5765 = vadd.f32 0.0, %v5764
    %v5766 = vpop.f32.mrb[0].mxu0
    %v5767 = vadd.f32 0.0, %v5766
    %5768 = vdwg.mxu0
    %v5769 = vadd.f32 %v5556, %v5694
    %v5770 = vadd.f32 %v5557, %v5696
    %v5771 = vadd.f32 %v5558, %v5765
    %v5772 = vadd.f32 %v5559, %v5767
    %5773 = vrot.lane.b32.xlu0 %v4696, 18
    %v5774 = vpop.permute.xlu0 %5773
    %5775 = vrot.lane.b32.xlu0 %v4700, 18
    %v5776 = vpop.permute.xlu0 %5775
    %5777 = vrot.lane.b32.xlu0 %v4704, 18
    %v5778 = vpop.permute.xlu0 %5777
    %5779 = vrot.lane.b32.xlu0 %v4708, 18
    %v5780 = vpop.permute.xlu0 %5779
    %5781 = vrot.lane.b32.xlu0 %v4697, 18
    %v5782 = vpop.permute.xlu0 %5781
    %5783 = vrot.lane.b32.xlu0 %v4701, 18
    %v5784 = vpop.permute.xlu0 %5783
    %5785 = vrot.lane.b32.xlu0 %v4705, 18
    %v5786 = vpop.permute.xlu0 %5785
    %5787 = vrot.lane.b32.xlu0 %v4709, 18
    %v5788 = vpop.permute.xlu0 %5787
    %5789 = vrot.lane.b32.xlu0 %v4698, 18
    %v5790 = vpop.permute.xlu0 %5789
    %5791 = vrot.lane.b32.xlu0 %v4702, 18
    %v5792 = vpop.permute.xlu0 %5791
    %5793 = vrot.lane.b32.xlu0 %v4706, 18
    %v5794 = vpop.permute.xlu0 %5793
    %5795 = vrot.lane.b32.xlu0 %v4710, 18
    %v5796 = vpop.permute.xlu0 %5795
    %5797 = vrot.lane.b32.xlu0 %v4699, 18
    %v5798 = vpop.permute.xlu0 %5797
    %5799 = vrot.lane.b32.xlu0 %v4703, 18
    %v5800 = vpop.permute.xlu0 %5799
    %5801 = vrot.lane.b32.xlu0 %v4707, 18
    %v5802 = vpop.permute.xlu0 %5801
    %5803 = vrot.lane.b32.xlu0 %v4711, 18
    %v5804 = vpop.permute.xlu0 %5803
    %v5805 = vsel %vm283, %v5790, %v5798
    %v5806 = vsel %vm283, %v5792, %v5800
    %v5807 = vsel %vm283, %v5794, %v5802
    %v5808 = vsel %vm283, %v5796, %v5804
    %v5809 = vsel %vm283, %v5782, %v5790
    %v5810 = vsel %vm283, %v5784, %v5792
    %v5811 = vsel %vm283, %v5786, %v5794
    %v5812 = vsel %vm283, %v5788, %v5796
    %v5813 = vsel %vm283, %v5774, %v5782
    %v5814 = vsel %vm283, %v5776, %v5784
    %v5815 = vsel %vm283, %v5778, %v5786
    %v5816 = vsel %vm283, %v5780, %v5788
    %v5817 = vsel %vm283, %v5798, %v5774
    %v5818 = vsel %vm283, %v5800, %v5776
    %v5819 = vsel %vm283, %v5802, %v5778
    %v5820 = vsel %vm283, %v5804, %v5780
    %v5821 = vmul.f32 %v5817, %v291
    %v5822 = vmul.f32 %v5813, %v295
    %v5823 = vmul.f32 %v5809, %v299
    %v5824 = vmul.f32 %v5805, %v303
    %v5825 = vmul.f32 %v5818, %v291
    %v5826 = vmul.f32 %v5814, %v295
    %v5827 = vmul.f32 %v5810, %v299
    %v5828 = vmul.f32 %v5806, %v303
    %v5829 = vmul.f32 %v5819, %v291
    %v5830 = vmul.f32 %v5815, %v295
    %v5831 = vmul.f32 %v5811, %v299
    %v5832 = vmul.f32 %v5807, %v303
    %v5833 = vmul.f32 %v5820, %v291
    %v5834 = vmul.f32 %v5816, %v295
    %v5835 = vmul.f32 %v5812, %v299
    %v5836 = vmul.f32 %v5808, %v303
    %v5837 = vrot.slane %v4712, 5
    %v5838 = vsel %vm3938, %v5837, 0
    %5840 = vmatprep.subr.mxu0 %v5822
    %5841 = vmatpush1.msra.mxu0 %v5821
    %5842 = vmatprep.subr.mxu0 %v5826
    %5843 = vmatpush1.msra.mxu0 %v5825
    %5844 = vmatprep.subr.mxu0 %v5830
    %5845 = vmatpush1.msra.mxu0 %v5829
    %5846 = vmatprep.subr.mxu0 %v5834
    %5847 = vmatpush1.msra.mxu0 %v5833
    %5848 = vmatprep.subr.mxu0 0.0
    %5849 = vmatpush1.msra.mxu0 0.0
    %5850 = vmatprep.subr.mxu0 0.0
    %5851 = vmatpush1.msra.mxu0 0.0
    %5852 = vmatprep.subr.mxu0 0.0
    %5853 = vmatpush1.msra.mxu0 0.0
    %5854 = vmatprep.subr.mxu0 0.0
    %5855 = vmatpush1.msra.mxu0 0.0
    %5856 = vmatprep.subr.mxu0 0.0
    %5857 = vmatpush1.msra.mxu0 0.0
    %5858 = vmatprep.subr.mxu0 0.0
    %5859 = vmatpush1.msra.mxu0 0.0
    %5860 = vmatprep.subr.mxu0 0.0
    %5861 = vmatpush1.msra.mxu0 0.0
    %5862 = vmatprep.subr.mxu0 0.0
    %5863 = vmatpush1.msra.mxu0 0.0
    %5864 = vmatprep.subr.mxu0 0.0
    %5865 = vmatpush1.msra.mxu0 0.0
    %5866 = vmatprep.subr.mxu0 0.0
    %5867 = vmatpush1.msra.mxu0 0.0
    %5868 = vmatprep.subr.mxu0 0.0
    %5869 = vmatpush1.msra.mxu0 0.0
    %5870 = vmatprep.subr.mxu0 0.0
    %5871 = vmatpush1.msra.mxu0 0.0
    %5872 = vmatprep.subr.mxu0 0.0
    %5873 = vmatpush1.msra.mxu0 0.0
    %5874 = vmatprep.subr.mxu0 0.0
    %5875 = vmatpush1.msra.mxu0 0.0
    %5876 = vmatprep.subr.mxu0 0.0
    %5877 = vmatpush1.msra.mxu0 0.0
    %5878 = vmatprep.subr.mxu0 0.0
    %5879 = vmatpush1.msra.mxu0 0.0
    %5880 = vmatprep.subr.mxu0 0.0
    %5881 = vmatpush1.msra.mxu0 0.0
    %5882 = vmatprep.subr.mxu0 0.0
    %5883 = vmatpush1.msra.mxu0 0.0
    %5884 = vmatprep.subr.mxu0 0.0
    %5885 = vmatpush1.msra.mxu0 0.0
    %5886 = vmatprep.subr.mxu0 0.0
    %5887 = vmatpush1.msra.mxu0 0.0
    %5888 = vmatprep.subr.mxu0 0.0
    %5889 = vmatpush1.msra.mxu0 0.0
    %5890 = vmatprep.subr.mxu0 0.0
    %5891 = vmatpush1.msra.mxu0 0.0
    %5892 = vmatprep.subr.mxu0 0.0
    %5893 = vmatpush1.msra.mxu0 0.0
    %5894 = vmatprep.subr.mxu0 0.0
    %5895 = vmatpush1.msra.mxu0 0.0
    %5896 = vmatprep.subr.mxu0 0.0
    %5897 = vmatpush1.msra.mxu0 0.0
    %5898 = vmatprep.subr.mxu0 0.0
    %5899 = vmatpush1.msra.mxu0 0.0
    %5900 = vmatprep.subr.mxu0 0.0
    %5901 = vmatpush1.msra.mxu0 0.0
    %5902 = vmatprep.subr.mxu0 0.0
    %5903 = vmatpush1.msra.mxu0 0.0
    %5904 = vmatprep.mubr.f32.mxu0 0.0
    %5905 = vmatmul.mubr.f32.gmra.mrb[0].mxu0 %v5838
    %v5906 = vpop.f32.mrb[0].mxu0
    %v5907 = vadd.f32 0.0, %v5906
    %v5908 = vpop.f32.mrb[0].mxu0
    %v5909 = vadd.f32 0.0, %v5908
    %5910 = vdwg.mxu0
    %5911 = vmatprep.subr.mxu0 %v5824
    %5912 = vmatpush1.msra.mxu0 %v5823
    %5913 = vmatprep.subr.mxu0 %v5828
    %5914 = vmatpush1.msra.mxu0 %v5827
    %5915 = vmatprep.subr.mxu0 %v5832
    %5916 = vmatpush1.msra.mxu0 %v5831
    %5917 = vmatprep.subr.mxu0 %v5836
    %5918 = vmatpush1.msra.mxu0 %v5835
    %5919 = vmatprep.subr.mxu0 0.0
    %5920 = vmatpush1.msra.mxu0 0.0
    %5921 = vmatprep.subr.mxu0 0.0
    %5922 = vmatpush1.msra.mxu0 0.0
    %5923 = vmatprep.subr.mxu0 0.0
    %5924 = vmatpush1.msra.mxu0 0.0
    %5925 = vmatprep.subr.mxu0 0.0
    %5926 = vmatpush1.msra.mxu0 0.0
    %5927 = vmatprep.subr.mxu0 0.0
    %5928 = vmatpush1.msra.mxu0 0.0
    %5929 = vmatprep.subr.mxu0 0.0
    %5930 = vmatpush1.msra.mxu0 0.0
    %5931 = vmatprep.subr.mxu0 0.0
    %5932 = vmatpush1.msra.mxu0 0.0
    %5933 = vmatprep.subr.mxu0 0.0
    %5934 = vmatpush1.msra.mxu0 0.0
    %5935 = vmatprep.subr.mxu0 0.0
    %5936 = vmatpush1.msra.mxu0 0.0
    %5937 = vmatprep.subr.mxu0 0.0
    %5938 = vmatpush1.msra.mxu0 0.0
    %5939 = vmatprep.subr.mxu0 0.0
    %5940 = vmatpush1.msra.mxu0 0.0
    %5941 = vmatprep.subr.mxu0 0.0
    %5942 = vmatpush1.msra.mxu0 0.0
    %5943 = vmatprep.subr.mxu0 0.0
    %5944 = vmatpush1.msra.mxu0 0.0
    %5945 = vmatprep.subr.mxu0 0.0
    %5946 = vmatpush1.msra.mxu0 0.0
    %5947 = vmatprep.subr.mxu0 0.0
    %5948 = vmatpush1.msra.mxu0 0.0
    %5949 = vmatprep.subr.mxu0 0.0
    %5950 = vmatpush1.msra.mxu0 0.0
    %5951 = vmatprep.subr.mxu0 0.0
    %5952 = vmatpush1.msra.mxu0 0.0
    %5953 = vmatprep.subr.mxu0 0.0
    %5954 = vmatpush1.msra.mxu0 0.0
    %5955 = vmatprep.subr.mxu0 0.0
    %5956 = vmatpush1.msra.mxu0 0.0
    %5957 = vmatprep.subr.mxu0 0.0
    %5958 = vmatpush1.msra.mxu0 0.0
    %5959 = vmatprep.subr.mxu0 0.0
    %5960 = vmatpush1.msra.mxu0 0.0
    %5961 = vmatprep.subr.mxu0 0.0
    %5962 = vmatpush1.msra.mxu0 0.0
    %5963 = vmatprep.subr.mxu0 0.0
    %5964 = vmatpush1.msra.mxu0 0.0
    %5965 = vmatprep.subr.mxu0 0.0
    %5966 = vmatpush1.msra.mxu0 0.0
    %5967 = vmatprep.subr.mxu0 0.0
    %5968 = vmatpush1.msra.mxu0 0.0
    %5969 = vmatprep.subr.mxu0 0.0
    %5970 = vmatpush1.msra.mxu0 0.0
    %5971 = vmatprep.subr.mxu0 0.0
    %5972 = vmatpush1.msra.mxu0 0.0
    %5973 = vmatprep.subr.mxu0 0.0
    %5974 = vmatpush1.msra.mxu0 0.0
    %5975 = vmatprep.mubr.f32.mxu0 0.0
    %5976 = vmatmul.mubr.f32.gmra.mrb[0].mxu0 %v5838
    %v5977 = vpop.f32.mrb[0].mxu0
    %v5978 = vadd.f32 0.0, %v5977
    %v5979 = vpop.f32.mrb[0].mxu0
    %v5980 = vadd.f32 0.0, %v5979
    %5981 = vdwg.mxu0
    %v5982 = vadd.f32 %v5769, %v5907
    %v5983 = vadd.f32 %v5770, %v5909
    %v5984 = vadd.f32 %v5771, %v5978
    %v5985 = vadd.f32 %v5772, %v5980
    %5986 = vrot.lane.b32.xlu0 %v4696, 17
    %v5987 = vpop.permute.xlu0 %5986
    %5988 = vrot.lane.b32.xlu0 %v4700, 17
    %v5989 = vpop.permute.xlu0 %5988
    %5990 = vrot.lane.b32.xlu0 %v4704, 17
    %v5991 = vpop.permute.xlu0 %5990
    %5992 = vrot.lane.b32.xlu0 %v4708, 17
    %v5993 = vpop.permute.xlu0 %5992
    %5994 = vrot.lane.b32.xlu0 %v4697, 17
    %v5995 = vpop.permute.xlu0 %5994
    %5996 = vrot.lane.b32.xlu0 %v4701, 17
    %v5997 = vpop.permute.xlu0 %5996
    %5998 = vrot.lane.b32.xlu0 %v4705, 17
    %v5999 = vpop.permute.xlu0 %5998
    %6000 = vrot.lane.b32.xlu0 %v4709, 17
    %v6001 = vpop.permute.xlu0 %6000
    %6002 = vrot.lane.b32.xlu0 %v4698, 17
    %v6003 = vpop.permute.xlu0 %6002
    %6004 = vrot.lane.b32.xlu0 %v4702, 17
    %v6005 = vpop.permute.xlu0 %6004
    %6006 = vrot.lane.b32.xlu0 %v4706, 17
    %v6007 = vpop.permute.xlu0 %6006
    %6008 = vrot.lane.b32.xlu0 %v4710, 17
    %v6009 = vpop.permute.xlu0 %6008
    %6010 = vrot.lane.b32.xlu0 %v4699, 17
    %v6011 = vpop.permute.xlu0 %6010
    %6012 = vrot.lane.b32.xlu0 %v4703, 17
    %v6013 = vpop.permute.xlu0 %6012
    %6014 = vrot.lane.b32.xlu0 %v4707, 17
    %v6015 = vpop.permute.xlu0 %6014
    %6016 = vrot.lane.b32.xlu0 %v4711, 17
    %v6017 = vpop.permute.xlu0 %6016
    %v6018 = vsel %vm316, %v6003, %v6011
    %v6019 = vsel %vm316, %v6005, %v6013
    %v6020 = vsel %vm316, %v6007, %v6015
    %v6021 = vsel %vm316, %v6009, %v6017
    %v6022 = vsel %vm316, %v5995, %v6003
    %v6023 = vsel %vm316, %v5997, %v6005
    %v6024 = vsel %vm316, %v5999, %v6007
    %v6025 = vsel %vm316, %v6001, %v6009
    %v6026 = vsel %vm316, %v5987, %v5995
    %v6027 = vsel %vm316, %v5989, %v5997
    %v6028 = vsel %vm316, %v5991, %v5999
    %v6029 = vsel %vm316, %v5993, %v6001
    %v6030 = vsel %vm316, %v6011, %v5987
    %v6031 = vsel %vm316, %v6013, %v5989
    %v6032 = vsel %vm316, %v6015, %v5991
    %v6033 = vsel %vm316, %v6017, %v5993
    %v6034 = vmul.f32 %v6030, %v324
    %v6035 = vmul.f32 %v6026, %v328
    %v6036 = vmul.f32 %v6022, %v332
    %v6037 = vmul.f32 %v6018, %v336
    %v6038 = vmul.f32 %v6031, %v324
    %v6039 = vmul.f32 %v6027, %v328
    %v6040 = vmul.f32 %v6023, %v332
    %v6041 = vmul.f32 %v6019, %v336
    %v6042 = vmul.f32 %v6032, %v324
    %v6043 = vmul.f32 %v6028, %v328
    %v6044 = vmul.f32 %v6024, %v332
    %v6045 = vmul.f32 %v6020, %v336
    %v6046 = vmul.f32 %v6033, %v324
    %v6047 = vmul.f32 %v6029, %v328
    %v6048 = vmul.f32 %v6025, %v332
    %v6049 = vmul.f32 %v6021, %v336
    %v6050 = vrot.slane %v4712, 6
    %v6051 = vsel %vm3938, %v6050, 0
    %6053 = vmatprep.subr.mxu0 %v6035
    %6054 = vmatpush1.msra.mxu0 %v6034
    %6055 = vmatprep.subr.mxu0 %v6039
    %6056 = vmatpush1.msra.mxu0 %v6038
    %6057 = vmatprep.subr.mxu0 %v6043
    %6058 = vmatpush1.msra.mxu0 %v6042
    %6059 = vmatprep.subr.mxu0 %v6047
    %6060 = vmatpush1.msra.mxu0 %v6046
    %6061 = vmatprep.subr.mxu0 0.0
    %6062 = vmatpush1.msra.mxu0 0.0
    %6063 = vmatprep.subr.mxu0 0.0
    %6064 = vmatpush1.msra.mxu0 0.0
    %6065 = vmatprep.subr.mxu0 0.0
    %6066 = vmatpush1.msra.mxu0 0.0
    %6067 = vmatprep.subr.mxu0 0.0
    %6068 = vmatpush1.msra.mxu0 0.0
    %6069 = vmatprep.subr.mxu0 0.0
    %6070 = vmatpush1.msra.mxu0 0.0
    %6071 = vmatprep.subr.mxu0 0.0
    %6072 = vmatpush1.msra.mxu0 0.0
    %6073 = vmatprep.subr.mxu0 0.0
    %6074 = vmatpush1.msra.mxu0 0.0
    %6075 = vmatprep.subr.mxu0 0.0
    %6076 = vmatpush1.msra.mxu0 0.0
    %6077 = vmatprep.subr.mxu0 0.0
    %6078 = vmatpush1.msra.mxu0 0.0
    %6079 = vmatprep.subr.mxu0 0.0
    %6080 = vmatpush1.msra.mxu0 0.0
    %6081 = vmatprep.subr.mxu0 0.0
    %6082 = vmatpush1.msra.mxu0 0.0
    %6083 = vmatprep.subr.mxu0 0.0
    %6084 = vmatpush1.msra.mxu0 0.0
    %6085 = vmatprep.subr.mxu0 0.0
    %6086 = vmatpush1.msra.mxu0 0.0
    %6087 = vmatprep.subr.mxu0 0.0
    %6088 = vmatpush1.msra.mxu0 0.0
    %6089 = vmatprep.subr.mxu0 0.0
    %6090 = vmatpush1.msra.mxu0 0.0
    %6091 = vmatprep.subr.mxu0 0.0
    %6092 = vmatpush1.msra.mxu0 0.0
    %6093 = vmatprep.subr.mxu0 0.0
    %6094 = vmatpush1.msra.mxu0 0.0
    %6095 = vmatprep.subr.mxu0 0.0
    %6096 = vmatpush1.msra.mxu0 0.0
    %6097 = vmatprep.subr.mxu0 0.0
    %6098 = vmatpush1.msra.mxu0 0.0
    %6099 = vmatprep.subr.mxu0 0.0
    %6100 = vmatpush1.msra.mxu0 0.0
    %6101 = vmatprep.subr.mxu0 0.0
    %6102 = vmatpush1.msra.mxu0 0.0
    %6103 = vmatprep.subr.mxu0 0.0
    %6104 = vmatpush1.msra.mxu0 0.0
    %6105 = vmatprep.subr.mxu0 0.0
    %6106 = vmatpush1.msra.mxu0 0.0
    %6107 = vmatprep.subr.mxu0 0.0
    %6108 = vmatpush1.msra.mxu0 0.0
    %6109 = vmatprep.subr.mxu0 0.0
    %6110 = vmatpush1.msra.mxu0 0.0
    %6111 = vmatprep.subr.mxu0 0.0
    %6112 = vmatpush1.msra.mxu0 0.0
    %6113 = vmatprep.subr.mxu0 0.0
    %6114 = vmatpush1.msra.mxu0 0.0
    %6115 = vmatprep.subr.mxu0 0.0
    %6116 = vmatpush1.msra.mxu0 0.0
    %6117 = vmatprep.mubr.f32.mxu0 0.0
    %6118 = vmatmul.mubr.f32.gmra.mrb[0].mxu0 %v6051
    %v6119 = vpop.f32.mrb[0].mxu0
    %v6120 = vadd.f32 0.0, %v6119
    %v6121 = vpop.f32.mrb[0].mxu0
    %v6122 = vadd.f32 0.0, %v6121
    %6123 = vdwg.mxu0
    %6124 = vmatprep.subr.mxu0 %v6037
    %6125 = vmatpush1.msra.mxu0 %v6036
    %6126 = vmatprep.subr.mxu0 %v6041
    %6127 = vmatpush1.msra.mxu0 %v6040
    %6128 = vmatprep.subr.mxu0 %v6045
    %6129 = vmatpush1.msra.mxu0 %v6044
    %6130 = vmatprep.subr.mxu0 %v6049
    %6131 = vmatpush1.msra.mxu0 %v6048
    %6132 = vmatprep.subr.mxu0 0.0
    %6133 = vmatpush1.msra.mxu0 0.0
    %6134 = vmatprep.subr.mxu0 0.0
    %6135 = vmatpush1.msra.mxu0 0.0
    %6136 = vmatprep.subr.mxu0 0.0
    %6137 = vmatpush1.msra.mxu0 0.0
    %6138 = vmatprep.subr.mxu0 0.0
    %6139 = vmatpush1.msra.mxu0 0.0
    %6140 = vmatprep.subr.mxu0 0.0
    %6141 = vmatpush1.msra.mxu0 0.0
    %6142 = vmatprep.subr.mxu0 0.0
    %6143 = vmatpush1.msra.mxu0 0.0
    %6144 = vmatprep.subr.mxu0 0.0
    %6145 = vmatpush1.msra.mxu0 0.0
    %6146 = vmatprep.subr.mxu0 0.0
    %6147 = vmatpush1.msra.mxu0 0.0
    %6148 = vmatprep.subr.mxu0 0.0
    %6149 = vmatpush1.msra.mxu0 0.0
    %6150 = vmatprep.subr.mxu0 0.0
    %6151 = vmatpush1.msra.mxu0 0.0
    %6152 = vmatprep.subr.mxu0 0.0
    %6153 = vmatpush1.msra.mxu0 0.0
    %6154 = vmatprep.subr.mxu0 0.0
    %6155 = vmatpush1.msra.mxu0 0.0
    %6156 = vmatprep.subr.mxu0 0.0
    %6157 = vmatpush1.msra.mxu0 0.0
    %6158 = vmatprep.subr.mxu0 0.0
    %6159 = vmatpush1.msra.mxu0 0.0
    %6160 = vmatprep.subr.mxu0 0.0
    %6161 = vmatpush1.msra.mxu0 0.0
    %6162 = vmatprep.subr.mxu0 0.0
    %6163 = vmatpush1.msra.mxu0 0.0
    %6164 = vmatprep.subr.mxu0 0.0
    %6165 = vmatpush1.msra.mxu0 0.0
    %6166 = vmatprep.subr.mxu0 0.0
    %6167 = vmatpush1.msra.mxu0 0.0
    %6168 = vmatprep.subr.mxu0 0.0
    %6169 = vmatpush1.msra.mxu0 0.0
    %6170 = vmatprep.subr.mxu0 0.0
    %6171 = vmatpush1.msra.mxu0 0.0
    %6172 = vmatprep.subr.mxu0 0.0
    %6173 = vmatpush1.msra.mxu0 0.0
    %6174 = vmatprep.subr.mxu0 0.0
    %6175 = vmatpush1.msra.mxu0 0.0
    %6176 = vmatprep.subr.mxu0 0.0
    %6177 = vmatpush1.msra.mxu0 0.0
    %6178 = vmatprep.subr.mxu0 0.0
    %6179 = vmatpush1.msra.mxu0 0.0
    %6180 = vmatprep.subr.mxu0 0.0
    %6181 = vmatpush1.msra.mxu0 0.0
    %6182 = vmatprep.subr.mxu0 0.0
    %6183 = vmatpush1.msra.mxu0 0.0
    %6184 = vmatprep.subr.mxu0 0.0
    %6185 = vmatpush1.msra.mxu0 0.0
    %6186 = vmatprep.subr.mxu0 0.0
    %6187 = vmatpush1.msra.mxu0 0.0
    %6188 = vmatprep.mubr.f32.mxu0 0.0
    %6189 = vmatmul.mubr.f32.gmra.mrb[0].mxu0 %v6051
    %v6190 = vpop.f32.mrb[0].mxu0
    %v6191 = vadd.f32 0.0, %v6190
    %v6192 = vpop.f32.mrb[0].mxu0
    %v6193 = vadd.f32 0.0, %v6192
    %6194 = vdwg.mxu0
    %v6195 = vadd.f32 %v5982, %v6120
    %v6196 = vadd.f32 %v5983, %v6122
    %v6197 = vadd.f32 %v5984, %v6191
    %v6198 = vadd.f32 %v5985, %v6193
    %6199 = vrot.lane.b32.xlu0 %v4696, 16
    %v6200 = vpop.permute.xlu0 %6199
    %6201 = vrot.lane.b32.xlu0 %v4700, 16
    %v6202 = vpop.permute.xlu0 %6201
    %6203 = vrot.lane.b32.xlu0 %v4704, 16
    %v6204 = vpop.permute.xlu0 %6203
    %6205 = vrot.lane.b32.xlu0 %v4708, 16
    %v6206 = vpop.permute.xlu0 %6205
    %6207 = vrot.lane.b32.xlu0 %v4697, 16
    %v6208 = vpop.permute.xlu0 %6207
    %6209 = vrot.lane.b32.xlu0 %v4701, 16
    %v6210 = vpop.permute.xlu0 %6209
    %6211 = vrot.lane.b32.xlu0 %v4705, 16
    %v6212 = vpop.permute.xlu0 %6211
    %6213 = vrot.lane.b32.xlu0 %v4709, 16
    %v6214 = vpop.permute.xlu0 %6213
    %6215 = vrot.lane.b32.xlu0 %v4698, 16
    %v6216 = vpop.permute.xlu0 %6215
    %6217 = vrot.lane.b32.xlu0 %v4702, 16
    %v6218 = vpop.permute.xlu0 %6217
    %6219 = vrot.lane.b32.xlu0 %v4706, 16
    %v6220 = vpop.permute.xlu0 %6219
    %6221 = vrot.lane.b32.xlu0 %v4710, 16
    %v6222 = vpop.permute.xlu0 %6221
    %6223 = vrot.lane.b32.xlu0 %v4699, 16
    %v6224 = vpop.permute.xlu0 %6223
    %6225 = vrot.lane.b32.xlu0 %v4703, 16
    %v6226 = vpop.permute.xlu0 %6225
    %6227 = vrot.lane.b32.xlu0 %v4707, 16
    %v6228 = vpop.permute.xlu0 %6227
    %6229 = vrot.lane.b32.xlu0 %v4711, 16
    %v6230 = vpop.permute.xlu0 %6229
    %v6231 = vsel %vm349, %v6216, %v6224
    %v6232 = vsel %vm349, %v6218, %v6226
    %v6233 = vsel %vm349, %v6220, %v6228
    %v6234 = vsel %vm349, %v6222, %v6230
    %v6235 = vsel %vm349, %v6208, %v6216
    %v6236 = vsel %vm349, %v6210, %v6218
    %v6237 = vsel %vm349, %v6212, %v6220
    %v6238 = vsel %vm349, %v6214, %v6222
    %v6239 = vsel %vm349, %v6200, %v6208
    %v6240 = vsel %vm349, %v6202, %v6210
    %v6241 = vsel %vm349, %v6204, %v6212
    %v6242 = vsel %vm349, %v6206, %v6214
    %v6243 = vsel %vm349, %v6224, %v6200
    %v6244 = vsel %vm349, %v6226, %v6202
    %v6245 = vsel %vm349, %v6228, %v6204
    %v6246 = vsel %vm349, %v6230, %v6206
    %v6247 = vmul.f32 %v6243, %v357
    %v6248 = vmul.f32 %v6239, %v361
    %v6249 = vmul.f32 %v6235, %v365
    %v6250 = vmul.f32 %v6231, %v369
    %v6251 = vmul.f32 %v6244, %v357
    %v6252 = vmul.f32 %v6240, %v361
    %v6253 = vmul.f32 %v6236, %v365
    %v6254 = vmul.f32 %v6232, %v369
    %v6255 = vmul.f32 %v6245, %v357
    %v6256 = vmul.f32 %v6241, %v361
    %v6257 = vmul.f32 %v6237, %v365
    %v6258 = vmul.f32 %v6233, %v369
    %v6259 = vmul.f32 %v6246, %v357
    %v6260 = vmul.f32 %v6242, %v361
    %v6261 = vmul.f32 %v6238, %v365
    %v6262 = vmul.f32 %v6234, %v369
    %v6263 = vrot.slane %v4712, 7
    %v6264 = vsel %vm3938, %v6263, 0
    %6266 = vmatprep.subr.mxu0 %v6248
    %6267 = vmatpush1.msra.mxu0 %v6247
    %6268 = vmatprep.subr.mxu0 %v6252
    %6269 = vmatpush1.msra.mxu0 %v6251
    %6270 = vmatprep.subr.mxu0 %v6256
    %6271 = vmatpush1.msra.mxu0 %v6255
    %6272 = vmatprep.subr.mxu0 %v6260
    %6273 = vmatpush1.msra.mxu0 %v6259
    %6274 = vmatprep.subr.mxu0 0.0
    %6275 = vmatpush1.msra.mxu0 0.0
    %6276 = vmatprep.subr.mxu0 0.0
    %6277 = vmatpush1.msra.mxu0 0.0
    %6278 = vmatprep.subr.mxu0 0.0
    %6279 = vmatpush1.msra.mxu0 0.0
    %6280 = vmatprep.subr.mxu0 0.0
    %6281 = vmatpush1.msra.mxu0 0.0
    %6282 = vmatprep.subr.mxu0 0.0
    %6283 = vmatpush1.msra.mxu0 0.0
    %6284 = vmatprep.subr.mxu0 0.0
    %6285 = vmatpush1.msra.mxu0 0.0
    %6286 = vmatprep.subr.mxu0 0.0
    %6287 = vmatpush1.msra.mxu0 0.0
    %6288 = vmatprep.subr.mxu0 0.0
    %6289 = vmatpush1.msra.mxu0 0.0
    %6290 = vmatprep.subr.mxu0 0.0
    %6291 = vmatpush1.msra.mxu0 0.0
    %6292 = vmatprep.subr.mxu0 0.0
    %6293 = vmatpush1.msra.mxu0 0.0
    %6294 = vmatprep.subr.mxu0 0.0
    %6295 = vmatpush1.msra.mxu0 0.0
    %6296 = vmatprep.subr.mxu0 0.0
    %6297 = vmatpush1.msra.mxu0 0.0
    %6298 = vmatprep.subr.mxu0 0.0
    %6299 = vmatpush1.msra.mxu0 0.0
    %6300 = vmatprep.subr.mxu0 0.0
    %6301 = vmatpush1.msra.mxu0 0.0
    %6302 = vmatprep.subr.mxu0 0.0
    %6303 = vmatpush1.msra.mxu0 0.0
    %6304 = vmatprep.subr.mxu0 0.0
    %6305 = vmatpush1.msra.mxu0 0.0
    %6306 = vmatprep.subr.mxu0 0.0
    %6307 = vmatpush1.msra.mxu0 0.0
    %6308 = vmatprep.subr.mxu0 0.0
    %6309 = vmatpush1.msra.mxu0 0.0
    %6310 = vmatprep.subr.mxu0 0.0
    %6311 = vmatpush1.msra.mxu0 0.0
    %6312 = vmatprep.subr.mxu0 0.0
    %6313 = vmatpush1.msra.mxu0 0.0
    %6314 = vmatprep.subr.mxu0 0.0
    %6315 = vmatpush1.msra.mxu0 0.0
    %6316 = vmatprep.subr.mxu0 0.0
    %6317 = vmatpush1.msra.mxu0 0.0
    %6318 = vmatprep.subr.mxu0 0.0
    %6319 = vmatpush1.msra.mxu0 0.0
    %6320 = vmatprep.subr.mxu0 0.0
    %6321 = vmatpush1.msra.mxu0 0.0
    %6322 = vmatprep.subr.mxu0 0.0
    %6323 = vmatpush1.msra.mxu0 0.0
    %6324 = vmatprep.subr.mxu0 0.0
    %6325 = vmatpush1.msra.mxu0 0.0
    %6326 = vmatprep.subr.mxu0 0.0
    %6327 = vmatpush1.msra.mxu0 0.0
    %6328 = vmatprep.subr.mxu0 0.0
    %6329 = vmatpush1.msra.mxu0 0.0
    %6330 = vmatprep.mubr.f32.mxu0 0.0
    %6331 = vmatmul.mubr.f32.gmra.mrb[0].mxu0 %v6264
    %v6332 = vpop.f32.mrb[0].mxu0
    %v6333 = vadd.f32 0.0, %v6332
    %v6334 = vpop.f32.mrb[0].mxu0
    %v6335 = vadd.f32 0.0, %v6334
    %6336 = vdwg.mxu0
    %6337 = vmatprep.subr.mxu0 %v6250
    %6338 = vmatpush1.msra.mxu0 %v6249
    %6339 = vmatprep.subr.mxu0 %v6254
    %6340 = vmatpush1.msra.mxu0 %v6253
    %6341 = vmatprep.subr.mxu0 %v6258
    %6342 = vmatpush1.msra.mxu0 %v6257
    %6343 = vmatprep.subr.mxu0 %v6262
    %6344 = vmatpush1.msra.mxu0 %v6261
    %6345 = vmatprep.subr.mxu0 0.0
    %6346 = vmatpush1.msra.mxu0 0.0
    %6347 = vmatprep.subr.mxu0 0.0
    %6348 = vmatpush1.msra.mxu0 0.0
    %6349 = vmatprep.subr.mxu0 0.0
    %6350 = vmatpush1.msra.mxu0 0.0
    %6351 = vmatprep.subr.mxu0 0.0
    %6352 = vmatpush1.msra.mxu0 0.0
    %6353 = vmatprep.subr.mxu0 0.0
    %6354 = vmatpush1.msra.mxu0 0.0
    %6355 = vmatprep.subr.mxu0 0.0
    %6356 = vmatpush1.msra.mxu0 0.0
    %6357 = vmatprep.subr.mxu0 0.0
    %6358 = vmatpush1.msra.mxu0 0.0
    %6359 = vmatprep.subr.mxu0 0.0
    %6360 = vmatpush1.msra.mxu0 0.0
    %6361 = vmatprep.subr.mxu0 0.0
    %6362 = vmatpush1.msra.mxu0 0.0
    %6363 = vmatprep.subr.mxu0 0.0
    %6364 = vmatpush1.msra.mxu0 0.0
    %6365 = vmatprep.subr.mxu0 0.0
    %6366 = vmatpush1.msra.mxu0 0.0
    %6367 = vmatprep.subr.mxu0 0.0
    %6368 = vmatpush1.msra.mxu0 0.0
    %6369 = vmatprep.subr.mxu0 0.0
    %6370 = vmatpush1.msra.mxu0 0.0
    %6371 = vmatprep.subr.mxu0 0.0
    %6372 = vmatpush1.msra.mxu0 0.0
    %6373 = vmatprep.subr.mxu0 0.0
    %6374 = vmatpush1.msra.mxu0 0.0
    %6375 = vmatprep.subr.mxu0 0.0
    %6376 = vmatpush1.msra.mxu0 0.0
    %6377 = vmatprep.subr.mxu0 0.0
    %6378 = vmatpush1.msra.mxu0 0.0
    %6379 = vmatprep.subr.mxu0 0.0
    %6380 = vmatpush1.msra.mxu0 0.0
    %6381 = vmatprep.subr.mxu0 0.0
    %6382 = vmatpush1.msra.mxu0 0.0
    %6383 = vmatprep.subr.mxu0 0.0
    %6384 = vmatpush1.msra.mxu0 0.0
    %6385 = vmatprep.subr.mxu0 0.0
    %6386 = vmatpush1.msra.mxu0 0.0
    %6387 = vmatprep.subr.mxu0 0.0
    %6388 = vmatpush1.msra.mxu0 0.0
    %6389 = vmatprep.subr.mxu0 0.0
    %6390 = vmatpush1.msra.mxu0 0.0
    %6391 = vmatprep.subr.mxu0 0.0
    %6392 = vmatpush1.msra.mxu0 0.0
    %6393 = vmatprep.subr.mxu0 0.0
    %6394 = vmatpush1.msra.mxu0 0.0
    %6395 = vmatprep.subr.mxu0 0.0
    %6396 = vmatpush1.msra.mxu0 0.0
    %6397 = vmatprep.subr.mxu0 0.0
    %6398 = vmatpush1.msra.mxu0 0.0
    %6399 = vmatprep.subr.mxu0 0.0
    %6400 = vmatpush1.msra.mxu0 0.0
    %6401 = vmatprep.mubr.f32.mxu0 0.0
    %6402 = vmatmul.mubr.f32.gmra.mrb[0].mxu0 %v6264
    %v6403 = vpop.f32.mrb[0].mxu0
    %v6404 = vadd.f32 0.0, %v6403
    %v6405 = vpop.f32.mrb[0].mxu0
    %v6406 = vadd.f32 0.0, %v6405
    %6407 = vdwg.mxu0
    %v6408 = vadd.f32 %v6195, %v6333
    %v6409 = vadd.f32 %v6196, %v6335
    %v6410 = vadd.f32 %v6197, %v6404
    %v6411 = vadd.f32 %v6198, %v6406
    %6412 = vrot.lane.b32.xlu0 %v4696, 15
    %v6413 = vpop.permute.xlu0 %6412
    %6414 = vrot.lane.b32.xlu0 %v4700, 15
    %v6415 = vpop.permute.xlu0 %6414
    %6416 = vrot.lane.b32.xlu0 %v4704, 15
    %v6417 = vpop.permute.xlu0 %6416
    %6418 = vrot.lane.b32.xlu0 %v4708, 15
    %v6419 = vpop.permute.xlu0 %6418
    %6420 = vrot.lane.b32.xlu0 %v4697, 15
    %v6421 = vpop.permute.xlu0 %6420
    %6422 = vrot.lane.b32.xlu0 %v4701, 15
    %v6423 = vpop.permute.xlu0 %6422
    %6424 = vrot.lane.b32.xlu0 %v4705, 15
    %v6425 = vpop.permute.xlu0 %6424
    %6426 = vrot.lane.b32.xlu0 %v4709, 15
    %v6427 = vpop.permute.xlu0 %6426
    %6428 = vrot.lane.b32.xlu0 %v4698, 15
    %v6429 = vpop.permute.xlu0 %6428
    %6430 = vrot.lane.b32.xlu0 %v4702, 15
    %v6431 = vpop.permute.xlu0 %6430
    %6432 = vrot.lane.b32.xlu0 %v4706, 15
    %v6433 = vpop.permute.xlu0 %6432
    %6434 = vrot.lane.b32.xlu0 %v4710, 15
    %v6435 = vpop.permute.xlu0 %6434
    %6436 = vrot.lane.b32.xlu0 %v4699, 15
    %v6437 = vpop.permute.xlu0 %6436
    %6438 = vrot.lane.b32.xlu0 %v4703, 15
    %v6439 = vpop.permute.xlu0 %6438
    %6440 = vrot.lane.b32.xlu0 %v4707, 15
    %v6441 = vpop.permute.xlu0 %6440
    %6442 = vrot.lane.b32.xlu0 %v4711, 15
    %v6443 = vpop.permute.xlu0 %6442
    %v6444 = vsel %vm382, %v6429, %v6437
    %v6445 = vsel %vm382, %v6431, %v6439
    %v6446 = vsel %vm382, %v6433, %v6441
    %v6447 = vsel %vm382, %v6435, %v6443
    %v6448 = vsel %vm382, %v6421, %v6429
    %v6449 = vsel %vm382, %v6423, %v6431
    %v6450 = vsel %vm382, %v6425, %v6433
    %v6451 = vsel %vm382, %v6427, %v6435
    %v6452 = vsel %vm382, %v6413, %v6421
    %v6453 = vsel %vm382, %v6415, %v6423
    %v6454 = vsel %vm382, %v6417, %v6425
    %v6455 = vsel %vm382, %v6419, %v6427
    %v6456 = vsel %vm382, %v6437, %v6413
    %v6457 = vsel %vm382, %v6439, %v6415
    %v6458 = vsel %vm382, %v6441, %v6417
    %v6459 = vsel %vm382, %v6443, %v6419
    %v6460 = vmul.f32 %v6456, %v390
    %v6461 = vmul.f32 %v6452, %v394
    %v6462 = vmul.f32 %v6448, %v398
    %v6463 = vmul.f32 %v6444, %v402
    %v6464 = vmul.f32 %v6457, %v390
    %v6465 = vmul.f32 %v6453, %v394
    %v6466 = vmul.f32 %v6449, %v398
    %v6467 = vmul.f32 %v6445, %v402
    %v6468 = vmul.f32 %v6458, %v390
    %v6469 = vmul.f32 %v6454, %v394
    %v6470 = vmul.f32 %v6450, %v398
    %v6471 = vmul.f32 %v6446, %v402
    %v6472 = vmul.f32 %v6459, %v390
    %v6473 = vmul.f32 %v6455, %v394
    %v6474 = vmul.f32 %v6451, %v398
    %v6475 = vmul.f32 %v6447, %v402
    %v6477 = vsel %vm3938, %v4713, 0
    %6479 = vmatprep.subr.mxu0 %v6461
    %6480 = vmatpush1.msra.mxu0 %v6460
    %6481 = vmatprep.subr.mxu0 %v6465
    %6482 = vmatpush1.msra.mxu0 %v6464
    %6483 = vmatprep.subr.mxu0 %v6469
    %6484 = vmatpush1.msra.mxu0 %v6468
    %6485 = vmatprep.subr.mxu0 %v6473
    %6486 = vmatpush1.msra.mxu0 %v6472
    %6487 = vmatprep.subr.mxu0 0.0
    %6488 = vmatpush1.msra.mxu0 0.0
    %6489 = vmatprep.subr.mxu0 0.0
    %6490 = vmatpush1.msra.mxu0 0.0
    %6491 = vmatprep.subr.mxu0 0.0
    %6492 = vmatpush1.msra.mxu0 0.0
    %6493 = vmatprep.subr.mxu0 0.0
    %6494 = vmatpush1.msra.mxu0 0.0
    %6495 = vmatprep.subr.mxu0 0.0
    %6496 = vmatpush1.msra.mxu0 0.0
    %6497 = vmatprep.subr.mxu0 0.0
    %6498 = vmatpush1.msra.mxu0 0.0
    %6499 = vmatprep.subr.mxu0 0.0
    %6500 = vmatpush1.msra.mxu0 0.0
    %6501 = vmatprep.subr.mxu0 0.0
    %6502 = vmatpush1.msra.mxu0 0.0
    %6503 = vmatprep.subr.mxu0 0.0
    %6504 = vmatpush1.msra.mxu0 0.0
    %6505 = vmatprep.subr.mxu0 0.0
    %6506 = vmatpush1.msra.mxu0 0.0
    %6507 = vmatprep.subr.mxu0 0.0
    %6508 = vmatpush1.msra.mxu0 0.0
    %6509 = vmatprep.subr.mxu0 0.0
    %6510 = vmatpush1.msra.mxu0 0.0
    %6511 = vmatprep.subr.mxu0 0.0
    %6512 = vmatpush1.msra.mxu0 0.0
    %6513 = vmatprep.subr.mxu0 0.0
    %6514 = vmatpush1.msra.mxu0 0.0
    %6515 = vmatprep.subr.mxu0 0.0
    %6516 = vmatpush1.msra.mxu0 0.0
    %6517 = vmatprep.subr.mxu0 0.0
    %6518 = vmatpush1.msra.mxu0 0.0
    %6519 = vmatprep.subr.mxu0 0.0
    %6520 = vmatpush1.msra.mxu0 0.0
    %6521 = vmatprep.subr.mxu0 0.0
    %6522 = vmatpush1.msra.mxu0 0.0
    %6523 = vmatprep.subr.mxu0 0.0
    %6524 = vmatpush1.msra.mxu0 0.0
    %6525 = vmatprep.subr.mxu0 0.0
    %6526 = vmatpush1.msra.mxu0 0.0
    %6527 = vmatprep.subr.mxu0 0.0
    %6528 = vmatpush1.msra.mxu0 0.0
    %6529 = vmatprep.subr.mxu0 0.0
    %6530 = vmatpush1.msra.mxu0 0.0
    %6531 = vmatprep.subr.mxu0 0.0
    %6532 = vmatpush1.msra.mxu0 0.0
    %6533 = vmatprep.subr.mxu0 0.0
    %6534 = vmatpush1.msra.mxu0 0.0
    %6535 = vmatprep.subr.mxu0 0.0
    %6536 = vmatpush1.msra.mxu0 0.0
    %6537 = vmatprep.subr.mxu0 0.0
    %6538 = vmatpush1.msra.mxu0 0.0
    %6539 = vmatprep.subr.mxu0 0.0
    %6540 = vmatpush1.msra.mxu0 0.0
    %6541 = vmatprep.subr.mxu0 0.0
    %6542 = vmatpush1.msra.mxu0 0.0
    %6543 = vmatprep.mubr.f32.mxu0 0.0
    %6544 = vmatmul.mubr.f32.gmra.mrb[0].mxu0 %v6477
    %v6545 = vpop.f32.mrb[0].mxu0
    %v6546 = vadd.f32 0.0, %v6545
    %v6547 = vpop.f32.mrb[0].mxu0
    %v6548 = vadd.f32 0.0, %v6547
    %6549 = vdwg.mxu0
    %6550 = vmatprep.subr.mxu0 %v6463
    %6551 = vmatpush1.msra.mxu0 %v6462
    %6552 = vmatprep.subr.mxu0 %v6467
    %6553 = vmatpush1.msra.mxu0 %v6466
    %6554 = vmatprep.subr.mxu0 %v6471
    %6555 = vmatpush1.msra.mxu0 %v6470
    %6556 = vmatprep.subr.mxu0 %v6475
    %6557 = vmatpush1.msra.mxu0 %v6474
    %6558 = vmatprep.subr.mxu0 0.0
    %6559 = vmatpush1.msra.mxu0 0.0
    %6560 = vmatprep.subr.mxu0 0.0
    %6561 = vmatpush1.msra.mxu0 0.0
    %6562 = vmatprep.subr.mxu0 0.0
    %6563 = vmatpush1.msra.mxu0 0.0
    %6564 = vmatprep.subr.mxu0 0.0
    %6565 = vmatpush1.msra.mxu0 0.0
    %6566 = vmatprep.subr.mxu0 0.0
    %6567 = vmatpush1.msra.mxu0 0.0
    %6568 = vmatprep.subr.mxu0 0.0
    %6569 = vmatpush1.msra.mxu0 0.0
    %6570 = vmatprep.subr.mxu0 0.0
    %6571 = vmatpush1.msra.mxu0 0.0
    %6572 = vmatprep.subr.mxu0 0.0
    %6573 = vmatpush1.msra.mxu0 0.0
    %6574 = vmatprep.subr.mxu0 0.0
    %6575 = vmatpush1.msra.mxu0 0.0
    %6576 = vmatprep.subr.mxu0 0.0
    %6577 = vmatpush1.msra.mxu0 0.0
    %6578 = vmatprep.subr.mxu0 0.0
    %6579 = vmatpush1.msra.mxu0 0.0
    %6580 = vmatprep.subr.mxu0 0.0
    %6581 = vmatpush1.msra.mxu0 0.0
    %6582 = vmatprep.subr.mxu0 0.0
    %6583 = vmatpush1.msra.mxu0 0.0
    %6584 = vmatprep.subr.mxu0 0.0
    %6585 = vmatpush1.msra.mxu0 0.0
    %6586 = vmatprep.subr.mxu0 0.0
    %6587 = vmatpush1.msra.mxu0 0.0
    %6588 = vmatprep.subr.mxu0 0.0
    %6589 = vmatpush1.msra.mxu0 0.0
    %6590 = vmatprep.subr.mxu0 0.0
    %6591 = vmatpush1.msra.mxu0 0.0
    %6592 = vmatprep.subr.mxu0 0.0
    %6593 = vmatpush1.msra.mxu0 0.0
    %6594 = vmatprep.subr.mxu0 0.0
    %6595 = vmatpush1.msra.mxu0 0.0
    %6596 = vmatprep.subr.mxu0 0.0
    %6597 = vmatpush1.msra.mxu0 0.0
    %6598 = vmatprep.subr.mxu0 0.0
    %6599 = vmatpush1.msra.mxu0 0.0
    %6600 = vmatprep.subr.mxu0 0.0
    %6601 = vmatpush1.msra.mxu0 0.0
    %6602 = vmatprep.subr.mxu0 0.0
    %6603 = vmatpush1.msra.mxu0 0.0
    %6604 = vmatprep.subr.mxu0 0.0
    %6605 = vmatpush1.msra.mxu0 0.0
    %6606 = vmatprep.subr.mxu0 0.0
    %6607 = vmatpush1.msra.mxu0 0.0
    %6608 = vmatprep.subr.mxu0 0.0
    %6609 = vmatpush1.msra.mxu0 0.0
    %6610 = vmatprep.subr.mxu0 0.0
    %6611 = vmatpush1.msra.mxu0 0.0
    %6612 = vmatprep.subr.mxu0 0.0
    %6613 = vmatpush1.msra.mxu0 0.0
    %6614 = vmatprep.mubr.f32.mxu0 0.0
    %6615 = vmatmul.mubr.f32.gmra.mrb[0].mxu0 %v6477
    %v6616 = vpop.f32.mrb[0].mxu0
    %v6617 = vadd.f32 0.0, %v6616
    %v6618 = vpop.f32.mrb[0].mxu0
    %v6619 = vadd.f32 0.0, %v6618
    %6620 = vdwg.mxu0
    %v6621 = vadd.f32 %v6408, %v6546
    %v6622 = vadd.f32 %v6409, %v6548
    %v6623 = vadd.f32 %v6410, %v6617
    %v6624 = vadd.f32 %v6411, %v6619
    %6625 = vrot.lane.b32.xlu0 %v4696, 14
    %v6626 = vpop.permute.xlu0 %6625
    %6627 = vrot.lane.b32.xlu0 %v4700, 14
    %v6628 = vpop.permute.xlu0 %6627
    %6629 = vrot.lane.b32.xlu0 %v4704, 14
    %v6630 = vpop.permute.xlu0 %6629
    %6631 = vrot.lane.b32.xlu0 %v4708, 14
    %v6632 = vpop.permute.xlu0 %6631
    %6633 = vrot.lane.b32.xlu0 %v4697, 14
    %v6634 = vpop.permute.xlu0 %6633
    %6635 = vrot.lane.b32.xlu0 %v4701, 14
    %v6636 = vpop.permute.xlu0 %6635
    %6637 = vrot.lane.b32.xlu0 %v4705, 14
    %v6638 = vpop.permute.xlu0 %6637
    %6639 = vrot.lane.b32.xlu0 %v4709, 14
    %v6640 = vpop.permute.xlu0 %6639
    %6641 = vrot.lane.b32.xlu0 %v4698, 14
    %v6642 = vpop.permute.xlu0 %6641
    %6643 = vrot.lane.b32.xlu0 %v4702, 14
    %v6644 = vpop.permute.xlu0 %6643
    %6645 = vrot.lane.b32.xlu0 %v4706, 14
    %v6646 = vpop.permute.xlu0 %6645
    %6647 = vrot.lane.b32.xlu0 %v4710, 14
    %v6648 = vpop.permute.xlu0 %6647
    %6649 = vrot.lane.b32.xlu0 %v4699, 14
    %v6650 = vpop.permute.xlu0 %6649
    %6651 = vrot.lane.b32.xlu0 %v4703, 14
    %v6652 = vpop.permute.xlu0 %6651
    %6653 = vrot.lane.b32.xlu0 %v4707, 14
    %v6654 = vpop.permute.xlu0 %6653
    %6655 = vrot.lane.b32.xlu0 %v4711, 14
    %v6656 = vpop.permute.xlu0 %6655
    %v6657 = vsel %vm415, %v6642, %v6650
    %v6658 = vsel %vm415, %v6644, %v6652
    %v6659 = vsel %vm415, %v6646, %v6654
    %v6660 = vsel %vm415, %v6648, %v6656
    %v6661 = vsel %vm415, %v6634, %v6642
    %v6662 = vsel %vm415, %v6636, %v6644
    %v6663 = vsel %vm415, %v6638, %v6646
    %v6664 = vsel %vm415, %v6640, %v6648
    %v6665 = vsel %vm415, %v6626, %v6634
    %v6666 = vsel %vm415, %v6628, %v6636
    %v6667 = vsel %vm415, %v6630, %v6638
    %v6668 = vsel %vm415, %v6632, %v6640
    %v6669 = vsel %vm415, %v6650, %v6626
    %v6670 = vsel %vm415, %v6652, %v6628
    %v6671 = vsel %vm415, %v6654, %v6630
    %v6672 = vsel %vm415, %v6656, %v6632
    %v6673 = vmul.f32 %v6669, %v423
    %v6674 = vmul.f32 %v6665, %v427
    %v6675 = vmul.f32 %v6661, %v431
    %v6676 = vmul.f32 %v6657, %v435
    %v6677 = vmul.f32 %v6670, %v423
    %v6678 = vmul.f32 %v6666, %v427
    %v6679 = vmul.f32 %v6662, %v431
    %v6680 = vmul.f32 %v6658, %v435
    %v6681 = vmul.f32 %v6671, %v423
    %v6682 = vmul.f32 %v6667, %v427
    %v6683 = vmul.f32 %v6663, %v431
    %v6684 = vmul.f32 %v6659, %v435
    %v6685 = vmul.f32 %v6672, %v423
    %v6686 = vmul.f32 %v6668, %v427
    %v6687 = vmul.f32 %v6664, %v431
    %v6688 = vmul.f32 %v6660, %v435
    %v6689 = vrot.slane %v4713, 1
    %v6690 = vsel %vm3938, %v6689, 0
    %6692 = vmatprep.subr.mxu0 %v6674
    %6693 = vmatpush1.msra.mxu0 %v6673
    %6694 = vmatprep.subr.mxu0 %v6678
    %6695 = vmatpush1.msra.mxu0 %v6677
    %6696 = vmatprep.subr.mxu0 %v6682
    %6697 = vmatpush1.msra.mxu0 %v6681
    %6698 = vmatprep.subr.mxu0 %v6686
    %6699 = vmatpush1.msra.mxu0 %v6685
    %6700 = vmatprep.subr.mxu0 0.0
    %6701 = vmatpush1.msra.mxu0 0.0
    %6702 = vmatprep.subr.mxu0 0.0
    %6703 = vmatpush1.msra.mxu0 0.0
    %6704 = vmatprep.subr.mxu0 0.0
    %6705 = vmatpush1.msra.mxu0 0.0
    %6706 = vmatprep.subr.mxu0 0.0
    %6707 = vmatpush1.msra.mxu0 0.0
    %6708 = vmatprep.subr.mxu0 0.0
    %6709 = vmatpush1.msra.mxu0 0.0
    %6710 = vmatprep.subr.mxu0 0.0
    %6711 = vmatpush1.msra.mxu0 0.0
    %6712 = vmatprep.subr.mxu0 0.0
    %6713 = vmatpush1.msra.mxu0 0.0
    %6714 = vmatprep.subr.mxu0 0.0
    %6715 = vmatpush1.msra.mxu0 0.0
    %6716 = vmatprep.subr.mxu0 0.0
    %6717 = vmatpush1.msra.mxu0 0.0
    %6718 = vmatprep.subr.mxu0 0.0
    %6719 = vmatpush1.msra.mxu0 0.0
    %6720 = vmatprep.subr.mxu0 0.0
    %6721 = vmatpush1.msra.mxu0 0.0
    %6722 = vmatprep.subr.mxu0 0.0
    %6723 = vmatpush1.msra.mxu0 0.0
    %6724 = vmatprep.subr.mxu0 0.0
    %6725 = vmatpush1.msra.mxu0 0.0
    %6726 = vmatprep.subr.mxu0 0.0
    %6727 = vmatpush1.msra.mxu0 0.0
    %6728 = vmatprep.subr.mxu0 0.0
    %6729 = vmatpush1.msra.mxu0 0.0
    %6730 = vmatprep.subr.mxu0 0.0
    %6731 = vmatpush1.msra.mxu0 0.0
    %6732 = vmatprep.subr.mxu0 0.0
    %6733 = vmatpush1.msra.mxu0 0.0
    %6734 = vmatprep.subr.mxu0 0.0
    %6735 = vmatpush1.msra.mxu0 0.0
    %6736 = vmatprep.subr.mxu0 0.0
    %6737 = vmatpush1.msra.mxu0 0.0
    %6738 = vmatprep.subr.mxu0 0.0
    %6739 = vmatpush1.msra.mxu0 0.0
    %6740 = vmatprep.subr.mxu0 0.0
    %6741 = vmatpush1.msra.mxu0 0.0
    %6742 = vmatprep.subr.mxu0 0.0
    %6743 = vmatpush1.msra.mxu0 0.0
    %6744 = vmatprep.subr.mxu0 0.0
    %6745 = vmatpush1.msra.mxu0 0.0
    %6746 = vmatprep.subr.mxu0 0.0
    %6747 = vmatpush1.msra.mxu0 0.0
    %6748 = vmatprep.subr.mxu0 0.0
    %6749 = vmatpush1.msra.mxu0 0.0
    %6750 = vmatprep.subr.mxu0 0.0
    %6751 = vmatpush1.msra.mxu0 0.0
    %6752 = vmatprep.subr.mxu0 0.0
    %6753 = vmatpush1.msra.mxu0 0.0
    %6754 = vmatprep.subr.mxu0 0.0
    %6755 = vmatpush1.msra.mxu0 0.0
    %6756 = vmatprep.mubr.f32.mxu0 0.0
    %6757 = vmatmul.mubr.f32.gmra.mrb[0].mxu0 %v6690
    %v6758 = vpop.f32.mrb[0].mxu0
    %v6759 = vadd.f32 0.0, %v6758
    %v6760 = vpop.f32.mrb[0].mxu0
    %v6761 = vadd.f32 0.0, %v6760
    %6762 = vdwg.mxu0
    %6763 = vmatprep.subr.mxu0 %v6676
    %6764 = vmatpush1.msra.mxu0 %v6675
    %6765 = vmatprep.subr.mxu0 %v6680
    %6766 = vmatpush1.msra.mxu0 %v6679
    %6767 = vmatprep.subr.mxu0 %v6684
    %6768 = vmatpush1.msra.mxu0 %v6683
    %6769 = vmatprep.subr.mxu0 %v6688
    %6770 = vmatpush1.msra.mxu0 %v6687
    %6771 = vmatprep.subr.mxu0 0.0
    %6772 = vmatpush1.msra.mxu0 0.0
    %6773 = vmatprep.subr.mxu0 0.0
    %6774 = vmatpush1.msra.mxu0 0.0
    %6775 = vmatprep.subr.mxu0 0.0
    %6776 = vmatpush1.msra.mxu0 0.0
    %6777 = vmatprep.subr.mxu0 0.0
    %6778 = vmatpush1.msra.mxu0 0.0
    %6779 = vmatprep.subr.mxu0 0.0
    %6780 = vmatpush1.msra.mxu0 0.0
    %6781 = vmatprep.subr.mxu0 0.0
    %6782 = vmatpush1.msra.mxu0 0.0
    %6783 = vmatprep.subr.mxu0 0.0
    %6784 = vmatpush1.msra.mxu0 0.0
    %6785 = vmatprep.subr.mxu0 0.0
    %6786 = vmatpush1.msra.mxu0 0.0
    %6787 = vmatprep.subr.mxu0 0.0
    %6788 = vmatpush1.msra.mxu0 0.0
    %6789 = vmatprep.subr.mxu0 0.0
    %6790 = vmatpush1.msra.mxu0 0.0
    %6791 = vmatprep.subr.mxu0 0.0
    %6792 = vmatpush1.msra.mxu0 0.0
    %6793 = vmatprep.subr.mxu0 0.0
    %6794 = vmatpush1.msra.mxu0 0.0
    %6795 = vmatprep.subr.mxu0 0.0
    %6796 = vmatpush1.msra.mxu0 0.0
    %6797 = vmatprep.subr.mxu0 0.0
    %6798 = vmatpush1.msra.mxu0 0.0
    %6799 = vmatprep.subr.mxu0 0.0
    %6800 = vmatpush1.msra.mxu0 0.0
    %6801 = vmatprep.subr.mxu0 0.0
    %6802 = vmatpush1.msra.mxu0 0.0
    %6803 = vmatprep.subr.mxu0 0.0
    %6804 = vmatpush1.msra.mxu0 0.0
    %6805 = vmatprep.subr.mxu0 0.0
    %6806 = vmatpush1.msra.mxu0 0.0
    %6807 = vmatprep.subr.mxu0 0.0
    %6808 = vmatpush1.msra.mxu0 0.0
    %6809 = vmatprep.subr.mxu0 0.0
    %6810 = vmatpush1.msra.mxu0 0.0
    %6811 = vmatprep.subr.mxu0 0.0
    %6812 = vmatpush1.msra.mxu0 0.0
    %6813 = vmatprep.subr.mxu0 0.0
    %6814 = vmatpush1.msra.mxu0 0.0
    %6815 = vmatprep.subr.mxu0 0.0
    %6816 = vmatpush1.msra.mxu0 0.0
    %6817 = vmatprep.subr.mxu0 0.0
    %6818 = vmatpush1.msra.mxu0 0.0
    %6819 = vmatprep.subr.mxu0 0.0
    %6820 = vmatpush1.msra.mxu0 0.0
    %6821 = vmatprep.subr.mxu0 0.0
    %6822 = vmatpush1.msra.mxu0 0.0
    %6823 = vmatprep.subr.mxu0 0.0
    %6824 = vmatpush1.msra.mxu0 0.0
    %6825 = vmatprep.subr.mxu0 0.0
    %6826 = vmatpush1.msra.mxu0 0.0
    %6827 = vmatprep.mubr.f32.mxu0 0.0
    %6828 = vmatmul.mubr.f32.gmra.mrb[0].mxu0 %v6690
    %v6829 = vpop.f32.mrb[0].mxu0
    %v6830 = vadd.f32 0.0, %v6829
    %v6831 = vpop.f32.mrb[0].mxu0
    %v6832 = vadd.f32 0.0, %v6831
    %6833 = vdwg.mxu0
    %v6834 = vadd.f32 %v6621, %v6759
    %v6835 = vadd.f32 %v6622, %v6761
    %v6836 = vadd.f32 %v6623, %v6830
    %v6837 = vadd.f32 %v6624, %v6832
    %6838 = vrot.lane.b32.xlu0 %v4696, 2
    %v6839 = vpop.permute.xlu0 %6838
    %6840 = vrot.lane.b32.xlu0 %v4700, 2
    %v6841 = vpop.permute.xlu0 %6840
    %6842 = vrot.lane.b32.xlu0 %v4704, 2
    %v6843 = vpop.permute.xlu0 %6842
    %6844 = vrot.lane.b32.xlu0 %v4708, 2
    %v6845 = vpop.permute.xlu0 %6844
    %6846 = vrot.lane.b32.xlu0 %v4697, 2
    %v6847 = vpop.permute.xlu0 %6846
    %6848 = vrot.lane.b32.xlu0 %v4701, 2
    %v6849 = vpop.permute.xlu0 %6848
    %6850 = vrot.lane.b32.xlu0 %v4705, 2
    %v6851 = vpop.permute.xlu0 %6850
    %6852 = vrot.lane.b32.xlu0 %v4709, 2
    %v6853 = vpop.permute.xlu0 %6852
    %6854 = vrot.lane.b32.xlu0 %v4698, 2
    %v6855 = vpop.permute.xlu0 %6854
    %6856 = vrot.lane.b32.xlu0 %v4702, 2
    %v6857 = vpop.permute.xlu0 %6856
    %6858 = vrot.lane.b32.xlu0 %v4706, 2
    %v6859 = vpop.permute.xlu0 %6858
    %6860 = vrot.lane.b32.xlu0 %v4710, 2
    %v6861 = vpop.permute.xlu0 %6860
    %6862 = vrot.lane.b32.xlu0 %v4699, 2
    %v6863 = vpop.permute.xlu0 %6862
    %6864 = vrot.lane.b32.xlu0 %v4703, 2
    %v6865 = vpop.permute.xlu0 %6864
    %6866 = vrot.lane.b32.xlu0 %v4707, 2
    %v6867 = vpop.permute.xlu0 %6866
    %6868 = vrot.lane.b32.xlu0 %v4711, 2
    %v6869 = vpop.permute.xlu0 %6868
    %v6870 = vsel %vm448, %v6855, %v6863
    %v6871 = vsel %vm448, %v6857, %v6865
    %v6872 = vsel %vm448, %v6859, %v6867
    %v6873 = vsel %vm448, %v6861, %v6869
    %v6874 = vsel %vm448, %v6847, %v6855
    %v6875 = vsel %vm448, %v6849, %v6857
    %v6876 = vsel %vm448, %v6851, %v6859
    %v6877 = vsel %vm448, %v6853, %v6861
    %v6878 = vsel %vm448, %v6839, %v6847
    %v6879 = vsel %vm448, %v6841, %v6849
    %v6880 = vsel %vm448, %v6843, %v6851
    %v6881 = vsel %vm448, %v6845, %v6853
    %v6882 = vsel %vm448, %v6863, %v6839
    %v6883 = vsel %vm448, %v6865, %v6841
    %v6884 = vsel %vm448, %v6867, %v6843
    %v6885 = vsel %vm448, %v6869, %v6845
    %v6886 = vmul.f32 %v6882, %v456
    %v6887 = vmul.f32 %v6878, %v460
    %v6888 = vmul.f32 %v6874, %v464
    %v6889 = vmul.f32 %v6870, %v468
    %v6890 = vmul.f32 %v6883, %v456
    %v6891 = vmul.f32 %v6879, %v460
    %v6892 = vmul.f32 %v6875, %v464
    %v6893 = vmul.f32 %v6871, %v468
    %v6894 = vmul.f32 %v6884, %v456
    %v6895 = vmul.f32 %v6880, %v460
    %v6896 = vmul.f32 %v6876, %v464
    %v6897 = vmul.f32 %v6872, %v468
    %v6898 = vmul.f32 %v6885, %v456
    %v6899 = vmul.f32 %v6881, %v460
    %v6900 = vmul.f32 %v6877, %v464
    %v6901 = vmul.f32 %v6873, %v468
    %v6902 = vrot.slane %v4713, 2
    %v6903 = vsel %vm3938, %v6902, 0
    %6905 = vmatprep.subr.mxu0 %v6887
    %6906 = vmatpush1.msra.mxu0 %v6886
    %6907 = vmatprep.subr.mxu0 %v6891
    %6908 = vmatpush1.msra.mxu0 %v6890
    %6909 = vmatprep.subr.mxu0 %v6895
    %6910 = vmatpush1.msra.mxu0 %v6894
    %6911 = vmatprep.subr.mxu0 %v6899
    %6912 = vmatpush1.msra.mxu0 %v6898
    %6913 = vmatprep.subr.mxu0 0.0
    %6914 = vmatpush1.msra.mxu0 0.0
    %6915 = vmatprep.subr.mxu0 0.0
    %6916 = vmatpush1.msra.mxu0 0.0
    %6917 = vmatprep.subr.mxu0 0.0
    %6918 = vmatpush1.msra.mxu0 0.0
    %6919 = vmatprep.subr.mxu0 0.0
    %6920 = vmatpush1.msra.mxu0 0.0
    %6921 = vmatprep.subr.mxu0 0.0
    %6922 = vmatpush1.msra.mxu0 0.0
    %6923 = vmatprep.subr.mxu0 0.0
    %6924 = vmatpush1.msra.mxu0 0.0
    %6925 = vmatprep.subr.mxu0 0.0
    %6926 = vmatpush1.msra.mxu0 0.0
    %6927 = vmatprep.subr.mxu0 0.0
    %6928 = vmatpush1.msra.mxu0 0.0
    %6929 = vmatprep.subr.mxu0 0.0
    %6930 = vmatpush1.msra.mxu0 0.0
    %6931 = vmatprep.subr.mxu0 0.0
    %6932 = vmatpush1.msra.mxu0 0.0
    %6933 = vmatprep.subr.mxu0 0.0
    %6934 = vmatpush1.msra.mxu0 0.0
    %6935 = vmatprep.subr.mxu0 0.0
    %6936 = vmatpush1.msra.mxu0 0.0
    %6937 = vmatprep.subr.mxu0 0.0
    %6938 = vmatpush1.msra.mxu0 0.0
    %6939 = vmatprep.subr.mxu0 0.0
    %6940 = vmatpush1.msra.mxu0 0.0
    %6941 = vmatprep.subr.mxu0 0.0
    %6942 = vmatpush1.msra.mxu0 0.0
    %6943 = vmatprep.subr.mxu0 0.0
    %6944 = vmatpush1.msra.mxu0 0.0
    %6945 = vmatprep.subr.mxu0 0.0
    %6946 = vmatpush1.msra.mxu0 0.0
    %6947 = vmatprep.subr.mxu0 0.0
    %6948 = vmatpush1.msra.mxu0 0.0
    %6949 = vmatprep.subr.mxu0 0.0
    %6950 = vmatpush1.msra.mxu0 0.0
    %6951 = vmatprep.subr.mxu0 0.0
    %6952 = vmatpush1.msra.mxu0 0.0
    %6953 = vmatprep.subr.mxu0 0.0
    %6954 = vmatpush1.msra.mxu0 0.0
    %6955 = vmatprep.subr.mxu0 0.0
    %6956 = vmatpush1.msra.mxu0 0.0
    %6957 = vmatprep.subr.mxu0 0.0
    %6958 = vmatpush1.msra.mxu0 0.0
    %6959 = vmatprep.subr.mxu0 0.0
    %6960 = vmatpush1.msra.mxu0 0.0
    %6961 = vmatprep.subr.mxu0 0.0
    %6962 = vmatpush1.msra.mxu0 0.0
    %6963 = vmatprep.subr.mxu0 0.0
    %6964 = vmatpush1.msra.mxu0 0.0
    %6965 = vmatprep.subr.mxu0 0.0
    %6966 = vmatpush1.msra.mxu0 0.0
    %6967 = vmatprep.subr.mxu0 0.0
    %6968 = vmatpush1.msra.mxu0 0.0
    %6969 = vmatprep.mubr.f32.mxu0 0.0
    %6970 = vmatmul.mubr.f32.gmra.mrb[0].mxu0 %v6903
    %v6971 = vpop.f32.mrb[0].mxu0
    %v6972 = vadd.f32 0.0, %v6971
    %v6973 = vpop.f32.mrb[0].mxu0
    %v6974 = vadd.f32 0.0, %v6973
    %6975 = vdwg.mxu0
    %6976 = vmatprep.subr.mxu0 %v6889
    %6977 = vmatpush1.msra.mxu0 %v6888
    %6978 = vmatprep.subr.mxu0 %v6893
    %6979 = vmatpush1.msra.mxu0 %v6892
    %6980 = vmatprep.subr.mxu0 %v6897
    %6981 = vmatpush1.msra.mxu0 %v6896
    %6982 = vmatprep.subr.mxu0 %v6901
    %6983 = vmatpush1.msra.mxu0 %v6900
    %6984 = vmatprep.subr.mxu0 0.0
    %6985 = vmatpush1.msra.mxu0 0.0
    %6986 = vmatprep.subr.mxu0 0.0
    %6987 = vmatpush1.msra.mxu0 0.0
    %6988 = vmatprep.subr.mxu0 0.0
    %6989 = vmatpush1.msra.mxu0 0.0
    %6990 = vmatprep.subr.mxu0 0.0
    %6991 = vmatpush1.msra.mxu0 0.0
    %6992 = vmatprep.subr.mxu0 0.0
    %6993 = vmatpush1.msra.mxu0 0.0
    %6994 = vmatprep.subr.mxu0 0.0
    %6995 = vmatpush1.msra.mxu0 0.0
    %6996 = vmatprep.subr.mxu0 0.0
    %6997 = vmatpush1.msra.mxu0 0.0
    %6998 = vmatprep.subr.mxu0 0.0
    %6999 = vmatpush1.msra.mxu0 0.0
    %7000 = vmatprep.subr.mxu0 0.0
    %7001 = vmatpush1.msra.mxu0 0.0
    %7002 = vmatprep.subr.mxu0 0.0
    %7003 = vmatpush1.msra.mxu0 0.0
    %7004 = vmatprep.subr.mxu0 0.0
    %7005 = vmatpush1.msra.mxu0 0.0
    %7006 = vmatprep.subr.mxu0 0.0
    %7007 = vmatpush1.msra.mxu0 0.0
    %7008 = vmatprep.subr.mxu0 0.0
    %7009 = vmatpush1.msra.mxu0 0.0
    %7010 = vmatprep.subr.mxu0 0.0
    %7011 = vmatpush1.msra.mxu0 0.0
    %7012 = vmatprep.subr.mxu0 0.0
    %7013 = vmatpush1.msra.mxu0 0.0
    %7014 = vmatprep.subr.mxu0 0.0
    %7015 = vmatpush1.msra.mxu0 0.0
    %7016 = vmatprep.subr.mxu0 0.0
    %7017 = vmatpush1.msra.mxu0 0.0
    %7018 = vmatprep.subr.mxu0 0.0
    %7019 = vmatpush1.msra.mxu0 0.0
    %7020 = vmatprep.subr.mxu0 0.0
    %7021 = vmatpush1.msra.mxu0 0.0
    %7022 = vmatprep.subr.mxu0 0.0
    %7023 = vmatpush1.msra.mxu0 0.0
    %7024 = vmatprep.subr.mxu0 0.0
    %7025 = vmatpush1.msra.mxu0 0.0
    %7026 = vmatprep.subr.mxu0 0.0
    %7027 = vmatpush1.msra.mxu0 0.0
    %7028 = vmatprep.subr.mxu0 0.0
    %7029 = vmatpush1.msra.mxu0 0.0
    %7030 = vmatprep.subr.mxu0 0.0
    %7031 = vmatpush1.msra.mxu0 0.0
    %7032 = vmatprep.subr.mxu0 0.0
    %7033 = vmatpush1.msra.mxu0 0.0
    %7034 = vmatprep.subr.mxu0 0.0
    %7035 = vmatpush1.msra.mxu0 0.0
    %7036 = vmatprep.subr.mxu0 0.0
    %7037 = vmatpush1.msra.mxu0 0.0
    %7038 = vmatprep.subr.mxu0 0.0
    %7039 = vmatpush1.msra.mxu0 0.0
    %7040 = vmatprep.mubr.f32.mxu0 0.0
    %7041 = vmatmul.mubr.f32.gmra.mrb[0].mxu0 %v6903
    %v7042 = vpop.f32.mrb[0].mxu0
    %v7043 = vadd.f32 0.0, %v7042
    %v7044 = vpop.f32.mrb[0].mxu0
    %v7045 = vadd.f32 0.0, %v7044
    %7046 = vdwg.mxu0
    %v7047 = vadd.f32 %v6834, %v6972
    %v7048 = vadd.f32 %v6835, %v6974
    %v7049 = vadd.f32 %v6836, %v7043
    %v7050 = vadd.f32 %v6837, %v7045
    %7051 = vrot.lane.b32.xlu0 %v4696, 1
    %v7052 = vpop.permute.xlu0 %7051
    %7053 = vrot.lane.b32.xlu0 %v4700, 1
    %v7054 = vpop.permute.xlu0 %7053
    %7055 = vrot.lane.b32.xlu0 %v4704, 1
    %v7056 = vpop.permute.xlu0 %7055
    %7057 = vrot.lane.b32.xlu0 %v4708, 1
    %v7058 = vpop.permute.xlu0 %7057
    %7059 = vrot.lane.b32.xlu0 %v4697, 1
    %v7060 = vpop.permute.xlu0 %7059
    %7061 = vrot.lane.b32.xlu0 %v4701, 1
    %v7062 = vpop.permute.xlu0 %7061
    %7063 = vrot.lane.b32.xlu0 %v4705, 1
    %v7064 = vpop.permute.xlu0 %7063
    %7065 = vrot.lane.b32.xlu0 %v4709, 1
    %v7066 = vpop.permute.xlu0 %7065
    %7067 = vrot.lane.b32.xlu0 %v4698, 1
    %v7068 = vpop.permute.xlu0 %7067
    %7069 = vrot.lane.b32.xlu0 %v4702, 1
    %v7070 = vpop.permute.xlu0 %7069
    %7071 = vrot.lane.b32.xlu0 %v4706, 1
    %v7072 = vpop.permute.xlu0 %7071
    %7073 = vrot.lane.b32.xlu0 %v4710, 1
    %v7074 = vpop.permute.xlu0 %7073
    %7075 = vrot.lane.b32.xlu0 %v4699, 1
    %v7076 = vpop.permute.xlu0 %7075
    %7077 = vrot.lane.b32.xlu0 %v4703, 1
    %v7078 = vpop.permute.xlu0 %7077
    %7079 = vrot.lane.b32.xlu0 %v4707, 1
    %v7080 = vpop.permute.xlu0 %7079
    %7081 = vrot.lane.b32.xlu0 %v4711, 1
    %v7082 = vpop.permute.xlu0 %7081
    %v7083 = vsel %vm481, %v7068, %v7076
    %v7084 = vsel %vm481, %v7070, %v7078
    %v7085 = vsel %vm481, %v7072, %v7080
    %v7086 = vsel %vm481, %v7074, %v7082
    %v7087 = vsel %vm481, %v7060, %v7068
    %v7088 = vsel %vm481, %v7062, %v7070
    %v7089 = vsel %vm481, %v7064, %v7072
    %v7090 = vsel %vm481, %v7066, %v7074
    %v7091 = vsel %vm481, %v7052, %v7060
    %v7092 = vsel %vm481, %v7054, %v7062
    %v7093 = vsel %vm481, %v7056, %v7064
    %v7094 = vsel %vm481, %v7058, %v7066
    %v7095 = vsel %vm481, %v7076, %v7052
    %v7096 = vsel %vm481, %v7078, %v7054
    %v7097 = vsel %vm481, %v7080, %v7056
    %v7098 = vsel %vm481, %v7082, %v7058
    %v7099 = vmul.f32 %v7095, %v489
    %v7100 = vmul.f32 %v7091, %v493
    %v7101 = vmul.f32 %v7087, %v497
    %v7102 = vmul.f32 %v7083, %v501
    %v7103 = vmul.f32 %v7096, %v489
    %v7104 = vmul.f32 %v7092, %v493
    %v7105 = vmul.f32 %v7088, %v497
    %v7106 = vmul.f32 %v7084, %v501
    %v7107 = vmul.f32 %v7097, %v489
    %v7108 = vmul.f32 %v7093, %v493
    %v7109 = vmul.f32 %v7089, %v497
    %v7110 = vmul.f32 %v7085, %v501
    %v7111 = vmul.f32 %v7098, %v489
    %v7112 = vmul.f32 %v7094, %v493
    %v7113 = vmul.f32 %v7090, %v497
    %v7114 = vmul.f32 %v7086, %v501
    %v7115 = vrot.slane %v4713, 3
    %v7116 = vsel %vm3938, %v7115, 0
    %7118 = vmatprep.subr.mxu0 %v7100
    %7119 = vmatpush1.msra.mxu0 %v7099
    %7120 = vmatprep.subr.mxu0 %v7104
    %7121 = vmatpush1.msra.mxu0 %v7103
    %7122 = vmatprep.subr.mxu0 %v7108
    %7123 = vmatpush1.msra.mxu0 %v7107
    %7124 = vmatprep.subr.mxu0 %v7112
    %7125 = vmatpush1.msra.mxu0 %v7111
    %7126 = vmatprep.subr.mxu0 0.0
    %7127 = vmatpush1.msra.mxu0 0.0
    %7128 = vmatprep.subr.mxu0 0.0
    %7129 = vmatpush1.msra.mxu0 0.0
    %7130 = vmatprep.subr.mxu0 0.0
    %7131 = vmatpush1.msra.mxu0 0.0
    %7132 = vmatprep.subr.mxu0 0.0
    %7133 = vmatpush1.msra.mxu0 0.0
    %7134 = vmatprep.subr.mxu0 0.0
    %7135 = vmatpush1.msra.mxu0 0.0
    %7136 = vmatprep.subr.mxu0 0.0
    %7137 = vmatpush1.msra.mxu0 0.0
    %7138 = vmatprep.subr.mxu0 0.0
    %7139 = vmatpush1.msra.mxu0 0.0
    %7140 = vmatprep.subr.mxu0 0.0
    %7141 = vmatpush1.msra.mxu0 0.0
    %7142 = vmatprep.subr.mxu0 0.0
    %7143 = vmatpush1.msra.mxu0 0.0
    %7144 = vmatprep.subr.mxu0 0.0
    %7145 = vmatpush1.msra.mxu0 0.0
    %7146 = vmatprep.subr.mxu0 0.0
    %7147 = vmatpush1.msra.mxu0 0.0
    %7148 = vmatprep.subr.mxu0 0.0
    %7149 = vmatpush1.msra.mxu0 0.0
    %7150 = vmatprep.subr.mxu0 0.0
    %7151 = vmatpush1.msra.mxu0 0.0
    %7152 = vmatprep.subr.mxu0 0.0
    %7153 = vmatpush1.msra.mxu0 0.0
    %7154 = vmatprep.subr.mxu0 0.0
    %7155 = vmatpush1.msra.mxu0 0.0
    %7156 = vmatprep.subr.mxu0 0.0
    %7157 = vmatpush1.msra.mxu0 0.0
    %7158 = vmatprep.subr.mxu0 0.0
    %7159 = vmatpush1.msra.mxu0 0.0
    %7160 = vmatprep.subr.mxu0 0.0
    %7161 = vmatpush1.msra.mxu0 0.0
    %7162 = vmatprep.subr.mxu0 0.0
    %7163 = vmatpush1.msra.mxu0 0.0
    %7164 = vmatprep.subr.mxu0 0.0
    %7165 = vmatpush1.msra.mxu0 0.0
    %7166 = vmatprep.subr.mxu0 0.0
    %7167 = vmatpush1.msra.mxu0 0.0
    %7168 = vmatprep.subr.mxu0 0.0
    %7169 = vmatpush1.msra.mxu0 0.0
    %7170 = vmatprep.subr.mxu0 0.0
    %7171 = vmatpush1.msra.mxu0 0.0
    %7172 = vmatprep.subr.mxu0 0.0
    %7173 = vmatpush1.msra.mxu0 0.0
    %7174 = vmatprep.subr.mxu0 0.0
    %7175 = vmatpush1.msra.mxu0 0.0
    %7176 = vmatprep.subr.mxu0 0.0
    %7177 = vmatpush1.msra.mxu0 0.0
    %7178 = vmatprep.subr.mxu0 0.0
    %7179 = vmatpush1.msra.mxu0 0.0
    %7180 = vmatprep.subr.mxu0 0.0
    %7181 = vmatpush1.msra.mxu0 0.0
    %7182 = vmatprep.mubr.f32.mxu0 0.0
    %7183 = vmatmul.mubr.f32.gmra.mrb[0].mxu0 %v7116
    %v7184 = vpop.f32.mrb[0].mxu0
    %v7185 = vadd.f32 0.0, %v7184
    %v7186 = vpop.f32.mrb[0].mxu0
    %v7187 = vadd.f32 0.0, %v7186
    %7188 = vdwg.mxu0
    %7189 = vmatprep.subr.mxu0 %v7102
    %7190 = vmatpush1.msra.mxu0 %v7101
    %7191 = vmatprep.subr.mxu0 %v7106
    %7192 = vmatpush1.msra.mxu0 %v7105
    %7193 = vmatprep.subr.mxu0 %v7110
    %7194 = vmatpush1.msra.mxu0 %v7109
    %7195 = vmatprep.subr.mxu0 %v7114
    %7196 = vmatpush1.msra.mxu0 %v7113
    %7197 = vmatprep.subr.mxu0 0.0
    %7198 = vmatpush1.msra.mxu0 0.0
    %7199 = vmatprep.subr.mxu0 0.0
    %7200 = vmatpush1.msra.mxu0 0.0
    %7201 = vmatprep.subr.mxu0 0.0
    %7202 = vmatpush1.msra.mxu0 0.0
    %7203 = vmatprep.subr.mxu0 0.0
    %7204 = vmatpush1.msra.mxu0 0.0
    %7205 = vmatprep.subr.mxu0 0.0
    %7206 = vmatpush1.msra.mxu0 0.0
    %7207 = vmatprep.subr.mxu0 0.0
    %7208 = vmatpush1.msra.mxu0 0.0
    %7209 = vmatprep.subr.mxu0 0.0
    %7210 = vmatpush1.msra.mxu0 0.0
    %7211 = vmatprep.subr.mxu0 0.0
    %7212 = vmatpush1.msra.mxu0 0.0
    %7213 = vmatprep.subr.mxu0 0.0
    %7214 = vmatpush1.msra.mxu0 0.0
    %7215 = vmatprep.subr.mxu0 0.0
    %7216 = vmatpush1.msra.mxu0 0.0
    %7217 = vmatprep.subr.mxu0 0.0
    %7218 = vmatpush1.msra.mxu0 0.0
    %7219 = vmatprep.subr.mxu0 0.0
    %7220 = vmatpush1.msra.mxu0 0.0
    %7221 = vmatprep.subr.mxu0 0.0
    %7222 = vmatpush1.msra.mxu0 0.0
    %7223 = vmatprep.subr.mxu0 0.0
    %7224 = vmatpush1.msra.mxu0 0.0
    %7225 = vmatprep.subr.mxu0 0.0
    %7226 = vmatpush1.msra.mxu0 0.0
    %7227 = vmatprep.subr.mxu0 0.0
    %7228 = vmatpush1.msra.mxu0 0.0
    %7229 = vmatprep.subr.mxu0 0.0
    %7230 = vmatpush1.msra.mxu0 0.0
    %7231 = vmatprep.subr.mxu0 0.0
    %7232 = vmatpush1.msra.mxu0 0.0
    %7233 = vmatprep.subr.mxu0 0.0
    %7234 = vmatpush1.msra.mxu0 0.0
    %7235 = vmatprep.subr.mxu0 0.0
    %7236 = vmatpush1.msra.mxu0 0.0
    %7237 = vmatprep.subr.mxu0 0.0
    %7238 = vmatpush1.msra.mxu0 0.0
    %7239 = vmatprep.subr.mxu0 0.0
    %7240 = vmatpush1.msra.mxu0 0.0
    %7241 = vmatprep.subr.mxu0 0.0
    %7242 = vmatpush1.msra.mxu0 0.0
    %7243 = vmatprep.subr.mxu0 0.0
    %7244 = vmatpush1.msra.mxu0 0.0
    %7245 = vmatprep.subr.mxu0 0.0
    %7246 = vmatpush1.msra.mxu0 0.0
    %7247 = vmatprep.subr.mxu0 0.0
    %7248 = vmatpush1.msra.mxu0 0.0
    %7249 = vmatprep.subr.mxu0 0.0
    %7250 = vmatpush1.msra.mxu0 0.0
    %7251 = vmatprep.subr.mxu0 0.0
    %7252 = vmatpush1.msra.mxu0 0.0
    %7253 = vmatprep.mubr.f32.mxu0 0.0
    %7254 = vmatmul.mubr.f32.gmra.mrb[0].mxu0 %v7116
    %v7255 = vpop.f32.mrb[0].mxu0
    %v7256 = vadd.f32 0.0, %v7255
    %v7257 = vpop.f32.mrb[0].mxu0
    %v7258 = vadd.f32 0.0, %v7257
    %7259 = vdwg.mxu0
    %v7260 = vadd.f32 %v7047, %v7185
    %v7261 = vadd.f32 %v7048, %v7187
    %v7262 = vadd.f32 %v7049, %v7256
    %v7263 = vadd.f32 %v7050, %v7258
    %v7264 = vmul.f32 %v4696, %v509
    %v7265 = vmul.f32 %v4697, %v513
    %v7266 = vmul.f32 %v4698, %v517
    %v7267 = vmul.f32 %v4699, %v521
    %v7268 = vmul.f32 %v4700, %v509
    %v7269 = vmul.f32 %v4701, %v513
    %v7270 = vmul.f32 %v4702, %v517
    %v7271 = vmul.f32 %v4703, %v521
    %v7272 = vmul.f32 %v4704, %v509
    %v7273 = vmul.f32 %v4705, %v513
    %v7274 = vmul.f32 %v4706, %v517
    %v7275 = vmul.f32 %v4707, %v521
    %v7276 = vmul.f32 %v4708, %v509
    %v7277 = vmul.f32 %v4709, %v513
    %v7278 = vmul.f32 %v4710, %v517
    %v7279 = vmul.f32 %v4711, %v521
    %v7280 = vrot.slane %v4713, 4
    %v7281 = vsel %vm3938, %v7280, 0
    %7283 = vmatprep.subr.mxu0 %v7265
    %7284 = vmatpush1.msra.mxu0 %v7264
    %7285 = vmatprep.subr.mxu0 %v7269
    %7286 = vmatpush1.msra.mxu0 %v7268
    %7287 = vmatprep.subr.mxu0 %v7273
    %7288 = vmatpush1.msra.mxu0 %v7272
    %7289 = vmatprep.subr.mxu0 %v7277
    %7290 = vmatpush1.msra.mxu0 %v7276
    %7291 = vmatprep.subr.mxu0 0.0
    %7292 = vmatpush1.msra.mxu0 0.0
    %7293 = vmatprep.subr.mxu0 0.0
    %7294 = vmatpush1.msra.mxu0 0.0
    %7295 = vmatprep.subr.mxu0 0.0
    %7296 = vmatpush1.msra.mxu0 0.0
    %7297 = vmatprep.subr.mxu0 0.0
    %7298 = vmatpush1.msra.mxu0 0.0
    %7299 = vmatprep.subr.mxu0 0.0
    %7300 = vmatpush1.msra.mxu0 0.0
    %7301 = vmatprep.subr.mxu0 0.0
    %7302 = vmatpush1.msra.mxu0 0.0
    %7303 = vmatprep.subr.mxu0 0.0
    %7304 = vmatpush1.msra.mxu0 0.0
    %7305 = vmatprep.subr.mxu0 0.0
    %7306 = vmatpush1.msra.mxu0 0.0
    %7307 = vmatprep.subr.mxu0 0.0
    %7308 = vmatpush1.msra.mxu0 0.0
    %7309 = vmatprep.subr.mxu0 0.0
    %7310 = vmatpush1.msra.mxu0 0.0
    %7311 = vmatprep.subr.mxu0 0.0
    %7312 = vmatpush1.msra.mxu0 0.0
    %7313 = vmatprep.subr.mxu0 0.0
    %7314 = vmatpush1.msra.mxu0 0.0
    %7315 = vmatprep.subr.mxu0 0.0
    %7316 = vmatpush1.msra.mxu0 0.0
    %7317 = vmatprep.subr.mxu0 0.0
    %7318 = vmatpush1.msra.mxu0 0.0
    %7319 = vmatprep.subr.mxu0 0.0
    %7320 = vmatpush1.msra.mxu0 0.0
    %7321 = vmatprep.subr.mxu0 0.0
    %7322 = vmatpush1.msra.mxu0 0.0
    %7323 = vmatprep.subr.mxu0 0.0
    %7324 = vmatpush1.msra.mxu0 0.0
    %7325 = vmatprep.subr.mxu0 0.0
    %7326 = vmatpush1.msra.mxu0 0.0
    %7327 = vmatprep.subr.mxu0 0.0
    %7328 = vmatpush1.msra.mxu0 0.0
    %7329 = vmatprep.subr.mxu0 0.0
    %7330 = vmatpush1.msra.mxu0 0.0
    %7331 = vmatprep.subr.mxu0 0.0
    %7332 = vmatpush1.msra.mxu0 0.0
    %7333 = vmatprep.subr.mxu0 0.0
    %7334 = vmatpush1.msra.mxu0 0.0
    %7335 = vmatprep.subr.mxu0 0.0
    %7336 = vmatpush1.msra.mxu0 0.0
    %7337 = vmatprep.subr.mxu0 0.0
    %7338 = vmatpush1.msra.mxu0 0.0
    %7339 = vmatprep.subr.mxu0 0.0
    %7340 = vmatpush1.msra.mxu0 0.0
    %7341 = vmatprep.subr.mxu0 0.0
    %7342 = vmatpush1.msra.mxu0 0.0
    %7343 = vmatprep.subr.mxu0 0.0
    %7344 = vmatpush1.msra.mxu0 0.0
    %7345 = vmatprep.subr.mxu0 0.0
    %7346 = vmatpush1.msra.mxu0 0.0
    %7347 = vmatprep.mubr.f32.mxu0 0.0
    %7348 = vmatmul.mubr.f32.gmra.mrb[0].mxu0 %v7281
    %v7349 = vpop.f32.mrb[0].mxu0
    %v7350 = vadd.f32 0.0, %v7349
    %v7351 = vpop.f32.mrb[0].mxu0
    %v7352 = vadd.f32 0.0, %v7351
    %7353 = vdwg.mxu0
    %7354 = vmatprep.subr.mxu0 %v7267
    %7355 = vmatpush1.msra.mxu0 %v7266
    %7356 = vmatprep.subr.mxu0 %v7271
    %7357 = vmatpush1.msra.mxu0 %v7270
    %7358 = vmatprep.subr.mxu0 %v7275
    %7359 = vmatpush1.msra.mxu0 %v7274
    %7360 = vmatprep.subr.mxu0 %v7279
    %7361 = vmatpush1.msra.mxu0 %v7278
    %7362 = vmatprep.subr.mxu0 0.0
    %7363 = vmatpush1.msra.mxu0 0.0
    %7364 = vmatprep.subr.mxu0 0.0
    %7365 = vmatpush1.msra.mxu0 0.0
    %7366 = vmatprep.subr.mxu0 0.0
    %7367 = vmatpush1.msra.mxu0 0.0
    %7368 = vmatprep.subr.mxu0 0.0
    %7369 = vmatpush1.msra.mxu0 0.0
    %7370 = vmatprep.subr.mxu0 0.0
    %7371 = vmatpush1.msra.mxu0 0.0
    %7372 = vmatprep.subr.mxu0 0.0
    %7373 = vmatpush1.msra.mxu0 0.0
    %7374 = vmatprep.subr.mxu0 0.0
    %7375 = vmatpush1.msra.mxu0 0.0
    %7376 = vmatprep.subr.mxu0 0.0
    %7377 = vmatpush1.msra.mxu0 0.0
    %7378 = vmatprep.subr.mxu0 0.0
    %7379 = vmatpush1.msra.mxu0 0.0
    %7380 = vmatprep.subr.mxu0 0.0
    %7381 = vmatpush1.msra.mxu0 0.0
    %7382 = vmatprep.subr.mxu0 0.0
    %7383 = vmatpush1.msra.mxu0 0.0
    %7384 = vmatprep.subr.mxu0 0.0
    %7385 = vmatpush1.msra.mxu0 0.0
    %7386 = vmatprep.subr.mxu0 0.0
    %7387 = vmatpush1.msra.mxu0 0.0
    %7388 = vmatprep.subr.mxu0 0.0
    %7389 = vmatpush1.msra.mxu0 0.0
    %7390 = vmatprep.subr.mxu0 0.0
    %7391 = vmatpush1.msra.mxu0 0.0
    %7392 = vmatprep.subr.mxu0 0.0
    %7393 = vmatpush1.msra.mxu0 0.0
    %7394 = vmatprep.subr.mxu0 0.0
    %7395 = vmatpush1.msra.mxu0 0.0
    %7396 = vmatprep.subr.mxu0 0.0
    %7397 = vmatpush1.msra.mxu0 0.0
    %7398 = vmatprep.subr.mxu0 0.0
    %7399 = vmatpush1.msra.mxu0 0.0
    %7400 = vmatprep.subr.mxu0 0.0
    %7401 = vmatpush1.msra.mxu0 0.0
    %7402 = vmatprep.subr.mxu0 0.0
    %7403 = vmatpush1.msra.mxu0 0.0
    %7404 = vmatprep.subr.mxu0 0.0
    %7405 = vmatpush1.msra.mxu0 0.0
    %7406 = vmatprep.subr.mxu0 0.0
    %7407 = vmatpush1.msra.mxu0 0.0
    %7408 = vmatprep.subr.mxu0 0.0
    %7409 = vmatpush1.msra.mxu0 0.0
    %7410 = vmatprep.subr.mxu0 0.0
    %7411 = vmatpush1.msra.mxu0 0.0
    %7412 = vmatprep.subr.mxu0 0.0
    %7413 = vmatpush1.msra.mxu0 0.0
    %7414 = vmatprep.subr.mxu0 0.0
    %7415 = vmatpush1.msra.mxu0 0.0
    %7416 = vmatprep.subr.mxu0 0.0
    %7417 = vmatpush1.msra.mxu0 0.0
    %7418 = vmatprep.mubr.f32.mxu0 0.0
    %7419 = vmatmul.mubr.f32.gmra.mrb[0].mxu0 %v7281
    %v7420 = vpop.f32.mrb[0].mxu0
    %v7421 = vadd.f32 0.0, %v7420
    %v7422 = vpop.f32.mrb[0].mxu0
    %v7423 = vadd.f32 0.0, %v7422
    %7424 = vdwg.mxu0
    %v7425 = vadd.f32 %v7260, %v7350
    %v7426 = vadd.f32 %v7261, %v7352
    %v7427 = vadd.f32 %v7262, %v7421
    %v7428 = vadd.f32 %v7263, %v7423
    %7429 = vrot.lane.b32.xlu0 %v4696, 127
    %v7430 = vpop.permute.xlu0 %7429
    %7431 = vrot.lane.b32.xlu0 %v4700, 127
    %v7432 = vpop.permute.xlu0 %7431
    %7433 = vrot.lane.b32.xlu0 %v4704, 127
    %v7434 = vpop.permute.xlu0 %7433
    %7435 = vrot.lane.b32.xlu0 %v4708, 127
    %v7436 = vpop.permute.xlu0 %7435
    %7437 = vrot.lane.b32.xlu0 %v4697, 127
    %v7438 = vpop.permute.xlu0 %7437
    %7439 = vrot.lane.b32.xlu0 %v4701, 127
    %v7440 = vpop.permute.xlu0 %7439
    %7441 = vrot.lane.b32.xlu0 %v4705, 127
    %v7442 = vpop.permute.xlu0 %7441
    %7443 = vrot.lane.b32.xlu0 %v4709, 127
    %v7444 = vpop.permute.xlu0 %7443
    %7445 = vrot.lane.b32.xlu0 %v4698, 127
    %v7446 = vpop.permute.xlu0 %7445
    %7447 = vrot.lane.b32.xlu0 %v4702, 127
    %v7448 = vpop.permute.xlu0 %7447
    %7449 = vrot.lane.b32.xlu0 %v4706, 127
    %v7450 = vpop.permute.xlu0 %7449
    %7451 = vrot.lane.b32.xlu0 %v4710, 127
    %v7452 = vpop.permute.xlu0 %7451
    %7453 = vrot.lane.b32.xlu0 %v4699, 127
    %v7454 = vpop.permute.xlu0 %7453
    %7455 = vrot.lane.b32.xlu0 %v4703, 127
    %v7456 = vpop.permute.xlu0 %7455
    %7457 = vrot.lane.b32.xlu0 %v4707, 127
    %v7458 = vpop.permute.xlu0 %7457
    %7459 = vrot.lane.b32.xlu0 %v4711, 127
    %v7460 = vpop.permute.xlu0 %7459
    %v7461 = vsel %vm553, %v7446, %v7454
    %v7462 = vsel %vm553, %v7448, %v7456
    %v7463 = vsel %vm553, %v7450, %v7458
    %v7464 = vsel %vm553, %v7452, %v7460
    %v7465 = vsel %vm553, %v7438, %v7446
    %v7466 = vsel %vm553, %v7440, %v7448
    %v7467 = vsel %vm553, %v7442, %v7450
    %v7468 = vsel %vm553, %v7444, %v7452
    %v7469 = vsel %vm553, %v7430, %v7438
    %v7470 = vsel %vm553, %v7432, %v7440
    %v7471 = vsel %vm553, %v7434, %v7442
    %v7472 = vsel %vm553, %v7436, %v7444
    %v7473 = vsel %vm553, %v7454, %v7430
    %v7474 = vsel %vm553, %v7456, %v7432
    %v7475 = vsel %vm553, %v7458, %v7434
    %v7476 = vsel %vm553, %v7460, %v7436
    %v7477 = vmul.f32 %v7469, %v561
    %v7478 = vmul.f32 %v7465, %v565
    %v7479 = vmul.f32 %v7461, %v569
    %v7480 = vmul.f32 %v7473, %v573
    %v7481 = vmul.f32 %v7470, %v561
    %v7482 = vmul.f32 %v7466, %v565
    %v7483 = vmul.f32 %v7462, %v569
    %v7484 = vmul.f32 %v7474, %v573
    %v7485 = vmul.f32 %v7471, %v561
    %v7486 = vmul.f32 %v7467, %v565
    %v7487 = vmul.f32 %v7463, %v569
    %v7488 = vmul.f32 %v7475, %v573
    %v7489 = vmul.f32 %v7472, %v561
    %v7490 = vmul.f32 %v7468, %v565
    %v7491 = vmul.f32 %v7464, %v569
    %v7492 = vmul.f32 %v7476, %v573
    %v7493 = vrot.slane %v4713, 5
    %v7494 = vsel %vm3938, %v7493, 0
    %7496 = vmatprep.subr.mxu0 %v7478
    %7497 = vmatpush1.msra.mxu0 %v7477
    %7498 = vmatprep.subr.mxu0 %v7482
    %7499 = vmatpush1.msra.mxu0 %v7481
    %7500 = vmatprep.subr.mxu0 %v7486
    %7501 = vmatpush1.msra.mxu0 %v7485
    %7502 = vmatprep.subr.mxu0 %v7490
    %7503 = vmatpush1.msra.mxu0 %v7489
    %7504 = vmatprep.subr.mxu0 0.0
    %7505 = vmatpush1.msra.mxu0 0.0
    %7506 = vmatprep.subr.mxu0 0.0
    %7507 = vmatpush1.msra.mxu0 0.0
    %7508 = vmatprep.subr.mxu0 0.0
    %7509 = vmatpush1.msra.mxu0 0.0
    %7510 = vmatprep.subr.mxu0 0.0
    %7511 = vmatpush1.msra.mxu0 0.0
    %7512 = vmatprep.subr.mxu0 0.0
    %7513 = vmatpush1.msra.mxu0 0.0
    %7514 = vmatprep.subr.mxu0 0.0
    %7515 = vmatpush1.msra.mxu0 0.0
    %7516 = vmatprep.subr.mxu0 0.0
    %7517 = vmatpush1.msra.mxu0 0.0
    %7518 = vmatprep.subr.mxu0 0.0
    %7519 = vmatpush1.msra.mxu0 0.0
    %7520 = vmatprep.subr.mxu0 0.0
    %7521 = vmatpush1.msra.mxu0 0.0
    %7522 = vmatprep.subr.mxu0 0.0
    %7523 = vmatpush1.msra.mxu0 0.0
    %7524 = vmatprep.subr.mxu0 0.0
    %7525 = vmatpush1.msra.mxu0 0.0
    %7526 = vmatprep.subr.mxu0 0.0
    %7527 = vmatpush1.msra.mxu0 0.0
    %7528 = vmatprep.subr.mxu0 0.0
    %7529 = vmatpush1.msra.mxu0 0.0
    %7530 = vmatprep.subr.mxu0 0.0
    %7531 = vmatpush1.msra.mxu0 0.0
    %7532 = vmatprep.subr.mxu0 0.0
    %7533 = vmatpush1.msra.mxu0 0.0
    %7534 = vmatprep.subr.mxu0 0.0
    %7535 = vmatpush1.msra.mxu0 0.0
    %7536 = vmatprep.subr.mxu0 0.0
    %7537 = vmatpush1.msra.mxu0 0.0
    %7538 = vmatprep.subr.mxu0 0.0
    %7539 = vmatpush1.msra.mxu0 0.0
    %7540 = vmatprep.subr.mxu0 0.0
    %7541 = vmatpush1.msra.mxu0 0.0
    %7542 = vmatprep.subr.mxu0 0.0
    %7543 = vmatpush1.msra.mxu0 0.0
    %7544 = vmatprep.subr.mxu0 0.0
    %7545 = vmatpush1.msra.mxu0 0.0
    %7546 = vmatprep.subr.mxu0 0.0
    %7547 = vmatpush1.msra.mxu0 0.0
    %7548 = vmatprep.subr.mxu0 0.0
    %7549 = vmatpush1.msra.mxu0 0.0
    %7550 = vmatprep.subr.mxu0 0.0
    %7551 = vmatpush1.msra.mxu0 0.0
    %7552 = vmatprep.subr.mxu0 0.0
    %7553 = vmatpush1.msra.mxu0 0.0
    %7554 = vmatprep.subr.mxu0 0.0
    %7555 = vmatpush1.msra.mxu0 0.0
    %7556 = vmatprep.subr.mxu0 0.0
    %7557 = vmatpush1.msra.mxu0 0.0
    %7558 = vmatprep.subr.mxu0 0.0
    %7559 = vmatpush1.msra.mxu0 0.0
    %7560 = vmatprep.mubr.f32.mxu0 0.0
    %7561 = vmatmul.mubr.f32.gmra.mrb[0].mxu0 %v7494
    %v7562 = vpop.f32.mrb[0].mxu0
    %v7563 = vadd.f32 0.0, %v7562
    %v7564 = vpop.f32.mrb[0].mxu0
    %v7565 = vadd.f32 0.0, %v7564
    %7566 = vdwg.mxu0
    %7567 = vmatprep.subr.mxu0 %v7480
    %7568 = vmatpush1.msra.mxu0 %v7479
    %7569 = vmatprep.subr.mxu0 %v7484
    %7570 = vmatpush1.msra.mxu0 %v7483
    %7571 = vmatprep.subr.mxu0 %v7488
    %7572 = vmatpush1.msra.mxu0 %v7487
    %7573 = vmatprep.subr.mxu0 %v7492
    %7574 = vmatpush1.msra.mxu0 %v7491
    %7575 = vmatprep.subr.mxu0 0.0
    %7576 = vmatpush1.msra.mxu0 0.0
    %7577 = vmatprep.subr.mxu0 0.0
    %7578 = vmatpush1.msra.mxu0 0.0
    %7579 = vmatprep.subr.mxu0 0.0
    %7580 = vmatpush1.msra.mxu0 0.0
    %7581 = vmatprep.subr.mxu0 0.0
    %7582 = vmatpush1.msra.mxu0 0.0
    %7583 = vmatprep.subr.mxu0 0.0
    %7584 = vmatpush1.msra.mxu0 0.0
    %7585 = vmatprep.subr.mxu0 0.0
    %7586 = vmatpush1.msra.mxu0 0.0
    %7587 = vmatprep.subr.mxu0 0.0
    %7588 = vmatpush1.msra.mxu0 0.0
    %7589 = vmatprep.subr.mxu0 0.0
    %7590 = vmatpush1.msra.mxu0 0.0
    %7591 = vmatprep.subr.mxu0 0.0
    %7592 = vmatpush1.msra.mxu0 0.0
    %7593 = vmatprep.subr.mxu0 0.0
    %7594 = vmatpush1.msra.mxu0 0.0
    %7595 = vmatprep.subr.mxu0 0.0
    %7596 = vmatpush1.msra.mxu0 0.0
    %7597 = vmatprep.subr.mxu0 0.0
    %7598 = vmatpush1.msra.mxu0 0.0
    %7599 = vmatprep.subr.mxu0 0.0
    %7600 = vmatpush1.msra.mxu0 0.0
    %7601 = vmatprep.subr.mxu0 0.0
    %7602 = vmatpush1.msra.mxu0 0.0
    %7603 = vmatprep.subr.mxu0 0.0
    %7604 = vmatpush1.msra.mxu0 0.0
    %7605 = vmatprep.subr.mxu0 0.0
    %7606 = vmatpush1.msra.mxu0 0.0
    %7607 = vmatprep.subr.mxu0 0.0
    %7608 = vmatpush1.msra.mxu0 0.0
    %7609 = vmatprep.subr.mxu0 0.0
    %7610 = vmatpush1.msra.mxu0 0.0
    %7611 = vmatprep.subr.mxu0 0.0
    %7612 = vmatpush1.msra.mxu0 0.0
    %7613 = vmatprep.subr.mxu0 0.0
    %7614 = vmatpush1.msra.mxu0 0.0
    %7615 = vmatprep.subr.mxu0 0.0
    %7616 = vmatpush1.msra.mxu0 0.0
    %7617 = vmatprep.subr.mxu0 0.0
    %7618 = vmatpush1.msra.mxu0 0.0
    %7619 = vmatprep.subr.mxu0 0.0
    %7620 = vmatpush1.msra.mxu0 0.0
    %7621 = vmatprep.subr.mxu0 0.0
    %7622 = vmatpush1.msra.mxu0 0.0
    %7623 = vmatprep.subr.mxu0 0.0
    %7624 = vmatpush1.msra.mxu0 0.0
    %7625 = vmatprep.subr.mxu0 0.0
    %7626 = vmatpush1.msra.mxu0 0.0
    %7627 = vmatprep.subr.mxu0 0.0
    %7628 = vmatpush1.msra.mxu0 0.0
    %7629 = vmatprep.subr.mxu0 0.0
    %7630 = vmatpush1.msra.mxu0 0.0
    %7631 = vmatprep.mubr.f32.mxu0 0.0
    %7632 = vmatmul.mubr.f32.gmra.mrb[0].mxu0 %v7494
    %v7633 = vpop.f32.mrb[0].mxu0
    %v7634 = vadd.f32 0.0, %v7633
    %v7635 = vpop.f32.mrb[0].mxu0
    %v7636 = vadd.f32 0.0, %v7635
    %7637 = vdwg.mxu0
    %v7638 = vadd.f32 %v7425, %v7563
    %v7639 = vadd.f32 %v7426, %v7565
    %v7640 = vadd.f32 %v7427, %v7634
    %v7641 = vadd.f32 %v7428, %v7636
    %7642 = vrot.lane.b32.xlu0 %v4696, 126
    %v7643 = vpop.permute.xlu0 %7642
    %7644 = vrot.lane.b32.xlu0 %v4700, 126
    %v7645 = vpop.permute.xlu0 %7644
    %7646 = vrot.lane.b32.xlu0 %v4704, 126
    %v7647 = vpop.permute.xlu0 %7646
    %7648 = vrot.lane.b32.xlu0 %v4708, 126
    %v7649 = vpop.permute.xlu0 %7648
    %7650 = vrot.lane.b32.xlu0 %v4697, 126
    %v7651 = vpop.permute.xlu0 %7650
    %7652 = vrot.lane.b32.xlu0 %v4701, 126
    %v7653 = vpop.permute.xlu0 %7652
    %7654 = vrot.lane.b32.xlu0 %v4705, 126
    %v7655 = vpop.permute.xlu0 %7654
    %7656 = vrot.lane.b32.xlu0 %v4709, 126
    %v7657 = vpop.permute.xlu0 %7656
    %7658 = vrot.lane.b32.xlu0 %v4698, 126
    %v7659 = vpop.permute.xlu0 %7658
    %7660 = vrot.lane.b32.xlu0 %v4702, 126
    %v7661 = vpop.permute.xlu0 %7660
    %7662 = vrot.lane.b32.xlu0 %v4706, 126
    %v7663 = vpop.permute.xlu0 %7662
    %7664 = vrot.lane.b32.xlu0 %v4710, 126
    %v7665 = vpop.permute.xlu0 %7664
    %7666 = vrot.lane.b32.xlu0 %v4699, 126
    %v7667 = vpop.permute.xlu0 %7666
    %7668 = vrot.lane.b32.xlu0 %v4703, 126
    %v7669 = vpop.permute.xlu0 %7668
    %7670 = vrot.lane.b32.xlu0 %v4707, 126
    %v7671 = vpop.permute.xlu0 %7670
    %7672 = vrot.lane.b32.xlu0 %v4711, 126
    %v7673 = vpop.permute.xlu0 %7672
    %v7674 = vsel %vm586, %v7659, %v7667
    %v7675 = vsel %vm586, %v7661, %v7669
    %v7676 = vsel %vm586, %v7663, %v7671
    %v7677 = vsel %vm586, %v7665, %v7673
    %v7678 = vsel %vm586, %v7651, %v7659
    %v7679 = vsel %vm586, %v7653, %v7661
    %v7680 = vsel %vm586, %v7655, %v7663
    %v7681 = vsel %vm586, %v7657, %v7665
    %v7682 = vsel %vm586, %v7643, %v7651
    %v7683 = vsel %vm586, %v7645, %v7653
    %v7684 = vsel %vm586, %v7647, %v7655
    %v7685 = vsel %vm586, %v7649, %v7657
    %v7686 = vsel %vm586, %v7667, %v7643
    %v7687 = vsel %vm586, %v7669, %v7645
    %v7688 = vsel %vm586, %v7671, %v7647
    %v7689 = vsel %vm586, %v7673, %v7649
    %v7690 = vmul.f32 %v7682, %v594
    %v7691 = vmul.f32 %v7678, %v598
    %v7692 = vmul.f32 %v7674, %v602
    %v7693 = vmul.f32 %v7686, %v606
    %v7694 = vmul.f32 %v7683, %v594
    %v7695 = vmul.f32 %v7679, %v598
    %v7696 = vmul.f32 %v7675, %v602
    %v7697 = vmul.f32 %v7687, %v606
    %v7698 = vmul.f32 %v7684, %v594
    %v7699 = vmul.f32 %v7680, %v598
    %v7700 = vmul.f32 %v7676, %v602
    %v7701 = vmul.f32 %v7688, %v606
    %v7702 = vmul.f32 %v7685, %v594
    %v7703 = vmul.f32 %v7681, %v598
    %v7704 = vmul.f32 %v7677, %v602
    %v7705 = vmul.f32 %v7689, %v606
    %v7706 = vrot.slane %v4713, 6
    %v7707 = vsel %vm3938, %v7706, 0
    %7709 = vmatprep.subr.mxu0 %v7691
    %7710 = vmatpush1.msra.mxu0 %v7690
    %7711 = vmatprep.subr.mxu0 %v7695
    %7712 = vmatpush1.msra.mxu0 %v7694
    %7713 = vmatprep.subr.mxu0 %v7699
    %7714 = vmatpush1.msra.mxu0 %v7698
    %7715 = vmatprep.subr.mxu0 %v7703
    %7716 = vmatpush1.msra.mxu0 %v7702
    %7717 = vmatprep.subr.mxu0 0.0
    %7718 = vmatpush1.msra.mxu0 0.0
    %7719 = vmatprep.subr.mxu0 0.0
    %7720 = vmatpush1.msra.mxu0 0.0
    %7721 = vmatprep.subr.mxu0 0.0
    %7722 = vmatpush1.msra.mxu0 0.0
    %7723 = vmatprep.subr.mxu0 0.0
    %7724 = vmatpush1.msra.mxu0 0.0
    %7725 = vmatprep.subr.mxu0 0.0
    %7726 = vmatpush1.msra.mxu0 0.0
    %7727 = vmatprep.subr.mxu0 0.0
    %7728 = vmatpush1.msra.mxu0 0.0
    %7729 = vmatprep.subr.mxu0 0.0
    %7730 = vmatpush1.msra.mxu0 0.0
    %7731 = vmatprep.subr.mxu0 0.0
    %7732 = vmatpush1.msra.mxu0 0.0
    %7733 = vmatprep.subr.mxu0 0.0
    %7734 = vmatpush1.msra.mxu0 0.0
    %7735 = vmatprep.subr.mxu0 0.0
    %7736 = vmatpush1.msra.mxu0 0.0
    %7737 = vmatprep.subr.mxu0 0.0
    %7738 = vmatpush1.msra.mxu0 0.0
    %7739 = vmatprep.subr.mxu0 0.0
    %7740 = vmatpush1.msra.mxu0 0.0
    %7741 = vmatprep.subr.mxu0 0.0
    %7742 = vmatpush1.msra.mxu0 0.0
    %7743 = vmatprep.subr.mxu0 0.0
    %7744 = vmatpush1.msra.mxu0 0.0
    %7745 = vmatprep.subr.mxu0 0.0
    %7746 = vmatpush1.msra.mxu0 0.0
    %7747 = vmatprep.subr.mxu0 0.0
    %7748 = vmatpush1.msra.mxu0 0.0
    %7749 = vmatprep.subr.mxu0 0.0
    %7750 = vmatpush1.msra.mxu0 0.0
    %7751 = vmatprep.subr.mxu0 0.0
    %7752 = vmatpush1.msra.mxu0 0.0
    %7753 = vmatprep.subr.mxu0 0.0
    %7754 = vmatpush1.msra.mxu0 0.0
    %7755 = vmatprep.subr.mxu0 0.0
    %7756 = vmatpush1.msra.mxu0 0.0
    %7757 = vmatprep.subr.mxu0 0.0
    %7758 = vmatpush1.msra.mxu0 0.0
    %7759 = vmatprep.subr.mxu0 0.0
    %7760 = vmatpush1.msra.mxu0 0.0
    %7761 = vmatprep.subr.mxu0 0.0
    %7762 = vmatpush1.msra.mxu0 0.0
    %7763 = vmatprep.subr.mxu0 0.0
    %7764 = vmatpush1.msra.mxu0 0.0
    %7765 = vmatprep.subr.mxu0 0.0
    %7766 = vmatpush1.msra.mxu0 0.0
    %7767 = vmatprep.subr.mxu0 0.0
    %7768 = vmatpush1.msra.mxu0 0.0
    %7769 = vmatprep.subr.mxu0 0.0
    %7770 = vmatpush1.msra.mxu0 0.0
    %7771 = vmatprep.subr.mxu0 0.0
    %7772 = vmatpush1.msra.mxu0 0.0
    %7773 = vmatprep.mubr.f32.mxu0 0.0
    %7774 = vmatmul.mubr.f32.gmra.mrb[0].mxu0 %v7707
    %v7775 = vpop.f32.mrb[0].mxu0
    %v7776 = vadd.f32 0.0, %v7775
    %v7777 = vpop.f32.mrb[0].mxu0
    %v7778 = vadd.f32 0.0, %v7777
    %7779 = vdwg.mxu0
    %7780 = vmatprep.subr.mxu0 %v7693
    %7781 = vmatpush1.msra.mxu0 %v7692
    %7782 = vmatprep.subr.mxu0 %v7697
    %7783 = vmatpush1.msra.mxu0 %v7696
    %7784 = vmatprep.subr.mxu0 %v7701
    %7785 = vmatpush1.msra.mxu0 %v7700
    %7786 = vmatprep.subr.mxu0 %v7705
    %7787 = vmatpush1.msra.mxu0 %v7704
    %7788 = vmatprep.subr.mxu0 0.0
    %7789 = vmatpush1.msra.mxu0 0.0
    %7790 = vmatprep.subr.mxu0 0.0
    %7791 = vmatpush1.msra.mxu0 0.0
    %7792 = vmatprep.subr.mxu0 0.0
    %7793 = vmatpush1.msra.mxu0 0.0
    %7794 = vmatprep.subr.mxu0 0.0
    %7795 = vmatpush1.msra.mxu0 0.0
    %7796 = vmatprep.subr.mxu0 0.0
    %7797 = vmatpush1.msra.mxu0 0.0
    %7798 = vmatprep.subr.mxu0 0.0
    %7799 = vmatpush1.msra.mxu0 0.0
    %7800 = vmatprep.subr.mxu0 0.0
    %7801 = vmatpush1.msra.mxu0 0.0
    %7802 = vmatprep.subr.mxu0 0.0
    %7803 = vmatpush1.msra.mxu0 0.0
    %7804 = vmatprep.subr.mxu0 0.0
    %7805 = vmatpush1.msra.mxu0 0.0
    %7806 = vmatprep.subr.mxu0 0.0
    %7807 = vmatpush1.msra.mxu0 0.0
    %7808 = vmatprep.subr.mxu0 0.0
    %7809 = vmatpush1.msra.mxu0 0.0
    %7810 = vmatprep.subr.mxu0 0.0
    %7811 = vmatpush1.msra.mxu0 0.0
    %7812 = vmatprep.subr.mxu0 0.0
    %7813 = vmatpush1.msra.mxu0 0.0
    %7814 = vmatprep.subr.mxu0 0.0
    %7815 = vmatpush1.msra.mxu0 0.0
    %7816 = vmatprep.subr.mxu0 0.0
    %7817 = vmatpush1.msra.mxu0 0.0
    %7818 = vmatprep.subr.mxu0 0.0
    %7819 = vmatpush1.msra.mxu0 0.0
    %7820 = vmatprep.subr.mxu0 0.0
    %7821 = vmatpush1.msra.mxu0 0.0
    %7822 = vmatprep.subr.mxu0 0.0
    %7823 = vmatpush1.msra.mxu0 0.0
    %7824 = vmatprep.subr.mxu0 0.0
    %7825 = vmatpush1.msra.mxu0 0.0
    %7826 = vmatprep.subr.mxu0 0.0
    %7827 = vmatpush1.msra.mxu0 0.0
    %7828 = vmatprep.subr.mxu0 0.0
    %7829 = vmatpush1.msra.mxu0 0.0
    %7830 = vmatprep.subr.mxu0 0.0
    %7831 = vmatpush1.msra.mxu0 0.0
    %7832 = vmatprep.subr.mxu0 0.0
    %7833 = vmatpush1.msra.mxu0 0.0
    %7834 = vmatprep.subr.mxu0 0.0
    %7835 = vmatpush1.msra.mxu0 0.0
    %7836 = vmatprep.subr.mxu0 0.0
    %7837 = vmatpush1.msra.mxu0 0.0
    %7838 = vmatprep.subr.mxu0 0.0
    %7839 = vmatpush1.msra.mxu0 0.0
    %7840 = vmatprep.subr.mxu0 0.0
    %7841 = vmatpush1.msra.mxu0 0.0
    %7842 = vmatprep.subr.mxu0 0.0
    %7843 = vmatpush1.msra.mxu0 0.0
    %7844 = vmatprep.mubr.f32.mxu0 0.0
    %7845 = vmatmul.mubr.f32.gmra.mrb[0].mxu0 %v7707
    %v7846 = vpop.f32.mrb[0].mxu0
    %v7847 = vadd.f32 0.0, %v7846
    %v7848 = vpop.f32.mrb[0].mxu0
    %v7849 = vadd.f32 0.0, %v7848
    %7850 = vdwg.mxu0
    %v7851 = vadd.f32 %v7638, %v7776
    %v7852 = vadd.f32 %v7639, %v7778
    %v7853 = vadd.f32 %v7640, %v7847
    %v7854 = vadd.f32 %v7641, %v7849
    %7855 = vrot.lane.b32.xlu0 %v4696, 114
    %v7856 = vpop.permute.xlu0 %7855
    %7857 = vrot.lane.b32.xlu0 %v4700, 114
    %v7858 = vpop.permute.xlu0 %7857
    %7859 = vrot.lane.b32.xlu0 %v4704, 114
    %v7860 = vpop.permute.xlu0 %7859
    %7861 = vrot.lane.b32.xlu0 %v4708, 114
    %v7862 = vpop.permute.xlu0 %7861
    %7863 = vrot.lane.b32.xlu0 %v4697, 114
    %v7864 = vpop.permute.xlu0 %7863
    %7865 = vrot.lane.b32.xlu0 %v4701, 114
    %v7866 = vpop.permute.xlu0 %7865
    %7867 = vrot.lane.b32.xlu0 %v4705, 114
    %v7868 = vpop.permute.xlu0 %7867
    %7869 = vrot.lane.b32.xlu0 %v4709, 114
    %v7870 = vpop.permute.xlu0 %7869
    %7871 = vrot.lane.b32.xlu0 %v4698, 114
    %v7872 = vpop.permute.xlu0 %7871
    %7873 = vrot.lane.b32.xlu0 %v4702, 114
    %v7874 = vpop.permute.xlu0 %7873
    %7875 = vrot.lane.b32.xlu0 %v4706, 114
    %v7876 = vpop.permute.xlu0 %7875
    %7877 = vrot.lane.b32.xlu0 %v4710, 114
    %v7878 = vpop.permute.xlu0 %7877
    %7879 = vrot.lane.b32.xlu0 %v4699, 114
    %v7880 = vpop.permute.xlu0 %7879
    %7881 = vrot.lane.b32.xlu0 %v4703, 114
    %v7882 = vpop.permute.xlu0 %7881
    %7883 = vrot.lane.b32.xlu0 %v4707, 114
    %v7884 = vpop.permute.xlu0 %7883
    %7885 = vrot.lane.b32.xlu0 %v4711, 114
    %v7886 = vpop.permute.xlu0 %7885
    %v7887 = vsel %vm619, %v7872, %v7880
    %v7888 = vsel %vm619, %v7874, %v7882
    %v7889 = vsel %vm619, %v7876, %v7884
    %v7890 = vsel %vm619, %v7878, %v7886
    %v7891 = vsel %vm619, %v7864, %v7872
    %v7892 = vsel %vm619, %v7866, %v7874
    %v7893 = vsel %vm619, %v7868, %v7876
    %v7894 = vsel %vm619, %v7870, %v7878
    %v7895 = vsel %vm619, %v7856, %v7864
    %v7896 = vsel %vm619, %v7858, %v7866
    %v7897 = vsel %vm619, %v7860, %v7868
    %v7898 = vsel %vm619, %v7862, %v7870
    %v7899 = vsel %vm619, %v7880, %v7856
    %v7900 = vsel %vm619, %v7882, %v7858
    %v7901 = vsel %vm619, %v7884, %v7860
    %v7902 = vsel %vm619, %v7886, %v7862
    %v7903 = vmul.f32 %v7895, %v627
    %v7904 = vmul.f32 %v7891, %v631
    %v7905 = vmul.f32 %v7887, %v635
    %v7906 = vmul.f32 %v7899, %v639
    %v7907 = vmul.f32 %v7896, %v627
    %v7908 = vmul.f32 %v7892, %v631
    %v7909 = vmul.f32 %v7888, %v635
    %v7910 = vmul.f32 %v7900, %v639
    %v7911 = vmul.f32 %v7897, %v627
    %v7912 = vmul.f32 %v7893, %v631
    %v7913 = vmul.f32 %v7889, %v635
    %v7914 = vmul.f32 %v7901, %v639
    %v7915 = vmul.f32 %v7898, %v627
    %v7916 = vmul.f32 %v7894, %v631
    %v7917 = vmul.f32 %v7890, %v635
    %v7918 = vmul.f32 %v7902, %v639
    %v7919 = vrot.slane %v4713, 7
    %v7920 = vsel %vm3938, %v7919, 0
    %7922 = vmatprep.subr.mxu0 %v7904
    %7923 = vmatpush1.msra.mxu0 %v7903
    %7924 = vmatprep.subr.mxu0 %v7908
    %7925 = vmatpush1.msra.mxu0 %v7907
    %7926 = vmatprep.subr.mxu0 %v7912
    %7927 = vmatpush1.msra.mxu0 %v7911
    %7928 = vmatprep.subr.mxu0 %v7916
    %7929 = vmatpush1.msra.mxu0 %v7915
    %7930 = vmatprep.subr.mxu0 0.0
    %7931 = vmatpush1.msra.mxu0 0.0
    %7932 = vmatprep.subr.mxu0 0.0
    %7933 = vmatpush1.msra.mxu0 0.0
    %7934 = vmatprep.subr.mxu0 0.0
    %7935 = vmatpush1.msra.mxu0 0.0
    %7936 = vmatprep.subr.mxu0 0.0
    %7937 = vmatpush1.msra.mxu0 0.0
    %7938 = vmatprep.subr.mxu0 0.0
    %7939 = vmatpush1.msra.mxu0 0.0
    %7940 = vmatprep.subr.mxu0 0.0
    %7941 = vmatpush1.msra.mxu0 0.0
    %7942 = vmatprep.subr.mxu0 0.0
    %7943 = vmatpush1.msra.mxu0 0.0
    %7944 = vmatprep.subr.mxu0 0.0
    %7945 = vmatpush1.msra.mxu0 0.0
    %7946 = vmatprep.subr.mxu0 0.0
    %7947 = vmatpush1.msra.mxu0 0.0
    %7948 = vmatprep.subr.mxu0 0.0
    %7949 = vmatpush1.msra.mxu0 0.0
    %7950 = vmatprep.subr.mxu0 0.0
    %7951 = vmatpush1.msra.mxu0 0.0
    %7952 = vmatprep.subr.mxu0 0.0
    %7953 = vmatpush1.msra.mxu0 0.0
    %7954 = vmatprep.subr.mxu0 0.0
    %7955 = vmatpush1.msra.mxu0 0.0
    %7956 = vmatprep.subr.mxu0 0.0
    %7957 = vmatpush1.msra.mxu0 0.0
    %7958 = vmatprep.subr.mxu0 0.0
    %7959 = vmatpush1.msra.mxu0 0.0
    %7960 = vmatprep.subr.mxu0 0.0
    %7961 = vmatpush1.msra.mxu0 0.0
    %7962 = vmatprep.subr.mxu0 0.0
    %7963 = vmatpush1.msra.mxu0 0.0
    %7964 = vmatprep.subr.mxu0 0.0
    %7965 = vmatpush1.msra.mxu0 0.0
    %7966 = vmatprep.subr.mxu0 0.0
    %7967 = vmatpush1.msra.mxu0 0.0
    %7968 = vmatprep.subr.mxu0 0.0
    %7969 = vmatpush1.msra.mxu0 0.0
    %7970 = vmatprep.subr.mxu0 0.0
    %7971 = vmatpush1.msra.mxu0 0.0
    %7972 = vmatprep.subr.mxu0 0.0
    %7973 = vmatpush1.msra.mxu0 0.0
    %7974 = vmatprep.subr.mxu0 0.0
    %7975 = vmatpush1.msra.mxu0 0.0
    %7976 = vmatprep.subr.mxu0 0.0
    %7977 = vmatpush1.msra.mxu0 0.0
    %7978 = vmatprep.subr.mxu0 0.0
    %7979 = vmatpush1.msra.mxu0 0.0
    %7980 = vmatprep.subr.mxu0 0.0
    %7981 = vmatpush1.msra.mxu0 0.0
    %7982 = vmatprep.subr.mxu0 0.0
    %7983 = vmatpush1.msra.mxu0 0.0
    %7984 = vmatprep.subr.mxu0 0.0
    %7985 = vmatpush1.msra.mxu0 0.0
    %7986 = vmatprep.mubr.f32.mxu0 0.0
    %7987 = vmatmul.mubr.f32.gmra.mrb[0].mxu0 %v7920
    %v7988 = vpop.f32.mrb[0].mxu0
    %v7989 = vadd.f32 0.0, %v7988
    %v7990 = vpop.f32.mrb[0].mxu0
    %v7991 = vadd.f32 0.0, %v7990
    %7992 = vdwg.mxu0
    %7993 = vmatprep.subr.mxu0 %v7906
    %7994 = vmatpush1.msra.mxu0 %v7905
    %7995 = vmatprep.subr.mxu0 %v7910
    %7996 = vmatpush1.msra.mxu0 %v7909
    %7997 = vmatprep.subr.mxu0 %v7914
    %7998 = vmatpush1.msra.mxu0 %v7913
    %7999 = vmatprep.subr.mxu0 %v7918
    %8000 = vmatpush1.msra.mxu0 %v7917
    %8001 = vmatprep.subr.mxu0 0.0
    %8002 = vmatpush1.msra.mxu0 0.0
    %8003 = vmatprep.subr.mxu0 0.0
    %8004 = vmatpush1.msra.mxu0 0.0
    %8005 = vmatprep.subr.mxu0 0.0
    %8006 = vmatpush1.msra.mxu0 0.0
    %8007 = vmatprep.subr.mxu0 0.0
    %8008 = vmatpush1.msra.mxu0 0.0
    %8009 = vmatprep.subr.mxu0 0.0
    %8010 = vmatpush1.msra.mxu0 0.0
    %8011 = vmatprep.subr.mxu0 0.0
    %8012 = vmatpush1.msra.mxu0 0.0
    %8013 = vmatprep.subr.mxu0 0.0
    %8014 = vmatpush1.msra.mxu0 0.0
    %8015 = vmatprep.subr.mxu0 0.0
    %8016 = vmatpush1.msra.mxu0 0.0
    %8017 = vmatprep.subr.mxu0 0.0
    %8018 = vmatpush1.msra.mxu0 0.0
    %8019 = vmatprep.subr.mxu0 0.0
    %8020 = vmatpush1.msra.mxu0 0.0
    %8021 = vmatprep.subr.mxu0 0.0
    %8022 = vmatpush1.msra.mxu0 0.0
    %8023 = vmatprep.subr.mxu0 0.0
    %8024 = vmatpush1.msra.mxu0 0.0
    %8025 = vmatprep.subr.mxu0 0.0
    %8026 = vmatpush1.msra.mxu0 0.0
    %8027 = vmatprep.subr.mxu0 0.0
    %8028 = vmatpush1.msra.mxu0 0.0
    %8029 = vmatprep.subr.mxu0 0.0
    %8030 = vmatpush1.msra.mxu0 0.0
    %8031 = vmatprep.subr.mxu0 0.0
    %8032 = vmatpush1.msra.mxu0 0.0
    %8033 = vmatprep.subr.mxu0 0.0
    %8034 = vmatpush1.msra.mxu0 0.0
    %8035 = vmatprep.subr.mxu0 0.0
    %8036 = vmatpush1.msra.mxu0 0.0
    %8037 = vmatprep.subr.mxu0 0.0
    %8038 = vmatpush1.msra.mxu0 0.0
    %8039 = vmatprep.subr.mxu0 0.0
    %8040 = vmatpush1.msra.mxu0 0.0
    %8041 = vmatprep.subr.mxu0 0.0
    %8042 = vmatpush1.msra.mxu0 0.0
    %8043 = vmatprep.subr.mxu0 0.0
    %8044 = vmatpush1.msra.mxu0 0.0
    %8045 = vmatprep.subr.mxu0 0.0
    %8046 = vmatpush1.msra.mxu0 0.0
    %8047 = vmatprep.subr.mxu0 0.0
    %8048 = vmatpush1.msra.mxu0 0.0
    %8049 = vmatprep.subr.mxu0 0.0
    %8050 = vmatpush1.msra.mxu0 0.0
    %8051 = vmatprep.subr.mxu0 0.0
    %8052 = vmatpush1.msra.mxu0 0.0
    %8053 = vmatprep.subr.mxu0 0.0
    %8054 = vmatpush1.msra.mxu0 0.0
    %8055 = vmatprep.subr.mxu0 0.0
    %8056 = vmatpush1.msra.mxu0 0.0
    %8057 = vmatprep.mubr.f32.mxu0 0.0
    %8058 = vmatmul.mubr.f32.gmra.mrb[0].mxu0 %v7920
    %v8059 = vpop.f32.mrb[0].mxu0
    %v8060 = vadd.f32 0.0, %v8059
    %v8061 = vpop.f32.mrb[0].mxu0
    %v8062 = vadd.f32 0.0, %v8061
    %8063 = vdwg.mxu0
    %v8064 = vadd.f32 %v7851, %v7989
    %v8065 = vadd.f32 %v7852, %v7991
    %v8066 = vadd.f32 %v7853, %v8060
    %v8067 = vadd.f32 %v7854, %v8062
    %8068 = vrot.lane.b32.xlu0 %v4696, 113
    %v8069 = vpop.permute.xlu0 %8068
    %8070 = vrot.lane.b32.xlu0 %v4700, 113
    %v8071 = vpop.permute.xlu0 %8070
    %8072 = vrot.lane.b32.xlu0 %v4704, 113
    %v8073 = vpop.permute.xlu0 %8072
    %8074 = vrot.lane.b32.xlu0 %v4708, 113
    %v8075 = vpop.permute.xlu0 %8074
    %8076 = vrot.lane.b32.xlu0 %v4697, 113
    %v8077 = vpop.permute.xlu0 %8076
    %8078 = vrot.lane.b32.xlu0 %v4701, 113
    %v8079 = vpop.permute.xlu0 %8078
    %8080 = vrot.lane.b32.xlu0 %v4705, 113
    %v8081 = vpop.permute.xlu0 %8080
    %8082 = vrot.lane.b32.xlu0 %v4709, 113
    %v8083 = vpop.permute.xlu0 %8082
    %8084 = vrot.lane.b32.xlu0 %v4698, 113
    %v8085 = vpop.permute.xlu0 %8084
    %8086 = vrot.lane.b32.xlu0 %v4702, 113
    %v8087 = vpop.permute.xlu0 %8086
    %8088 = vrot.lane.b32.xlu0 %v4706, 113
    %v8089 = vpop.permute.xlu0 %8088
    %8090 = vrot.lane.b32.xlu0 %v4710, 113
    %v8091 = vpop.permute.xlu0 %8090
    %8092 = vrot.lane.b32.xlu0 %v4699, 113
    %v8093 = vpop.permute.xlu0 %8092
    %8094 = vrot.lane.b32.xlu0 %v4703, 113
    %v8095 = vpop.permute.xlu0 %8094
    %8096 = vrot.lane.b32.xlu0 %v4707, 113
    %v8097 = vpop.permute.xlu0 %8096
    %8098 = vrot.lane.b32.xlu0 %v4711, 113
    %v8099 = vpop.permute.xlu0 %8098
    %v8100 = vsel %vm652, %v8085, %v8093
    %v8101 = vsel %vm652, %v8087, %v8095
    %v8102 = vsel %vm652, %v8089, %v8097
    %v8103 = vsel %vm652, %v8091, %v8099
    %v8104 = vsel %vm652, %v8077, %v8085
    %v8105 = vsel %vm652, %v8079, %v8087
    %v8106 = vsel %vm652, %v8081, %v8089
    %v8107 = vsel %vm652, %v8083, %v8091
    %v8108 = vsel %vm652, %v8069, %v8077
    %v8109 = vsel %vm652, %v8071, %v8079
    %v8110 = vsel %vm652, %v8073, %v8081
    %v8111 = vsel %vm652, %v8075, %v8083
    %v8112 = vsel %vm652, %v8093, %v8069
    %v8113 = vsel %vm652, %v8095, %v8071
    %v8114 = vsel %vm652, %v8097, %v8073
    %v8115 = vsel %vm652, %v8099, %v8075
    %v8116 = vmul.f32 %v8108, %v660
    %v8117 = vmul.f32 %v8104, %v664
    %v8118 = vmul.f32 %v8100, %v668
    %v8119 = vmul.f32 %v8112, %v672
    %v8120 = vmul.f32 %v8109, %v660
    %v8121 = vmul.f32 %v8105, %v664
    %v8122 = vmul.f32 %v8101, %v668
    %v8123 = vmul.f32 %v8113, %v672
    %v8124 = vmul.f32 %v8110, %v660
    %v8125 = vmul.f32 %v8106, %v664
    %v8126 = vmul.f32 %v8102, %v668
    %v8127 = vmul.f32 %v8114, %v672
    %v8128 = vmul.f32 %v8111, %v660
    %v8129 = vmul.f32 %v8107, %v664
    %v8130 = vmul.f32 %v8103, %v668
    %v8131 = vmul.f32 %v8115, %v672
    %v8133 = vsel %vm3938, %v4714, 0
    %8135 = vmatprep.subr.mxu0 %v8117
    %8136 = vmatpush1.msra.mxu0 %v8116
    %8137 = vmatprep.subr.mxu0 %v8121
    %8138 = vmatpush1.msra.mxu0 %v8120
    %8139 = vmatprep.subr.mxu0 %v8125
    %8140 = vmatpush1.msra.mxu0 %v8124
    %8141 = vmatprep.subr.mxu0 %v8129
    %8142 = vmatpush1.msra.mxu0 %v8128
    %8143 = vmatprep.subr.mxu0 0.0
    %8144 = vmatpush1.msra.mxu0 0.0
    %8145 = vmatprep.subr.mxu0 0.0
    %8146 = vmatpush1.msra.mxu0 0.0
    %8147 = vmatprep.subr.mxu0 0.0
    %8148 = vmatpush1.msra.mxu0 0.0
    %8149 = vmatprep.subr.mxu0 0.0
    %8150 = vmatpush1.msra.mxu0 0.0
    %8151 = vmatprep.subr.mxu0 0.0
    %8152 = vmatpush1.msra.mxu0 0.0
    %8153 = vmatprep.subr.mxu0 0.0
    %8154 = vmatpush1.msra.mxu0 0.0
    %8155 = vmatprep.subr.mxu0 0.0
    %8156 = vmatpush1.msra.mxu0 0.0
    %8157 = vmatprep.subr.mxu0 0.0
    %8158 = vmatpush1.msra.mxu0 0.0
    %8159 = vmatprep.subr.mxu0 0.0
    %8160 = vmatpush1.msra.mxu0 0.0
    %8161 = vmatprep.subr.mxu0 0.0
    %8162 = vmatpush1.msra.mxu0 0.0
    %8163 = vmatprep.subr.mxu0 0.0
    %8164 = vmatpush1.msra.mxu0 0.0
    %8165 = vmatprep.subr.mxu0 0.0
    %8166 = vmatpush1.msra.mxu0 0.0
    %8167 = vmatprep.subr.mxu0 0.0
    %8168 = vmatpush1.msra.mxu0 0.0
    %8169 = vmatprep.subr.mxu0 0.0
    %8170 = vmatpush1.msra.mxu0 0.0
    %8171 = vmatprep.subr.mxu0 0.0
    %8172 = vmatpush1.msra.mxu0 0.0
    %8173 = vmatprep.subr.mxu0 0.0
    %8174 = vmatpush1.msra.mxu0 0.0
    %8175 = vmatprep.subr.mxu0 0.0
    %8176 = vmatpush1.msra.mxu0 0.0
    %8177 = vmatprep.subr.mxu0 0.0
    %8178 = vmatpush1.msra.mxu0 0.0
    %8179 = vmatprep.subr.mxu0 0.0
    %8180 = vmatpush1.msra.mxu0 0.0
    %8181 = vmatprep.subr.mxu0 0.0
    %8182 = vmatpush1.msra.mxu0 0.0
    %8183 = vmatprep.subr.mxu0 0.0
    %8184 = vmatpush1.msra.mxu0 0.0
    %8185 = vmatprep.subr.mxu0 0.0
    %8186 = vmatpush1.msra.mxu0 0.0
    %8187 = vmatprep.subr.mxu0 0.0
    %8188 = vmatpush1.msra.mxu0 0.0
    %8189 = vmatprep.subr.mxu0 0.0
    %8190 = vmatpush1.msra.mxu0 0.0
    %8191 = vmatprep.subr.mxu0 0.0
    %8192 = vmatpush1.msra.mxu0 0.0
    %8193 = vmatprep.subr.mxu0 0.0
    %8194 = vmatpush1.msra.mxu0 0.0
    %8195 = vmatprep.subr.mxu0 0.0
    %8196 = vmatpush1.msra.mxu0 0.0
    %8197 = vmatprep.subr.mxu0 0.0
    %8198 = vmatpush1.msra.mxu0 0.0
    %8199 = vmatprep.mubr.f32.mxu0 0.0
    %8200 = vmatmul.mubr.f32.gmra.mrb[0].mxu0 %v8133
    %v8201 = vpop.f32.mrb[0].mxu0
    %v8202 = vadd.f32 0.0, %v8201
    %v8203 = vpop.f32.mrb[0].mxu0
    %v8204 = vadd.f32 0.0, %v8203
    %8205 = vdwg.mxu0
    %8206 = vmatprep.subr.mxu0 %v8119
    %8207 = vmatpush1.msra.mxu0 %v8118
    %8208 = vmatprep.subr.mxu0 %v8123
    %8209 = vmatpush1.msra.mxu0 %v8122
    %8210 = vmatprep.subr.mxu0 %v8127
    %8211 = vmatpush1.msra.mxu0 %v8126
    %8212 = vmatprep.subr.mxu0 %v8131
    %8213 = vmatpush1.msra.mxu0 %v8130
    %8214 = vmatprep.subr.mxu0 0.0
    %8215 = vmatpush1.msra.mxu0 0.0
    %8216 = vmatprep.subr.mxu0 0.0
    %8217 = vmatpush1.msra.mxu0 0.0
    %8218 = vmatprep.subr.mxu0 0.0
    %8219 = vmatpush1.msra.mxu0 0.0
    %8220 = vmatprep.subr.mxu0 0.0
    %8221 = vmatpush1.msra.mxu0 0.0
    %8222 = vmatprep.subr.mxu0 0.0
    %8223 = vmatpush1.msra.mxu0 0.0
    %8224 = vmatprep.subr.mxu0 0.0
    %8225 = vmatpush1.msra.mxu0 0.0
    %8226 = vmatprep.subr.mxu0 0.0
    %8227 = vmatpush1.msra.mxu0 0.0
    %8228 = vmatprep.subr.mxu0 0.0
    %8229 = vmatpush1.msra.mxu0 0.0
    %8230 = vmatprep.subr.mxu0 0.0
    %8231 = vmatpush1.msra.mxu0 0.0
    %8232 = vmatprep.subr.mxu0 0.0
    %8233 = vmatpush1.msra.mxu0 0.0
    %8234 = vmatprep.subr.mxu0 0.0
    %8235 = vmatpush1.msra.mxu0 0.0
    %8236 = vmatprep.subr.mxu0 0.0
    %8237 = vmatpush1.msra.mxu0 0.0
    %8238 = vmatprep.subr.mxu0 0.0
    %8239 = vmatpush1.msra.mxu0 0.0
    %8240 = vmatprep.subr.mxu0 0.0
    %8241 = vmatpush1.msra.mxu0 0.0
    %8242 = vmatprep.subr.mxu0 0.0
    %8243 = vmatpush1.msra.mxu0 0.0
    %8244 = vmatprep.subr.mxu0 0.0
    %8245 = vmatpush1.msra.mxu0 0.0
    %8246 = vmatprep.subr.mxu0 0.0
    %8247 = vmatpush1.msra.mxu0 0.0
    %8248 = vmatprep.subr.mxu0 0.0
    %8249 = vmatpush1.msra.mxu0 0.0
    %8250 = vmatprep.subr.mxu0 0.0
    %8251 = vmatpush1.msra.mxu0 0.0
    %8252 = vmatprep.subr.mxu0 0.0
    %8253 = vmatpush1.msra.mxu0 0.0
    %8254 = vmatprep.subr.mxu0 0.0
    %8255 = vmatpush1.msra.mxu0 0.0
    %8256 = vmatprep.subr.mxu0 0.0
    %8257 = vmatpush1.msra.mxu0 0.0
    %8258 = vmatprep.subr.mxu0 0.0
    %8259 = vmatpush1.msra.mxu0 0.0
    %8260 = vmatprep.subr.mxu0 0.0
    %8261 = vmatpush1.msra.mxu0 0.0
    %8262 = vmatprep.subr.mxu0 0.0
    %8263 = vmatpush1.msra.mxu0 0.0
    %8264 = vmatprep.subr.mxu0 0.0
    %8265 = vmatpush1.msra.mxu0 0.0
    %8266 = vmatprep.subr.mxu0 0.0
    %8267 = vmatpush1.msra.mxu0 0.0
    %8268 = vmatprep.subr.mxu0 0.0
    %8269 = vmatpush1.msra.mxu0 0.0
    %8270 = vmatprep.mubr.f32.mxu0 0.0
    %8271 = vmatmul.mubr.f32.gmra.mrb[0].mxu0 %v8133
    %v8272 = vpop.f32.mrb[0].mxu0
    %v8273 = vadd.f32 0.0, %v8272
    %v8274 = vpop.f32.mrb[0].mxu0
    %v8275 = vadd.f32 0.0, %v8274
    %8276 = vdwg.mxu0
    %v8277 = vadd.f32 %v8064, %v8202
    %v8278 = vadd.f32 %v8065, %v8204
    %v8279 = vadd.f32 %v8066, %v8273
    %v8280 = vadd.f32 %v8067, %v8275
    %8281 = vrot.lane.b32.xlu0 %v4696, 112
    %v8282 = vpop.permute.xlu0 %8281
    %8283 = vrot.lane.b32.xlu0 %v4700, 112
    %v8284 = vpop.permute.xlu0 %8283
    %8285 = vrot.lane.b32.xlu0 %v4704, 112
    %v8286 = vpop.permute.xlu0 %8285
    %8287 = vrot.lane.b32.xlu0 %v4708, 112
    %v8288 = vpop.permute.xlu0 %8287
    %8289 = vrot.lane.b32.xlu0 %v4697, 112
    %v8290 = vpop.permute.xlu0 %8289
    %8291 = vrot.lane.b32.xlu0 %v4701, 112
    %v8292 = vpop.permute.xlu0 %8291
    %8293 = vrot.lane.b32.xlu0 %v4705, 112
    %v8294 = vpop.permute.xlu0 %8293
    %8295 = vrot.lane.b32.xlu0 %v4709, 112
    %v8296 = vpop.permute.xlu0 %8295
    %8297 = vrot.lane.b32.xlu0 %v4698, 112
    %v8298 = vpop.permute.xlu0 %8297
    %8299 = vrot.lane.b32.xlu0 %v4702, 112
    %v8300 = vpop.permute.xlu0 %8299
    %8301 = vrot.lane.b32.xlu0 %v4706, 112
    %v8302 = vpop.permute.xlu0 %8301
    %8303 = vrot.lane.b32.xlu0 %v4710, 112
    %v8304 = vpop.permute.xlu0 %8303
    %8305 = vrot.lane.b32.xlu0 %v4699, 112
    %v8306 = vpop.permute.xlu0 %8305
    %8307 = vrot.lane.b32.xlu0 %v4703, 112
    %v8308 = vpop.permute.xlu0 %8307
    %8309 = vrot.lane.b32.xlu0 %v4707, 112
    %v8310 = vpop.permute.xlu0 %8309
    %8311 = vrot.lane.b32.xlu0 %v4711, 112
    %v8312 = vpop.permute.xlu0 %8311
    %v8313 = vsel %vm685, %v8298, %v8306
    %v8314 = vsel %vm685, %v8300, %v8308
    %v8315 = vsel %vm685, %v8302, %v8310
    %v8316 = vsel %vm685, %v8304, %v8312
    %v8317 = vsel %vm685, %v8290, %v8298
    %v8318 = vsel %vm685, %v8292, %v8300
    %v8319 = vsel %vm685, %v8294, %v8302
    %v8320 = vsel %vm685, %v8296, %v8304
    %v8321 = vsel %vm685, %v8282, %v8290
    %v8322 = vsel %vm685, %v8284, %v8292
    %v8323 = vsel %vm685, %v8286, %v8294
    %v8324 = vsel %vm685, %v8288, %v8296
    %v8325 = vsel %vm685, %v8306, %v8282
    %v8326 = vsel %vm685, %v8308, %v8284
    %v8327 = vsel %vm685, %v8310, %v8286
    %v8328 = vsel %vm685, %v8312, %v8288
    %v8329 = vmul.f32 %v8321, %v693
    %v8330 = vmul.f32 %v8317, %v697
    %v8331 = vmul.f32 %v8313, %v701
    %v8332 = vmul.f32 %v8325, %v705
    %v8333 = vmul.f32 %v8322, %v693
    %v8334 = vmul.f32 %v8318, %v697
    %v8335 = vmul.f32 %v8314, %v701
    %v8336 = vmul.f32 %v8326, %v705
    %v8337 = vmul.f32 %v8323, %v693
    %v8338 = vmul.f32 %v8319, %v697
    %v8339 = vmul.f32 %v8315, %v701
    %v8340 = vmul.f32 %v8327, %v705
    %v8341 = vmul.f32 %v8324, %v693
    %v8342 = vmul.f32 %v8320, %v697
    %v8343 = vmul.f32 %v8316, %v701
    %v8344 = vmul.f32 %v8328, %v705
    %v8345 = vrot.slane %v4714, 1
    %v8346 = vsel %vm3938, %v8345, 0
    %8348 = vmatprep.subr.mxu0 %v8330
    %8349 = vmatpush1.msra.mxu0 %v8329
    %8350 = vmatprep.subr.mxu0 %v8334
    %8351 = vmatpush1.msra.mxu0 %v8333
    %8352 = vmatprep.subr.mxu0 %v8338
    %8353 = vmatpush1.msra.mxu0 %v8337
    %8354 = vmatprep.subr.mxu0 %v8342
    %8355 = vmatpush1.msra.mxu0 %v8341
    %8356 = vmatprep.subr.mxu0 0.0
    %8357 = vmatpush1.msra.mxu0 0.0
    %8358 = vmatprep.subr.mxu0 0.0
    %8359 = vmatpush1.msra.mxu0 0.0
    %8360 = vmatprep.subr.mxu0 0.0
    %8361 = vmatpush1.msra.mxu0 0.0
    %8362 = vmatprep.subr.mxu0 0.0
    %8363 = vmatpush1.msra.mxu0 0.0
    %8364 = vmatprep.subr.mxu0 0.0
    %8365 = vmatpush1.msra.mxu0 0.0
    %8366 = vmatprep.subr.mxu0 0.0
    %8367 = vmatpush1.msra.mxu0 0.0
    %8368 = vmatprep.subr.mxu0 0.0
    %8369 = vmatpush1.msra.mxu0 0.0
    %8370 = vmatprep.subr.mxu0 0.0
    %8371 = vmatpush1.msra.mxu0 0.0
    %8372 = vmatprep.subr.mxu0 0.0
    %8373 = vmatpush1.msra.mxu0 0.0
    %8374 = vmatprep.subr.mxu0 0.0
    %8375 = vmatpush1.msra.mxu0 0.0
    %8376 = vmatprep.subr.mxu0 0.0
    %8377 = vmatpush1.msra.mxu0 0.0
    %8378 = vmatprep.subr.mxu0 0.0
    %8379 = vmatpush1.msra.mxu0 0.0
    %8380 = vmatprep.subr.mxu0 0.0
    %8381 = vmatpush1.msra.mxu0 0.0
    %8382 = vmatprep.subr.mxu0 0.0
    %8383 = vmatpush1.msra.mxu0 0.0
    %8384 = vmatprep.subr.mxu0 0.0
    %8385 = vmatpush1.msra.mxu0 0.0
    %8386 = vmatprep.subr.mxu0 0.0
    %8387 = vmatpush1.msra.mxu0 0.0
    %8388 = vmatprep.subr.mxu0 0.0
    %8389 = vmatpush1.msra.mxu0 0.0
    %8390 = vmatprep.subr.mxu0 0.0
    %8391 = vmatpush1.msra.mxu0 0.0
    %8392 = vmatprep.subr.mxu0 0.0
    %8393 = vmatpush1.msra.mxu0 0.0
    %8394 = vmatprep.subr.mxu0 0.0
    %8395 = vmatpush1.msra.mxu0 0.0
    %8396 = vmatprep.subr.mxu0 0.0
    %8397 = vmatpush1.msra.mxu0 0.0
    %8398 = vmatprep.subr.mxu0 0.0
    %8399 = vmatpush1.msra.mxu0 0.0
    %8400 = vmatprep.subr.mxu0 0.0
    %8401 = vmatpush1.msra.mxu0 0.0
    %8402 = vmatprep.subr.mxu0 0.0
    %8403 = vmatpush1.msra.mxu0 0.0
    %8404 = vmatprep.subr.mxu0 0.0
    %8405 = vmatpush1.msra.mxu0 0.0
    %8406 = vmatprep.subr.mxu0 0.0
    %8407 = vmatpush1.msra.mxu0 0.0
    %8408 = vmatprep.subr.mxu0 0.0
    %8409 = vmatpush1.msra.mxu0 0.0
    %8410 = vmatprep.subr.mxu0 0.0
    %8411 = vmatpush1.msra.mxu0 0.0
    %8412 = vmatprep.mubr.f32.mxu0 0.0
    %8413 = vmatmul.mubr.f32.gmra.mrb[0].mxu0 %v8346
    %v8414 = vpop.f32.mrb[0].mxu0
    %v8415 = vadd.f32 0.0, %v8414
    %v8416 = vpop.f32.mrb[0].mxu0
    %v8417 = vadd.f32 0.0, %v8416
    %8418 = vdwg.mxu0
    %8419 = vmatprep.subr.mxu0 %v8332
    %8420 = vmatpush1.msra.mxu0 %v8331
    %8421 = vmatprep.subr.mxu0 %v8336
    %8422 = vmatpush1.msra.mxu0 %v8335
    %8423 = vmatprep.subr.mxu0 %v8340
    %8424 = vmatpush1.msra.mxu0 %v8339
    %8425 = vmatprep.subr.mxu0 %v8344
    %8426 = vmatpush1.msra.mxu0 %v8343
    %8427 = vmatprep.subr.mxu0 0.0
    %8428 = vmatpush1.msra.mxu0 0.0
    %8429 = vmatprep.subr.mxu0 0.0
    %8430 = vmatpush1.msra.mxu0 0.0
    %8431 = vmatprep.subr.mxu0 0.0
    %8432 = vmatpush1.msra.mxu0 0.0
    %8433 = vmatprep.subr.mxu0 0.0
    %8434 = vmatpush1.msra.mxu0 0.0
    %8435 = vmatprep.subr.mxu0 0.0
    %8436 = vmatpush1.msra.mxu0 0.0
    %8437 = vmatprep.subr.mxu0 0.0
    %8438 = vmatpush1.msra.mxu0 0.0
    %8439 = vmatprep.subr.mxu0 0.0
    %8440 = vmatpush1.msra.mxu0 0.0
    %8441 = vmatprep.subr.mxu0 0.0
    %8442 = vmatpush1.msra.mxu0 0.0
    %8443 = vmatprep.subr.mxu0 0.0
    %8444 = vmatpush1.msra.mxu0 0.0
    %8445 = vmatprep.subr.mxu0 0.0
    %8446 = vmatpush1.msra.mxu0 0.0
    %8447 = vmatprep.subr.mxu0 0.0
    %8448 = vmatpush1.msra.mxu0 0.0
    %8449 = vmatprep.subr.mxu0 0.0
    %8450 = vmatpush1.msra.mxu0 0.0
    %8451 = vmatprep.subr.mxu0 0.0
    %8452 = vmatpush1.msra.mxu0 0.0
    %8453 = vmatprep.subr.mxu0 0.0
    %8454 = vmatpush1.msra.mxu0 0.0
    %8455 = vmatprep.subr.mxu0 0.0
    %8456 = vmatpush1.msra.mxu0 0.0
    %8457 = vmatprep.subr.mxu0 0.0
    %8458 = vmatpush1.msra.mxu0 0.0
    %8459 = vmatprep.subr.mxu0 0.0
    %8460 = vmatpush1.msra.mxu0 0.0
    %8461 = vmatprep.subr.mxu0 0.0
    %8462 = vmatpush1.msra.mxu0 0.0
    %8463 = vmatprep.subr.mxu0 0.0
    %8464 = vmatpush1.msra.mxu0 0.0
    %8465 = vmatprep.subr.mxu0 0.0
    %8466 = vmatpush1.msra.mxu0 0.0
    %8467 = vmatprep.subr.mxu0 0.0
    %8468 = vmatpush1.msra.mxu0 0.0
    %8469 = vmatprep.subr.mxu0 0.0
    %8470 = vmatpush1.msra.mxu0 0.0
    %8471 = vmatprep.subr.mxu0 0.0
    %8472 = vmatpush1.msra.mxu0 0.0
    %8473 = vmatprep.subr.mxu0 0.0
    %8474 = vmatpush1.msra.mxu0 0.0
    %8475 = vmatprep.subr.mxu0 0.0
    %8476 = vmatpush1.msra.mxu0 0.0
    %8477 = vmatprep.subr.mxu0 0.0
    %8478 = vmatpush1.msra.mxu0 0.0
    %8479 = vmatprep.subr.mxu0 0.0
    %8480 = vmatpush1.msra.mxu0 0.0
    %8481 = vmatprep.subr.mxu0 0.0
    %8482 = vmatpush1.msra.mxu0 0.0
    %8483 = vmatprep.mubr.f32.mxu0 0.0
    %8484 = vmatmul.mubr.f32.gmra.mrb[0].mxu0 %v8346
    %v8485 = vpop.f32.mrb[0].mxu0
    %v8486 = vadd.f32 0.0, %v8485
    %v8487 = vpop.f32.mrb[0].mxu0
    %v8488 = vadd.f32 0.0, %v8487
    %8489 = vdwg.mxu0
    %v8490 = vadd.f32 %v8277, %v8415
    %v8491 = vadd.f32 %v8278, %v8417
    %v8492 = vadd.f32 %v8279, %v8486
    %v8493 = vadd.f32 %v8280, %v8488
    %8494 = vrot.lane.b32.xlu0 %v4696, 111
    %v8495 = vpop.permute.xlu0 %8494
    %8496 = vrot.lane.b32.xlu0 %v4700, 111
    %v8497 = vpop.permute.xlu0 %8496
    %8498 = vrot.lane.b32.xlu0 %v4704, 111
    %v8499 = vpop.permute.xlu0 %8498
    %8500 = vrot.lane.b32.xlu0 %v4708, 111
    %v8501 = vpop.permute.xlu0 %8500
    %8502 = vrot.lane.b32.xlu0 %v4697, 111
    %v8503 = vpop.permute.xlu0 %8502
    %8504 = vrot.lane.b32.xlu0 %v4701, 111
    %v8505 = vpop.permute.xlu0 %8504
    %8506 = vrot.lane.b32.xlu0 %v4705, 111
    %v8507 = vpop.permute.xlu0 %8506
    %8508 = vrot.lane.b32.xlu0 %v4709, 111
    %v8509 = vpop.permute.xlu0 %8508
    %8510 = vrot.lane.b32.xlu0 %v4698, 111
    %v8511 = vpop.permute.xlu0 %8510
    %8512 = vrot.lane.b32.xlu0 %v4702, 111
    %v8513 = vpop.permute.xlu0 %8512
    %8514 = vrot.lane.b32.xlu0 %v4706, 111
    %v8515 = vpop.permute.xlu0 %8514
    %8516 = vrot.lane.b32.xlu0 %v4710, 111
    %v8517 = vpop.permute.xlu0 %8516
    %8518 = vrot.lane.b32.xlu0 %v4699, 111
    %v8519 = vpop.permute.xlu0 %8518
    %8520 = vrot.lane.b32.xlu0 %v4703, 111
    %v8521 = vpop.permute.xlu0 %8520
    %8522 = vrot.lane.b32.xlu0 %v4707, 111
    %v8523 = vpop.permute.xlu0 %8522
    %8524 = vrot.lane.b32.xlu0 %v4711, 111
    %v8525 = vpop.permute.xlu0 %8524
    %v8526 = vsel %vm718, %v8511, %v8519
    %v8527 = vsel %vm718, %v8513, %v8521
    %v8528 = vsel %vm718, %v8515, %v8523
    %v8529 = vsel %vm718, %v8517, %v8525
    %v8530 = vsel %vm718, %v8503, %v8511
    %v8531 = vsel %vm718, %v8505, %v8513
    %v8532 = vsel %vm718, %v8507, %v8515
    %v8533 = vsel %vm718, %v8509, %v8517
    %v8534 = vsel %vm718, %v8495, %v8503
    %v8535 = vsel %vm718, %v8497, %v8505
    %v8536 = vsel %vm718, %v8499, %v8507
    %v8537 = vsel %vm718, %v8501, %v8509
    %v8538 = vsel %vm718, %v8519, %v8495
    %v8539 = vsel %vm718, %v8521, %v8497
    %v8540 = vsel %vm718, %v8523, %v8499
    %v8541 = vsel %vm718, %v8525, %v8501
    %v8542 = vmul.f32 %v8534, %v726
    %v8543 = vmul.f32 %v8530, %v730
    %v8544 = vmul.f32 %v8526, %v734
    %v8545 = vmul.f32 %v8538, %v738
    %v8546 = vmul.f32 %v8535, %v726
    %v8547 = vmul.f32 %v8531, %v730
    %v8548 = vmul.f32 %v8527, %v734
    %v8549 = vmul.f32 %v8539, %v738
    %v8550 = vmul.f32 %v8536, %v726
    %v8551 = vmul.f32 %v8532, %v730
    %v8552 = vmul.f32 %v8528, %v734
    %v8553 = vmul.f32 %v8540, %v738
    %v8554 = vmul.f32 %v8537, %v726
    %v8555 = vmul.f32 %v8533, %v730
    %v8556 = vmul.f32 %v8529, %v734
    %v8557 = vmul.f32 %v8541, %v738
    %v8558 = vrot.slane %v4714, 2
    %v8559 = vsel %vm3938, %v8558, 0
    %8561 = vmatprep.subr.mxu0 %v8543
    %8562 = vmatpush1.msra.mxu0 %v8542
    %8563 = vmatprep.subr.mxu0 %v8547
    %8564 = vmatpush1.msra.mxu0 %v8546
    %8565 = vmatprep.subr.mxu0 %v8551
    %8566 = vmatpush1.msra.mxu0 %v8550
    %8567 = vmatprep.subr.mxu0 %v8555
    %8568 = vmatpush1.msra.mxu0 %v8554
    %8569 = vmatprep.subr.mxu0 0.0
    %8570 = vmatpush1.msra.mxu0 0.0
    %8571 = vmatprep.subr.mxu0 0.0
    %8572 = vmatpush1.msra.mxu0 0.0
    %8573 = vmatprep.subr.mxu0 0.0
    %8574 = vmatpush1.msra.mxu0 0.0
    %8575 = vmatprep.subr.mxu0 0.0
    %8576 = vmatpush1.msra.mxu0 0.0
    %8577 = vmatprep.subr.mxu0 0.0
    %8578 = vmatpush1.msra.mxu0 0.0
    %8579 = vmatprep.subr.mxu0 0.0
    %8580 = vmatpush1.msra.mxu0 0.0
    %8581 = vmatprep.subr.mxu0 0.0
    %8582 = vmatpush1.msra.mxu0 0.0
    %8583 = vmatprep.subr.mxu0 0.0
    %8584 = vmatpush1.msra.mxu0 0.0
    %8585 = vmatprep.subr.mxu0 0.0
    %8586 = vmatpush1.msra.mxu0 0.0
    %8587 = vmatprep.subr.mxu0 0.0
    %8588 = vmatpush1.msra.mxu0 0.0
    %8589 = vmatprep.subr.mxu0 0.0
    %8590 = vmatpush1.msra.mxu0 0.0
    %8591 = vmatprep.subr.mxu0 0.0
    %8592 = vmatpush1.msra.mxu0 0.0
    %8593 = vmatprep.subr.mxu0 0.0
    %8594 = vmatpush1.msra.mxu0 0.0
    %8595 = vmatprep.subr.mxu0 0.0
    %8596 = vmatpush1.msra.mxu0 0.0
    %8597 = vmatprep.subr.mxu0 0.0
    %8598 = vmatpush1.msra.mxu0 0.0
    %8599 = vmatprep.subr.mxu0 0.0
    %8600 = vmatpush1.msra.mxu0 0.0
    %8601 = vmatprep.subr.mxu0 0.0
    %8602 = vmatpush1.msra.mxu0 0.0
    %8603 = vmatprep.subr.mxu0 0.0
    %8604 = vmatpush1.msra.mxu0 0.0
    %8605 = vmatprep.subr.mxu0 0.0
    %8606 = vmatpush1.msra.mxu0 0.0
    %8607 = vmatprep.subr.mxu0 0.0
    %8608 = vmatpush1.msra.mxu0 0.0
    %8609 = vmatprep.subr.mxu0 0.0
    %8610 = vmatpush1.msra.mxu0 0.0
    %8611 = vmatprep.subr.mxu0 0.0
    %8612 = vmatpush1.msra.mxu0 0.0
    %8613 = vmatprep.subr.mxu0 0.0
    %8614 = vmatpush1.msra.mxu0 0.0
    %8615 = vmatprep.subr.mxu0 0.0
    %8616 = vmatpush1.msra.mxu0 0.0
    %8617 = vmatprep.subr.mxu0 0.0
    %8618 = vmatpush1.msra.mxu0 0.0
    %8619 = vmatprep.subr.mxu0 0.0
    %8620 = vmatpush1.msra.mxu0 0.0
    %8621 = vmatprep.subr.mxu0 0.0
    %8622 = vmatpush1.msra.mxu0 0.0
    %8623 = vmatprep.subr.mxu0 0.0
    %8624 = vmatpush1.msra.mxu0 0.0
    %8625 = vmatprep.mubr.f32.mxu0 0.0
    %8626 = vmatmul.mubr.f32.gmra.mrb[0].mxu0 %v8559
    %v8627 = vpop.f32.mrb[0].mxu0
    %v8628 = vadd.f32 0.0, %v8627
    %v8629 = vpop.f32.mrb[0].mxu0
    %v8630 = vadd.f32 0.0, %v8629
    %8631 = vdwg.mxu0
    %8632 = vmatprep.subr.mxu0 %v8545
    %8633 = vmatpush1.msra.mxu0 %v8544
    %8634 = vmatprep.subr.mxu0 %v8549
    %8635 = vmatpush1.msra.mxu0 %v8548
    %8636 = vmatprep.subr.mxu0 %v8553
    %8637 = vmatpush1.msra.mxu0 %v8552
    %8638 = vmatprep.subr.mxu0 %v8557
    %8639 = vmatpush1.msra.mxu0 %v8556
    %8640 = vmatprep.subr.mxu0 0.0
    %8641 = vmatpush1.msra.mxu0 0.0
    %8642 = vmatprep.subr.mxu0 0.0
    %8643 = vmatpush1.msra.mxu0 0.0
    %8644 = vmatprep.subr.mxu0 0.0
    %8645 = vmatpush1.msra.mxu0 0.0
    %8646 = vmatprep.subr.mxu0 0.0
    %8647 = vmatpush1.msra.mxu0 0.0
    %8648 = vmatprep.subr.mxu0 0.0
    %8649 = vmatpush1.msra.mxu0 0.0
    %8650 = vmatprep.subr.mxu0 0.0
    %8651 = vmatpush1.msra.mxu0 0.0
    %8652 = vmatprep.subr.mxu0 0.0
    %8653 = vmatpush1.msra.mxu0 0.0
    %8654 = vmatprep.subr.mxu0 0.0
    %8655 = vmatpush1.msra.mxu0 0.0
    %8656 = vmatprep.subr.mxu0 0.0
    %8657 = vmatpush1.msra.mxu0 0.0
    %8658 = vmatprep.subr.mxu0 0.0
    %8659 = vmatpush1.msra.mxu0 0.0
    %8660 = vmatprep.subr.mxu0 0.0
    %8661 = vmatpush1.msra.mxu0 0.0
    %8662 = vmatprep.subr.mxu0 0.0
    %8663 = vmatpush1.msra.mxu0 0.0
    %8664 = vmatprep.subr.mxu0 0.0
    %8665 = vmatpush1.msra.mxu0 0.0
    %8666 = vmatprep.subr.mxu0 0.0
    %8667 = vmatpush1.msra.mxu0 0.0
    %8668 = vmatprep.subr.mxu0 0.0
    %8669 = vmatpush1.msra.mxu0 0.0
    %8670 = vmatprep.subr.mxu0 0.0
    %8671 = vmatpush1.msra.mxu0 0.0
    %8672 = vmatprep.subr.mxu0 0.0
    %8673 = vmatpush1.msra.mxu0 0.0
    %8674 = vmatprep.subr.mxu0 0.0
    %8675 = vmatpush1.msra.mxu0 0.0
    %8676 = vmatprep.subr.mxu0 0.0
    %8677 = vmatpush1.msra.mxu0 0.0
    %8678 = vmatprep.subr.mxu0 0.0
    %8679 = vmatpush1.msra.mxu0 0.0
    %8680 = vmatprep.subr.mxu0 0.0
    %8681 = vmatpush1.msra.mxu0 0.0
    %8682 = vmatprep.subr.mxu0 0.0
    %8683 = vmatpush1.msra.mxu0 0.0
    %8684 = vmatprep.subr.mxu0 0.0
    %8685 = vmatpush1.msra.mxu0 0.0
    %8686 = vmatprep.subr.mxu0 0.0
    %8687 = vmatpush1.msra.mxu0 0.0
    %8688 = vmatprep.subr.mxu0 0.0
    %8689 = vmatpush1.msra.mxu0 0.0
    %8690 = vmatprep.subr.mxu0 0.0
    %8691 = vmatpush1.msra.mxu0 0.0
    %8692 = vmatprep.subr.mxu0 0.0
    %8693 = vmatpush1.msra.mxu0 0.0
    %8694 = vmatprep.subr.mxu0 0.0
    %8695 = vmatpush1.msra.mxu0 0.0
    %8696 = vmatprep.mubr.f32.mxu0 0.0
    %8697 = vmatmul.mubr.f32.gmra.mrb[0].mxu0 %v8559
    %v8698 = vpop.f32.mrb[0].mxu0
    %v8699 = vadd.f32 0.0, %v8698
    %v8700 = vpop.f32.mrb[0].mxu0
    %v8701 = vadd.f32 0.0, %v8700
    %8702 = vdwg.mxu0
    %v8703 = vadd.f32 %v8490, %v8628
    %v8704 = vadd.f32 %v8491, %v8630
    %v8705 = vadd.f32 %v8492, %v8699
    %v8706 = vadd.f32 %v8493, %v8701
    %8707 = vrot.lane.b32.xlu0 %v4696, 110
    %v8708 = vpop.permute.xlu0 %8707
    %8709 = vrot.lane.b32.xlu0 %v4700, 110
    %v8710 = vpop.permute.xlu0 %8709
    %8711 = vrot.lane.b32.xlu0 %v4704, 110
    %v8712 = vpop.permute.xlu0 %8711
    %8713 = vrot.lane.b32.xlu0 %v4708, 110
    %v8714 = vpop.permute.xlu0 %8713
    %8715 = vrot.lane.b32.xlu0 %v4697, 110
    %v8716 = vpop.permute.xlu0 %8715
    %8717 = vrot.lane.b32.xlu0 %v4701, 110
    %v8718 = vpop.permute.xlu0 %8717
    %8719 = vrot.lane.b32.xlu0 %v4705, 110
    %v8720 = vpop.permute.xlu0 %8719
    %8721 = vrot.lane.b32.xlu0 %v4709, 110
    %v8722 = vpop.permute.xlu0 %8721
    %8723 = vrot.lane.b32.xlu0 %v4698, 110
    %v8724 = vpop.permute.xlu0 %8723
    %8725 = vrot.lane.b32.xlu0 %v4702, 110
    %v8726 = vpop.permute.xlu0 %8725
    %8727 = vrot.lane.b32.xlu0 %v4706, 110
    %v8728 = vpop.permute.xlu0 %8727
    %8729 = vrot.lane.b32.xlu0 %v4710, 110
    %v8730 = vpop.permute.xlu0 %8729
    %8731 = vrot.lane.b32.xlu0 %v4699, 110
    %v8732 = vpop.permute.xlu0 %8731
    %8733 = vrot.lane.b32.xlu0 %v4703, 110
    %v8734 = vpop.permute.xlu0 %8733
    %8735 = vrot.lane.b32.xlu0 %v4707, 110
    %v8736 = vpop.permute.xlu0 %8735
    %8737 = vrot.lane.b32.xlu0 %v4711, 110
    %v8738 = vpop.permute.xlu0 %8737
    %v8739 = vsel %vm751, %v8724, %v8732
    %v8740 = vsel %vm751, %v8726, %v8734
    %v8741 = vsel %vm751, %v8728, %v8736
    %v8742 = vsel %vm751, %v8730, %v8738
    %v8743 = vsel %vm751, %v8716, %v8724
    %v8744 = vsel %vm751, %v8718, %v8726
    %v8745 = vsel %vm751, %v8720, %v8728
    %v8746 = vsel %vm751, %v8722, %v8730
    %v8747 = vsel %vm751, %v8708, %v8716
    %v8748 = vsel %vm751, %v8710, %v8718
    %v8749 = vsel %vm751, %v8712, %v8720
    %v8750 = vsel %vm751, %v8714, %v8722
    %v8751 = vsel %vm751, %v8732, %v8708
    %v8752 = vsel %vm751, %v8734, %v8710
    %v8753 = vsel %vm751, %v8736, %v8712
    %v8754 = vsel %vm751, %v8738, %v8714
    %v8755 = vmul.f32 %v8747, %v759
    %v8756 = vmul.f32 %v8743, %v763
    %v8757 = vmul.f32 %v8739, %v767
    %v8758 = vmul.f32 %v8751, %v771
    %v8759 = vmul.f32 %v8748, %v759
    %v8760 = vmul.f32 %v8744, %v763
    %v8761 = vmul.f32 %v8740, %v767
    %v8762 = vmul.f32 %v8752, %v771
    %v8763 = vmul.f32 %v8749, %v759
    %v8764 = vmul.f32 %v8745, %v763
    %v8765 = vmul.f32 %v8741, %v767
    %v8766 = vmul.f32 %v8753, %v771
    %v8767 = vmul.f32 %v8750, %v759
    %v8768 = vmul.f32 %v8746, %v763
    %v8769 = vmul.f32 %v8742, %v767
    %v8770 = vmul.f32 %v8754, %v771
    %v8771 = vrot.slane %v4714, 3
    %v8772 = vsel %vm3938, %v8771, 0
    %8774 = vmatprep.subr.mxu0 %v8756
    %8775 = vmatpush1.msra.mxu0 %v8755
    %8776 = vmatprep.subr.mxu0 %v8760
    %8777 = vmatpush1.msra.mxu0 %v8759
    %8778 = vmatprep.subr.mxu0 %v8764
    %8779 = vmatpush1.msra.mxu0 %v8763
    %8780 = vmatprep.subr.mxu0 %v8768
    %8781 = vmatpush1.msra.mxu0 %v8767
    %8782 = vmatprep.subr.mxu0 0.0
    %8783 = vmatpush1.msra.mxu0 0.0
    %8784 = vmatprep.subr.mxu0 0.0
    %8785 = vmatpush1.msra.mxu0 0.0
    %8786 = vmatprep.subr.mxu0 0.0
    %8787 = vmatpush1.msra.mxu0 0.0
    %8788 = vmatprep.subr.mxu0 0.0
    %8789 = vmatpush1.msra.mxu0 0.0
    %8790 = vmatprep.subr.mxu0 0.0
    %8791 = vmatpush1.msra.mxu0 0.0
    %8792 = vmatprep.subr.mxu0 0.0
    %8793 = vmatpush1.msra.mxu0 0.0
    %8794 = vmatprep.subr.mxu0 0.0
    %8795 = vmatpush1.msra.mxu0 0.0
    %8796 = vmatprep.subr.mxu0 0.0
    %8797 = vmatpush1.msra.mxu0 0.0
    %8798 = vmatprep.subr.mxu0 0.0
    %8799 = vmatpush1.msra.mxu0 0.0
    %8800 = vmatprep.subr.mxu0 0.0
    %8801 = vmatpush1.msra.mxu0 0.0
    %8802 = vmatprep.subr.mxu0 0.0
    %8803 = vmatpush1.msra.mxu0 0.0
    %8804 = vmatprep.subr.mxu0 0.0
    %8805 = vmatpush1.msra.mxu0 0.0
    %8806 = vmatprep.subr.mxu0 0.0
    %8807 = vmatpush1.msra.mxu0 0.0
    %8808 = vmatprep.subr.mxu0 0.0
    %8809 = vmatpush1.msra.mxu0 0.0
    %8810 = vmatprep.subr.mxu0 0.0
    %8811 = vmatpush1.msra.mxu0 0.0
    %8812 = vmatprep.subr.mxu0 0.0
    %8813 = vmatpush1.msra.mxu0 0.0
    %8814 = vmatprep.subr.mxu0 0.0
    %8815 = vmatpush1.msra.mxu0 0.0
    %8816 = vmatprep.subr.mxu0 0.0
    %8817 = vmatpush1.msra.mxu0 0.0
    %8818 = vmatprep.subr.mxu0 0.0
    %8819 = vmatpush1.msra.mxu0 0.0
    %8820 = vmatprep.subr.mxu0 0.0
    %8821 = vmatpush1.msra.mxu0 0.0
    %8822 = vmatprep.subr.mxu0 0.0
    %8823 = vmatpush1.msra.mxu0 0.0
    %8824 = vmatprep.subr.mxu0 0.0
    %8825 = vmatpush1.msra.mxu0 0.0
    %8826 = vmatprep.subr.mxu0 0.0
    %8827 = vmatpush1.msra.mxu0 0.0
    %8828 = vmatprep.subr.mxu0 0.0
    %8829 = vmatpush1.msra.mxu0 0.0
    %8830 = vmatprep.subr.mxu0 0.0
    %8831 = vmatpush1.msra.mxu0 0.0
    %8832 = vmatprep.subr.mxu0 0.0
    %8833 = vmatpush1.msra.mxu0 0.0
    %8834 = vmatprep.subr.mxu0 0.0
    %8835 = vmatpush1.msra.mxu0 0.0
    %8836 = vmatprep.subr.mxu0 0.0
    %8837 = vmatpush1.msra.mxu0 0.0
    %8838 = vmatprep.mubr.f32.mxu0 0.0
    %8839 = vmatmul.mubr.f32.gmra.mrb[0].mxu0 %v8772
    %v8840 = vpop.f32.mrb[0].mxu0
    %v8841 = vadd.f32 0.0, %v8840
    %v8842 = vpop.f32.mrb[0].mxu0
    %v8843 = vadd.f32 0.0, %v8842
    %8844 = vdwg.mxu0
    %8845 = vmatprep.subr.mxu0 %v8758
    %8846 = vmatpush1.msra.mxu0 %v8757
    %8847 = vmatprep.subr.mxu0 %v8762
    %8848 = vmatpush1.msra.mxu0 %v8761
    %8849 = vmatprep.subr.mxu0 %v8766
    %8850 = vmatpush1.msra.mxu0 %v8765
    %8851 = vmatprep.subr.mxu0 %v8770
    %8852 = vmatpush1.msra.mxu0 %v8769
    %8853 = vmatprep.subr.mxu0 0.0
    %8854 = vmatpush1.msra.mxu0 0.0
    %8855 = vmatprep.subr.mxu0 0.0
    %8856 = vmatpush1.msra.mxu0 0.0
    %8857 = vmatprep.subr.mxu0 0.0
    %8858 = vmatpush1.msra.mxu0 0.0
    %8859 = vmatprep.subr.mxu0 0.0
    %8860 = vmatpush1.msra.mxu0 0.0
    %8861 = vmatprep.subr.mxu0 0.0
    %8862 = vmatpush1.msra.mxu0 0.0
    %8863 = vmatprep.subr.mxu0 0.0
    %8864 = vmatpush1.msra.mxu0 0.0
    %8865 = vmatprep.subr.mxu0 0.0
    %8866 = vmatpush1.msra.mxu0 0.0
    %8867 = vmatprep.subr.mxu0 0.0
    %8868 = vmatpush1.msra.mxu0 0.0
    %8869 = vmatprep.subr.mxu0 0.0
    %8870 = vmatpush1.msra.mxu0 0.0
    %8871 = vmatprep.subr.mxu0 0.0
    %8872 = vmatpush1.msra.mxu0 0.0
    %8873 = vmatprep.subr.mxu0 0.0
    %8874 = vmatpush1.msra.mxu0 0.0
    %8875 = vmatprep.subr.mxu0 0.0
    %8876 = vmatpush1.msra.mxu0 0.0
    %8877 = vmatprep.subr.mxu0 0.0
    %8878 = vmatpush1.msra.mxu0 0.0
    %8879 = vmatprep.subr.mxu0 0.0
    %8880 = vmatpush1.msra.mxu0 0.0
    %8881 = vmatprep.subr.mxu0 0.0
    %8882 = vmatpush1.msra.mxu0 0.0
    %8883 = vmatprep.subr.mxu0 0.0
    %8884 = vmatpush1.msra.mxu0 0.0
    %8885 = vmatprep.subr.mxu0 0.0
    %8886 = vmatpush1.msra.mxu0 0.0
    %8887 = vmatprep.subr.mxu0 0.0
    %8888 = vmatpush1.msra.mxu0 0.0
    %8889 = vmatprep.subr.mxu0 0.0
    %8890 = vmatpush1.msra.mxu0 0.0
    %8891 = vmatprep.subr.mxu0 0.0
    %8892 = vmatpush1.msra.mxu0 0.0
    %8893 = vmatprep.subr.mxu0 0.0
    %8894 = vmatpush1.msra.mxu0 0.0
    %8895 = vmatprep.subr.mxu0 0.0
    %8896 = vmatpush1.msra.mxu0 0.0
    %8897 = vmatprep.subr.mxu0 0.0
    %8898 = vmatpush1.msra.mxu0 0.0
    %8899 = vmatprep.subr.mxu0 0.0
    %8900 = vmatpush1.msra.mxu0 0.0
    %8901 = vmatprep.subr.mxu0 0.0
    %8902 = vmatpush1.msra.mxu0 0.0
    %8903 = vmatprep.subr.mxu0 0.0
    %8904 = vmatpush1.msra.mxu0 0.0
    %8905 = vmatprep.subr.mxu0 0.0
    %8906 = vmatpush1.msra.mxu0 0.0
    %8907 = vmatprep.subr.mxu0 0.0
    %8908 = vmatpush1.msra.mxu0 0.0
    %8909 = vmatprep.mubr.f32.mxu0 0.0
    %8910 = vmatmul.mubr.f32.gmra.mrb[0].mxu0 %v8772
    %v8911 = vpop.f32.mrb[0].mxu0
    %v8912 = vadd.f32 0.0, %v8911
    %v8913 = vpop.f32.mrb[0].mxu0
    %v8914 = vadd.f32 0.0, %v8913
    %8915 = vdwg.mxu0
    %v8916 = vadd.f32 %v8703, %v8841
    %v8917 = vadd.f32 %v8704, %v8843
    %v8918 = vadd.f32 %v8705, %v8912
    %v8919 = vadd.f32 %v8706, %v8914
    %8920 = vrot.lane.b32.xlu0 %v4696, 98
    %v8921 = vpop.permute.xlu0 %8920
    %8922 = vrot.lane.b32.xlu0 %v4700, 98
    %v8923 = vpop.permute.xlu0 %8922
    %8924 = vrot.lane.b32.xlu0 %v4704, 98
    %v8925 = vpop.permute.xlu0 %8924
    %8926 = vrot.lane.b32.xlu0 %v4708, 98
    %v8927 = vpop.permute.xlu0 %8926
    %8928 = vrot.lane.b32.xlu0 %v4697, 98
    %v8929 = vpop.permute.xlu0 %8928
    %8930 = vrot.lane.b32.xlu0 %v4701, 98
    %v8931 = vpop.permute.xlu0 %8930
    %8932 = vrot.lane.b32.xlu0 %v4705, 98
    %v8933 = vpop.permute.xlu0 %8932
    %8934 = vrot.lane.b32.xlu0 %v4709, 98
    %v8935 = vpop.permute.xlu0 %8934
    %8936 = vrot.lane.b32.xlu0 %v4698, 98
    %v8937 = vpop.permute.xlu0 %8936
    %8938 = vrot.lane.b32.xlu0 %v4702, 98
    %v8939 = vpop.permute.xlu0 %8938
    %8940 = vrot.lane.b32.xlu0 %v4706, 98
    %v8941 = vpop.permute.xlu0 %8940
    %8942 = vrot.lane.b32.xlu0 %v4710, 98
    %v8943 = vpop.permute.xlu0 %8942
    %8944 = vrot.lane.b32.xlu0 %v4699, 98
    %v8945 = vpop.permute.xlu0 %8944
    %8946 = vrot.lane.b32.xlu0 %v4703, 98
    %v8947 = vpop.permute.xlu0 %8946
    %8948 = vrot.lane.b32.xlu0 %v4707, 98
    %v8949 = vpop.permute.xlu0 %8948
    %8950 = vrot.lane.b32.xlu0 %v4711, 98
    %v8951 = vpop.permute.xlu0 %8950
    %v8952 = vsel %vm784, %v8937, %v8945
    %v8953 = vsel %vm784, %v8939, %v8947
    %v8954 = vsel %vm784, %v8941, %v8949
    %v8955 = vsel %vm784, %v8943, %v8951
    %v8956 = vsel %vm784, %v8929, %v8937
    %v8957 = vsel %vm784, %v8931, %v8939
    %v8958 = vsel %vm784, %v8933, %v8941
    %v8959 = vsel %vm784, %v8935, %v8943
    %v8960 = vsel %vm784, %v8921, %v8929
    %v8961 = vsel %vm784, %v8923, %v8931
    %v8962 = vsel %vm784, %v8925, %v8933
    %v8963 = vsel %vm784, %v8927, %v8935
    %v8964 = vsel %vm784, %v8945, %v8921
    %v8965 = vsel %vm784, %v8947, %v8923
    %v8966 = vsel %vm784, %v8949, %v8925
    %v8967 = vsel %vm784, %v8951, %v8927
    %v8968 = vmul.f32 %v8960, %v792
    %v8969 = vmul.f32 %v8956, %v796
    %v8970 = vmul.f32 %v8952, %v800
    %v8971 = vmul.f32 %v8964, %v804
    %v8972 = vmul.f32 %v8961, %v792
    %v8973 = vmul.f32 %v8957, %v796
    %v8974 = vmul.f32 %v8953, %v800
    %v8975 = vmul.f32 %v8965, %v804
    %v8976 = vmul.f32 %v8962, %v792
    %v8977 = vmul.f32 %v8958, %v796
    %v8978 = vmul.f32 %v8954, %v800
    %v8979 = vmul.f32 %v8966, %v804
    %v8980 = vmul.f32 %v8963, %v792
    %v8981 = vmul.f32 %v8959, %v796
    %v8982 = vmul.f32 %v8955, %v800
    %v8983 = vmul.f32 %v8967, %v804
    %v8984 = vrot.slane %v4714, 4
    %v8985 = vsel %vm3938, %v8984, 0
    %8987 = vmatprep.subr.mxu0 %v8969
    %8988 = vmatpush1.msra.mxu0 %v8968
    %8989 = vmatprep.subr.mxu0 %v8973
    %8990 = vmatpush1.msra.mxu0 %v8972
    %8991 = vmatprep.subr.mxu0 %v8977
    %8992 = vmatpush1.msra.mxu0 %v8976
    %8993 = vmatprep.subr.mxu0 %v8981
    %8994 = vmatpush1.msra.mxu0 %v8980
    %8995 = vmatprep.subr.mxu0 0.0
    %8996 = vmatpush1.msra.mxu0 0.0
    %8997 = vmatprep.subr.mxu0 0.0
    %8998 = vmatpush1.msra.mxu0 0.0
    %8999 = vmatprep.subr.mxu0 0.0
    %9000 = vmatpush1.msra.mxu0 0.0
    %9001 = vmatprep.subr.mxu0 0.0
    %9002 = vmatpush1.msra.mxu0 0.0
    %9003 = vmatprep.subr.mxu0 0.0
    %9004 = vmatpush1.msra.mxu0 0.0
    %9005 = vmatprep.subr.mxu0 0.0
    %9006 = vmatpush1.msra.mxu0 0.0
    %9007 = vmatprep.subr.mxu0 0.0
    %9008 = vmatpush1.msra.mxu0 0.0
    %9009 = vmatprep.subr.mxu0 0.0
    %9010 = vmatpush1.msra.mxu0 0.0
    %9011 = vmatprep.subr.mxu0 0.0
    %9012 = vmatpush1.msra.mxu0 0.0
    %9013 = vmatprep.subr.mxu0 0.0
    %9014 = vmatpush1.msra.mxu0 0.0
    %9015 = vmatprep.subr.mxu0 0.0
    %9016 = vmatpush1.msra.mxu0 0.0
    %9017 = vmatprep.subr.mxu0 0.0
    %9018 = vmatpush1.msra.mxu0 0.0
    %9019 = vmatprep.subr.mxu0 0.0
    %9020 = vmatpush1.msra.mxu0 0.0
    %9021 = vmatprep.subr.mxu0 0.0
    %9022 = vmatpush1.msra.mxu0 0.0
    %9023 = vmatprep.subr.mxu0 0.0
    %9024 = vmatpush1.msra.mxu0 0.0
    %9025 = vmatprep.subr.mxu0 0.0
    %9026 = vmatpush1.msra.mxu0 0.0
    %9027 = vmatprep.subr.mxu0 0.0
    %9028 = vmatpush1.msra.mxu0 0.0
    %9029 = vmatprep.subr.mxu0 0.0
    %9030 = vmatpush1.msra.mxu0 0.0
    %9031 = vmatprep.subr.mxu0 0.0
    %9032 = vmatpush1.msra.mxu0 0.0
    %9033 = vmatprep.subr.mxu0 0.0
    %9034 = vmatpush1.msra.mxu0 0.0
    %9035 = vmatprep.subr.mxu0 0.0
    %9036 = vmatpush1.msra.mxu0 0.0
    %9037 = vmatprep.subr.mxu0 0.0
    %9038 = vmatpush1.msra.mxu0 0.0
    %9039 = vmatprep.subr.mxu0 0.0
    %9040 = vmatpush1.msra.mxu0 0.0
    %9041 = vmatprep.subr.mxu0 0.0
    %9042 = vmatpush1.msra.mxu0 0.0
    %9043 = vmatprep.subr.mxu0 0.0
    %9044 = vmatpush1.msra.mxu0 0.0
    %9045 = vmatprep.subr.mxu0 0.0
    %9046 = vmatpush1.msra.mxu0 0.0
    %9047 = vmatprep.subr.mxu0 0.0
    %9048 = vmatpush1.msra.mxu0 0.0
    %9049 = vmatprep.subr.mxu0 0.0
    %9050 = vmatpush1.msra.mxu0 0.0
    %9051 = vmatprep.mubr.f32.mxu0 0.0
    %9052 = vmatmul.mubr.f32.gmra.mrb[0].mxu0 %v8985
    %v9053 = vpop.f32.mrb[0].mxu0
    %v9054 = vadd.f32 0.0, %v9053
    %v9055 = vpop.f32.mrb[0].mxu0
    %v9056 = vadd.f32 0.0, %v9055
    %9057 = vdwg.mxu0
    %9058 = vmatprep.subr.mxu0 %v8971
    %9059 = vmatpush1.msra.mxu0 %v8970
    %9060 = vmatprep.subr.mxu0 %v8975
    %9061 = vmatpush1.msra.mxu0 %v8974
    %9062 = vmatprep.subr.mxu0 %v8979
    %9063 = vmatpush1.msra.mxu0 %v8978
    %9064 = vmatprep.subr.mxu0 %v8983
    %9065 = vmatpush1.msra.mxu0 %v8982
    %9066 = vmatprep.subr.mxu0 0.0
    %9067 = vmatpush1.msra.mxu0 0.0
    %9068 = vmatprep.subr.mxu0 0.0
    %9069 = vmatpush1.msra.mxu0 0.0
    %9070 = vmatprep.subr.mxu0 0.0
    %9071 = vmatpush1.msra.mxu0 0.0
    %9072 = vmatprep.subr.mxu0 0.0
    %9073 = vmatpush1.msra.mxu0 0.0
    %9074 = vmatprep.subr.mxu0 0.0
    %9075 = vmatpush1.msra.mxu0 0.0
    %9076 = vmatprep.subr.mxu0 0.0
    %9077 = vmatpush1.msra.mxu0 0.0
    %9078 = vmatprep.subr.mxu0 0.0
    %9079 = vmatpush1.msra.mxu0 0.0
    %9080 = vmatprep.subr.mxu0 0.0
    %9081 = vmatpush1.msra.mxu0 0.0
    %9082 = vmatprep.subr.mxu0 0.0
    %9083 = vmatpush1.msra.mxu0 0.0
    %9084 = vmatprep.subr.mxu0 0.0
    %9085 = vmatpush1.msra.mxu0 0.0
    %9086 = vmatprep.subr.mxu0 0.0
    %9087 = vmatpush1.msra.mxu0 0.0
    %9088 = vmatprep.subr.mxu0 0.0
    %9089 = vmatpush1.msra.mxu0 0.0
    %9090 = vmatprep.subr.mxu0 0.0
    %9091 = vmatpush1.msra.mxu0 0.0
    %9092 = vmatprep.subr.mxu0 0.0
    %9093 = vmatpush1.msra.mxu0 0.0
    %9094 = vmatprep.subr.mxu0 0.0
    %9095 = vmatpush1.msra.mxu0 0.0
    %9096 = vmatprep.subr.mxu0 0.0
    %9097 = vmatpush1.msra.mxu0 0.0
    %9098 = vmatprep.subr.mxu0 0.0
    %9099 = vmatpush1.msra.mxu0 0.0
    %9100 = vmatprep.subr.mxu0 0.0
    %9101 = vmatpush1.msra.mxu0 0.0
    %9102 = vmatprep.subr.mxu0 0.0
    %9103 = vmatpush1.msra.mxu0 0.0
    %9104 = vmatprep.subr.mxu0 0.0
    %9105 = vmatpush1.msra.mxu0 0.0
    %9106 = vmatprep.subr.mxu0 0.0
    %9107 = vmatpush1.msra.mxu0 0.0
    %9108 = vmatprep.subr.mxu0 0.0
    %9109 = vmatpush1.msra.mxu0 0.0
    %9110 = vmatprep.subr.mxu0 0.0
    %9111 = vmatpush1.msra.mxu0 0.0
    %9112 = vmatprep.subr.mxu0 0.0
    %9113 = vmatpush1.msra.mxu0 0.0
    %9114 = vmatprep.subr.mxu0 0.0
    %9115 = vmatpush1.msra.mxu0 0.0
    %9116 = vmatprep.subr.mxu0 0.0
    %9117 = vmatpush1.msra.mxu0 0.0
    %9118 = vmatprep.subr.mxu0 0.0
    %9119 = vmatpush1.msra.mxu0 0.0
    %9120 = vmatprep.subr.mxu0 0.0
    %9121 = vmatpush1.msra.mxu0 0.0
    %9122 = vmatprep.mubr.f32.mxu0 0.0
    %9123 = vmatmul.mubr.f32.gmra.mrb[0].mxu0 %v8985
    %v9124 = vpop.f32.mrb[0].mxu0
    %v9125 = vadd.f32 0.0, %v9124
    %v9126 = vpop.f32.mrb[0].mxu0
    %v9127 = vadd.f32 0.0, %v9126
    %9128 = vdwg.mxu0
    %v9129 = vadd.f32 %v8916, %v9054
    %v9130 = vadd.f32 %v8917, %v9056
    %v9131 = vadd.f32 %v8918, %v9125
    %v9132 = vadd.f32 %v8919, %v9127
    %9133 = vrot.lane.b32.xlu0 %v4696, 97
    %v9134 = vpop.permute.xlu0 %9133
    %9135 = vrot.lane.b32.xlu0 %v4700, 97
    %v9136 = vpop.permute.xlu0 %9135
    %9137 = vrot.lane.b32.xlu0 %v4704, 97
    %v9138 = vpop.permute.xlu0 %9137
    %9139 = vrot.lane.b32.xlu0 %v4708, 97
    %v9140 = vpop.permute.xlu0 %9139
    %9141 = vrot.lane.b32.xlu0 %v4697, 97
    %v9142 = vpop.permute.xlu0 %9141
    %9143 = vrot.lane.b32.xlu0 %v4701, 97
    %v9144 = vpop.permute.xlu0 %9143
    %9145 = vrot.lane.b32.xlu0 %v4705, 97
    %v9146 = vpop.permute.xlu0 %9145
    %9147 = vrot.lane.b32.xlu0 %v4709, 97
    %v9148 = vpop.permute.xlu0 %9147
    %9149 = vrot.lane.b32.xlu0 %v4698, 97
    %v9150 = vpop.permute.xlu0 %9149
    %9151 = vrot.lane.b32.xlu0 %v4702, 97
    %v9152 = vpop.permute.xlu0 %9151
    %9153 = vrot.lane.b32.xlu0 %v4706, 97
    %v9154 = vpop.permute.xlu0 %9153
    %9155 = vrot.lane.b32.xlu0 %v4710, 97
    %v9156 = vpop.permute.xlu0 %9155
    %9157 = vrot.lane.b32.xlu0 %v4699, 97
    %v9158 = vpop.permute.xlu0 %9157
    %9159 = vrot.lane.b32.xlu0 %v4703, 97
    %v9160 = vpop.permute.xlu0 %9159
    %9161 = vrot.lane.b32.xlu0 %v4707, 97
    %v9162 = vpop.permute.xlu0 %9161
    %9163 = vrot.lane.b32.xlu0 %v4711, 97
    %v9164 = vpop.permute.xlu0 %9163
    %v9165 = vsel %vm817, %v9150, %v9158
    %v9166 = vsel %vm817, %v9152, %v9160
    %v9167 = vsel %vm817, %v9154, %v9162
    %v9168 = vsel %vm817, %v9156, %v9164
    %v9169 = vsel %vm817, %v9142, %v9150
    %v9170 = vsel %vm817, %v9144, %v9152
    %v9171 = vsel %vm817, %v9146, %v9154
    %v9172 = vsel %vm817, %v9148, %v9156
    %v9173 = vsel %vm817, %v9134, %v9142
    %v9174 = vsel %vm817, %v9136, %v9144
    %v9175 = vsel %vm817, %v9138, %v9146
    %v9176 = vsel %vm817, %v9140, %v9148
    %v9177 = vsel %vm817, %v9158, %v9134
    %v9178 = vsel %vm817, %v9160, %v9136
    %v9179 = vsel %vm817, %v9162, %v9138
    %v9180 = vsel %vm817, %v9164, %v9140
    %v9181 = vmul.f32 %v9173, %v825
    %v9182 = vmul.f32 %v9169, %v829
    %v9183 = vmul.f32 %v9165, %v833
    %v9184 = vmul.f32 %v9177, %v837
    %v9185 = vmul.f32 %v9174, %v825
    %v9186 = vmul.f32 %v9170, %v829
    %v9187 = vmul.f32 %v9166, %v833
    %v9188 = vmul.f32 %v9178, %v837
    %v9189 = vmul.f32 %v9175, %v825
    %v9190 = vmul.f32 %v9171, %v829
    %v9191 = vmul.f32 %v9167, %v833
    %v9192 = vmul.f32 %v9179, %v837
    %v9193 = vmul.f32 %v9176, %v825
    %v9194 = vmul.f32 %v9172, %v829
    %v9195 = vmul.f32 %v9168, %v833
    %v9196 = vmul.f32 %v9180, %v837
    %v9197 = vrot.slane %v4714, 5
    %v9198 = vsel %vm3938, %v9197, 0
    %9200 = vmatprep.subr.mxu0 %v9182
    %9201 = vmatpush1.msra.mxu0 %v9181
    %9202 = vmatprep.subr.mxu0 %v9186
    %9203 = vmatpush1.msra.mxu0 %v9185
    %9204 = vmatprep.subr.mxu0 %v9190
    %9205 = vmatpush1.msra.mxu0 %v9189
    %9206 = vmatprep.subr.mxu0 %v9194
    %9207 = vmatpush1.msra.mxu0 %v9193
    %9208 = vmatprep.subr.mxu0 0.0
    %9209 = vmatpush1.msra.mxu0 0.0
    %9210 = vmatprep.subr.mxu0 0.0
    %9211 = vmatpush1.msra.mxu0 0.0
    %9212 = vmatprep.subr.mxu0 0.0
    %9213 = vmatpush1.msra.mxu0 0.0
    %9214 = vmatprep.subr.mxu0 0.0
    %9215 = vmatpush1.msra.mxu0 0.0
    %9216 = vmatprep.subr.mxu0 0.0
    %9217 = vmatpush1.msra.mxu0 0.0
    %9218 = vmatprep.subr.mxu0 0.0
    %9219 = vmatpush1.msra.mxu0 0.0
    %9220 = vmatprep.subr.mxu0 0.0
    %9221 = vmatpush1.msra.mxu0 0.0
    %9222 = vmatprep.subr.mxu0 0.0
    %9223 = vmatpush1.msra.mxu0 0.0
    %9224 = vmatprep.subr.mxu0 0.0
    %9225 = vmatpush1.msra.mxu0 0.0
    %9226 = vmatprep.subr.mxu0 0.0
    %9227 = vmatpush1.msra.mxu0 0.0
    %9228 = vmatprep.subr.mxu0 0.0
    %9229 = vmatpush1.msra.mxu0 0.0
    %9230 = vmatprep.subr.mxu0 0.0
    %9231 = vmatpush1.msra.mxu0 0.0
    %9232 = vmatprep.subr.mxu0 0.0
    %9233 = vmatpush1.msra.mxu0 0.0
    %9234 = vmatprep.subr.mxu0 0.0
    %9235 = vmatpush1.msra.mxu0 0.0
    %9236 = vmatprep.subr.mxu0 0.0
    %9237 = vmatpush1.msra.mxu0 0.0
    %9238 = vmatprep.subr.mxu0 0.0
    %9239 = vmatpush1.msra.mxu0 0.0
    %9240 = vmatprep.subr.mxu0 0.0
    %9241 = vmatpush1.msra.mxu0 0.0
    %9242 = vmatprep.subr.mxu0 0.0
    %9243 = vmatpush1.msra.mxu0 0.0
    %9244 = vmatprep.subr.mxu0 0.0
    %9245 = vmatpush1.msra.mxu0 0.0
    %9246 = vmatprep.subr.mxu0 0.0
    %9247 = vmatpush1.msra.mxu0 0.0
    %9248 = vmatprep.subr.mxu0 0.0
    %9249 = vmatpush1.msra.mxu0 0.0
    %9250 = vmatprep.subr.mxu0 0.0
    %9251 = vmatpush1.msra.mxu0 0.0
    %9252 = vmatprep.subr.mxu0 0.0
    %9253 = vmatpush1.msra.mxu0 0.0
    %9254 = vmatprep.subr.mxu0 0.0
    %9255 = vmatpush1.msra.mxu0 0.0
    %9256 = vmatprep.subr.mxu0 0.0
    %9257 = vmatpush1.msra.mxu0 0.0
    %9258 = vmatprep.subr.mxu0 0.0
    %9259 = vmatpush1.msra.mxu0 0.0
    %9260 = vmatprep.subr.mxu0 0.0
    %9261 = vmatpush1.msra.mxu0 0.0
    %9262 = vmatprep.subr.mxu0 0.0
    %9263 = vmatpush1.msra.mxu0 0.0
    %9264 = vmatprep.mubr.f32.mxu0 0.0
    %9265 = vmatmul.mubr.f32.gmra.mrb[0].mxu0 %v9198
    %v9266 = vpop.f32.mrb[0].mxu0
    %v9267 = vadd.f32 0.0, %v9266
    %v9268 = vpop.f32.mrb[0].mxu0
    %v9269 = vadd.f32 0.0, %v9268
    %9270 = vdwg.mxu0
    %9271 = vmatprep.subr.mxu0 %v9184
    %9272 = vmatpush1.msra.mxu0 %v9183
    %9273 = vmatprep.subr.mxu0 %v9188
    %9274 = vmatpush1.msra.mxu0 %v9187
    %9275 = vmatprep.subr.mxu0 %v9192
    %9276 = vmatpush1.msra.mxu0 %v9191
    %9277 = vmatprep.subr.mxu0 %v9196
    %9278 = vmatpush1.msra.mxu0 %v9195
    %9279 = vmatprep.subr.mxu0 0.0
    %9280 = vmatpush1.msra.mxu0 0.0
    %9281 = vmatprep.subr.mxu0 0.0
    %9282 = vmatpush1.msra.mxu0 0.0
    %9283 = vmatprep.subr.mxu0 0.0
    %9284 = vmatpush1.msra.mxu0 0.0
    %9285 = vmatprep.subr.mxu0 0.0
    %9286 = vmatpush1.msra.mxu0 0.0
    %9287 = vmatprep.subr.mxu0 0.0
    %9288 = vmatpush1.msra.mxu0 0.0
    %9289 = vmatprep.subr.mxu0 0.0
    %9290 = vmatpush1.msra.mxu0 0.0
    %9291 = vmatprep.subr.mxu0 0.0
    %9292 = vmatpush1.msra.mxu0 0.0
    %9293 = vmatprep.subr.mxu0 0.0
    %9294 = vmatpush1.msra.mxu0 0.0
    %9295 = vmatprep.subr.mxu0 0.0
    %9296 = vmatpush1.msra.mxu0 0.0
    %9297 = vmatprep.subr.mxu0 0.0
    %9298 = vmatpush1.msra.mxu0 0.0
    %9299 = vmatprep.subr.mxu0 0.0
    %9300 = vmatpush1.msra.mxu0 0.0
    %9301 = vmatprep.subr.mxu0 0.0
    %9302 = vmatpush1.msra.mxu0 0.0
    %9303 = vmatprep.subr.mxu0 0.0
    %9304 = vmatpush1.msra.mxu0 0.0
    %9305 = vmatprep.subr.mxu0 0.0
    %9306 = vmatpush1.msra.mxu0 0.0
    %9307 = vmatprep.subr.mxu0 0.0
    %9308 = vmatpush1.msra.mxu0 0.0
    %9309 = vmatprep.subr.mxu0 0.0
    %9310 = vmatpush1.msra.mxu0 0.0
    %9311 = vmatprep.subr.mxu0 0.0
    %9312 = vmatpush1.msra.mxu0 0.0
    %9313 = vmatprep.subr.mxu0 0.0
    %9314 = vmatpush1.msra.mxu0 0.0
    %9315 = vmatprep.subr.mxu0 0.0
    %9316 = vmatpush1.msra.mxu0 0.0
    %9317 = vmatprep.subr.mxu0 0.0
    %9318 = vmatpush1.msra.mxu0 0.0
    %9319 = vmatprep.subr.mxu0 0.0
    %9320 = vmatpush1.msra.mxu0 0.0
    %9321 = vmatprep.subr.mxu0 0.0
    %9322 = vmatpush1.msra.mxu0 0.0
    %9323 = vmatprep.subr.mxu0 0.0
    %9324 = vmatpush1.msra.mxu0 0.0
    %9325 = vmatprep.subr.mxu0 0.0
    %9326 = vmatpush1.msra.mxu0 0.0
    %9327 = vmatprep.subr.mxu0 0.0
    %9328 = vmatpush1.msra.mxu0 0.0
    %9329 = vmatprep.subr.mxu0 0.0
    %9330 = vmatpush1.msra.mxu0 0.0
    %9331 = vmatprep.subr.mxu0 0.0
    %9332 = vmatpush1.msra.mxu0 0.0
    %9333 = vmatprep.subr.mxu0 0.0
    %9334 = vmatpush1.msra.mxu0 0.0
    %9335 = vmatprep.mubr.f32.mxu0 0.0
    %9336 = vmatmul.mubr.f32.gmra.mrb[0].mxu0 %v9198
    %v9337 = vpop.f32.mrb[0].mxu0
    %v9338 = vadd.f32 0.0, %v9337
    %v9339 = vpop.f32.mrb[0].mxu0
    %v9340 = vadd.f32 0.0, %v9339
    %9341 = vdwg.mxu0
    %v9342 = vadd.f32 %v9129, %v9267
    %v9343 = vadd.f32 %v9130, %v9269
    %v9344 = vadd.f32 %v9131, %v9338
    %v9345 = vadd.f32 %v9132, %v9340
    %9346 = vrot.lane.b32.xlu0 %v4696, 96
    %v9347 = vpop.permute.xlu0 %9346
    %9348 = vrot.lane.b32.xlu0 %v4700, 96
    %v9349 = vpop.permute.xlu0 %9348
    %9350 = vrot.lane.b32.xlu0 %v4704, 96
    %v9351 = vpop.permute.xlu0 %9350
    %9352 = vrot.lane.b32.xlu0 %v4708, 96
    %v9353 = vpop.permute.xlu0 %9352
    %9354 = vrot.lane.b32.xlu0 %v4697, 96
    %v9355 = vpop.permute.xlu0 %9354
    %9356 = vrot.lane.b32.xlu0 %v4701, 96
    %v9357 = vpop.permute.xlu0 %9356
    %9358 = vrot.lane.b32.xlu0 %v4705, 96
    %v9359 = vpop.permute.xlu0 %9358
    %9360 = vrot.lane.b32.xlu0 %v4709, 96
    %v9361 = vpop.permute.xlu0 %9360
    %9362 = vrot.lane.b32.xlu0 %v4698, 96
    %v9363 = vpop.permute.xlu0 %9362
    %9364 = vrot.lane.b32.xlu0 %v4702, 96
    %v9365 = vpop.permute.xlu0 %9364
    %9366 = vrot.lane.b32.xlu0 %v4706, 96
    %v9367 = vpop.permute.xlu0 %9366
    %9368 = vrot.lane.b32.xlu0 %v4710, 96
    %v9369 = vpop.permute.xlu0 %9368
    %9370 = vrot.lane.b32.xlu0 %v4699, 96
    %v9371 = vpop.permute.xlu0 %9370
    %9372 = vrot.lane.b32.xlu0 %v4703, 96
    %v9373 = vpop.permute.xlu0 %9372
    %9374 = vrot.lane.b32.xlu0 %v4707, 96
    %v9375 = vpop.permute.xlu0 %9374
    %9376 = vrot.lane.b32.xlu0 %v4711, 96
    %v9377 = vpop.permute.xlu0 %9376
    %v9378 = vsel %vm850, %v9363, %v9371
    %v9379 = vsel %vm850, %v9365, %v9373
    %v9380 = vsel %vm850, %v9367, %v9375
    %v9381 = vsel %vm850, %v9369, %v9377
    %v9382 = vsel %vm850, %v9355, %v9363
    %v9383 = vsel %vm850, %v9357, %v9365
    %v9384 = vsel %vm850, %v9359, %v9367
    %v9385 = vsel %vm850, %v9361, %v9369
    %v9386 = vsel %vm850, %v9347, %v9355
    %v9387 = vsel %vm850, %v9349, %v9357
    %v9388 = vsel %vm850, %v9351, %v9359
    %v9389 = vsel %vm850, %v9353, %v9361
    %v9390 = vsel %vm850, %v9371, %v9347
    %v9391 = vsel %vm850, %v9373, %v9349
    %v9392 = vsel %vm850, %v9375, %v9351
    %v9393 = vsel %vm850, %v9377, %v9353
    %v9394 = vmul.f32 %v9386, %v858
    %v9395 = vmul.f32 %v9382, %v862
    %v9396 = vmul.f32 %v9378, %v866
    %v9397 = vmul.f32 %v9390, %v870
    %v9398 = vmul.f32 %v9387, %v858
    %v9399 = vmul.f32 %v9383, %v862
    %v9400 = vmul.f32 %v9379, %v866
    %v9401 = vmul.f32 %v9391, %v870
    %v9402 = vmul.f32 %v9388, %v858
    %v9403 = vmul.f32 %v9384, %v862
    %v9404 = vmul.f32 %v9380, %v866
    %v9405 = vmul.f32 %v9392, %v870
    %v9406 = vmul.f32 %v9389, %v858
    %v9407 = vmul.f32 %v9385, %v862
    %v9408 = vmul.f32 %v9381, %v866
    %v9409 = vmul.f32 %v9393, %v870
    %v9410 = vrot.slane %v4714, 6
    %v9411 = vsel %vm3938, %v9410, 0
    %9413 = vmatprep.subr.mxu0 %v9395
    %9414 = vmatpush1.msra.mxu0 %v9394
    %9415 = vmatprep.subr.mxu0 %v9399
    %9416 = vmatpush1.msra.mxu0 %v9398
    %9417 = vmatprep.subr.mxu0 %v9403
    %9418 = vmatpush1.msra.mxu0 %v9402
    %9419 = vmatprep.subr.mxu0 %v9407
    %9420 = vmatpush1.msra.mxu0 %v9406
    %9421 = vmatprep.subr.mxu0 0.0
    %9422 = vmatpush1.msra.mxu0 0.0
    %9423 = vmatprep.subr.mxu0 0.0
    %9424 = vmatpush1.msra.mxu0 0.0
    %9425 = vmatprep.subr.mxu0 0.0
    %9426 = vmatpush1.msra.mxu0 0.0
    %9427 = vmatprep.subr.mxu0 0.0
    %9428 = vmatpush1.msra.mxu0 0.0
    %9429 = vmatprep.subr.mxu0 0.0
    %9430 = vmatpush1.msra.mxu0 0.0
    %9431 = vmatprep.subr.mxu0 0.0
    %9432 = vmatpush1.msra.mxu0 0.0
    %9433 = vmatprep.subr.mxu0 0.0
    %9434 = vmatpush1.msra.mxu0 0.0
    %9435 = vmatprep.subr.mxu0 0.0
    %9436 = vmatpush1.msra.mxu0 0.0
    %9437 = vmatprep.subr.mxu0 0.0
    %9438 = vmatpush1.msra.mxu0 0.0
    %9439 = vmatprep.subr.mxu0 0.0
    %9440 = vmatpush1.msra.mxu0 0.0
    %9441 = vmatprep.subr.mxu0 0.0
    %9442 = vmatpush1.msra.mxu0 0.0
    %9443 = vmatprep.subr.mxu0 0.0
    %9444 = vmatpush1.msra.mxu0 0.0
    %9445 = vmatprep.subr.mxu0 0.0
    %9446 = vmatpush1.msra.mxu0 0.0
    %9447 = vmatprep.subr.mxu0 0.0
    %9448 = vmatpush1.msra.mxu0 0.0
    %9449 = vmatprep.subr.mxu0 0.0
    %9450 = vmatpush1.msra.mxu0 0.0
    %9451 = vmatprep.subr.mxu0 0.0
    %9452 = vmatpush1.msra.mxu0 0.0
    %9453 = vmatprep.subr.mxu0 0.0
    %9454 = vmatpush1.msra.mxu0 0.0
    %9455 = vmatprep.subr.mxu0 0.0
    %9456 = vmatpush1.msra.mxu0 0.0
    %9457 = vmatprep.subr.mxu0 0.0
    %9458 = vmatpush1.msra.mxu0 0.0
    %9459 = vmatprep.subr.mxu0 0.0
    %9460 = vmatpush1.msra.mxu0 0.0
    %9461 = vmatprep.subr.mxu0 0.0
    %9462 = vmatpush1.msra.mxu0 0.0
    %9463 = vmatprep.subr.mxu0 0.0
    %9464 = vmatpush1.msra.mxu0 0.0
    %9465 = vmatprep.subr.mxu0 0.0
    %9466 = vmatpush1.msra.mxu0 0.0
    %9467 = vmatprep.subr.mxu0 0.0
    %9468 = vmatpush1.msra.mxu0 0.0
    %9469 = vmatprep.subr.mxu0 0.0
    %9470 = vmatpush1.msra.mxu0 0.0
    %9471 = vmatprep.subr.mxu0 0.0
    %9472 = vmatpush1.msra.mxu0 0.0
    %9473 = vmatprep.subr.mxu0 0.0
    %9474 = vmatpush1.msra.mxu0 0.0
    %9475 = vmatprep.subr.mxu0 0.0
    %9476 = vmatpush1.msra.mxu0 0.0
    %9477 = vmatprep.mubr.f32.mxu0 0.0
    %9478 = vmatmul.mubr.f32.gmra.mrb[0].mxu0 %v9411
    %v9479 = vpop.f32.mrb[0].mxu0
    %v9480 = vadd.f32 0.0, %v9479
    %v9481 = vpop.f32.mrb[0].mxu0
    %v9482 = vadd.f32 0.0, %v9481
    %9483 = vdwg.mxu0
    %9484 = vmatprep.subr.mxu0 %v9397
    %9485 = vmatpush1.msra.mxu0 %v9396
    %9486 = vmatprep.subr.mxu0 %v9401
    %9487 = vmatpush1.msra.mxu0 %v9400
    %9488 = vmatprep.subr.mxu0 %v9405
    %9489 = vmatpush1.msra.mxu0 %v9404
    %9490 = vmatprep.subr.mxu0 %v9409
    %9491 = vmatpush1.msra.mxu0 %v9408
    %9492 = vmatprep.subr.mxu0 0.0
    %9493 = vmatpush1.msra.mxu0 0.0
    %9494 = vmatprep.subr.mxu0 0.0
    %9495 = vmatpush1.msra.mxu0 0.0
    %9496 = vmatprep.subr.mxu0 0.0
    %9497 = vmatpush1.msra.mxu0 0.0
    %9498 = vmatprep.subr.mxu0 0.0
    %9499 = vmatpush1.msra.mxu0 0.0
    %9500 = vmatprep.subr.mxu0 0.0
    %9501 = vmatpush1.msra.mxu0 0.0
    %9502 = vmatprep.subr.mxu0 0.0
    %9503 = vmatpush1.msra.mxu0 0.0
    %9504 = vmatprep.subr.mxu0 0.0
    %9505 = vmatpush1.msra.mxu0 0.0
    %9506 = vmatprep.subr.mxu0 0.0
    %9507 = vmatpush1.msra.mxu0 0.0
    %9508 = vmatprep.subr.mxu0 0.0
    %9509 = vmatpush1.msra.mxu0 0.0
    %9510 = vmatprep.subr.mxu0 0.0
    %9511 = vmatpush1.msra.mxu0 0.0
    %9512 = vmatprep.subr.mxu0 0.0
    %9513 = vmatpush1.msra.mxu0 0.0
    %9514 = vmatprep.subr.mxu0 0.0
    %9515 = vmatpush1.msra.mxu0 0.0
    %9516 = vmatprep.subr.mxu0 0.0
    %9517 = vmatpush1.msra.mxu0 0.0
    %9518 = vmatprep.subr.mxu0 0.0
    %9519 = vmatpush1.msra.mxu0 0.0
    %9520 = vmatprep.subr.mxu0 0.0
    %9521 = vmatpush1.msra.mxu0 0.0
    %9522 = vmatprep.subr.mxu0 0.0
    %9523 = vmatpush1.msra.mxu0 0.0
    %9524 = vmatprep.subr.mxu0 0.0
    %9525 = vmatpush1.msra.mxu0 0.0
    %9526 = vmatprep.subr.mxu0 0.0
    %9527 = vmatpush1.msra.mxu0 0.0
    %9528 = vmatprep.subr.mxu0 0.0
    %9529 = vmatpush1.msra.mxu0 0.0
    %9530 = vmatprep.subr.mxu0 0.0
    %9531 = vmatpush1.msra.mxu0 0.0
    %9532 = vmatprep.subr.mxu0 0.0
    %9533 = vmatpush1.msra.mxu0 0.0
    %9534 = vmatprep.subr.mxu0 0.0
    %9535 = vmatpush1.msra.mxu0 0.0
    %9536 = vmatprep.subr.mxu0 0.0
    %9537 = vmatpush1.msra.mxu0 0.0
    %9538 = vmatprep.subr.mxu0 0.0
    %9539 = vmatpush1.msra.mxu0 0.0
    %9540 = vmatprep.subr.mxu0 0.0
    %9541 = vmatpush1.msra.mxu0 0.0
    %9542 = vmatprep.subr.mxu0 0.0
    %9543 = vmatpush1.msra.mxu0 0.0
    %9544 = vmatprep.subr.mxu0 0.0
    %9545 = vmatpush1.msra.mxu0 0.0
    %9546 = vmatprep.subr.mxu0 0.0
    %9547 = vmatpush1.msra.mxu0 0.0
    %9548 = vmatprep.mubr.f32.mxu0 0.0
    %9549 = vmatmul.mubr.f32.gmra.mrb[0].mxu0 %v9411
    %v9550 = vpop.f32.mrb[0].mxu0
    %v9551 = vadd.f32 0.0, %v9550
    %v9552 = vpop.f32.mrb[0].mxu0
    %v9553 = vadd.f32 0.0, %v9552
    %9554 = vdwg.mxu0
    %v9555 = vadd.f32 %v9342, %v9480
    %v9556 = vadd.f32 %v9343, %v9482
    %v9557 = vadd.f32 %v9344, %v9551
    %v9558 = vadd.f32 %v9345, %v9553
    %9559 = vrot.lane.b32.xlu0 %v4696, 95
    %v9560 = vpop.permute.xlu0 %9559
    %9561 = vrot.lane.b32.xlu0 %v4700, 95
    %v9562 = vpop.permute.xlu0 %9561
    %9563 = vrot.lane.b32.xlu0 %v4704, 95
    %v9564 = vpop.permute.xlu0 %9563
    %9565 = vrot.lane.b32.xlu0 %v4708, 95
    %v9566 = vpop.permute.xlu0 %9565
    %9567 = vrot.lane.b32.xlu0 %v4697, 95
    %v9568 = vpop.permute.xlu0 %9567
    %9569 = vrot.lane.b32.xlu0 %v4701, 95
    %v9570 = vpop.permute.xlu0 %9569
    %9571 = vrot.lane.b32.xlu0 %v4705, 95
    %v9572 = vpop.permute.xlu0 %9571
    %9573 = vrot.lane.b32.xlu0 %v4709, 95
    %v9574 = vpop.permute.xlu0 %9573
    %9575 = vrot.lane.b32.xlu0 %v4698, 95
    %v9576 = vpop.permute.xlu0 %9575
    %9577 = vrot.lane.b32.xlu0 %v4702, 95
    %v9578 = vpop.permute.xlu0 %9577
    %9579 = vrot.lane.b32.xlu0 %v4706, 95
    %v9580 = vpop.permute.xlu0 %9579
    %9581 = vrot.lane.b32.xlu0 %v4710, 95
    %v9582 = vpop.permute.xlu0 %9581
    %9583 = vrot.lane.b32.xlu0 %v4699, 95
    %v9584 = vpop.permute.xlu0 %9583
    %9585 = vrot.lane.b32.xlu0 %v4703, 95
    %v9586 = vpop.permute.xlu0 %9585
    %9587 = vrot.lane.b32.xlu0 %v4707, 95
    %v9588 = vpop.permute.xlu0 %9587
    %9589 = vrot.lane.b32.xlu0 %v4711, 95
    %v9590 = vpop.permute.xlu0 %9589
    %v9591 = vsel %vm883, %v9576, %v9584
    %v9592 = vsel %vm883, %v9578, %v9586
    %v9593 = vsel %vm883, %v9580, %v9588
    %v9594 = vsel %vm883, %v9582, %v9590
    %v9595 = vsel %vm883, %v9568, %v9576
    %v9596 = vsel %vm883, %v9570, %v9578
    %v9597 = vsel %vm883, %v9572, %v9580
    %v9598 = vsel %vm883, %v9574, %v9582
    %v9599 = vsel %vm883, %v9560, %v9568
    %v9600 = vsel %vm883, %v9562, %v9570
    %v9601 = vsel %vm883, %v9564, %v9572
    %v9602 = vsel %vm883, %v9566, %v9574
    %v9603 = vsel %vm883, %v9584, %v9560
    %v9604 = vsel %vm883, %v9586, %v9562
    %v9605 = vsel %vm883, %v9588, %v9564
    %v9606 = vsel %vm883, %v9590, %v9566
    %v9607 = vmul.f32 %v9599, %v891
    %v9608 = vmul.f32 %v9595, %v895
    %v9609 = vmul.f32 %v9591, %v899
    %v9610 = vmul.f32 %v9603, %v903
    %v9611 = vmul.f32 %v9600, %v891
    %v9612 = vmul.f32 %v9596, %v895
    %v9613 = vmul.f32 %v9592, %v899
    %v9614 = vmul.f32 %v9604, %v903
    %v9615 = vmul.f32 %v9601, %v891
    %v9616 = vmul.f32 %v9597, %v895
    %v9617 = vmul.f32 %v9593, %v899
    %v9618 = vmul.f32 %v9605, %v903
    %v9619 = vmul.f32 %v9602, %v891
    %v9620 = vmul.f32 %v9598, %v895
    %v9621 = vmul.f32 %v9594, %v899
    %v9622 = vmul.f32 %v9606, %v903
    %v9623 = vrot.slane %v4714, 7
    %v9624 = vsel %vm3938, %v9623, 0
    %9626 = vmatprep.subr.mxu0 %v9608
    %9627 = vmatpush1.msra.mxu0 %v9607
    %9628 = vmatprep.subr.mxu0 %v9612
    %9629 = vmatpush1.msra.mxu0 %v9611
    %9630 = vmatprep.subr.mxu0 %v9616
    %9631 = vmatpush1.msra.mxu0 %v9615
    %9632 = vmatprep.subr.mxu0 %v9620
    %9633 = vmatpush1.msra.mxu0 %v9619
    %9634 = vmatprep.subr.mxu0 0.0
    %9635 = vmatpush1.msra.mxu0 0.0
    %9636 = vmatprep.subr.mxu0 0.0
    %9637 = vmatpush1.msra.mxu0 0.0
    %9638 = vmatprep.subr.mxu0 0.0
    %9639 = vmatpush1.msra.mxu0 0.0
    %9640 = vmatprep.subr.mxu0 0.0
    %9641 = vmatpush1.msra.mxu0 0.0
    %9642 = vmatprep.subr.mxu0 0.0
    %9643 = vmatpush1.msra.mxu0 0.0
    %9644 = vmatprep.subr.mxu0 0.0
    %9645 = vmatpush1.msra.mxu0 0.0
    %9646 = vmatprep.subr.mxu0 0.0
    %9647 = vmatpush1.msra.mxu0 0.0
    %9648 = vmatprep.subr.mxu0 0.0
    %9649 = vmatpush1.msra.mxu0 0.0
    %9650 = vmatprep.subr.mxu0 0.0
    %9651 = vmatpush1.msra.mxu0 0.0
    %9652 = vmatprep.subr.mxu0 0.0
    %9653 = vmatpush1.msra.mxu0 0.0
    %9654 = vmatprep.subr.mxu0 0.0
    %9655 = vmatpush1.msra.mxu0 0.0
    %9656 = vmatprep.subr.mxu0 0.0
    %9657 = vmatpush1.msra.mxu0 0.0
    %9658 = vmatprep.subr.mxu0 0.0
    %9659 = vmatpush1.msra.mxu0 0.0
    %9660 = vmatprep.subr.mxu0 0.0
    %9661 = vmatpush1.msra.mxu0 0.0
    %9662 = vmatprep.subr.mxu0 0.0
    %9663 = vmatpush1.msra.mxu0 0.0
    %9664 = vmatprep.subr.mxu0 0.0
    %9665 = vmatpush1.msra.mxu0 0.0
    %9666 = vmatprep.subr.mxu0 0.0
    %9667 = vmatpush1.msra.mxu0 0.0
    %9668 = vmatprep.subr.mxu0 0.0
    %9669 = vmatpush1.msra.mxu0 0.0
    %9670 = vmatprep.subr.mxu0 0.0
    %9671 = vmatpush1.msra.mxu0 0.0
    %9672 = vmatprep.subr.mxu0 0.0
    %9673 = vmatpush1.msra.mxu0 0.0
    %9674 = vmatprep.subr.mxu0 0.0
    %9675 = vmatpush1.msra.mxu0 0.0
    %9676 = vmatprep.subr.mxu0 0.0
    %9677 = vmatpush1.msra.mxu0 0.0
    %9678 = vmatprep.subr.mxu0 0.0
    %9679 = vmatpush1.msra.mxu0 0.0
    %9680 = vmatprep.subr.mxu0 0.0
    %9681 = vmatpush1.msra.mxu0 0.0
    %9682 = vmatprep.subr.mxu0 0.0
    %9683 = vmatpush1.msra.mxu0 0.0
    %9684 = vmatprep.subr.mxu0 0.0
    %9685 = vmatpush1.msra.mxu0 0.0
    %9686 = vmatprep.subr.mxu0 0.0
    %9687 = vmatpush1.msra.mxu0 0.0
    %9688 = vmatprep.subr.mxu0 0.0
    %9689 = vmatpush1.msra.mxu0 0.0
    %9690 = vmatprep.mubr.f32.mxu0 0.0
    %9691 = vmatmul.mubr.f32.gmra.mrb[0].mxu0 %v9624
    %v9692 = vpop.f32.mrb[0].mxu0
    %v9693 = vadd.f32 0.0, %v9692
    %v9694 = vpop.f32.mrb[0].mxu0
    %v9695 = vadd.f32 0.0, %v9694
    %9696 = vdwg.mxu0
    %9697 = vmatprep.subr.mxu0 %v9610
    %9698 = vmatpush1.msra.mxu0 %v9609
    %9699 = vmatprep.subr.mxu0 %v9614
    %9700 = vmatpush1.msra.mxu0 %v9613
    %9701 = vmatprep.subr.mxu0 %v9618
    %9702 = vmatpush1.msra.mxu0 %v9617
    %9703 = vmatprep.subr.mxu0 %v9622
    %9704 = vmatpush1.msra.mxu0 %v9621
    %9705 = vmatprep.subr.mxu0 0.0
    %9706 = vmatpush1.msra.mxu0 0.0
    %9707 = vmatprep.subr.mxu0 0.0
    %9708 = vmatpush1.msra.mxu0 0.0
    %9709 = vmatprep.subr.mxu0 0.0
    %9710 = vmatpush1.msra.mxu0 0.0
    %9711 = vmatprep.subr.mxu0 0.0
    %9712 = vmatpush1.msra.mxu0 0.0
    %9713 = vmatprep.subr.mxu0 0.0
    %9714 = vmatpush1.msra.mxu0 0.0
    %9715 = vmatprep.subr.mxu0 0.0
    %9716 = vmatpush1.msra.mxu0 0.0
    %9717 = vmatprep.subr.mxu0 0.0
    %9718 = vmatpush1.msra.mxu0 0.0
    %9719 = vmatprep.subr.mxu0 0.0
    %9720 = vmatpush1.msra.mxu0 0.0
    %9721 = vmatprep.subr.mxu0 0.0
    %9722 = vmatpush1.msra.mxu0 0.0
    %9723 = vmatprep.subr.mxu0 0.0
    %9724 = vmatpush1.msra.mxu0 0.0
    %9725 = vmatprep.subr.mxu0 0.0
    %9726 = vmatpush1.msra.mxu0 0.0
    %9727 = vmatprep.subr.mxu0 0.0
    %9728 = vmatpush1.msra.mxu0 0.0
    %9729 = vmatprep.subr.mxu0 0.0
    %9730 = vmatpush1.msra.mxu0 0.0
    %9731 = vmatprep.subr.mxu0 0.0
    %9732 = vmatpush1.msra.mxu0 0.0
    %9733 = vmatprep.subr.mxu0 0.0
    %9734 = vmatpush1.msra.mxu0 0.0
    %9735 = vmatprep.subr.mxu0 0.0
    %9736 = vmatpush1.msra.mxu0 0.0
    %9737 = vmatprep.subr.mxu0 0.0
    %9738 = vmatpush1.msra.mxu0 0.0
    %9739 = vmatprep.subr.mxu0 0.0
    %9740 = vmatpush1.msra.mxu0 0.0
    %9741 = vmatprep.subr.mxu0 0.0
    %9742 = vmatpush1.msra.mxu0 0.0
    %9743 = vmatprep.subr.mxu0 0.0
    %9744 = vmatpush1.msra.mxu0 0.0
    %9745 = vmatprep.subr.mxu0 0.0
    %9746 = vmatpush1.msra.mxu0 0.0
    %9747 = vmatprep.subr.mxu0 0.0
    %9748 = vmatpush1.msra.mxu0 0.0
    %9749 = vmatprep.subr.mxu0 0.0
    %9750 = vmatpush1.msra.mxu0 0.0
    %9751 = vmatprep.subr.mxu0 0.0
    %9752 = vmatpush1.msra.mxu0 0.0
    %9753 = vmatprep.subr.mxu0 0.0
    %9754 = vmatpush1.msra.mxu0 0.0
    %9755 = vmatprep.subr.mxu0 0.0
    %9756 = vmatpush1.msra.mxu0 0.0
    %9757 = vmatprep.subr.mxu0 0.0
    %9758 = vmatpush1.msra.mxu0 0.0
    %9759 = vmatprep.subr.mxu0 0.0
    %9760 = vmatpush1.msra.mxu0 0.0
    %9761 = vmatprep.mubr.f32.mxu0 0.0
    %9762 = vmatmul.mubr.f32.gmra.mrb[0].mxu0 %v9624
    %v9763 = vpop.f32.mrb[0].mxu0
    %v9764 = vadd.f32 0.0, %v9763
    %v9765 = vpop.f32.mrb[0].mxu0
    %v9766 = vadd.f32 0.0, %v9765
    %9767 = vdwg.mxu0
    %v9768 = vadd.f32 %v9555, %v9693
    %v9769 = vadd.f32 %v9556, %v9695
    %v9770 = vadd.f32 %v9557, %v9764
    %v9771 = vadd.f32 %v9558, %v9766
    %9772 = vrot.lane.b32.xlu0 %v4696, 94
    %v9773 = vpop.permute.xlu0 %9772
    %9774 = vrot.lane.b32.xlu0 %v4700, 94
    %v9775 = vpop.permute.xlu0 %9774
    %9776 = vrot.lane.b32.xlu0 %v4704, 94
    %v9777 = vpop.permute.xlu0 %9776
    %9778 = vrot.lane.b32.xlu0 %v4708, 94
    %v9779 = vpop.permute.xlu0 %9778
    %9780 = vrot.lane.b32.xlu0 %v4697, 94
    %v9781 = vpop.permute.xlu0 %9780
    %9782 = vrot.lane.b32.xlu0 %v4701, 94
    %v9783 = vpop.permute.xlu0 %9782
    %9784 = vrot.lane.b32.xlu0 %v4705, 94
    %v9785 = vpop.permute.xlu0 %9784
    %9786 = vrot.lane.b32.xlu0 %v4709, 94
    %v9787 = vpop.permute.xlu0 %9786
    %9788 = vrot.lane.b32.xlu0 %v4698, 94
    %v9789 = vpop.permute.xlu0 %9788
    %9790 = vrot.lane.b32.xlu0 %v4702, 94
    %v9791 = vpop.permute.xlu0 %9790
    %9792 = vrot.lane.b32.xlu0 %v4706, 94
    %v9793 = vpop.permute.xlu0 %9792
    %9794 = vrot.lane.b32.xlu0 %v4710, 94
    %v9795 = vpop.permute.xlu0 %9794
    %9796 = vrot.lane.b32.xlu0 %v4699, 94
    %v9797 = vpop.permute.xlu0 %9796
    %9798 = vrot.lane.b32.xlu0 %v4703, 94
    %v9799 = vpop.permute.xlu0 %9798
    %9800 = vrot.lane.b32.xlu0 %v4707, 94
    %v9801 = vpop.permute.xlu0 %9800
    %9802 = vrot.lane.b32.xlu0 %v4711, 94
    %v9803 = vpop.permute.xlu0 %9802
    %v9804 = vsel %vm916, %v9789, %v9797
    %v9805 = vsel %vm916, %v9791, %v9799
    %v9806 = vsel %vm916, %v9793, %v9801
    %v9807 = vsel %vm916, %v9795, %v9803
    %v9808 = vsel %vm916, %v9781, %v9789
    %v9809 = vsel %vm916, %v9783, %v9791
    %v9810 = vsel %vm916, %v9785, %v9793
    %v9811 = vsel %vm916, %v9787, %v9795
    %v9812 = vsel %vm916, %v9773, %v9781
    %v9813 = vsel %vm916, %v9775, %v9783
    %v9814 = vsel %vm916, %v9777, %v9785
    %v9815 = vsel %vm916, %v9779, %v9787
    %v9816 = vsel %vm916, %v9797, %v9773
    %v9817 = vsel %vm916, %v9799, %v9775
    %v9818 = vsel %vm916, %v9801, %v9777
    %v9819 = vsel %vm916, %v9803, %v9779
    %v9820 = vmul.f32 %v9812, %v924
    %v9821 = vmul.f32 %v9808, %v928
    %v9822 = vmul.f32 %v9804, %v932
    %v9823 = vmul.f32 %v9816, %v936
    %v9824 = vmul.f32 %v9813, %v924
    %v9825 = vmul.f32 %v9809, %v928
    %v9826 = vmul.f32 %v9805, %v932
    %v9827 = vmul.f32 %v9817, %v936
    %v9828 = vmul.f32 %v9814, %v924
    %v9829 = vmul.f32 %v9810, %v928
    %v9830 = vmul.f32 %v9806, %v932
    %v9831 = vmul.f32 %v9818, %v936
    %v9832 = vmul.f32 %v9815, %v924
    %v9833 = vmul.f32 %v9811, %v928
    %v9834 = vmul.f32 %v9807, %v932
    %v9835 = vmul.f32 %v9819, %v936
    %v9837 = vsel %vm3938, %v4715, 0
    %9839 = vmatprep.subr.mxu0 %v9821
    %9840 = vmatpush1.msra.mxu0 %v9820
    %9841 = vmatprep.subr.mxu0 %v9825
    %9842 = vmatpush1.msra.mxu0 %v9824
    %9843 = vmatprep.subr.mxu0 %v9829
    %9844 = vmatpush1.msra.mxu0 %v9828
    %9845 = vmatprep.subr.mxu0 %v9833
    %9846 = vmatpush1.msra.mxu0 %v9832
    %9847 = vmatprep.subr.mxu0 0.0
    %9848 = vmatpush1.msra.mxu0 0.0
    %9849 = vmatprep.subr.mxu0 0.0
    %9850 = vmatpush1.msra.mxu0 0.0
    %9851 = vmatprep.subr.mxu0 0.0
    %9852 = vmatpush1.msra.mxu0 0.0
    %9853 = vmatprep.subr.mxu0 0.0
    %9854 = vmatpush1.msra.mxu0 0.0
    %9855 = vmatprep.subr.mxu0 0.0
    %9856 = vmatpush1.msra.mxu0 0.0
    %9857 = vmatprep.subr.mxu0 0.0
    %9858 = vmatpush1.msra.mxu0 0.0
    %9859 = vmatprep.subr.mxu0 0.0
    %9860 = vmatpush1.msra.mxu0 0.0
    %9861 = vmatprep.subr.mxu0 0.0
    %9862 = vmatpush1.msra.mxu0 0.0
    %9863 = vmatprep.subr.mxu0 0.0
    %9864 = vmatpush1.msra.mxu0 0.0
    %9865 = vmatprep.subr.mxu0 0.0
    %9866 = vmatpush1.msra.mxu0 0.0
    %9867 = vmatprep.subr.mxu0 0.0
    %9868 = vmatpush1.msra.mxu0 0.0
    %9869 = vmatprep.subr.mxu0 0.0
    %9870 = vmatpush1.msra.mxu0 0.0
    %9871 = vmatprep.subr.mxu0 0.0
    %9872 = vmatpush1.msra.mxu0 0.0
    %9873 = vmatprep.subr.mxu0 0.0
    %9874 = vmatpush1.msra.mxu0 0.0
    %9875 = vmatprep.subr.mxu0 0.0
    %9876 = vmatpush1.msra.mxu0 0.0
    %9877 = vmatprep.subr.mxu0 0.0
    %9878 = vmatpush1.msra.mxu0 0.0
    %9879 = vmatprep.subr.mxu0 0.0
    %9880 = vmatpush1.msra.mxu0 0.0
    %9881 = vmatprep.subr.mxu0 0.0
    %9882 = vmatpush1.msra.mxu0 0.0
    %9883 = vmatprep.subr.mxu0 0.0
    %9884 = vmatpush1.msra.mxu0 0.0
    %9885 = vmatprep.subr.mxu0 0.0
    %9886 = vmatpush1.msra.mxu0 0.0
    %9887 = vmatprep.subr.mxu0 0.0
    %9888 = vmatpush1.msra.mxu0 0.0
    %9889 = vmatprep.subr.mxu0 0.0
    %9890 = vmatpush1.msra.mxu0 0.0
    %9891 = vmatprep.subr.mxu0 0.0
    %9892 = vmatpush1.msra.mxu0 0.0
    %9893 = vmatprep.subr.mxu0 0.0
    %9894 = vmatpush1.msra.mxu0 0.0
    %9895 = vmatprep.subr.mxu0 0.0
    %9896 = vmatpush1.msra.mxu0 0.0
    %9897 = vmatprep.subr.mxu0 0.0
    %9898 = vmatpush1.msra.mxu0 0.0
    %9899 = vmatprep.subr.mxu0 0.0
    %9900 = vmatpush1.msra.mxu0 0.0
    %9901 = vmatprep.subr.mxu0 0.0
    %9902 = vmatpush1.msra.mxu0 0.0
    %9903 = vmatprep.mubr.f32.mxu0 0.0
    %9904 = vmatmul.mubr.f32.gmra.mrb[0].mxu0 %v9837
    %v9905 = vpop.f32.mrb[0].mxu0
    %v9906 = vadd.f32 0.0, %v9905
    %v9907 = vpop.f32.mrb[0].mxu0
    %v9908 = vadd.f32 0.0, %v9907
    %9909 = vdwg.mxu0
    %9910 = vmatprep.subr.mxu0 %v9823
    %9911 = vmatpush1.msra.mxu0 %v9822
    %9912 = vmatprep.subr.mxu0 %v9827
    %9913 = vmatpush1.msra.mxu0 %v9826
    %9914 = vmatprep.subr.mxu0 %v9831
    %9915 = vmatpush1.msra.mxu0 %v9830
    %9916 = vmatprep.subr.mxu0 %v9835
    %9917 = vmatpush1.msra.mxu0 %v9834
    %9918 = vmatprep.subr.mxu0 0.0
    %9919 = vmatpush1.msra.mxu0 0.0
    %9920 = vmatprep.subr.mxu0 0.0
    %9921 = vmatpush1.msra.mxu0 0.0
    %9922 = vmatprep.subr.mxu0 0.0
    %9923 = vmatpush1.msra.mxu0 0.0
    %9924 = vmatprep.subr.mxu0 0.0
    %9925 = vmatpush1.msra.mxu0 0.0
    %9926 = vmatprep.subr.mxu0 0.0
    %9927 = vmatpush1.msra.mxu0 0.0
    %9928 = vmatprep.subr.mxu0 0.0
    %9929 = vmatpush1.msra.mxu0 0.0
    %9930 = vmatprep.subr.mxu0 0.0
    %9931 = vmatpush1.msra.mxu0 0.0
    %9932 = vmatprep.subr.mxu0 0.0
    %9933 = vmatpush1.msra.mxu0 0.0
    %9934 = vmatprep.subr.mxu0 0.0
    %9935 = vmatpush1.msra.mxu0 0.0
    %9936 = vmatprep.subr.mxu0 0.0
    %9937 = vmatpush1.msra.mxu0 0.0
    %9938 = vmatprep.subr.mxu0 0.0
    %9939 = vmatpush1.msra.mxu0 0.0
    %9940 = vmatprep.subr.mxu0 0.0
    %9941 = vmatpush1.msra.mxu0 0.0
    %9942 = vmatprep.subr.mxu0 0.0
    %9943 = vmatpush1.msra.mxu0 0.0
    %9944 = vmatprep.subr.mxu0 0.0
    %9945 = vmatpush1.msra.mxu0 0.0
    %9946 = vmatprep.subr.mxu0 0.0
    %9947 = vmatpush1.msra.mxu0 0.0
    %9948 = vmatprep.subr.mxu0 0.0
    %9949 = vmatpush1.msra.mxu0 0.0
    %9950 = vmatprep.subr.mxu0 0.0
    %9951 = vmatpush1.msra.mxu0 0.0
    %9952 = vmatprep.subr.mxu0 0.0
    %9953 = vmatpush1.msra.mxu0 0.0
    %9954 = vmatprep.subr.mxu0 0.0
    %9955 = vmatpush1.msra.mxu0 0.0
    %9956 = vmatprep.subr.mxu0 0.0
    %9957 = vmatpush1.msra.mxu0 0.0
    %9958 = vmatprep.subr.mxu0 0.0
    %9959 = vmatpush1.msra.mxu0 0.0
    %9960 = vmatprep.subr.mxu0 0.0
    %9961 = vmatpush1.msra.mxu0 0.0
    %9962 = vmatprep.subr.mxu0 0.0
    %9963 = vmatpush1.msra.mxu0 0.0
    %9964 = vmatprep.subr.mxu0 0.0
    %9965 = vmatpush1.msra.mxu0 0.0
    %9966 = vmatprep.subr.mxu0 0.0
    %9967 = vmatpush1.msra.mxu0 0.0
    %9968 = vmatprep.subr.mxu0 0.0
    %9969 = vmatpush1.msra.mxu0 0.0
    %9970 = vmatprep.subr.mxu0 0.0
    %9971 = vmatpush1.msra.mxu0 0.0
    %9972 = vmatprep.subr.mxu0 0.0
    %9973 = vmatpush1.msra.mxu0 0.0
    %9974 = vmatprep.mubr.f32.mxu0 0.0
    %9975 = vmatmul.mubr.f32.gmra.mrb[0].mxu0 %v9837
    %v9976 = vpop.f32.mrb[0].mxu0
    %v9977 = vadd.f32 0.0, %v9976
    %v9978 = vpop.f32.mrb[0].mxu0
    %v9979 = vadd.f32 0.0, %v9978
    %9980 = vdwg.mxu0
    %v9981 = vadd.f32 %v9768, %v9906
    %v9982 = vadd.f32 %v9769, %v9908
    %v9983 = vadd.f32 %v9770, %v9977
    %v9984 = vadd.f32 %v9771, %v9979
    %s9985 = sld [smem:[#allocation3]]
    %v9986 = vstv %s9985
    %v9987 = vadd.f32 %v9981, %v9986
    %v9988 = vadd.f32 %v9982, %v9986
    %v9989 = vadd.f32 %v9983, %v9986
    %v9990 = vadd.f32 %v9984, %v9986
    %v9991 = vlaneseq
    %v9992 = vshrl.u32 %v9991, 7
    %v9993 = vsub.s32 0, %v9992
    %v9994 = vrot.slane %v83, %v9993
    %v9995 = vlaneseq
    %v9996 = vshrl.u32 %v9995, 7
    %v9997 = vsub.s32 2, %v9996
    %v9998 = vrot.slane %v83, %v9997
    %v9999 = vlaneseq
    %v10000 = vshrl.u32 %v9999, 7
    %v10001 = vsub.s32 4, %v10000
    %v10002 = vrot.slane %v83, %v10001
    %v10003 = vlaneseq
    %v10004 = vshrl.u32 %v10003, 7
    %v10005 = vsub.s32 6, %v10004
    %v10006 = vrot.slane %v83, %v10005
    %v10011 = vadd.f32 %v9987, %v9994
    %v10012 = vadd.f32 %v9988, %v9998
    %v10013 = vadd.f32 %v9989, %v10002
    %v10014 = vadd.f32 %v9990, %v10006
    %v10019 = vcombine.low %v10011, %v10012
    %v10020 = vcombine.low %v10013, %v10014
    %v10022 = vunpack.c.l.s4 1966171168
    %v10023 = vunpack.c.0.s8 %v10022
    %v10024 = vlaneseq
    %v10025 = vshrl.u32 %v10024, 7
    %v10026 = vsub.s32 %v10023, %v10025
    %v10027 = vrot.slane %v10019, %v10026
    %v10029 = vunpack.c.l.s4 1966171168
    %v10030 = vunpack.c.0.s8 %v10029
    %v10031 = vlaneseq
    %v10032 = vshrl.u32 %v10031, 7
    %v10033 = vsub.s32 %v10030, %v10032
    %v10034 = vrot.slane %v10020, %v10033
    %v10035 = vcombine.low %v10027, %v10034
    %v10037 = vunpack.c.l.s4 1966171168
    %v10038 = vunpack.c.0.s8 %v10037
    %v10039 = vlaneseq
    %v10040 = vshrl.u32 %v10039, 7
    %v10041 = vsub.s32 %v10038, %v10040
    %v10042 = vrot.slane %v10035, %v10041
    %v10044 = vlaneseq
    %vm10045 = vcmp.ge.s32.totalorder %v10044, 0
    %vm10046 = vcmp.lt.s32.totalorder %v10044, 512
    %vm10047 = vmand %vm10045, %vm10046
    %10048 = vst.msk [vmem:[#allocation11] sm:$0xf] %vm10047, %v10042
    // Predicated region
    $region50: #{tpu_custom_call.1} parent=1 // pred_check
      _
    $region51: #{tpu_custom_call.1} parent=1 // pred_check_branch
      %10050 = sbr.rel (0) target = $region53
    $region52: #{tpu_custom_call.1} parent=1 // pred_region
      %s10052 = ssub.s32 64, 64
      %10053 = vsyncadd [#allocation8], %s10052
      %s10055 = sshll.u32 [#allocation11], 4
      %s10056 = int_to_ptr.vmem [resolvable:$true] %s10055
      %10058 = dma.vmem_to_hbm [thread:$0]  %s10056, 64, %s10, [#allocation8]
    $region53: #{tpu_custom_call.1} parent=1 // pred_fallthru
      _
    // Predicated region
    $region54: #{tpu_custom_call.1} parent=1 // pred_check
      _
    $region55: #{tpu_custom_call.1} parent=1 // pred_check_branch
      %10060 = sbr.rel (0) target = $region57
    $region56: #{tpu_custom_call.1} parent=1 // pred_region
      %10061 = dma.done [#allocation8], 64
    $region57: #{tpu_custom_call.1} parent=1 // pred_fallthru
      _
    %10062 = vsyncpa [#allocation7], 1
    %10063 = vsyncpa [#allocation10], 1
    %10064 = vsyncpa [#allocation8], 1

</llo_original>
